<compile_context>
chip_gen: v6e
topology: v6e:2x2x1
jax: 0.10.0
libtpu: 0.0.40
codegen_flags: <defaults>
</compile_context>

<pallas_src>
import math

import numpy as np
import jax
import jax.numpy as jnp
from jax.experimental import pallas as pl
from jax.experimental.pallas import tpu as pltpu


_VMEM_LIMIT = 32 * 1024 * 1024      # safe on v5e/v6e (128 MiB) and v7x (64 MiB)
_TILE_CANDIDATES = (2048, 1024, 512, 256, 128, 64, 32, 16, 8)


# ----------------------------- tiling helpers -----------------------------

def _pick_tile(m, cap=1024):
    """Largest candidate tile that divides m, bounded so the grid has >=2 steps."""
    limit = min(cap, m)
    if m >= 2 * _TILE_CANDIDATES[-1]:
        limit = min(limit, m // 2)          # keep >= 2 grid steps (v7x 2 TCs)
    for t in _TILE_CANDIDATES:
        if t <= limit and m % t == 0:
            return t
    return m  # unreachable here: M is padded to a multiple of 256 below


def _pick_window_tile(nwin, t_tokens, max_tokens=2048):
    """Windows per grid step: ~max_tokens tokens per block, divisor of nwin."""
    cap = max(1, max_tokens // t_tokens)
    if nwin >= 2:
        cap = min(cap, nwin // 2)           # keep >= 2 grid steps
    cap = max(1, min(cap, nwin))
    best = 1
    for w in range(1, cap + 1):
        if nwin % w == 0:
            best = w
    return best


# ----------------------------- Pallas kernels -----------------------------

def _make_matmul_kernel(relu, has_residual):
    """Fused (tile x K) @ (K x N) + bias [+ residual] [+ ReLU] kernel."""
    if has_residual:
        def kern(x_ref, w_ref, b_ref, r_ref, o_ref):
            acc = jnp.dot(x_ref[...], w_ref[...],
                          preferred_element_type=jnp.float32)
            acc = acc + b_ref[...]
            acc = acc + r_ref[...].astype(jnp.float32)
            if relu:
                acc = jnp.maximum(acc, 0.0)
            o_ref[...] = acc.astype(o_ref.dtype)
        return kern

    def kern(x_ref, w_ref, b_ref, o_ref):
        acc = jnp.dot(x_ref[...], w_ref[...],
                      preferred_element_type=jnp.float32)
        acc = acc + b_ref[...]
        if relu:
            acc = jnp.maximum(acc, 0.0)
        o_ref[...] = acc.astype(o_ref.dtype)
    return kern


def _fused_matmul(x, w, b, relu=False, residual=None, out_dtype=jnp.bfloat16):
    """x:(M,K) bf16, w:(K,N) bf16, b:(N,) f32 -> (M,N) out_dtype, f32 accumulate."""
    M, K = x.shape
    N = w.shape[1]
    # Pad M to a multiple of 256 so tiles are always bounded (never full-M).
    Mp = ((M + 255) // 256) * 256
    if Mp != M:
        x = jnp.pad(x, ((0, Mp - M), (0, 0)))
        if residual is not None:
            residual = jnp.pad(residual, ((0, Mp - M), (0, 0)))
    tm = _pick_tile(Mp, cap=1024)

    in_specs = [pl.BlockSpec((tm, K), lambda i: (i, 0)),
                pl.BlockSpec((K, N), lambda i: (0, 0)),
                pl.BlockSpec((1, N), lambda i: (0, 0))]
    args = [x, w, jnp.asarray(b, jnp.float32).reshape(1, -1)]
    if residual is not None:
        in_specs.append(pl.BlockSpec((tm, N), lambda i: (i, 0)))
        args.append(residual)

    out = pl.pallas_call(
        _make_matmul_kernel(relu, residual is not None),
        out_shape=jax.ShapeDtypeStruct((Mp, N), out_dtype),
        grid=(Mp // tm,),
        in_specs=in_specs,
        out_specs=pl.BlockSpec((tm, N), lambda i: (i, 0)),
        compiler_params=pltpu.CompilerParams(
            dimension_semantics=("parallel",),
            vmem_limit_bytes=_VMEM_LIMIT),
    )(*args)
    if Mp != M:
        out = out[:M]
    return out


def conv3x3(x, w, b, relu=False, residual=None, out_dtype=jnp.bfloat16):
    """3x3 'same' conv as a single deep-K matmul: (M, 9*Cin) @ (9*Cin, Cout).

    x: NHWC bf16, w: (3,3,Cin,Cout) bf16, b: (Cout,) f32.
    Optional fused residual add (residual: NHWC, Cout channels) and ReLU.
    """
    B, H, W, Cin = x.shape
    Cout = w.shape[-1]
    xp = jnp.pad(x, ((0, 0), (1, 1), (1, 1), (0, 0)))
    # Tap-concat layout: column order (ky, kx, cin) matches w.reshape(9*Cin, Cout).
    # TODO(synk): a halo'd row-slab DMA kernel would avoid materializing the
    #             9x tap tensor in HBM entirely (further ~4x input-traffic cut).
    taps = jnp.concatenate(
        [xp[:, ky:ky + H, kx:kx + W, :] for ky in range(3) for kx in range(3)],
        axis=-1).reshape(B * H * W, 9 * Cin)
    wf = w.reshape(9 * Cin, Cout)
    r2d = None if residual is None else residual.reshape(B * H * W, Cout)
    out = _fused_matmul(taps, wf, b, relu=relu, residual=r2d, out_dtype=out_dtype)
    return out.reshape(B, H, W, Cout)


def conv1x1(x, w, b, relu=False, residual=None, out_dtype=jnp.bfloat16):
    """1x1 conv: (B*H*W, Cin) @ (Cin, Cout) + bias [+ residual]."""
    B, H, W, Cin = x.shape
    Cout = w.shape[-1]
    r2d = None if residual is None else residual.reshape(B * H * W, Cout)
    out = _fused_matmul(x.reshape(B * H * W, Cin), w, b, relu=relu,
                        residual=r2d, out_dtype=out_dtype)
    return out.reshape(B, H, W, Cout)


def _win_attn_kernel(q_ref, v_ref, o_ref):
    # q_ref/v_ref/o_ref: (wt, T, cg) bf16 — wt windows per grid step.
    q = q_ref[...]
    v = v_ref[...]
    # s = q @ q^T per window, f32 accumulation (no 1/sqrt(d) scale in ELAN GMSA).
    s = jnp.einsum('wtc,wsc->wts', q, q, preferred_element_type=jnp.float32)
    s = s - jnp.max(s, axis=-1, keepdims=True)
    p = jnp.exp(s)
    denom = jnp.sum(p, axis=-1, keepdims=True)
    p = p * pl.reciprocal(denom, approx=True)
    o = jnp.einsum('wts,wsc->wtc', p.astype(v.dtype), v,
                   preferred_element_type=jnp.float32)
    o_ref[...] = o.astype(o_ref.dtype)


def window_self_attention(q, v):
    """q, v: (nwin, T, cg) bf16 -> softmax(q q^T) v, many windows per grid step."""
    nwin, T, cg = q.shape
    wt = _pick_window_tile(nwin, T)
    return pl.pallas_call(
        _win_attn_kernel,
        out_shape=jax.ShapeDtypeStruct((nwin, T, cg), q.dtype),
        grid=(nwin // wt,),
        in_specs=[pl.BlockSpec((wt, T, cg), lambda i: (i, 0, 0)),
                  pl.BlockSpec((wt, T, cg), lambda i: (i, 0, 0))],
        out_specs=pl.BlockSpec((wt, T, cg), lambda i: (i, 0, 0)),
        compiler_params=pltpu.CompilerParams(
            dimension_semantics=("parallel",),
            vmem_limit_bytes=_VMEM_LIMIT),
    )(q, v)


# ----------------------------- parameters -----------------------------

def _shift_mask(cin, cout):
    """ShiftConv2d mask (fast-training-speed variant), layout (kh,kw,Cin,Cout)."""
    g = cin // 5
    m = np.zeros((3, 3, cin, cout), np.float32)
    m[1, 2, 0 * g:1 * g, :] = 1.0
    m[1, 0, 1 * g:2 * g, :] = 1.0
    m[2, 1, 2 * g:3 * g, :] = 1.0
    m[0, 1, 3 * g:4 * g, :] = 1.0
    m[1, 1, 4 * g:, :] = 1.0
    return jnp.asarray(m)


def _conv_init(key, kh, kw, cin, cout):
    kw_key, kb_key = jax.random.split(key)
    fan_in = kh * kw * cin
    bound = 1.0 / math.sqrt(fan_in)
    w = jax.random.uniform(kw_key, (kh, kw, cin, cout), jnp.float32, -bound, bound)
    b = jax.random.uniform(kb_key, (cout,), jnp.float32, -bound, bound)
    return w, b


def init_elan_params(key, cfg):
    c, e = cfg['c_elan'], cfg['r_expand']
    assert cfg['n_share'] == 0
    # TODO(synk): n_share > 0 (shared-attention ELAB sub-blocks reusing `atn`)
    #             is not implemented; this config uses n_share=0.
    keys = iter(jax.random.split(key, 2 + 4 * cfg['m_elan']))
    params = {}

    def pack(w, b):
        return (w.astype(jnp.bfloat16), b.astype(jnp.float32))

    params['head'] = pack(*_conv_init(next(keys), 3, 3, cfg['colors_in'], c))

    body = []
    for _ in range(cfg['m_elan']):
        blk = {}
        # LFE: two ShiftConv2d (masked 3x3 convs), ReLU between them.
        w0, b0 = _conv_init(next(keys), 3, 3, c, c * e)
        w1, b1 = _conv_init(next(keys), 3, 3, c * e, c)
        w0b, b0b = pack(w0 * _shift_mask(c, c * e), b0)
        w1b, b1b = pack(w1 * _shift_mask(c * e, c), b1)
        blk['lfe'] = {'w0': w0b, 'b0': b0b, 'w1': w1b, 'b1': b1b}
        # GMSA project_inp: 1x1 conv (c -> 2c) + BatchNorm2d(2c) in eval mode
        # with fresh running stats -> folded into the 1x1 conv weights.
        wi, bi = _conv_init(next(keys), 1, 1, c, 2 * c)
        wi = wi.reshape(c, 2 * c)
        gamma = jnp.ones((2 * c,), jnp.float32)
        beta = jnp.zeros((2 * c,), jnp.float32)
        rmean = jnp.zeros((2 * c,), jnp.float32)
        rvar = jnp.ones((2 * c,), jnp.float32)
        scale = gamma / jnp.sqrt(rvar + 1e-5)
        wi = wi * scale[None, :]
        bi = (bi - rmean) * scale + beta
        wo, bo = _conv_init(next(keys), 1, 1, c, c)
        blk['gmsa'] = {'pi_w': wi.astype(jnp.bfloat16), 'pi_b': bi.astype(jnp.float32),
                       'po_w': wo.reshape(c, c).astype(jnp.bfloat16),
                       'po_b': bo.astype(jnp.float32)}
        body.append(blk)
    params['body'] = body
    params['tail'] = pack(*_conv_init(next(keys), 3, 3, c,
                                      cfg['colors_out'] * cfg['scale'] ** 2))
    return params


# ----------------------------- forward pass -----------------------------

def lfe_forward(x, p):
    y = conv3x3(x, p['w0'], p['b0'], relu=True)
    # Second shift-conv with the block residual fused into its epilogue.
    return conv3x3(y, p['w1'], p['b1'], relu=False, residual=x)


def gmsa_forward(x, p, shifts, window_sizes):
    B, H, W, C = x.shape
    cg = C // 3
    y = conv1x1(x, p['pi_w'], p['pi_b'])          # (B,H,W,2C), BN folded in
    ys = []
    for idx in range(3):
        wsize = window_sizes[idx]
        g = y[..., idx * 2 * cg:(idx + 1) * 2 * cg]
        if shifts > 0:
            g = jnp.roll(g, shift=(-(wsize // 2), -(wsize // 2)), axis=(1, 2))
        q, v = g[..., :cg], g[..., cg:]
        nh, nw = H // wsize, W // wsize

        def to_win(t):
            t = t.reshape(B, nh, wsize, nw, wsize, cg)
            return t.transpose(0, 1, 3, 2, 4, 5).reshape(B * nh * nw,
                                                         wsize * wsize, cg)

        yw = window_self_attention(to_win(q), to_win(v))
        yw = (yw.reshape(B, nh, nw, wsize, wsize, cg)
                .transpose(0, 1, 3, 2, 4, 5)
                .reshape(B, H, W, cg))
        if shifts > 0:
            yw = jnp.roll(yw, shift=(wsize // 2, wsize // 2), axis=(1, 2))
        ys.append(yw)
    ycat = jnp.concatenate(ys, axis=-1)           # (B,H,W,C)
    # project_out with the block residual fused into its epilogue.
    # TODO(synk): full GMSA fusion (project_inp + window attention +
    #             project_out in one pallas_call with window partition in the
    #             BlockSpec index_map) would remove the remaining roll /
    #             transpose HBM passes.
    return conv1x1(ycat, p['po_w'], p['po_b'], residual=x)


def elab_forward(x, blk, shifts, window_sizes):
    x = lfe_forward(x, blk['lfe'])                     # lfe(x) + x (fused)
    return gmsa_forward(x, blk['gmsa'], shifts, window_sizes)   # gmsa(x) + x (fused)


def elan_forward(x_nchw, params, cfg):
    window_sizes = cfg['window_sizes']
    scale = cfg['scale']
    B, C, H, W = x_nchw.shape
    x = x_nchw[:, :cfg['colors_in']]
    x = jnp.transpose(x, (0, 2, 3, 1)).astype(jnp.float32)   # NCHW -> NHWC
    # check_image_size: reflect-pad bottom/right to a multiple of lcm(window_sizes)
    wsz = window_sizes[0]
    for i in range(1, len(window_sizes)):
        wsz = wsz * window_sizes[i] // math.gcd(wsz, window_sizes[i])
    ph = (wsz - H % wsz) % wsz
    pw = (wsz - W % wsz) % wsz
    x = jnp.pad(x, ((0, 0), (0, ph), (0, pw), (0, 0)), mode='reflect')
    x = x.astype(jnp.bfloat16)
    # sub_mean / add_mean are commented out (dead code) in the reference forward.
    x = conv3x3(x, *params['head'])
    res = x
    for i, blk in enumerate(params['body']):
        shifts = 0 if (i + 1) % 2 == 1 else 1
        res = elab_forward(res, blk, shifts, window_sizes)
    res = res + x                                  # single global skip (once per fwd)
    out = conv3x3(res, *params['tail'], out_dtype=jnp.float32)
    # PixelShuffle(scale): channel c*r*r + i*r + j -> pixel (h*r+i, w*r+j, c)
    Bp, Hp, Wp, Cps = out.shape
    co = Cps // (scale * scale)
    out = out.reshape(Bp, Hp, Wp, co, scale, scale)
    out = out.transpose(0, 1, 4, 2, 5, 3).reshape(Bp, Hp * scale, Wp * scale, co)
    out = out[:, :H * scale, :W * scale, :]        # crop padding
    return jnp.transpose(out, (0, 3, 1, 2))        # NHWC -> NCHW


# ----------------------------- demo -----------------------------

if __name__ == "__main__":
    # Small, self-consistent config: c_elan divisible by 3 (q/v groups) and 5
    # (shift-conv channel groups); spatial 12 exercises the reflect-pad path
    # (lcm(window_sizes) = 16).
    cfg = dict(scale=2, colors_in=3, colors_out=3, window_sizes=[4, 8, 16],
               m_elan=2, c_elan=30, n_share=0, r_expand=2)

    key = jax.random.PRNGKey(0)
    pkey, xkey = jax.random.split(key)
    params = init_elan_params(pkey, cfg)

    x = jax.random.normal(xkey, (2, 3, 12, 12), jnp.float32)   # NCHW like torch

    fwd = jax.jit(lambda inp: elan_forward(inp, params, cfg))
    out = jax.block_until_ready(fwd(x))

    expected = (2, cfg['colors_out'], 12 * cfg['scale'], 12 * cfg['scale'])
    assert out.shape == expected, (out.shape, expected)
    assert bool(jnp.all(jnp.isfinite(out)))
    print("KERNEL_OK")
</pallas_src>

<mosaic_0001>
module attributes {stable_mosaic.version = 11 : i64} {
  func.func @kern(%arg0: i32, %arg1: memref<256x27xbf16, #tpu.memory_space<vmem>>, %arg2: memref<27x30xbf16, #tpu.memory_space<vmem>>, %arg3: memref<1x30xf32, #tpu.memory_space<vmem>>, %arg4: memref<256x30xbf16, #tpu.memory_space<vmem>>) attributes {dimension_semantics = [#tpu.dimension_semantics<parallel>], iteration_bounds = array<i64: 2>, scalar_prefetch = 0 : i64, scratch_operands = 0 : i64, tpu.core_type = #tpu.core_type<tc>, window_params = [{transform_indices = @transform_0, window_bounds = array<i64: 256, 27>}, {pipeline_mode = #tpu.pipeline_mode<synchronous>, transform_indices = @transform_1, window_bounds = array<i64: 27, 30>}, {pipeline_mode = #tpu.pipeline_mode<synchronous>, transform_indices = @transform_2, window_bounds = array<i64: 1, 30>}, {transform_indices = @transform_3, window_bounds = array<i64: 256, 30>}]} {
    %c0 = arith.constant 0 : index
    %c0_0 = arith.constant 0 : index
    %0 = vector.load %arg1[%c0, %c0_0] : memref<256x27xbf16, #tpu.memory_space<vmem>>, vector<256x27xbf16>
    %c0_1 = arith.constant 0 : index
    %c0_2 = arith.constant 0 : index
    %1 = vector.load %arg2[%c0_1, %c0_2] : memref<27x30xbf16, #tpu.memory_space<vmem>>, vector<27x30xbf16>
    %cst = arith.constant dense<0.000000e+00> : vector<256x30xf32>
    %2 = tpu.matmul %0, %1, %cst {dimension_numbers = #tpu.dot_dimension_numbers<[1], [0], [0], [1], [0, 0, 1, 1], [], []>} : vector<256x27xbf16>, vector<27x30xbf16>, vector<256x30xf32> -> vector<256x30xf32>
    %c0_3 = arith.constant 0 : index
    %c0_4 = arith.constant 0 : index
    %3 = vector.load %arg3[%c0_3, %c0_4] : memref<1x30xf32, #tpu.memory_space<vmem>>, vector<1x30xf32>
    %4 = vector.broadcast %3 : vector<1x30xf32> to vector<256x30xf32>
    %5 = arith.addf %2, %4 : vector<256x30xf32>
    %6 = arith.truncf %5 : vector<256x30xf32> to vector<256x30xbf16>
    %c0_5 = arith.constant 0 : index
    %c0_6 = arith.constant 0 : index
    %7 = vector.load %arg4[%c0_5, %c0_6] : memref<256x30xbf16, #tpu.memory_space<vmem>>, vector<256x30xbf16>
    tpu.vector_store %arg4[%c0_5, %c0_6], %6 {strides = array<i32>} : memref<256x30xbf16, #tpu.memory_space<vmem>>, vector<256x30xbf16>,
    return
  }
  func.func @transform_0(%arg0: i32) -> (i32, i32) {
    %c0_i32 = arith.constant 0 : i32
    %c0_i32_0 = arith.constant 0 : i32
    return %arg0, %c0_i32 : i32, i32
  }
  func.func @transform_1(%arg0: i32) -> (i32, i32) {
    %c0_i32 = arith.constant 0 : i32
    %c0_i32_0 = arith.constant 0 : i32
    %c0_i32_1 = arith.constant 0 : i32
    return %c0_i32, %c0_i32_0 : i32, i32
  }
  func.func @transform_2(%arg0: i32) -> (i32, i32) {
    %c0_i32 = arith.constant 0 : i32
    %c0_i32_0 = arith.constant 0 : i32
    %c0_i32_1 = arith.constant 0 : i32
    return %c0_i32, %c0_i32_0 : i32, i32
  }
  func.func @transform_3(%arg0: i32) -> (i32, i32) {
    %c0_i32 = arith.constant 0 : i32
    %c0_i32_0 = arith.constant 0 : i32
    return %arg0, %c0_i32 : i32, i32
  }
}

module attributes {stable_mosaic.version = 11 : i64} {
  func.func @kern(%arg0: i32, %arg1: memref<256x270xbf16, #tpu.memory_space<vmem>>, %arg2: memref<270x60xbf16, #tpu.memory_space<vmem>>, %arg3: memref<1x60xf32, #tpu.memory_space<vmem>>, %arg4: memref<256x60xbf16, #tpu.memory_space<vmem>>) attributes {dimension_semantics = [#tpu.dimension_semantics<parallel>], iteration_bounds = array<i64: 2>, scalar_prefetch = 0 : i64, scratch_operands = 0 : i64, tpu.core_type = #tpu.core_type<tc>, window_params = [{transform_indices = @transform_0, window_bounds = array<i64: 256, 270>}, {pipeline_mode = #tpu.pipeline_mode<synchronous>, transform_indices = @transform_1, window_bounds = array<i64: 270, 60>}, {pipeline_mode = #tpu.pipeline_mode<synchronous>, transform_indices = @transform_2, window_bounds = array<i64: 1, 60>}, {transform_indices = @transform_3, window_bounds = array<i64: 256, 60>}]} {
    %c0 = arith.constant 0 : index
    %c0_0 = arith.constant 0 : index
    %0 = vector.load %arg1[%c0, %c0_0] : memref<256x270xbf16, #tpu.memory_space<vmem>>, vector<256x270xbf16>
    %c0_1 = arith.constant 0 : index
    %c0_2 = arith.constant 0 : index
    %1 = vector.load %arg2[%c0_1, %c0_2] : memref<270x60xbf16, #tpu.memory_space<vmem>>, vector<270x60xbf16>
    %cst = arith.constant dense<0.000000e+00> : vector<256x60xf32>
    %2 = tpu.matmul %0, %1, %cst {dimension_numbers = #tpu.dot_dimension_numbers<[1], [0], [0], [1], [0, 0, 1, 1], [], []>} : vector<256x270xbf16>, vector<270x60xbf16>, vector<256x60xf32> -> vector<256x60xf32>
    %c0_3 = arith.constant 0 : index
    %c0_4 = arith.constant 0 : index
    %3 = vector.load %arg3[%c0_3, %c0_4] : memref<1x60xf32, #tpu.memory_space<vmem>>, vector<1x60xf32>
    %4 = vector.broadcast %3 : vector<1x60xf32> to vector<256x60xf32>
    %5 = arith.addf %2, %4 : vector<256x60xf32>
    %cst_5 = arith.constant 0.000000e+00 : f32
    %6 = vector.broadcast %cst_5 : f32 to vector<256x60xf32>
    %7 = arith.maximumf %5, %6 : vector<256x60xf32>
    %8 = arith.truncf %7 : vector<256x60xf32> to vector<256x60xbf16>
    %c0_6 = arith.constant 0 : index
    %c0_7 = arith.constant 0 : index
    %9 = vector.load %arg4[%c0_6, %c0_7] : memref<256x60xbf16, #tpu.memory_space<vmem>>, vector<256x60xbf16>
    tpu.vector_store %arg4[%c0_6, %c0_7], %8 {strides = array<i32>} : memref<256x60xbf16, #tpu.memory_space<vmem>>, vector<256x60xbf16>,
    return
  }
  func.func @transform_0(%arg0: i32) -> (i32, i32) {
    %c0_i32 = arith.constant 0 : i32
    %c0_i32_0 = arith.constant 0 : i32
    return %arg0, %c0_i32 : i32, i32
  }
  func.func @transform_1(%arg0: i32) -> (i32, i32) {
    %c0_i32 = arith.constant 0 : i32
    %c0_i32_0 = arith.constant 0 : i32
    %c0_i32_1 = arith.constant 0 : i32
    return %c0_i32, %c0_i32_0 : i32, i32
  }
  func.func @transform_2(%arg0: i32) -> (i32, i32) {
    %c0_i32 = arith.constant 0 : i32
    %c0_i32_0 = arith.constant 0 : i32
    %c0_i32_1 = arith.constant 0 : i32
    return %c0_i32, %c0_i32_0 : i32, i32
  }
  func.func @transform_3(%arg0: i32) -> (i32, i32) {
    %c0_i32 = arith.constant 0 : i32
    %c0_i32_0 = arith.constant 0 : i32
    return %arg0, %c0_i32 : i32, i32
  }
}

module attributes {stable_mosaic.version = 11 : i64} {
  func.func @kern(%arg0: i32, %arg1: memref<256x540xbf16, #tpu.memory_space<vmem>>, %arg2: memref<540x30xbf16, #tpu.memory_space<vmem>>, %arg3: memref<1x30xf32, #tpu.memory_space<vmem>>, %arg4: memref<256x30xbf16, #tpu.memory_space<vmem>>, %arg5: memref<256x30xbf16, #tpu.memory_space<vmem>>) attributes {dimension_semantics = [#tpu.dimension_semantics<parallel>], iteration_bounds = array<i64: 2>, scalar_prefetch = 0 : i64, scratch_operands = 0 : i64, tpu.core_type = #tpu.core_type<tc>, window_params = [{transform_indices = @transform_0, window_bounds = array<i64: 256, 540>}, {pipeline_mode = #tpu.pipeline_mode<synchronous>, transform_indices = @transform_1, window_bounds = array<i64: 540, 30>}, {pipeline_mode = #tpu.pipeline_mode<synchronous>, transform_indices = @transform_2, window_bounds = array<i64: 1, 30>}, {transform_indices = @transform_3, window_bounds = array<i64: 256, 30>}, {transform_indices = @transform_4, window_bounds = array<i64: 256, 30>}]} {
    %c0 = arith.constant 0 : index
    %c0_0 = arith.constant 0 : index
    %0 = vector.load %arg1[%c0, %c0_0] : memref<256x540xbf16, #tpu.memory_space<vmem>>, vector<256x540xbf16>
    %c0_1 = arith.constant 0 : index
    %c0_2 = arith.constant 0 : index
    %1 = vector.load %arg2[%c0_1, %c0_2] : memref<540x30xbf16, #tpu.memory_space<vmem>>, vector<540x30xbf16>
    %cst = arith.constant dense<0.000000e+00> : vector<256x30xf32>
    %2 = tpu.matmul %0, %1, %cst {dimension_numbers = #tpu.dot_dimension_numbers<[1], [0], [0], [1], [0, 0, 1, 1], [], []>} : vector<256x540xbf16>, vector<540x30xbf16>, vector<256x30xf32> -> vector<256x30xf32>
    %c0_3 = arith.constant 0 : index
    %c0_4 = arith.constant 0 : index
    %3 = vector.load %arg3[%c0_3, %c0_4] : memref<1x30xf32, #tpu.memory_space<vmem>>, vector<1x30xf32>
    %4 = vector.broadcast %3 : vector<1x30xf32> to vector<256x30xf32>
    %5 = arith.addf %2, %4 : vector<256x30xf32>
    %c0_5 = arith.constant 0 : index
    %c0_6 = arith.constant 0 : index
    %6 = vector.load %arg4[%c0_5, %c0_6] : memref<256x30xbf16, #tpu.memory_space<vmem>>, vector<256x30xbf16>
    %7 = arith.extf %6 : vector<256x30xbf16> to vector<256x30xf32>
    %8 = arith.addf %5, %7 : vector<256x30xf32>
    %9 = arith.truncf %8 : vector<256x30xf32> to vector<256x30xbf16>
    %c0_7 = arith.constant 0 : index
    %c0_8 = arith.constant 0 : index
    %10 = vector.load %arg5[%c0_7, %c0_8] : memref<256x30xbf16, #tpu.memory_space<vmem>>, vector<256x30xbf16>
    tpu.vector_store %arg5[%c0_7, %c0_8], %9 {strides = array<i32>} : memref<256x30xbf16, #tpu.memory_space<vmem>>, vector<256x30xbf16>,
    return
  }
  func.func @transform_0(%arg0: i32) -> (i32, i32) {
    %c0_i32 = arith.constant 0 : i32
    %c0_i32_0 = arith.constant 0 : i32
    return %arg0, %c0_i32 : i32, i32
  }
  func.func @transform_1(%arg0: i32) -> (i32, i32) {
    %c0_i32 = arith.constant 0 : i32
    %c0_i32_0 = arith.constant 0 : i32
    %c0_i32_1 = arith.constant 0 : i32
    return %c0_i32, %c0_i32_0 : i32, i32
  }
  func.func @transform_2(%arg0: i32) -> (i32, i32) {
    %c0_i32 = arith.constant 0 : i32
    %c0_i32_0 = arith.constant 0 : i32
    %c0_i32_1 = arith.constant 0 : i32
    return %c0_i32, %c0_i32_0 : i32, i32
  }
  func.func @transform_3(%arg0: i32) -> (i32, i32) {
    %c0_i32 = arith.constant 0 : i32
    %c0_i32_0 = arith.constant 0 : i32
    return %arg0, %c0_i32 : i32, i32
  }
  func.func @transform_4(%arg0: i32) -> (i32, i32) {
    %c0_i32 = arith.constant 0 : i32
    %c0_i32_0 = arith.constant 0 : i32
    return %arg0, %c0_i32 : i32, i32
  }
}

module attributes {stable_mosaic.version = 11 : i64} {
  func.func @kern(%arg0: i32, %arg1: memref<256x30xbf16, #tpu.memory_space<vmem>>, %arg2: memref<30x60xbf16, #tpu.memory_space<vmem>>, %arg3: memref<1x60xf32, #tpu.memory_space<vmem>>, %arg4: memref<256x60xbf16, #tpu.memory_space<vmem>>) attributes {dimension_semantics = [#tpu.dimension_semantics<parallel>], iteration_bounds = array<i64: 2>, scalar_prefetch = 0 : i64, scratch_operands = 0 : i64, tpu.core_type = #tpu.core_type<tc>, window_params = [{transform_indices = @transform_0, window_bounds = array<i64: 256, 30>}, {pipeline_mode = #tpu.pipeline_mode<synchronous>, transform_indices = @transform_1, window_bounds = array<i64: 30, 60>}, {pipeline_mode = #tpu.pipeline_mode<synchronous>, transform_indices = @transform_2, window_bounds = array<i64: 1, 60>}, {transform_indices = @transform_3, window_bounds = array<i64: 256, 60>}]} {
    %c0 = arith.constant 0 : index
    %c0_0 = arith.constant 0 : index
    %0 = vector.load %arg1[%c0, %c0_0] : memref<256x30xbf16, #tpu.memory_space<vmem>>, vector<256x30xbf16>
    %c0_1 = arith.constant 0 : index
    %c0_2 = arith.constant 0 : index
    %1 = vector.load %arg2[%c0_1, %c0_2] : memref<30x60xbf16, #tpu.memory_space<vmem>>, vector<30x60xbf16>
    %cst = arith.constant dense<0.000000e+00> : vector<256x60xf32>
    %2 = tpu.matmul %0, %1, %cst {dimension_numbers = #tpu.dot_dimension_numbers<[1], [0], [0], [1], [0, 0, 1, 1], [], []>} : vector<256x30xbf16>, vector<30x60xbf16>, vector<256x60xf32> -> vector<256x60xf32>
    %c0_3 = arith.constant 0 : index
    %c0_4 = arith.constant 0 : index
    %3 = vector.load %arg3[%c0_3, %c0_4] : memref<1x60xf32, #tpu.memory_space<vmem>>, vector<1x60xf32>
    %4 = vector.broadcast %3 : vector<1x60xf32> to vector<256x60xf32>
    %5 = arith.addf %2, %4 : vector<256x60xf32>
    %6 = arith.truncf %5 : vector<256x60xf32> to vector<256x60xbf16>
    %c0_5 = arith.constant 0 : index
    %c0_6 = arith.constant 0 : index
    %7 = vector.load %arg4[%c0_5, %c0_6] : memref<256x60xbf16, #tpu.memory_space<vmem>>, vector<256x60xbf16>
    tpu.vector_store %arg4[%c0_5, %c0_6], %6 {strides = array<i32>} : memref<256x60xbf16, #tpu.memory_space<vmem>>, vector<256x60xbf16>,
    return
  }
  func.func @transform_0(%arg0: i32) -> (i32, i32) {
    %c0_i32 = arith.constant 0 : i32
    %c0_i32_0 = arith.constant 0 : i32
    return %arg0, %c0_i32 : i32, i32
  }
  func.func @transform_1(%arg0: i32) -> (i32, i32) {
    %c0_i32 = arith.constant 0 : i32
    %c0_i32_0 = arith.constant 0 : i32
    %c0_i32_1 = arith.constant 0 : i32
    return %c0_i32, %c0_i32_0 : i32, i32
  }
  func.func @transform_2(%arg0: i32) -> (i32, i32) {
    %c0_i32 = arith.constant 0 : i32
    %c0_i32_0 = arith.constant 0 : i32
    %c0_i32_1 = arith.constant 0 : i32
    return %c0_i32, %c0_i32_0 : i32, i32
  }
  func.func @transform_3(%arg0: i32) -> (i32, i32) {
    %c0_i32 = arith.constant 0 : i32
    %c0_i32_0 = arith.constant 0 : i32
    return %arg0, %c0_i32 : i32, i32
  }
}

module attributes {stable_mosaic.version = 11 : i64} {
  func.func @_win_attn_kernel(%arg0: i32, %arg1: memref<1x256x10xbf16, #tpu.memory_space<vmem>>, %arg2: memref<1x256x10xbf16, #tpu.memory_space<vmem>>, %arg3: memref<1x256x10xbf16, #tpu.memory_space<vmem>>) attributes {dimension_semantics = [#tpu.dimension_semantics<parallel>], iteration_bounds = array<i64: 2>, scalar_prefetch = 0 : i64, scratch_operands = 0 : i64, tpu.core_type = #tpu.core_type<tc>, window_params = [{transform_indices = @transform_0, window_bounds = array<i64: 1, 256, 10>}, {transform_indices = @transform_1, window_bounds = array<i64: 1, 256, 10>}, {transform_indices = @transform_2, window_bounds = array<i64: 1, 256, 10>}]} {
    %c0 = arith.constant 0 : index
    %c0_0 = arith.constant 0 : index
    %c0_1 = arith.constant 0 : index
    %0 = vector.load %arg1[%c0, %c0_0, %c0_1] : memref<1x256x10xbf16, #tpu.memory_space<vmem>>, vector<1x256x10xbf16>
    %c0_2 = arith.constant 0 : index
    %c0_3 = arith.constant 0 : index
    %c0_4 = arith.constant 0 : index
    %1 = vector.load %arg2[%c0_2, %c0_3, %c0_4] : memref<1x256x10xbf16, #tpu.memory_space<vmem>>, vector<1x256x10xbf16>
    "tpu.trace_start"() <{level = 10 : i32, message = "wtc,wsc->wts"}> : () -> ()
    %cst = arith.constant dense<0.000000e+00> : vector<1x256x256xf32>
    %2 = tpu.matmul %0, %0, %cst {dimension_numbers = #tpu.dot_dimension_numbers<[2], [2], [1], [1], [0, 0, 0, 1, 1, 1], [0], [0]>} : vector<1x256x10xbf16>, vector<1x256x10xbf16>, vector<1x256x256xf32> -> vector<1x256x256xf32>
    "tpu.trace_stop"() : () -> ()
    %cst_5 = arith.constant dense<0xFF800000> : vector<1x256xf32>
    %3 = vector.multi_reduction <maximumf>, %2, %cst_5 [2] : vector<1x256x256xf32> to vector<1x256xf32>
    %4 = vector.shape_cast %3 : vector<1x256xf32> to vector<1x256x1xf32>
    %5 = vector.broadcast %4 : vector<1x256x1xf32> to vector<1x256x256xf32>
    %6 = arith.subf %2, %5 : vector<1x256x256xf32>
    %7 = math.exp %6 : vector<1x256x256xf32>
    %cst_6 = arith.constant dense<0.000000e+00> : vector<1x256xf32>
    %8 = vector.multi_reduction <add>, %7, %cst_6 [2] : vector<1x256x256xf32> to vector<1x256xf32>
    %9 = vector.shape_cast %8 : vector<1x256xf32> to vector<1x256x1xf32>
    %10 = tpu.reciprocal %9 {approx = true} : vector<1x256x1xf32> -> vector<1x256x1xf32>
    %11 = vector.broadcast %10 : vector<1x256x1xf32> to vector<1x256x256xf32>
    %12 = arith.mulf %7, %11 : vector<1x256x256xf32>
    %13 = arith.truncf %12 : vector<1x256x256xf32> to vector<1x256x256xbf16>
    "tpu.trace_start"() <{level = 10 : i32, message = "wts,wsc->wtc"}> : () -> ()
    %cst_7 = arith.constant dense<0.000000e+00> : vector<1x256x10xf32>
    %14 = tpu.matmul %13, %1, %cst_7 {dimension_numbers = #tpu.dot_dimension_numbers<[2], [1], [1], [2], [0, 0, 0, 1, 1, 2], [0], [0]>} : vector<1x256x256xbf16>, vector<1x256x10xbf16>, vector<1x256x10xf32> -> vector<1x256x10xf32>
    "tpu.trace_stop"() : () -> ()
    %15 = arith.truncf %14 : vector<1x256x10xf32> to vector<1x256x10xbf16>
    %c0_8 = arith.constant 0 : index
    %c0_9 = arith.constant 0 : index
    %c0_10 = arith.constant 0 : index
    %16 = vector.load %arg3[%c0_8, %c0_9, %c0_10] : memref<1x256x10xbf16, #tpu.memory_space<vmem>>, vector<1x256x10xbf16>
    tpu.vector_store %arg3[%c0_8, %c0_9, %c0_10], %15 {strides = array<i32>} : memref<1x256x10xbf16, #tpu.memory_space<vmem>>, vector<1x256x10xbf16>,
    return
  }
  func.func @transform_0(%arg0: i32) -> (i32, i32, i32) {
    %c0_i32 = arith.constant 0 : i32
    %c0_i32_0 = arith.constant 0 : i32
    %c0_i32_1 = arith.constant 0 : i32
    return %arg0, %c0_i32, %c0_i32_0 : i32, i32, i32
  }
  func.func @transform_1(%arg0: i32) -> (i32, i32, i32) {
    %c0_i32 = arith.constant 0 : i32
    %c0_i32_0 = arith.constant 0 : i32
    %c0_i32_1 = arith.constant 0 : i32
    return %arg0, %c0_i32, %c0_i32_0 : i32, i32, i32
  }
  func.func @transform_2(%arg0: i32) -> (i32, i32, i32) {
    %c0_i32 = arith.constant 0 : i32
    %c0_i32_0 = arith.constant 0 : i32
    %c0_i32_1 = arith.constant 0 : i32
    return %arg0, %c0_i32, %c0_i32_0 : i32, i32, i32
  }
}

module attributes {stable_mosaic.version = 11 : i64} {
  func.func @_win_attn_kernel(%arg0: i32, %arg1: memref<16x16x10xbf16, #tpu.memory_space<vmem>>, %arg2: memref<16x16x10xbf16, #tpu.memory_space<vmem>>, %arg3: memref<16x16x10xbf16, #tpu.memory_space<vmem>>) attributes {dimension_semantics = [#tpu.dimension_semantics<parallel>], iteration_bounds = array<i64: 2>, scalar_prefetch = 0 : i64, scratch_operands = 0 : i64, tpu.core_type = #tpu.core_type<tc>, window_params = [{transform_indices = @transform_0, window_bounds = array<i64: 16, 16, 10>}, {transform_indices = @transform_1, window_bounds = array<i64: 16, 16, 10>}, {transform_indices = @transform_2, window_bounds = array<i64: 16, 16, 10>}]} {
    %c0 = arith.constant 0 : index
    %c0_0 = arith.constant 0 : index
    %c0_1 = arith.constant 0 : index
    %0 = vector.load %arg1[%c0, %c0_0, %c0_1] : memref<16x16x10xbf16, #tpu.memory_space<vmem>>, vector<16x16x10xbf16>
    %c0_2 = arith.constant 0 : index
    %c0_3 = arith.constant 0 : index
    %c0_4 = arith.constant 0 : index
    %1 = vector.load %arg2[%c0_2, %c0_3, %c0_4] : memref<16x16x10xbf16, #tpu.memory_space<vmem>>, vector<16x16x10xbf16>
    "tpu.trace_start"() <{level = 10 : i32, message = "wtc,wsc->wts"}> : () -> ()
    %cst = arith.constant dense<0.000000e+00> : vector<16x16x16xf32>
    %2 = tpu.matmul %0, %0, %cst {dimension_numbers = #tpu.dot_dimension_numbers<[2], [2], [1], [1], [0, 0, 0, 1, 1, 1], [0], [0]>} : vector<16x16x10xbf16>, vector<16x16x10xbf16>, vector<16x16x16xf32> -> vector<16x16x16xf32>
    "tpu.trace_stop"() : () -> ()
    %cst_5 = arith.constant dense<0xFF800000> : vector<16x16xf32>
    %3 = vector.multi_reduction <maximumf>, %2, %cst_5 [2] : vector<16x16x16xf32> to vector<16x16xf32>
    %4 = vector.shape_cast %3 : vector<16x16xf32> to vector<16x16x1xf32>
    %5 = vector.broadcast %4 : vector<16x16x1xf32> to vector<16x16x16xf32>
    %6 = arith.subf %2, %5 : vector<16x16x16xf32>
    %7 = math.exp %6 : vector<16x16x16xf32>
    %cst_6 = arith.constant dense<0.000000e+00> : vector<16x16xf32>
    %8 = vector.multi_reduction <add>, %7, %cst_6 [2] : vector<16x16x16xf32> to vector<16x16xf32>
    %9 = vector.shape_cast %8 : vector<16x16xf32> to vector<16x16x1xf32>
    %10 = tpu.reciprocal %9 {approx = true} : vector<16x16x1xf32> -> vector<16x16x1xf32>
    %11 = vector.broadcast %10 : vector<16x16x1xf32> to vector<16x16x16xf32>
    %12 = arith.mulf %7, %11 : vector<16x16x16xf32>
    %13 = arith.truncf %12 : vector<16x16x16xf32> to vector<16x16x16xbf16>
    "tpu.trace_start"() <{level = 10 : i32, message = "wts,wsc->wtc"}> : () -> ()
    %cst_7 = arith.constant dense<0.000000e+00> : vector<16x16x10xf32>
    %14 = tpu.matmul %13, %1, %cst_7 {dimension_numbers = #tpu.dot_dimension_numbers<[2], [1], [1], [2], [0, 0, 0, 1, 1, 2], [0], [0]>} : vector<16x16x16xbf16>, vector<16x16x10xbf16>, vector<16x16x10xf32> -> vector<16x16x10xf32>
    "tpu.trace_stop"() : () -> ()
    %15 = arith.truncf %14 : vector<16x16x10xf32> to vector<16x16x10xbf16>
    %c0_8 = arith.constant 0 : index
    %c0_9 = arith.constant 0 : index
    %c0_10 = arith.constant 0 : index
    %16 = vector.load %arg3[%c0_8, %c0_9, %c0_10] : memref<16x16x10xbf16, #tpu.memory_space<vmem>>, vector<16x16x10xbf16>
    tpu.vector_store %arg3[%c0_8, %c0_9, %c0_10], %15 {strides = array<i32>} : memref<16x16x10xbf16, #tpu.memory_space<vmem>>, vector<16x16x10xbf16>,
    return
  }
  func.func @transform_0(%arg0: i32) -> (i32, i32, i32) {
    %c0_i32 = arith.constant 0 : i32
    %c0_i32_0 = arith.constant 0 : i32
    %c0_i32_1 = arith.constant 0 : i32
    return %arg0, %c0_i32, %c0_i32_0 : i32, i32, i32
  }
  func.func @transform_1(%arg0: i32) -> (i32, i32, i32) {
    %c0_i32 = arith.constant 0 : i32
    %c0_i32_0 = arith.constant 0 : i32
    %c0_i32_1 = arith.constant 0 : i32
    return %arg0, %c0_i32, %c0_i32_0 : i32, i32, i32
  }
  func.func @transform_2(%arg0: i32) -> (i32, i32, i32) {
    %c0_i32 = arith.constant 0 : i32
    %c0_i32_0 = arith.constant 0 : i32
    %c0_i32_1 = arith.constant 0 : i32
    return %arg0, %c0_i32, %c0_i32_0 : i32, i32, i32
  }
}

module attributes {stable_mosaic.version = 11 : i64} {
  func.func @_win_attn_kernel(%arg0: i32, %arg1: memref<4x64x10xbf16, #tpu.memory_space<vmem>>, %arg2: memref<4x64x10xbf16, #tpu.memory_space<vmem>>, %arg3: memref<4x64x10xbf16, #tpu.memory_space<vmem>>) attributes {dimension_semantics = [#tpu.dimension_semantics<parallel>], iteration_bounds = array<i64: 2>, scalar_prefetch = 0 : i64, scratch_operands = 0 : i64, tpu.core_type = #tpu.core_type<tc>, window_params = [{transform_indices = @transform_0, window_bounds = array<i64: 4, 64, 10>}, {transform_indices = @transform_1, window_bounds = array<i64: 4, 64, 10>}, {transform_indices = @transform_2, window_bounds = array<i64: 4, 64, 10>}]} {
    %c0 = arith.constant 0 : index
    %c0_0 = arith.constant 0 : index
    %c0_1 = arith.constant 0 : index
    %0 = vector.load %arg1[%c0, %c0_0, %c0_1] : memref<4x64x10xbf16, #tpu.memory_space<vmem>>, vector<4x64x10xbf16>
    %c0_2 = arith.constant 0 : index
    %c0_3 = arith.constant 0 : index
    %c0_4 = arith.constant 0 : index
    %1 = vector.load %arg2[%c0_2, %c0_3, %c0_4] : memref<4x64x10xbf16, #tpu.memory_space<vmem>>, vector<4x64x10xbf16>
    "tpu.trace_start"() <{level = 10 : i32, message = "wtc,wsc->wts"}> : () -> ()
    %cst = arith.constant dense<0.000000e+00> : vector<4x64x64xf32>
    %2 = tpu.matmul %0, %0, %cst {dimension_numbers = #tpu.dot_dimension_numbers<[2], [2], [1], [1], [0, 0, 0, 1, 1, 1], [0], [0]>} : vector<4x64x10xbf16>, vector<4x64x10xbf16>, vector<4x64x64xf32> -> vector<4x64x64xf32>
    "tpu.trace_stop"() : () -> ()
    %cst_5 = arith.constant dense<0xFF800000> : vector<4x64xf32>
    %3 = vector.multi_reduction <maximumf>, %2, %cst_5 [2] : vector<4x64x64xf32> to vector<4x64xf32>
    %4 = vector.shape_cast %3 : vector<4x64xf32> to vector<4x64x1xf32>
    %5 = vector.broadcast %4 : vector<4x64x1xf32> to vector<4x64x64xf32>
    %6 = arith.subf %2, %5 : vector<4x64x64xf32>
    %7 = math.exp %6 : vector<4x64x64xf32>
    %cst_6 = arith.constant dense<0.000000e+00> : vector<4x64xf32>
    %8 = vector.multi_reduction <add>, %7, %cst_6 [2] : vector<4x64x64xf32> to vector<4x64xf32>
    %9 = vector.shape_cast %8 : vector<4x64xf32> to vector<4x64x1xf32>
    %10 = tpu.reciprocal %9 {approx = true} : vector<4x64x1xf32> -> vector<4x64x1xf32>
    %11 = vector.broadcast %10 : vector<4x64x1xf32> to vector<4x64x64xf32>
    %12 = arith.mulf %7, %11 : vector<4x64x64xf32>
    %13 = arith.truncf %12 : vector<4x64x64xf32> to vector<4x64x64xbf16>
    "tpu.trace_start"() <{level = 10 : i32, message = "wts,wsc->wtc"}> : () -> ()
    %cst_7 = arith.constant dense<0.000000e+00> : vector<4x64x10xf32>
    %14 = tpu.matmul %13, %1, %cst_7 {dimension_numbers = #tpu.dot_dimension_numbers<[2], [1], [1], [2], [0, 0, 0, 1, 1, 2], [0], [0]>} : vector<4x64x64xbf16>, vector<4x64x10xbf16>, vector<4x64x10xf32> -> vector<4x64x10xf32>
    "tpu.trace_stop"() : () -> ()
    %15 = arith.truncf %14 : vector<4x64x10xf32> to vector<4x64x10xbf16>
    %c0_8 = arith.constant 0 : index
    %c0_9 = arith.constant 0 : index
    %c0_10 = arith.constant 0 : index
    %16 = vector.load %arg3[%c0_8, %c0_9, %c0_10] : memref<4x64x10xbf16, #tpu.memory_space<vmem>>, vector<4x64x10xbf16>
    tpu.vector_store %arg3[%c0_8, %c0_9, %c0_10], %15 {strides = array<i32>} : memref<4x64x10xbf16, #tpu.memory_space<vmem>>, vector<4x64x10xbf16>,
    return
  }
  func.func @transform_0(%arg0: i32) -> (i32, i32, i32) {
    %c0_i32 = arith.constant 0 : i32
    %c0_i32_0 = arith.constant 0 : i32
    %c0_i32_1 = arith.constant 0 : i32
    return %arg0, %c0_i32, %c0_i32_0 : i32, i32, i32
  }
  func.func @transform_1(%arg0: i32) -> (i32, i32, i32) {
    %c0_i32 = arith.constant 0 : i32
    %c0_i32_0 = arith.constant 0 : i32
    %c0_i32_1 = arith.constant 0 : i32
    return %arg0, %c0_i32, %c0_i32_0 : i32, i32, i32
  }
  func.func @transform_2(%arg0: i32) -> (i32, i32, i32) {
    %c0_i32 = arith.constant 0 : i32
    %c0_i32_0 = arith.constant 0 : i32
    %c0_i32_1 = arith.constant 0 : i32
    return %arg0, %c0_i32, %c0_i32_0 : i32, i32, i32
  }
}

module attributes {stable_mosaic.version = 11 : i64} {
  func.func @kern(%arg0: i32, %arg1: memref<256x30xbf16, #tpu.memory_space<vmem>>, %arg2: memref<30x30xbf16, #tpu.memory_space<vmem>>, %arg3: memref<1x30xf32, #tpu.memory_space<vmem>>, %arg4: memref<256x30xbf16, #tpu.memory_space<vmem>>, %arg5: memref<256x30xbf16, #tpu.memory_space<vmem>>) attributes {dimension_semantics = [#tpu.dimension_semantics<parallel>], iteration_bounds = array<i64: 2>, scalar_prefetch = 0 : i64, scratch_operands = 0 : i64, tpu.core_type = #tpu.core_type<tc>, window_params = [{transform_indices = @transform_0, window_bounds = array<i64: 256, 30>}, {pipeline_mode = #tpu.pipeline_mode<synchronous>, transform_indices = @transform_1, window_bounds = array<i64: 30, 30>}, {pipeline_mode = #tpu.pipeline_mode<synchronous>, transform_indices = @transform_2, window_bounds = array<i64: 1, 30>}, {transform_indices = @transform_3, window_bounds = array<i64: 256, 30>}, {transform_indices = @transform_4, window_bounds = array<i64: 256, 30>}]} {
    %c0 = arith.constant 0 : index
    %c0_0 = arith.constant 0 : index
    %0 = vector.load %arg1[%c0, %c0_0] : memref<256x30xbf16, #tpu.memory_space<vmem>>, vector<256x30xbf16>
    %c0_1 = arith.constant 0 : index
    %c0_2 = arith.constant 0 : index
    %1 = vector.load %arg2[%c0_1, %c0_2] : memref<30x30xbf16, #tpu.memory_space<vmem>>, vector<30x30xbf16>
    %cst = arith.constant dense<0.000000e+00> : vector<256x30xf32>
    %2 = tpu.matmul %0, %1, %cst {dimension_numbers = #tpu.dot_dimension_numbers<[1], [0], [0], [1], [0, 0, 1, 1], [], []>} : vector<256x30xbf16>, vector<30x30xbf16>, vector<256x30xf32> -> vector<256x30xf32>
    %c0_3 = arith.constant 0 : index
    %c0_4 = arith.constant 0 : index
    %3 = vector.load %arg3[%c0_3, %c0_4] : memref<1x30xf32, #tpu.memory_space<vmem>>, vector<1x30xf32>
    %4 = vector.broadcast %3 : vector<1x30xf32> to vector<256x30xf32>
    %5 = arith.addf %2, %4 : vector<256x30xf32>
    %c0_5 = arith.constant 0 : index
    %c0_6 = arith.constant 0 : index
    %6 = vector.load %arg4[%c0_5, %c0_6] : memref<256x30xbf16, #tpu.memory_space<vmem>>, vector<256x30xbf16>
    %7 = arith.extf %6 : vector<256x30xbf16> to vector<256x30xf32>
    %8 = arith.addf %5, %7 : vector<256x30xf32>
    %9 = arith.truncf %8 : vector<256x30xf32> to vector<256x30xbf16>
    %c0_7 = arith.constant 0 : index
    %c0_8 = arith.constant 0 : index
    %10 = vector.load %arg5[%c0_7, %c0_8] : memref<256x30xbf16, #tpu.memory_space<vmem>>, vector<256x30xbf16>
    tpu.vector_store %arg5[%c0_7, %c0_8], %9 {strides = array<i32>} : memref<256x30xbf16, #tpu.memory_space<vmem>>, vector<256x30xbf16>,
    return
  }
  func.func @transform_0(%arg0: i32) -> (i32, i32) {
    %c0_i32 = arith.constant 0 : i32
    %c0_i32_0 = arith.constant 0 : i32
    return %arg0, %c0_i32 : i32, i32
  }
  func.func @transform_1(%arg0: i32) -> (i32, i32) {
    %c0_i32 = arith.constant 0 : i32
    %c0_i32_0 = arith.constant 0 : i32
    %c0_i32_1 = arith.constant 0 : i32
    return %c0_i32, %c0_i32_0 : i32, i32
  }
  func.func @transform_2(%arg0: i32) -> (i32, i32) {
    %c0_i32 = arith.constant 0 : i32
    %c0_i32_0 = arith.constant 0 : i32
    %c0_i32_1 = arith.constant 0 : i32
    return %c0_i32, %c0_i32_0 : i32, i32
  }
  func.func @transform_3(%arg0: i32) -> (i32, i32) {
    %c0_i32 = arith.constant 0 : i32
    %c0_i32_0 = arith.constant 0 : i32
    return %arg0, %c0_i32 : i32, i32
  }
  func.func @transform_4(%arg0: i32) -> (i32, i32) {
    %c0_i32 = arith.constant 0 : i32
    %c0_i32_0 = arith.constant 0 : i32
    return %arg0, %c0_i32 : i32, i32
  }
}

module attributes {stable_mosaic.version = 11 : i64} {
  func.func @kern(%arg0: i32, %arg1: memref<256x270xbf16, #tpu.memory_space<vmem>>, %arg2: memref<270x12xbf16, #tpu.memory_space<vmem>>, %arg3: memref<1x12xf32, #tpu.memory_space<vmem>>, %arg4: memref<256x12xf32, #tpu.memory_space<vmem>>) attributes {dimension_semantics = [#tpu.dimension_semantics<parallel>], iteration_bounds = array<i64: 2>, scalar_prefetch = 0 : i64, scratch_operands = 0 : i64, tpu.core_type = #tpu.core_type<tc>, window_params = [{transform_indices = @transform_0, window_bounds = array<i64: 256, 270>}, {pipeline_mode = #tpu.pipeline_mode<synchronous>, transform_indices = @transform_1, window_bounds = array<i64: 270, 12>}, {pipeline_mode = #tpu.pipeline_mode<synchronous>, transform_indices = @transform_2, window_bounds = array<i64: 1, 12>}, {transform_indices = @transform_3, window_bounds = array<i64: 256, 12>}]} {
    %c0 = arith.constant 0 : index
    %c0_0 = arith.constant 0 : index
    %0 = vector.load %arg1[%c0, %c0_0] : memref<256x270xbf16, #tpu.memory_space<vmem>>, vector<256x270xbf16>
    %c0_1 = arith.constant 0 : index
    %c0_2 = arith.constant 0 : index
    %1 = vector.load %arg2[%c0_1, %c0_2] : memref<270x12xbf16, #tpu.memory_space<vmem>>, vector<270x12xbf16>
    %cst = arith.constant dense<0.000000e+00> : vector<256x12xf32>
    %2 = tpu.matmul %0, %1, %cst {dimension_numbers = #tpu.dot_dimension_numbers<[1], [0], [0], [1], [0, 0, 1, 1], [], []>} : vector<256x270xbf16>, vector<270x12xbf16>, vector<256x12xf32> -> vector<256x12xf32>
    %c0_3 = arith.constant 0 : index
    %c0_4 = arith.constant 0 : index
    %3 = vector.load %arg3[%c0_3, %c0_4] : memref<1x12xf32, #tpu.memory_space<vmem>>, vector<1x12xf32>
    %4 = vector.broadcast %3 : vector<1x12xf32> to vector<256x12xf32>
    %5 = arith.addf %2, %4 : vector<256x12xf32>
    %c0_5 = arith.constant 0 : index
    %c0_6 = arith.constant 0 : index
    %6 = vector.load %arg4[%c0_5, %c0_6] : memref<256x12xf32, #tpu.memory_space<vmem>>, vector<256x12xf32>
    tpu.vector_store %arg4[%c0_5, %c0_6], %5 {strides = array<i32>} : memref<256x12xf32, #tpu.memory_space<vmem>>, vector<256x12xf32>,
    return
  }
  func.func @transform_0(%arg0: i32) -> (i32, i32) {
    %c0_i32 = arith.constant 0 : i32
    %c0_i32_0 = arith.constant 0 : i32
    return %arg0, %c0_i32 : i32, i32
  }
  func.func @transform_1(%arg0: i32) -> (i32, i32) {
    %c0_i32 = arith.constant 0 : i32
    %c0_i32_0 = arith.constant 0 : i32
    %c0_i32_1 = arith.constant 0 : i32
    return %c0_i32, %c0_i32_0 : i32, i32
  }
  func.func @transform_2(%arg0: i32) -> (i32, i32) {
    %c0_i32 = arith.constant 0 : i32
    %c0_i32_0 = arith.constant 0 : i32
    %c0_i32_1 = arith.constant 0 : i32
    return %c0_i32, %c0_i32_0 : i32, i32
  }
  func.func @transform_3(%arg0: i32) -> (i32, i32) {
    %c0_i32 = arith.constant 0 : i32
    %c0_i32_0 = arith.constant 0 : i32
    return %arg0, %c0_i32 : i32, i32
  }
}

</mosaic_0001>

<llo_original>
// kernel: _lambda_.16
$region0: #{_lambda_.16}
  #allocation0 [shape = 'u32[]', space=smem, size = 0x4, offset = 0x4, fixed_abs, tag = 'smem constant byte address 0x4 - core index']
  #allocation1 [shape = 'u32[144,128]{1,0:T(1,128)}', space=vmem, size = 0x12000, scoped, tag = 'internal scratch']
  %s0 = inlined_call_operand.vmem [shape: bf16[512,27], index: 0, kind: input, shape index: {}]
  %s1 = inlined_call_operand.hbm [shape: bf16[27,30], index: 1, kind: input, shape index: {}]
  %s2 = inlined_call_operand.hbm [shape: f32[1,30], index: 2, kind: input, shape index: {}]
  %s3 = inlined_call_operand.vmem [shape: bf16[512,30], index: 3, kind: output, shape index: {}]
  %s4 = sld [smem:[#allocation0]]
  $region53: #{_lambda_.16} parent=0
    _
  %s6 = ssub.s32 1, %s4
  %s7 = scalar_select 0, %s6, %s4
  $region1: #{_lambda_.16} parent=0
    #allocation2 [shape = 'u8[8192]{0}', space=vmem, size = 0x2000, scoped, tag = 'input window, operand 1, single buffered']
    #allocation3 [shape = 's32[2]{0}', space=sflag, size = 0x8, scoped, tag = 'scoped memory for _lambda_.16']
    #allocation4 [shape = 'u8[512]{0}', space=vmem, size = 0x400, scoped, tag = 'input window, operand 2, single buffered']
    #allocation5 [shape = 's32[1]{0}', space=sflag, size = 0x4, scoped, tag = 'scoped memory for _lambda_.16']
    %8 = vsyncpa [#allocation3], 0
    %9 = vsyncpa [#allocation5], 0
    loop: start=0, step=1, limit=4
    $region2: #{_lambda_.16} parent=1 // loop_pre_header
      _
    $region3: #{_lambda_.16} parent=1 // loop_header
      %s11 = sphi 0, %s15
      %p12 = scmp.ge.s32.totalorder %s11, 4
      %s21 = sphi 0, %s23
      %s24 = sphi 0, %s21
      %s25 = sphi 0, %s24
      %s41 = sphi 0, %s25
      %s45 = sphi 0, %s45
      %s47 = sphi 0, %s45
      %s48 = sphi 0, %s47
      %s62 = sphi 0, %s48
      %s66 = sphi 0, %s66
      %s68 = sphi 0, %s66
      %s69 = sphi 0, %s68
      %s83 = sphi 0, %s69
      %s89 = sphi 0, %s91
      %s92 = sphi 0, %s89
      %s93 = sphi 0, %s92
      %s109 = sphi 0, %s93
    $region4: #{_lambda_.16} parent=1 // loop_header_branch
      %14 = sbr.rel (%p12) target = $region8
    $region5: #{_lambda_.16} parent=1 // loop_body
      %s16 = ssub.s32 %s11, 1
      %s17 = ssub.s32 %s11, 2
      %s18 = sadd.s32 %s11, 1
      %s19 = ssub.s32 %s11, %s18
      %p20 = scmp.eq.s32.totalorder %s19, 0
      %s22 = sadd.s32 %s21, 1
      %s23 = scalar_select %p20, %s21, %s22
      %p26 = pneg %p20
      %p27 = scmp.eq.s32.totalorder %s11, 1
      %p28 = por %p26, %p27
      %p29 = scmp.ne.s32.totalorder %s21, %s24
      %p30 = scmp.eq.s32.totalorder %s11, 0
      %p31 = por %p29, %p30
      %p32 = scmp.ne.s32.totalorder %s21, %s24
      %p33 = scmp.eq.s32.totalorder %s16, 1
      %p34 = por %p32, %p33
      %p35 = scmp.ne.s32.totalorder %s24, %s25
      %p36 = scmp.eq.s32.totalorder %s16, 0
      %p37 = por %p35, %p36
      %p38 = scmp.ne.s32.totalorder %s24, %s25
      %p39 = scmp.eq.s32.totalorder %s17, 1
      %p40 = por %p38, %p39
      %p42 = scmp.ne.s32.totalorder %s25, %s41
      %p43 = scmp.eq.s32.totalorder %s17, 0
      %p44 = por %p42, %p43
      %s46 = sadd.s32 %s45, 1
      %p49 = scmp.eq.s32.totalorder %s11, 1
      %p50 = scmp.ne.s32.totalorder %s45, %s47
      %p51 = scmp.eq.s32.totalorder %s11, 0
      %p52 = por %p50, %p51
      %p53 = scmp.ne.s32.totalorder %s45, %s47
      %p54 = scmp.eq.s32.totalorder %s16, 1
      %p55 = por %p53, %p54
      %p56 = scmp.ne.s32.totalorder %s47, %s48
      %p57 = scmp.eq.s32.totalorder %s16, 0
      %p58 = por %p56, %p57
      %p59 = scmp.ne.s32.totalorder %s47, %s48
      %p60 = scmp.eq.s32.totalorder %s17, 1
      %p61 = por %p59, %p60
      %p63 = scmp.ne.s32.totalorder %s48, %s62
      %p64 = scmp.eq.s32.totalorder %s17, 0
      %p65 = por %p63, %p64
      %s67 = sadd.s32 %s66, 1
      %p70 = scmp.eq.s32.totalorder %s11, 1
      %p71 = scmp.ne.s32.totalorder %s66, %s68
      %p72 = scmp.eq.s32.totalorder %s11, 0
      %p73 = por %p71, %p72
      %p74 = scmp.ne.s32.totalorder %s66, %s68
      %p75 = scmp.eq.s32.totalorder %s16, 1
      %p76 = por %p74, %p75
      %p77 = scmp.ne.s32.totalorder %s68, %s69
      %p78 = scmp.eq.s32.totalorder %s16, 0
      %p79 = por %p77, %p78
      %p80 = scmp.ne.s32.totalorder %s68, %s69
      %p81 = scmp.eq.s32.totalorder %s17, 1
      %p82 = por %p80, %p81
      %p84 = scmp.ne.s32.totalorder %s69, %s83
      %p85 = scmp.eq.s32.totalorder %s17, 0
      %p86 = por %p84, %p85
      %s87 = ssub.s32 %s11, %s18
      %p88 = scmp.eq.s32.totalorder %s87, 0
      %s90 = sadd.s32 %s89, 1
      %s91 = scalar_select %p88, %s89, %s90
      %p94 = pneg %p88
      %p95 = scmp.eq.s32.totalorder %s11, 1
      %p96 = por %p94, %p95
      %p97 = scmp.ne.s32.totalorder %s89, %s92
      %p98 = scmp.eq.s32.totalorder %s11, 0
      %p99 = por %p97, %p98
      %p100 = scmp.ne.s32.totalorder %s89, %s92
      %p101 = scmp.eq.s32.totalorder %s16, 1
      %p102 = por %p100, %p101
      %p103 = scmp.ne.s32.totalorder %s92, %s93
      %p104 = scmp.eq.s32.totalorder %s16, 0
      %p105 = por %p103, %p104
      %p106 = scmp.ne.s32.totalorder %s92, %s93
      %p107 = scmp.eq.s32.totalorder %s17, 1
      %p108 = por %p106, %p107
      %p110 = scmp.ne.s32.totalorder %s93, %s109
      %p111 = scmp.eq.s32.totalorder %s17, 0
      %p112 = por %p110, %p111
      %p113 = scmp.le.s32.totalorder 1, %s11
      %p114 = scmp.lt.s32.totalorder %s11, 3
      %p115 = pnand %p113, %p114
      %p116 = pneg %p115
      // Predicated region
      $region9: #{_lambda_.16} parent=5 // pred_check
        _
      $region10: #{_lambda_.16} parent=5 // pred_check_branch
        %118 = sbr.rel (%p115) target = $region12
      $region11: #{_lambda_.16} parent=5 // pred_region
        %s119 = ssub.s32 %s11, 1
        // Predicated region
        $region13: #{_lambda_.16} parent=11 // pred_check
          %p120 = pneg %p58
        $region14: #{_lambda_.16} parent=11 // pred_check_branch
          %122 = sbr.rel (%p120) target = $region16
        $region15: #{_lambda_.16} parent=11 // pred_region
          %s124 = ssub.s32 256, 256
          %125 = vsyncadd [#allocation3], %s124
          %s126 = sshll.u32 [#allocation2], 4
          %s127 = int_to_ptr.vmem [resolvable:$true] %s126
          %132 = dma.hbm_to_vmem [thread:$0]  %s1, 256, %s127, [#allocation3], 64, 64, 4
        $region16: #{_lambda_.16} parent=11 // pred_fallthru
          _
        // Predicated region
        $region17: #{_lambda_.16} parent=11 // pred_check
          %p133 = pneg %p79
        $region18: #{_lambda_.16} parent=11 // pred_check_branch
          %135 = sbr.rel (%p133) target = $region20
        $region19: #{_lambda_.16} parent=11 // pred_region
          %s137 = ssub.s32 16, 16
          %138 = vsyncadd [#allocation5], %s137
          %s140 = sshll.u32 [#allocation4], 4
          %s141 = int_to_ptr.vmem [resolvable:$true] %s140
          %143 = dma.hbm_to_vmem [thread:$0]  %s2, 16, %s141, [#allocation5]
        $region20: #{_lambda_.16} parent=11 // pred_fallthru
          _
      $region12: #{_lambda_.16} parent=5 // pred_fallthru
        _
      %p144 = scmp.lt.s32.totalorder %s11, 2
      // Predicated region
      $region21: #{_lambda_.16} parent=5 // pred_check
        %p145 = pneg %p144
      $region22: #{_lambda_.16} parent=5 // pred_check_branch
        %147 = sbr.rel (%p145) target = $region24
      $region23: #{_lambda_.16} parent=5 // pred_region
        // Predicated region
        $region25: #{_lambda_.16} parent=23 // pred_check
          %p148 = pneg %p31
        $region26: #{_lambda_.16} parent=23 // pred_check_branch
          %150 = sbr.rel (%p148) target = $region28
        $region27: #{_lambda_.16} parent=23 // pred_region
          %s151 = smul.u32 32, %s11
          %p152 = scmp.lt.s32.totalorder %s151, 63
          %s153 = scalar_select %p152, %s151, 63
          %s154 = smul.addr %s153, 4
          %s155 = scalar_lea.vmem %s0, %s154
          %s156 = smul.u32 32, %s11
        $region28: #{_lambda_.16} parent=23 // pred_fallthru
          _
      $region24: #{_lambda_.16} parent=5 // pred_fallthru
        _
      %p157 = scmp.le.s32.totalorder 1, %s11
      %p158 = scmp.lt.s32.totalorder %s11, 3
      %p159 = pnand %p157, %p158
      %p160 = pneg %p159
      // Predicated region
      $region29: #{_lambda_.16} parent=5 // pred_check
        _
      $region30: #{_lambda_.16} parent=5 // pred_check_branch
        %162 = sbr.rel (%p159) target = $region32
      $region31: #{_lambda_.16} parent=5 // pred_region
        %s163 = ssub.s32 %s11, 1
        // Predicated region
        $region33: #{_lambda_.16} parent=31 // pred_check
          %p164 = pneg %p58
        $region34: #{_lambda_.16} parent=31 // pred_check_branch
          %166 = sbr.rel (%p164) target = $region36
        $region35: #{_lambda_.16} parent=31 // pred_region
          %167 = dma.done [#allocation3], 256
        $region36: #{_lambda_.16} parent=31 // pred_fallthru
          _
        // Predicated region
        $region37: #{_lambda_.16} parent=31 // pred_check
          %p168 = pneg %p79
        $region38: #{_lambda_.16} parent=31 // pred_check_branch
          %170 = sbr.rel (%p168) target = $region40
        $region39: #{_lambda_.16} parent=31 // pred_region
          %171 = dma.done [#allocation5], 16
        $region40: #{_lambda_.16} parent=31 // pred_fallthru
          _
        %s172 = smul.u32 32, %s16
        %p173 = scmp.lt.s32.totalorder %s172, 63
        %s174 = scalar_select %p173, %s172, 63
        %s175 = smul.addr %s174, 4
        %s176 = scalar_lea.vmem %s0, %s175
        %p177 = pneg %p37
        %p178 = pneg %p34
        %p179 = pneg %p58
        %p180 = pneg %p55
        %p181 = pneg %p79
        %p182 = pneg %p76
        %p183 = pneg %p105
        %p184 = pneg %p102
        %s185 = smul.u32 32, %s16
        %p186 = scmp.lt.s32.totalorder %s185, 63
        %s187 = scalar_select %p186, %s185, 63
        %s188 = smul.addr %s187, 4
        %s189 = scalar_lea.vmem %s3, %s188
        %s190 = smul.u32 32, %s16
        %p191 = scmp.lt.s32.totalorder %s190, 63
        %s192 = scalar_select %p191, %s190, 63
        %s193 = smul.addr %s192, 4
        %s194 = scalar_lea.vmem %s0, %s193
        %s195 = smul.u32 32, %s16
        %s196 = smul.u32 32, %s16
        %p197 = scmp.lt.s32.totalorder %s196, 63
        %s198 = scalar_select %p197, %s196, 63
        %s199 = smul.addr %s198, 4
        %s200 = scalar_lea.vmem %s3, %s199
        %s201 = smul.u32 32, %s16
        %v203 = vld [vmem:[%s194] sm:$0xf]
        %v204 = vld [vmem:[%s194 + $0x4] sm:$0xf]
        %v205 = vld [vmem:[%s194 + $0x8] sm:$0xf]
        %v206 = vld [vmem:[%s194 + $0xc] sm:$0xf]
        %v207 = vld [vmem:[%s194 + $0x10] sm:$0xf]
        %v208 = vld [vmem:[%s194 + $0x14] sm:$0xf]
        %v209 = vld [vmem:[%s194 + $0x18] sm:$0xf]
        %v210 = vld [vmem:[%s194 + $0x1c] sm:$0xf]
        %v211 = vld [vmem:[%s194 + $0x20] sm:$0xf]
        %v212 = vld [vmem:[%s194 + $0x24] sm:$0xf]
        %v213 = vld [vmem:[%s194 + $0x28] sm:$0xf]
        %v214 = vld [vmem:[%s194 + $0x2c] sm:$0xf]
        %v215 = vld [vmem:[%s194 + $0x30] sm:$0xf]
        %v216 = vld [vmem:[%s194 + $0x34] sm:$0xf]
        %v217 = vld [vmem:[%s194 + $0x38] sm:$0xf]
        %v218 = vld [vmem:[%s194 + $0x3c] sm:$0xf]
        %v219 = vld [vmem:[%s194 + $0x40] sm:$0xf]
        %v220 = vld [vmem:[%s194 + $0x44] sm:$0xf]
        %v221 = vld [vmem:[%s194 + $0x48] sm:$0xf]
        %v222 = vld [vmem:[%s194 + $0x4c] sm:$0xf]
        %v223 = vld [vmem:[%s194 + $0x50] sm:$0xf]
        %v224 = vld [vmem:[%s194 + $0x54] sm:$0xf]
        %v225 = vld [vmem:[%s194 + $0x58] sm:$0xf]
        %v226 = vld [vmem:[%s194 + $0x5c] sm:$0xf]
        %v227 = vld [vmem:[%s194 + $0x60] sm:$0xf]
        %v228 = vld [vmem:[%s194 + $0x64] sm:$0xf]
        %v229 = vld [vmem:[%s194 + $0x68] sm:$0xf]
        %v230 = vld [vmem:[%s194 + $0x6c] sm:$0xf]
        %v231 = vld [vmem:[%s194 + $0x70] sm:$0xf]
        %v232 = vld [vmem:[%s194 + $0x74] sm:$0xf]
        %v233 = vld [vmem:[%s194 + $0x78] sm:$0xf]
        %v234 = vld [vmem:[%s194 + $0x7c] sm:$0xf]
        %v235 = vld [vmem:[#allocation2] sm:$0xf]
        %v236 = vld [vmem:[#allocation2 + $0x4] sm:$0xf]
        %v237 = vld [vmem:[#allocation2 + $0x8] sm:$0xf]
        %v238 = vld [vmem:[#allocation2 + $0xc] sm:$0x3]
        %v239 = vld [vmem:[#allocation4] sm:$0x1]
        %v241 = vlaneseq
        %v242 = vshrl.u32 %v241, 7
        %v243 = vsub.s32 0, %v242
        %v244 = vrot.slane %v239, %v243
        %v278 = vunpack.c.l.b16 %v203
        %v279 = vunpack.c.l.b16 %v204
        %v280 = vunpack.c.l.b16 %v205
        %v281 = vunpack.c.l.b16 %v206
        %v282 = vunpack.c.l.b16 %v207
        %v283 = vunpack.c.l.b16 %v208
        %v284 = vunpack.c.l.b16 %v209
        %v285 = vunpack.c.l.b16 %v210
        %v286 = vunpack.c.l.b16 %v211
        %v287 = vunpack.c.l.b16 %v212
        %v288 = vunpack.c.l.b16 %v213
        %v289 = vunpack.c.l.b16 %v214
        %v290 = vunpack.c.l.b16 %v215
        %v291 = vunpack.c.l.b16 %v216
        %v292 = vunpack.c.l.b16 %v217
        %v293 = vunpack.c.l.b16 %v218
        %v294 = vunpack.c.l.b16 %v219
        %v295 = vunpack.c.l.b16 %v220
        %v296 = vunpack.c.l.b16 %v221
        %v297 = vunpack.c.l.b16 %v222
        %v298 = vunpack.c.l.b16 %v223
        %v299 = vunpack.c.l.b16 %v224
        %v300 = vunpack.c.l.b16 %v225
        %v301 = vunpack.c.l.b16 %v226
        %v302 = vunpack.c.l.b16 %v227
        %v303 = vunpack.c.l.b16 %v228
        %v304 = vunpack.c.l.b16 %v229
        %v305 = vunpack.c.l.b16 %v230
        %v306 = vunpack.c.l.b16 %v231
        %v307 = vunpack.c.l.b16 %v232
        %v308 = vunpack.c.l.b16 %v233
        %v309 = vunpack.c.l.b16 %v234
        %v310 = vpack.c.b16 %v279, %v278
        %v311 = vpack.c.b16 %v281, %v280
        %v312 = vpack.c.b16 %v283, %v282
        %v313 = vpack.c.b16 %v285, %v284
        %v314 = vpack.c.b16 %v287, %v286
        %v315 = vpack.c.b16 %v289, %v288
        %v316 = vpack.c.b16 %v291, %v290
        %v317 = vpack.c.b16 %v293, %v292
        %v318 = vpack.c.b16 %v295, %v294
        %v319 = vpack.c.b16 %v297, %v296
        %v320 = vpack.c.b16 %v299, %v298
        %v321 = vpack.c.b16 %v301, %v300
        %v322 = vpack.c.b16 %v303, %v302
        %v323 = vpack.c.b16 %v305, %v304
        %v324 = vpack.c.b16 %v307, %v306
        %v325 = vpack.c.b16 %v309, %v308
        %v330 = vunpack.c.l.b16 %v235
        %v331 = vunpack.c.l.b16 %v236
        %v332 = vunpack.c.l.b16 %v237
        %v333 = vunpack.c.l.b16 %v238
        %v334 = vpack.c.b16 %v331, %v330
        %v335 = vpack.c.b16 %v333, %v332
        %vm337 = vcmask 220160
        %v339 = vsel %vm337, %v310, 0
        %v342 = vsel %vm337, %v311, 0
        %v345 = vsel %vm337, %v312, 0
        %v348 = vsel %vm337, %v313, 0
        %v351 = vsel %vm337, %v314, 0
        %v354 = vsel %vm337, %v315, 0
        %v357 = vsel %vm337, %v316, 0
        %v360 = vsel %vm337, %v317, 0
        %v363 = vsel %vm337, %v318, 0
        %v366 = vsel %vm337, %v319, 0
        %v369 = vsel %vm337, %v320, 0
        %v372 = vsel %vm337, %v321, 0
        %v375 = vsel %vm337, %v322, 0
        %v378 = vsel %vm337, %v323, 0
        %v381 = vsel %vm337, %v324, 0
        %v384 = vsel %vm337, %v325, 0
        %vm386 = vcmask 1044480
        %vm387 = vcmask 1045504
        %v388 = vsel %vm386, 4294967295, 65535
        %v389 = vsel %vm387, %v388, 0
        %v391 = vand.u32 %v335, %v389
        %393 = vmatprep.subr.bf16.mxu0 0
        %394 = vmatpush1.bf16.msra.mxu0 0
        %395 = vmatprep.subr.bf16.mxu0 0
        %396 = vmatpush1.bf16.msra.mxu0 0
        %397 = vmatprep.subr.bf16.mxu0 0
        %398 = vmatpush1.bf16.msra.mxu0 0
        %399 = vmatprep.subr.bf16.mxu0 0
        %400 = vmatpush1.bf16.msra.mxu0 0
        %401 = vmatprep.subr.bf16.mxu0 0
        %402 = vmatpush1.bf16.msra.mxu0 0
        %403 = vmatprep.subr.bf16.mxu0 0
        %404 = vmatpush1.bf16.msra.mxu0 0
        %405 = vmatprep.subr.bf16.mxu0 0
        %406 = vmatpush1.bf16.msra.mxu0 %v391
        %407 = vmatprep.subr.bf16.mxu0 0
        %408 = vmatpush1.bf16.msra.mxu0 %v334
        %409 = vmatprep.subr.bf16.mxu0 0
        %410 = vmatpush2.bf16.msra.mxu0 0
        %411 = vmatprep.subr.bf16.mxu0 0
        %412 = vmatpush2.bf16.msra.mxu0 0
        %413 = vmatprep.subr.bf16.mxu0 0
        %414 = vmatpush2.bf16.msra.mxu0 0
        %415 = vmatprep.subr.bf16.mxu0 0
        %416 = vmatpush2.bf16.msra.mxu0 0
        %417 = vmatprep.subr.bf16.mxu0 0
        %418 = vmatpush2.bf16.msra.mxu0 0
        %419 = vmatprep.subr.bf16.mxu0 0
        %420 = vmatpush2.bf16.msra.mxu0 0
        %421 = vmatprep.subr.bf16.mxu0 0
        %422 = vmatpush2.bf16.msra.mxu0 0
        %423 = vmatprep.subr.bf16.mxu0 0
        %424 = vmatpush2.bf16.msra.mxu0 0
        %425 = vmatprep.mubr.bf16.mxu0 0
        %426 = vmatmul.mubr.bf16.gmra.mxu0 %v339
        %v427 = vpop.f32.mrf.mxu0
        %v428 = vadd.f32 %v244, %v427
        %v429 = vpop.f32.mrf.mxu0
        %v430 = vpop.f32.mrf.mxu0
        %v431 = vadd.f32 %v244, %v430
        %v432 = vpop.f32.mrf.mxu0
        %433 = vmatprep.mubr.bf16.mxu0 0
        %434 = vmatmul.mubr.bf16.gmra.mxu0 %v342
        %v435 = vpop.f32.mrf.mxu0
        %v436 = vadd.f32 %v244, %v435
        %v437 = vpop.f32.mrf.mxu0
        %v438 = vpop.f32.mrf.mxu0
        %v439 = vadd.f32 %v244, %v438
        %v440 = vpop.f32.mrf.mxu0
        %441 = vmatprep.mubr.bf16.mxu0 0
        %442 = vmatmul.mubr.bf16.gmra.mxu0 %v345
        %v443 = vpop.f32.mrf.mxu0
        %v444 = vadd.f32 %v244, %v443
        %v445 = vpop.f32.mrf.mxu0
        %v446 = vpop.f32.mrf.mxu0
        %v447 = vadd.f32 %v244, %v446
        %v448 = vpop.f32.mrf.mxu0
        %449 = vmatprep.mubr.bf16.mxu0 0
        %450 = vmatmul.mubr.bf16.gmra.mxu0 %v348
        %v451 = vpop.f32.mrf.mxu0
        %v452 = vadd.f32 %v244, %v451
        %v453 = vpop.f32.mrf.mxu0
        %v454 = vpop.f32.mrf.mxu0
        %v455 = vadd.f32 %v244, %v454
        %v456 = vpop.f32.mrf.mxu0
        %457 = vmatprep.mubr.bf16.mxu0 0
        %458 = vmatmul.mubr.bf16.gmra.mxu0 %v351
        %v459 = vpop.f32.mrf.mxu0
        %v460 = vadd.f32 %v244, %v459
        %v461 = vpop.f32.mrf.mxu0
        %v462 = vpop.f32.mrf.mxu0
        %v463 = vadd.f32 %v244, %v462
        %v464 = vpop.f32.mrf.mxu0
        %465 = vmatprep.mubr.bf16.mxu0 0
        %466 = vmatmul.mubr.bf16.gmra.mxu0 %v354
        %v467 = vpop.f32.mrf.mxu0
        %v468 = vadd.f32 %v244, %v467
        %v469 = vpop.f32.mrf.mxu0
        %v470 = vpop.f32.mrf.mxu0
        %v471 = vadd.f32 %v244, %v470
        %v472 = vpop.f32.mrf.mxu0
        %473 = vmatprep.mubr.bf16.mxu0 0
        %474 = vmatmul.mubr.bf16.gmra.mxu0 %v357
        %v475 = vpop.f32.mrf.mxu0
        %v476 = vadd.f32 %v244, %v475
        %v477 = vpop.f32.mrf.mxu0
        %v478 = vpop.f32.mrf.mxu0
        %v479 = vadd.f32 %v244, %v478
        %v480 = vpop.f32.mrf.mxu0
        %481 = vmatprep.mubr.bf16.mxu0 0
        %482 = vmatmul.mubr.bf16.gmra.mxu0 %v360
        %v483 = vpop.f32.mrf.mxu0
        %v484 = vadd.f32 %v244, %v483
        %v485 = vpop.f32.mrf.mxu0
        %v486 = vpop.f32.mrf.mxu0
        %v487 = vadd.f32 %v244, %v486
        %v488 = vpop.f32.mrf.mxu0
        %489 = vmatprep.mubr.bf16.mxu0 0
        %490 = vmatmul.mubr.bf16.gmra.mxu0 %v363
        %v491 = vpop.f32.mrf.mxu0
        %v492 = vadd.f32 %v244, %v491
        %v493 = vpop.f32.mrf.mxu0
        %v494 = vpop.f32.mrf.mxu0
        %v495 = vadd.f32 %v244, %v494
        %v496 = vpop.f32.mrf.mxu0
        %497 = vmatprep.mubr.bf16.mxu0 0
        %498 = vmatmul.mubr.bf16.gmra.mxu0 %v366
        %v499 = vpop.f32.mrf.mxu0
        %v500 = vadd.f32 %v244, %v499
        %v501 = vpop.f32.mrf.mxu0
        %v502 = vpop.f32.mrf.mxu0
        %v503 = vadd.f32 %v244, %v502
        %v504 = vpop.f32.mrf.mxu0
        %505 = vmatprep.mubr.bf16.mxu0 0
        %506 = vmatmul.mubr.bf16.gmra.mxu0 %v369
        %v507 = vpop.f32.mrf.mxu0
        %v508 = vadd.f32 %v244, %v507
        %v509 = vpop.f32.mrf.mxu0
        %v510 = vpop.f32.mrf.mxu0
        %v511 = vadd.f32 %v244, %v510
        %v512 = vpop.f32.mrf.mxu0
        %513 = vmatprep.mubr.bf16.mxu0 0
        %514 = vmatmul.mubr.bf16.gmra.mxu0 %v372
        %v515 = vpop.f32.mrf.mxu0
        %v516 = vadd.f32 %v244, %v515
        %v517 = vpop.f32.mrf.mxu0
        %v518 = vpop.f32.mrf.mxu0
        %v519 = vadd.f32 %v244, %v518
        %v520 = vpop.f32.mrf.mxu0
        %521 = vmatprep.mubr.bf16.mxu0 0
        %522 = vmatmul.mubr.bf16.gmra.mxu0 %v375
        %v523 = vpop.f32.mrf.mxu0
        %v524 = vadd.f32 %v244, %v523
        %v525 = vpop.f32.mrf.mxu0
        %v526 = vpop.f32.mrf.mxu0
        %v527 = vadd.f32 %v244, %v526
        %v528 = vpop.f32.mrf.mxu0
        %529 = vmatprep.mubr.bf16.mxu0 0
        %530 = vmatmul.mubr.bf16.gmra.mxu0 %v378
        %v531 = vpop.f32.mrf.mxu0
        %v532 = vadd.f32 %v244, %v531
        %v533 = vpop.f32.mrf.mxu0
        %v534 = vpop.f32.mrf.mxu0
        %v535 = vadd.f32 %v244, %v534
        %v536 = vpop.f32.mrf.mxu0
        %537 = vmatprep.mubr.bf16.mxu0 0
        %538 = vmatmul.mubr.bf16.gmra.mxu0 %v381
        %v539 = vpop.f32.mrf.mxu0
        %v540 = vadd.f32 %v244, %v539
        %v541 = vpop.f32.mrf.mxu0
        %v542 = vpop.f32.mrf.mxu0
        %v543 = vadd.f32 %v244, %v542
        %v544 = vpop.f32.mrf.mxu0
        %545 = vmatprep.mubr.bf16.mxu0 0
        %546 = vmatmul.mubr.bf16.gmra.mxu0 %v384
        %v547 = vpop.f32.mrf.mxu0
        %v548 = vadd.f32 %v244, %v547
        %v549 = vpop.f32.mrf.mxu0
        %v550 = vpop.f32.mrf.mxu0
        %v551 = vadd.f32 %v244, %v550
        %v552 = vpop.f32.mrf.mxu0
        %553 = vdwg.mxu0
        %v554 = vpack.c.bf16 %v431, %v428
        %v555 = vpack.c.bf16 %v439, %v436
        %v556 = vpack.c.bf16 %v447, %v444
        %v557 = vpack.c.bf16 %v455, %v452
        %v558 = vpack.c.bf16 %v463, %v460
        %v559 = vpack.c.bf16 %v471, %v468
        %v560 = vpack.c.bf16 %v479, %v476
        %v561 = vpack.c.bf16 %v487, %v484
        %v562 = vpack.c.bf16 %v495, %v492
        %v563 = vpack.c.bf16 %v503, %v500
        %v564 = vpack.c.bf16 %v511, %v508
        %v565 = vpack.c.bf16 %v519, %v516
        %v566 = vpack.c.bf16 %v527, %v524
        %v567 = vpack.c.bf16 %v535, %v532
        %v568 = vpack.c.bf16 %v543, %v540
        %v569 = vpack.c.bf16 %v551, %v548
        %v586 = vunpack.c.l.b16 %v554
        %v587 = vunpack.c.h.b16 %v554
        %v588 = vunpack.c.l.b16 %v555
        %v589 = vunpack.c.h.b16 %v555
        %v590 = vunpack.c.l.b16 %v556
        %v591 = vunpack.c.h.b16 %v556
        %v592 = vunpack.c.l.b16 %v557
        %v593 = vunpack.c.h.b16 %v557
        %v594 = vunpack.c.l.b16 %v558
        %v595 = vunpack.c.h.b16 %v558
        %v596 = vunpack.c.l.b16 %v559
        %v597 = vunpack.c.h.b16 %v559
        %v598 = vunpack.c.l.b16 %v560
        %v599 = vunpack.c.h.b16 %v560
        %v600 = vunpack.c.l.b16 %v561
        %v601 = vunpack.c.h.b16 %v561
        %v602 = vunpack.c.l.b16 %v562
        %v603 = vunpack.c.h.b16 %v562
        %v604 = vunpack.c.l.b16 %v563
        %v605 = vunpack.c.h.b16 %v563
        %v606 = vunpack.c.l.b16 %v564
        %v607 = vunpack.c.h.b16 %v564
        %v608 = vunpack.c.l.b16 %v565
        %v609 = vunpack.c.h.b16 %v565
        %v610 = vunpack.c.l.b16 %v566
        %v611 = vunpack.c.h.b16 %v566
        %v612 = vunpack.c.l.b16 %v567
        %v613 = vunpack.c.h.b16 %v567
        %v614 = vunpack.c.l.b16 %v568
        %v615 = vunpack.c.h.b16 %v568
        %v616 = vunpack.c.l.b16 %v569
        %v617 = vunpack.c.h.b16 %v569
        %v618 = vpack.c.b16 %v586, %v586
        %v619 = vpack.c.b16 %v587, %v587
        %v620 = vpack.c.b16 %v588, %v588
        %v621 = vpack.c.b16 %v589, %v589
        %v622 = vpack.c.b16 %v590, %v590
        %v623 = vpack.c.b16 %v591, %v591
        %v624 = vpack.c.b16 %v592, %v592
        %v625 = vpack.c.b16 %v593, %v593
        %v626 = vpack.c.b16 %v594, %v594
        %v627 = vpack.c.b16 %v595, %v595
        %v628 = vpack.c.b16 %v596, %v596
        %v629 = vpack.c.b16 %v597, %v597
        %v630 = vpack.c.b16 %v598, %v598
        %v631 = vpack.c.b16 %v599, %v599
        %v632 = vpack.c.b16 %v600, %v600
        %v633 = vpack.c.b16 %v601, %v601
        %v634 = vpack.c.b16 %v602, %v602
        %v635 = vpack.c.b16 %v603, %v603
        %v636 = vpack.c.b16 %v604, %v604
        %v637 = vpack.c.b16 %v605, %v605
        %v638 = vpack.c.b16 %v606, %v606
        %v639 = vpack.c.b16 %v607, %v607
        %v640 = vpack.c.b16 %v608, %v608
        %v641 = vpack.c.b16 %v609, %v609
        %v642 = vpack.c.b16 %v610, %v610
        %v643 = vpack.c.b16 %v611, %v611
        %v644 = vpack.c.b16 %v612, %v612
        %v645 = vpack.c.b16 %v613, %v613
        %v646 = vpack.c.b16 %v614, %v614
        %v647 = vpack.c.b16 %v615, %v615
        %v648 = vpack.c.b16 %v616, %v616
        %v649 = vpack.c.b16 %v617, %v617
        %vm682 = vcmask 240640
        %683 = vst.msk [vmem:[%s200] sm:$0xf] %vm682, %v618
        %684 = vst.msk [vmem:[%s200 + $0x4] sm:$0xf] %vm682, %v619
        %685 = vst.msk [vmem:[%s200 + $0x8] sm:$0xf] %vm682, %v620
        %686 = vst.msk [vmem:[%s200 + $0xc] sm:$0xf] %vm682, %v621
        %687 = vst.msk [vmem:[%s200 + $0x10] sm:$0xf] %vm682, %v622
        %688 = vst.msk [vmem:[%s200 + $0x14] sm:$0xf] %vm682, %v623
        %689 = vst.msk [vmem:[%s200 + $0x18] sm:$0xf] %vm682, %v624
        %690 = vst.msk [vmem:[%s200 + $0x1c] sm:$0xf] %vm682, %v625
        %691 = vst.msk [vmem:[%s200 + $0x20] sm:$0xf] %vm682, %v626
        %692 = vst.msk [vmem:[%s200 + $0x24] sm:$0xf] %vm682, %v627
        %693 = vst.msk [vmem:[%s200 + $0x28] sm:$0xf] %vm682, %v628
        %694 = vst.msk [vmem:[%s200 + $0x2c] sm:$0xf] %vm682, %v629
        %695 = vst.msk [vmem:[%s200 + $0x30] sm:$0xf] %vm682, %v630
        %696 = vst.msk [vmem:[%s200 + $0x34] sm:$0xf] %vm682, %v631
        %697 = vst.msk [vmem:[%s200 + $0x38] sm:$0xf] %vm682, %v632
        %698 = vst.msk [vmem:[%s200 + $0x3c] sm:$0xf] %vm682, %v633
        %699 = vst.msk [vmem:[%s200 + $0x40] sm:$0xf] %vm682, %v634
        %700 = vst.msk [vmem:[%s200 + $0x44] sm:$0xf] %vm682, %v635
        %701 = vst.msk [vmem:[%s200 + $0x48] sm:$0xf] %vm682, %v636
        %702 = vst.msk [vmem:[%s200 + $0x4c] sm:$0xf] %vm682, %v637
        %703 = vst.msk [vmem:[%s200 + $0x50] sm:$0xf] %vm682, %v638
        %704 = vst.msk [vmem:[%s200 + $0x54] sm:$0xf] %vm682, %v639
        %705 = vst.msk [vmem:[%s200 + $0x58] sm:$0xf] %vm682, %v640
        %706 = vst.msk [vmem:[%s200 + $0x5c] sm:$0xf] %vm682, %v641
        %707 = vst.msk [vmem:[%s200 + $0x60] sm:$0xf] %vm682, %v642
        %708 = vst.msk [vmem:[%s200 + $0x64] sm:$0xf] %vm682, %v643
        %709 = vst.msk [vmem:[%s200 + $0x68] sm:$0xf] %vm682, %v644
        %710 = vst.msk [vmem:[%s200 + $0x6c] sm:$0xf] %vm682, %v645
        %711 = vst.msk [vmem:[%s200 + $0x70] sm:$0xf] %vm682, %v646
        %712 = vst.msk [vmem:[%s200 + $0x74] sm:$0xf] %vm682, %v647
        %713 = vst.msk [vmem:[%s200 + $0x78] sm:$0xf] %vm682, %v648
        %714 = vst.msk [vmem:[%s200 + $0x7c] sm:$0xf] %vm682, %v649
        %s715 = smul.u32 32, %s16
        %p716 = scmp.lt.s32.totalorder %s715, 63
        %s717 = scalar_select %p716, %s715, 63
        %s718 = smul.addr %s717, 4
        %s719 = scalar_lea.vmem %s3, %s718
        // Predicated region
        $region41: #{_lambda_.16} parent=31 // pred_check
          %p720 = pneg %p102
        $region42: #{_lambda_.16} parent=31 // pred_check_branch
          %722 = sbr.rel (%p720) target = $region44
        $region43: #{_lambda_.16} parent=31 // pred_region
          %s723 = smul.u32 32, %s16
        $region44: #{_lambda_.16} parent=31 // pred_fallthru
          _
      $region32: #{_lambda_.16} parent=5 // pred_fallthru
        _
      %p724 = scmp.le.s32.totalorder 2, %s11
      // Predicated region
      $region45: #{_lambda_.16} parent=5 // pred_check
        %p725 = pneg %p724
      $region46: #{_lambda_.16} parent=5 // pred_check_branch
        %727 = sbr.rel (%p725) target = $region48
      $region47: #{_lambda_.16} parent=5 // pred_region
        %s728 = ssub.s32 %s11, 2
        // Predicated region
        $region49: #{_lambda_.16} parent=47 // pred_check
          %p729 = pneg %p108
        $region50: #{_lambda_.16} parent=47 // pred_check_branch
          %731 = sbr.rel (%p729) target = $region52
        $region51: #{_lambda_.16} parent=47 // pred_region
          %s732 = smul.u32 32, %s17
          %p733 = scmp.lt.s32.totalorder %s732, 63
          %s734 = scalar_select %p733, %s732, 63
          %s735 = smul.addr %s734, 4
          %s736 = scalar_lea.vmem %s3, %s735
        $region52: #{_lambda_.16} parent=47 // pred_fallthru
          _
      $region48: #{_lambda_.16} parent=5 // pred_fallthru
        _
    $region6: #{_lambda_.16} parent=1 // loop_footer
      %s15 = sadd.s32 1, %s11
    $region7: #{_lambda_.16} parent=1 // loop_footer_branch
      %10 = sbr.rel target = $region3
    $region8: #{_lambda_.16} parent=1 // loop_exit
      _
    %737 = vsyncpa [#allocation3], 1
    %s738 = scalar_lea.sflag [#allocation3], 1
    %739 = vsyncpa %s738, 1
    %740 = vsyncpa [#allocation5], 1

// kernel: _lambda_.17
$region0: #{_lambda_.17}
  #allocation0 [shape = 'u32[]', space=smem, size = 0x4, offset = 0x4, fixed_abs, tag = 'smem constant byte address 0x4 - core index']
  #allocation1 [shape = 'u32[144,128]{1,0:T(1,128)}', space=vmem, size = 0x12000, scoped, tag = 'internal scratch']
  %s0 = inlined_call_operand.vmem [shape: bf16[512,270], index: 0, kind: input, shape index: {}]
  %s1 = inlined_call_operand.vmem [shape: bf16[270,60], index: 1, kind: input, shape index: {}]
  %s2 = inlined_call_operand.vmem [shape: f32[1,60], index: 2, kind: input, shape index: {}]
  %s3 = inlined_call_operand.vmem [shape: bf16[512,60], index: 3, kind: output, shape index: {}]
  %s4 = sld [smem:[#allocation0]]
  $region45: #{_lambda_.17} parent=0
    _
  %s6 = ssub.s32 1, %s4
  %s7 = scalar_select 0, %s6, %s4
  loop: start=0, step=1, limit=4
  $region2: #{_lambda_.17} parent=0 // loop_pre_header
    _
  $region3: #{_lambda_.17} parent=0 // loop_header
    %s9 = sphi 0, %s13
    %p10 = scmp.ge.s32.totalorder %s9, 4
    %s19 = sphi 0, %s21
    %s22 = sphi 0, %s19
    %s23 = sphi 0, %s22
    %s39 = sphi 0, %s23
    %s43 = sphi 0, %s43
    %s45 = sphi 0, %s43
    %s46 = sphi 0, %s45
    %s60 = sphi 0, %s46
    %s64 = sphi 0, %s64
    %s66 = sphi 0, %s64
    %s67 = sphi 0, %s66
    %s81 = sphi 0, %s67
    %s87 = sphi 0, %s89
    %s90 = sphi 0, %s87
    %s91 = sphi 0, %s90
    %s107 = sphi 0, %s91
  $region4: #{_lambda_.17} parent=0 // loop_header_branch
    %12 = sbr.rel (%p10) target = $region8
  $region5: #{_lambda_.17} parent=0 // loop_body
    %s14 = ssub.s32 %s9, 1
    %s15 = ssub.s32 %s9, 2
    %s16 = sadd.s32 %s9, 1
    %s17 = ssub.s32 %s9, %s16
    %p18 = scmp.eq.s32.totalorder %s17, 0
    %s20 = sadd.s32 %s19, 1
    %s21 = scalar_select %p18, %s19, %s20
    %p24 = pneg %p18
    %p25 = scmp.eq.s32.totalorder %s9, 1
    %p26 = por %p24, %p25
    %p27 = scmp.ne.s32.totalorder %s19, %s22
    %p28 = scmp.eq.s32.totalorder %s9, 0
    %p29 = por %p27, %p28
    %p30 = scmp.ne.s32.totalorder %s19, %s22
    %p31 = scmp.eq.s32.totalorder %s14, 1
    %p32 = por %p30, %p31
    %p33 = scmp.ne.s32.totalorder %s22, %s23
    %p34 = scmp.eq.s32.totalorder %s14, 0
    %p35 = por %p33, %p34
    %p36 = scmp.ne.s32.totalorder %s22, %s23
    %p37 = scmp.eq.s32.totalorder %s15, 1
    %p38 = por %p36, %p37
    %p40 = scmp.ne.s32.totalorder %s23, %s39
    %p41 = scmp.eq.s32.totalorder %s15, 0
    %p42 = por %p40, %p41
    %s44 = sadd.s32 %s43, 1
    %p47 = scmp.eq.s32.totalorder %s9, 1
    %p48 = scmp.ne.s32.totalorder %s43, %s45
    %p49 = scmp.eq.s32.totalorder %s9, 0
    %p50 = por %p48, %p49
    %p51 = scmp.ne.s32.totalorder %s43, %s45
    %p52 = scmp.eq.s32.totalorder %s14, 1
    %p53 = por %p51, %p52
    %p54 = scmp.ne.s32.totalorder %s45, %s46
    %p55 = scmp.eq.s32.totalorder %s14, 0
    %p56 = por %p54, %p55
    %p57 = scmp.ne.s32.totalorder %s45, %s46
    %p58 = scmp.eq.s32.totalorder %s15, 1
    %p59 = por %p57, %p58
    %p61 = scmp.ne.s32.totalorder %s46, %s60
    %p62 = scmp.eq.s32.totalorder %s15, 0
    %p63 = por %p61, %p62
    %s65 = sadd.s32 %s64, 1
    %p68 = scmp.eq.s32.totalorder %s9, 1
    %p69 = scmp.ne.s32.totalorder %s64, %s66
    %p70 = scmp.eq.s32.totalorder %s9, 0
    %p71 = por %p69, %p70
    %p72 = scmp.ne.s32.totalorder %s64, %s66
    %p73 = scmp.eq.s32.totalorder %s14, 1
    %p74 = por %p72, %p73
    %p75 = scmp.ne.s32.totalorder %s66, %s67
    %p76 = scmp.eq.s32.totalorder %s14, 0
    %p77 = por %p75, %p76
    %p78 = scmp.ne.s32.totalorder %s66, %s67
    %p79 = scmp.eq.s32.totalorder %s15, 1
    %p80 = por %p78, %p79
    %p82 = scmp.ne.s32.totalorder %s67, %s81
    %p83 = scmp.eq.s32.totalorder %s15, 0
    %p84 = por %p82, %p83
    %s85 = ssub.s32 %s9, %s16
    %p86 = scmp.eq.s32.totalorder %s85, 0
    %s88 = sadd.s32 %s87, 1
    %s89 = scalar_select %p86, %s87, %s88
    %p92 = pneg %p86
    %p93 = scmp.eq.s32.totalorder %s9, 1
    %p94 = por %p92, %p93
    %p95 = scmp.ne.s32.totalorder %s87, %s90
    %p96 = scmp.eq.s32.totalorder %s9, 0
    %p97 = por %p95, %p96
    %p98 = scmp.ne.s32.totalorder %s87, %s90
    %p99 = scmp.eq.s32.totalorder %s14, 1
    %p100 = por %p98, %p99
    %p101 = scmp.ne.s32.totalorder %s90, %s91
    %p102 = scmp.eq.s32.totalorder %s14, 0
    %p103 = por %p101, %p102
    %p104 = scmp.ne.s32.totalorder %s90, %s91
    %p105 = scmp.eq.s32.totalorder %s15, 1
    %p106 = por %p104, %p105
    %p108 = scmp.ne.s32.totalorder %s91, %s107
    %p109 = scmp.eq.s32.totalorder %s15, 0
    %p110 = por %p108, %p109
    %p111 = scmp.le.s32.totalorder 1, %s9
    %p112 = scmp.lt.s32.totalorder %s9, 3
    %p113 = pnand %p111, %p112
    %p114 = pneg %p113
    // Predicated region
    $region9: #{_lambda_.17} parent=5 // pred_check
      _
    $region10: #{_lambda_.17} parent=5 // pred_check_branch
      %116 = sbr.rel (%p113) target = $region12
    $region11: #{_lambda_.17} parent=5 // pred_region
      %s117 = ssub.s32 %s9, 1
      // Predicated region
      $region13: #{_lambda_.17} parent=11 // pred_check
        %p118 = pneg %p56
      $region14: #{_lambda_.17} parent=11 // pred_check_branch
        %120 = sbr.rel (%p118) target = $region16
      $region15: #{_lambda_.17} parent=11 // pred_region
        _
      $region16: #{_lambda_.17} parent=11 // pred_fallthru
        _
      // Predicated region
      $region17: #{_lambda_.17} parent=11 // pred_check
        %p121 = pneg %p77
      $region18: #{_lambda_.17} parent=11 // pred_check_branch
        %123 = sbr.rel (%p121) target = $region20
      $region19: #{_lambda_.17} parent=11 // pred_region
        _
      $region20: #{_lambda_.17} parent=11 // pred_fallthru
        _
    $region12: #{_lambda_.17} parent=5 // pred_fallthru
      _
    %p124 = scmp.lt.s32.totalorder %s9, 2
    // Predicated region
    $region21: #{_lambda_.17} parent=5 // pred_check
      %p125 = pneg %p124
    $region22: #{_lambda_.17} parent=5 // pred_check_branch
      %127 = sbr.rel (%p125) target = $region24
    $region23: #{_lambda_.17} parent=5 // pred_region
      // Predicated region
      $region25: #{_lambda_.17} parent=23 // pred_check
        %p128 = pneg %p29
      $region26: #{_lambda_.17} parent=23 // pred_check_branch
        %130 = sbr.rel (%p128) target = $region28
      $region27: #{_lambda_.17} parent=23 // pred_region
        %s131 = smul.u32 32, %s9
        %p132 = scmp.lt.s32.totalorder %s131, 63
        %s133 = scalar_select %p132, %s131, 63
        %s134 = smul.addr %s133, 3
        %s135 = smul.addr %s134, 4
        %s136 = scalar_lea.vmem %s0, %s135
        %s137 = smul.u32 32, %s9
      $region28: #{_lambda_.17} parent=23 // pred_fallthru
        _
    $region24: #{_lambda_.17} parent=5 // pred_fallthru
      _
    %p138 = scmp.le.s32.totalorder 1, %s9
    %p139 = scmp.lt.s32.totalorder %s9, 3
    %p140 = pnand %p138, %p139
    %p141 = pneg %p140
    // Predicated region
    $region29: #{_lambda_.17} parent=5 // pred_check
      _
    $region30: #{_lambda_.17} parent=5 // pred_check_branch
      %143 = sbr.rel (%p140) target = $region32
    $region31: #{_lambda_.17} parent=5 // pred_region
      %s144 = ssub.s32 %s9, 1
      %s145 = smul.u32 32, %s14
      %p146 = scmp.lt.s32.totalorder %s145, 63
      %s147 = scalar_select %p146, %s145, 63
      %s148 = smul.addr %s147, 3
      %s149 = smul.addr %s148, 4
      %s150 = scalar_lea.vmem %s0, %s149
      %p151 = pneg %p35
      %p152 = pneg %p32
      %p153 = pneg %p56
      %p154 = pneg %p53
      %p155 = pneg %p77
      %p156 = pneg %p74
      %p157 = pneg %p103
      %p158 = pneg %p100
      %s159 = smul.u32 32, %s14
      %p160 = scmp.lt.s32.totalorder %s159, 63
      %s161 = scalar_select %p160, %s159, 63
      %s162 = smul.addr %s161, 4
      %s163 = scalar_lea.vmem %s3, %s162
      %s164 = smul.u32 32, %s14
      %p165 = scmp.lt.s32.totalorder %s164, 63
      %s166 = scalar_select %p165, %s164, 63
      %s167 = smul.addr %s166, 3
      %s168 = smul.addr %s167, 4
      %s169 = scalar_lea.vmem %s0, %s168
      %s170 = smul.u32 32, %s14
      %s171 = smul.u32 32, %s14
      %p172 = scmp.lt.s32.totalorder %s171, 63
      %s173 = scalar_select %p172, %s171, 63
      %s174 = smul.addr %s173, 4
      %s175 = scalar_lea.vmem %s3, %s174
      %s176 = smul.u32 32, %s14
      %v178 = vld [vmem:[%s169] sm:$0xff]
      %v179 = vld [vmem:[%s169 + $0x8] sm:$0xf]
      %v180 = vld [vmem:[%s169 + $0xc] sm:$0xff]
      %v181 = vld [vmem:[%s169 + $0x14] sm:$0xf]
      %v182 = vld [vmem:[%s169 + $0x18] sm:$0xff]
      %v183 = vld [vmem:[%s169 + $0x20] sm:$0xf]
      %v184 = vld [vmem:[%s169 + $0x24] sm:$0xff]
      %v185 = vld [vmem:[%s169 + $0x2c] sm:$0xf]
      %v186 = vld [vmem:[%s169 + $0x30] sm:$0xff]
      %v187 = vld [vmem:[%s169 + $0x38] sm:$0xf]
      %v188 = vld [vmem:[%s169 + $0x3c] sm:$0xff]
      %v189 = vld [vmem:[%s169 + $0x44] sm:$0xf]
      %v190 = vld [vmem:[%s169 + $0x48] sm:$0xff]
      %v191 = vld [vmem:[%s169 + $0x50] sm:$0xf]
      %v192 = vld [vmem:[%s169 + $0x54] sm:$0xff]
      %v193 = vld [vmem:[%s169 + $0x5c] sm:$0xf]
      %v194 = vld [vmem:[%s169 + $0x60] sm:$0xff]
      %v195 = vld [vmem:[%s169 + $0x68] sm:$0xf]
      %v196 = vld [vmem:[%s169 + $0x6c] sm:$0xff]
      %v197 = vld [vmem:[%s169 + $0x74] sm:$0xf]
      %v198 = vld [vmem:[%s169 + $0x78] sm:$0xff]
      %v199 = vld [vmem:[%s169 + $0x80] sm:$0xf]
      %v200 = vld [vmem:[%s169 + $0x84] sm:$0xff]
      %v201 = vld [vmem:[%s169 + $0x8c] sm:$0xf]
      %v202 = vld [vmem:[%s169 + $0x90] sm:$0xff]
      %v203 = vld [vmem:[%s169 + $0x98] sm:$0xf]
      %v204 = vld [vmem:[%s169 + $0x9c] sm:$0xff]
      %v205 = vld [vmem:[%s169 + $0xa4] sm:$0xf]
      %v206 = vld [vmem:[%s169 + $0xa8] sm:$0xff]
      %v207 = vld [vmem:[%s169 + $0xb0] sm:$0xf]
      %v208 = vld [vmem:[%s169 + $0xb4] sm:$0xff]
      %v209 = vld [vmem:[%s169 + $0xbc] sm:$0xf]
      %v210 = vld [vmem:[%s169 + $0xc0] sm:$0xff]
      %v211 = vld [vmem:[%s169 + $0xc8] sm:$0xf]
      %v212 = vld [vmem:[%s169 + $0xcc] sm:$0xff]
      %v213 = vld [vmem:[%s169 + $0xd4] sm:$0xf]
      %v214 = vld [vmem:[%s169 + $0xd8] sm:$0xff]
      %v215 = vld [vmem:[%s169 + $0xe0] sm:$0xf]
      %v216 = vld [vmem:[%s169 + $0xe4] sm:$0xff]
      %v217 = vld [vmem:[%s169 + $0xec] sm:$0xf]
      %v218 = vld [vmem:[%s169 + $0xf0] sm:$0xff]
      %v219 = vld [vmem:[%s169 + $0xf8] sm:$0xf]
      %v220 = vld [vmem:[%s169 + $0xfc] sm:$0xff]
      %v221 = vld [vmem:[%s169 + $0x104] sm:$0xf]
      %v222 = vld [vmem:[%s169 + $0x108] sm:$0xff]
      %v223 = vld [vmem:[%s169 + $0x110] sm:$0xf]
      %v224 = vld [vmem:[%s169 + $0x114] sm:$0xff]
      %v225 = vld [vmem:[%s169 + $0x11c] sm:$0xf]
      %v226 = vld [vmem:[%s169 + $0x120] sm:$0xff]
      %v227 = vld [vmem:[%s169 + $0x128] sm:$0xf]
      %v228 = vld [vmem:[%s169 + $0x12c] sm:$0xff]
      %v229 = vld [vmem:[%s169 + $0x134] sm:$0xf]
      %v230 = vld [vmem:[%s169 + $0x138] sm:$0xff]
      %v231 = vld [vmem:[%s169 + $0x140] sm:$0xf]
      %v232 = vld [vmem:[%s169 + $0x144] sm:$0xff]
      %v233 = vld [vmem:[%s169 + $0x14c] sm:$0xf]
      %v234 = vld [vmem:[%s169 + $0x150] sm:$0xff]
      %v235 = vld [vmem:[%s169 + $0x158] sm:$0xf]
      %v236 = vld [vmem:[%s169 + $0x15c] sm:$0xff]
      %v237 = vld [vmem:[%s169 + $0x164] sm:$0xf]
      %v238 = vld [vmem:[%s169 + $0x168] sm:$0xff]
      %v239 = vld [vmem:[%s169 + $0x170] sm:$0xf]
      %v240 = vld [vmem:[%s169 + $0x174] sm:$0xff]
      %v241 = vld [vmem:[%s169 + $0x17c] sm:$0xf]
      %v242 = vld [vmem:[%s1] sm:$0xf]
      %v243 = vld [vmem:[%s1 + $0x4] sm:$0xf]
      %v244 = vld [vmem:[%s1 + $0x8] sm:$0xf]
      %v245 = vld [vmem:[%s1 + $0xc] sm:$0xf]
      %v246 = vld [vmem:[%s1 + $0x10] sm:$0xf]
      %v247 = vld [vmem:[%s1 + $0x14] sm:$0xf]
      %v248 = vld [vmem:[%s1 + $0x18] sm:$0xf]
      %v249 = vld [vmem:[%s1 + $0x1c] sm:$0xf]
      %v250 = vld [vmem:[%s1 + $0x20] sm:$0xf]
      %v251 = vld [vmem:[%s1 + $0x24] sm:$0xf]
      %v252 = vld [vmem:[%s1 + $0x28] sm:$0xf]
      %v253 = vld [vmem:[%s1 + $0x2c] sm:$0xf]
      %v254 = vld [vmem:[%s1 + $0x30] sm:$0xf]
      %v255 = vld [vmem:[%s1 + $0x34] sm:$0xf]
      %v256 = vld [vmem:[%s1 + $0x38] sm:$0xf]
      %v257 = vld [vmem:[%s1 + $0x3c] sm:$0xf]
      %v258 = vld [vmem:[%s1 + $0x40] sm:$0xf]
      %v259 = vld [vmem:[%s1 + $0x44] sm:$0xf]
      %v260 = vld [vmem:[%s1 + $0x48] sm:$0xf]
      %v261 = vld [vmem:[%s1 + $0x4c] sm:$0xf]
      %v262 = vld [vmem:[%s1 + $0x50] sm:$0xf]
      %v263 = vld [vmem:[%s1 + $0x54] sm:$0xf]
      %v264 = vld [vmem:[%s1 + $0x58] sm:$0xf]
      %v265 = vld [vmem:[%s1 + $0x5c] sm:$0xf]
      %v266 = vld [vmem:[%s1 + $0x60] sm:$0xf]
      %v267 = vld [vmem:[%s1 + $0x64] sm:$0xf]
      %v268 = vld [vmem:[%s1 + $0x68] sm:$0xf]
      %v269 = vld [vmem:[%s1 + $0x6c] sm:$0xf]
      %v270 = vld [vmem:[%s1 + $0x70] sm:$0xf]
      %v271 = vld [vmem:[%s1 + $0x74] sm:$0xf]
      %v272 = vld [vmem:[%s1 + $0x78] sm:$0xf]
      %v273 = vld [vmem:[%s1 + $0x7c] sm:$0xf]
      %v274 = vld [vmem:[%s1 + $0x80] sm:$0xf]
      %v275 = vld [vmem:[%s1 + $0x84] sm:$0x7]
      %v276 = vld [vmem:[%s2] sm:$0x1]
      %v278 = vlaneseq
      %v279 = vshrl.u32 %v278, 7
      %v280 = vsub.s32 0, %v279
      %v281 = vrot.slane %v276, %v280
      %v347 = vunpack.c.l.b16 %v178
      %v348 = vunpack.c.h.b16 %v178
      %v349 = vunpack.c.l.b16 %v179
      %v350 = vunpack.c.l.b16 %v180
      %v351 = vunpack.c.h.b16 %v180
      %v352 = vunpack.c.l.b16 %v181
      %v353 = vunpack.c.l.b16 %v182
      %v354 = vunpack.c.h.b16 %v182
      %v355 = vunpack.c.l.b16 %v183
      %v356 = vunpack.c.l.b16 %v184
      %v357 = vunpack.c.h.b16 %v184
      %v358 = vunpack.c.l.b16 %v185
      %v359 = vunpack.c.l.b16 %v186
      %v360 = vunpack.c.h.b16 %v186
      %v361 = vunpack.c.l.b16 %v187
      %v362 = vunpack.c.l.b16 %v188
      %v363 = vunpack.c.h.b16 %v188
      %v364 = vunpack.c.l.b16 %v189
      %v365 = vunpack.c.l.b16 %v190
      %v366 = vunpack.c.h.b16 %v190
      %v367 = vunpack.c.l.b16 %v191
      %v368 = vunpack.c.l.b16 %v192
      %v369 = vunpack.c.h.b16 %v192
      %v370 = vunpack.c.l.b16 %v193
      %v371 = vunpack.c.l.b16 %v194
      %v372 = vunpack.c.h.b16 %v194
      %v373 = vunpack.c.l.b16 %v195
      %v374 = vunpack.c.l.b16 %v196
      %v375 = vunpack.c.h.b16 %v196
      %v376 = vunpack.c.l.b16 %v197
      %v377 = vunpack.c.l.b16 %v198
      %v378 = vunpack.c.h.b16 %v198
      %v379 = vunpack.c.l.b16 %v199
      %v380 = vunpack.c.l.b16 %v200
      %v381 = vunpack.c.h.b16 %v200
      %v382 = vunpack.c.l.b16 %v201
      %v383 = vunpack.c.l.b16 %v202
      %v384 = vunpack.c.h.b16 %v202
      %v385 = vunpack.c.l.b16 %v203
      %v386 = vunpack.c.l.b16 %v204
      %v387 = vunpack.c.h.b16 %v204
      %v388 = vunpack.c.l.b16 %v205
      %v389 = vunpack.c.l.b16 %v206
      %v390 = vunpack.c.h.b16 %v206
      %v391 = vunpack.c.l.b16 %v207
      %v392 = vunpack.c.l.b16 %v208
      %v393 = vunpack.c.h.b16 %v208
      %v394 = vunpack.c.l.b16 %v209
      %v395 = vunpack.c.l.b16 %v210
      %v396 = vunpack.c.h.b16 %v210
      %v397 = vunpack.c.l.b16 %v211
      %v398 = vunpack.c.l.b16 %v212
      %v399 = vunpack.c.h.b16 %v212
      %v400 = vunpack.c.l.b16 %v213
      %v401 = vunpack.c.l.b16 %v214
      %v402 = vunpack.c.h.b16 %v214
      %v403 = vunpack.c.l.b16 %v215
      %v404 = vunpack.c.l.b16 %v216
      %v405 = vunpack.c.h.b16 %v216
      %v406 = vunpack.c.l.b16 %v217
      %v407 = vunpack.c.l.b16 %v218
      %v408 = vunpack.c.h.b16 %v218
      %v409 = vunpack.c.l.b16 %v219
      %v410 = vunpack.c.l.b16 %v220
      %v411 = vunpack.c.h.b16 %v220
      %v412 = vunpack.c.l.b16 %v221
      %v413 = vunpack.c.l.b16 %v222
      %v414 = vunpack.c.h.b16 %v222
      %v415 = vunpack.c.l.b16 %v223
      %v416 = vunpack.c.l.b16 %v224
      %v417 = vunpack.c.h.b16 %v224
      %v418 = vunpack.c.l.b16 %v225
      %v419 = vunpack.c.l.b16 %v226
      %v420 = vunpack.c.h.b16 %v226
      %v421 = vunpack.c.l.b16 %v227
      %v422 = vunpack.c.l.b16 %v228
      %v423 = vunpack.c.h.b16 %v228
      %v424 = vunpack.c.l.b16 %v229
      %v425 = vunpack.c.l.b16 %v230
      %v426 = vunpack.c.h.b16 %v230
      %v427 = vunpack.c.l.b16 %v231
      %v428 = vunpack.c.l.b16 %v232
      %v429 = vunpack.c.h.b16 %v232
      %v430 = vunpack.c.l.b16 %v233
      %v431 = vunpack.c.l.b16 %v234
      %v432 = vunpack.c.h.b16 %v234
      %v433 = vunpack.c.l.b16 %v235
      %v434 = vunpack.c.l.b16 %v236
      %v435 = vunpack.c.h.b16 %v236
      %v436 = vunpack.c.l.b16 %v237
      %v437 = vunpack.c.l.b16 %v238
      %v438 = vunpack.c.h.b16 %v238
      %v439 = vunpack.c.l.b16 %v239
      %v440 = vunpack.c.l.b16 %v240
      %v441 = vunpack.c.h.b16 %v240
      %v442 = vunpack.c.l.b16 %v241
      %v443 = vpack.c.b16 %v350, %v347
      %v444 = vpack.c.b16 %v351, %v348
      %v445 = vpack.c.b16 %v352, %v349
      %v446 = vpack.c.b16 %v356, %v353
      %v447 = vpack.c.b16 %v357, %v354
      %v448 = vpack.c.b16 %v358, %v355
      %v449 = vpack.c.b16 %v362, %v359
      %v450 = vpack.c.b16 %v363, %v360
      %v451 = vpack.c.b16 %v364, %v361
      %v452 = vpack.c.b16 %v368, %v365
      %v453 = vpack.c.b16 %v369, %v366
      %v454 = vpack.c.b16 %v370, %v367
      %v455 = vpack.c.b16 %v374, %v371
      %v456 = vpack.c.b16 %v375, %v372
      %v457 = vpack.c.b16 %v376, %v373
      %v458 = vpack.c.b16 %v380, %v377
      %v459 = vpack.c.b16 %v381, %v378
      %v460 = vpack.c.b16 %v382, %v379
      %v461 = vpack.c.b16 %v386, %v383
      %v462 = vpack.c.b16 %v387, %v384
      %v463 = vpack.c.b16 %v388, %v385
      %v464 = vpack.c.b16 %v392, %v389
      %v465 = vpack.c.b16 %v393, %v390
      %v466 = vpack.c.b16 %v394, %v391
      %v467 = vpack.c.b16 %v398, %v395
      %v468 = vpack.c.b16 %v399, %v396
      %v469 = vpack.c.b16 %v400, %v397
      %v470 = vpack.c.b16 %v404, %v401
      %v471 = vpack.c.b16 %v405, %v402
      %v472 = vpack.c.b16 %v406, %v403
      %v473 = vpack.c.b16 %v410, %v407
      %v474 = vpack.c.b16 %v411, %v408
      %v475 = vpack.c.b16 %v412, %v409
      %v476 = vpack.c.b16 %v416, %v413
      %v477 = vpack.c.b16 %v417, %v414
      %v478 = vpack.c.b16 %v418, %v415
      %v479 = vpack.c.b16 %v422, %v419
      %v480 = vpack.c.b16 %v423, %v420
      %v481 = vpack.c.b16 %v424, %v421
      %v482 = vpack.c.b16 %v428, %v425
      %v483 = vpack.c.b16 %v429, %v426
      %v484 = vpack.c.b16 %v430, %v427
      %v485 = vpack.c.b16 %v434, %v431
      %v486 = vpack.c.b16 %v435, %v432
      %v487 = vpack.c.b16 %v436, %v433
      %v488 = vpack.c.b16 %v440, %v437
      %v489 = vpack.c.b16 %v441, %v438
      %v490 = vpack.c.b16 %v442, %v439
      %v557 = vunpack.c.l.b16 %v242
      %v558 = vunpack.c.l.b16 %v243
      %v559 = vunpack.c.l.b16 %v244
      %v560 = vunpack.c.l.b16 %v245
      %v561 = vunpack.c.l.b16 %v246
      %v562 = vunpack.c.l.b16 %v247
      %v563 = vunpack.c.l.b16 %v248
      %v564 = vunpack.c.l.b16 %v249
      %v565 = vunpack.c.l.b16 %v250
      %v566 = vunpack.c.l.b16 %v251
      %v567 = vunpack.c.l.b16 %v252
      %v568 = vunpack.c.l.b16 %v253
      %v569 = vunpack.c.l.b16 %v254
      %v570 = vunpack.c.l.b16 %v255
      %v571 = vunpack.c.l.b16 %v256
      %v572 = vunpack.c.l.b16 %v257
      %v573 = vunpack.c.l.b16 %v258
      %v574 = vunpack.c.l.b16 %v259
      %v575 = vunpack.c.l.b16 %v260
      %v576 = vunpack.c.l.b16 %v261
      %v577 = vunpack.c.l.b16 %v262
      %v578 = vunpack.c.l.b16 %v263
      %v579 = vunpack.c.l.b16 %v264
      %v580 = vunpack.c.l.b16 %v265
      %v581 = vunpack.c.l.b16 %v266
      %v582 = vunpack.c.l.b16 %v267
      %v583 = vunpack.c.l.b16 %v268
      %v584 = vunpack.c.l.b16 %v269
      %v585 = vunpack.c.l.b16 %v270
      %v586 = vunpack.c.l.b16 %v271
      %v587 = vunpack.c.l.b16 %v272
      %v588 = vunpack.c.l.b16 %v273
      %v589 = vunpack.c.l.b16 %v274
      %v590 = vunpack.c.l.b16 %v275
      %v591 = vpack.c.b16 %v558, %v557
      %v592 = vpack.c.b16 %v560, %v559
      %v593 = vpack.c.b16 %v562, %v561
      %v594 = vpack.c.b16 %v564, %v563
      %v595 = vpack.c.b16 %v566, %v565
      %v596 = vpack.c.b16 %v568, %v567
      %v597 = vpack.c.b16 %v570, %v569
      %v598 = vpack.c.b16 %v572, %v571
      %v599 = vpack.c.b16 %v574, %v573
      %v600 = vpack.c.b16 %v576, %v575
      %v601 = vpack.c.b16 %v578, %v577
      %v602 = vpack.c.b16 %v580, %v579
      %v603 = vpack.c.b16 %v582, %v581
      %v604 = vpack.c.b16 %v584, %v583
      %v605 = vpack.c.b16 %v586, %v585
      %v606 = vpack.c.b16 %v588, %v587
      %v607 = vpack.c.b16 %v590, %v589
      %vm624 = vcmask 113664
      %v626 = vsel %vm624, %v445, 0
      %v629 = vsel %vm624, %v448, 0
      %v632 = vsel %vm624, %v451, 0
      %v635 = vsel %vm624, %v454, 0
      %v638 = vsel %vm624, %v457, 0
      %v641 = vsel %vm624, %v460, 0
      %v644 = vsel %vm624, %v463, 0
      %v647 = vsel %vm624, %v466, 0
      %v650 = vsel %vm624, %v469, 0
      %v653 = vsel %vm624, %v472, 0
      %v656 = vsel %vm624, %v475, 0
      %v659 = vsel %vm624, %v478, 0
      %v662 = vsel %vm624, %v481, 0
      %v665 = vsel %vm624, %v484, 0
      %v668 = vsel %vm624, %v487, 0
      %v671 = vsel %vm624, %v490, 0
      %vm673 = vcmask 1046528
      %v675 = vsel %vm673, %v607, 0
      %677 = vmatprep.subr.bf16.mxu0 0
      %678 = vmatpush1.bf16.msra.mxu0 %v598
      %679 = vmatprep.subr.bf16.mxu0 0
      %680 = vmatpush1.bf16.msra.mxu0 %v597
      %681 = vmatprep.subr.bf16.mxu0 0
      %682 = vmatpush1.bf16.msra.mxu0 %v596
      %683 = vmatprep.subr.bf16.mxu0 0
      %684 = vmatpush1.bf16.msra.mxu0 %v595
      %685 = vmatprep.subr.bf16.mxu0 0
      %686 = vmatpush1.bf16.msra.mxu0 %v594
      %687 = vmatprep.subr.bf16.mxu0 0
      %688 = vmatpush1.bf16.msra.mxu0 %v593
      %689 = vmatprep.subr.bf16.mxu0 0
      %690 = vmatpush1.bf16.msra.mxu0 %v592
      %691 = vmatprep.subr.bf16.mxu0 0
      %692 = vmatpush1.bf16.msra.mxu0 %v591
      %693 = vmatprep.subr.bf16.mxu0 0
      %694 = vmatpush2.bf16.msra.mxu0 %v606
      %695 = vmatprep.subr.bf16.mxu0 0
      %696 = vmatpush2.bf16.msra.mxu0 %v605
      %697 = vmatprep.subr.bf16.mxu0 0
      %698 = vmatpush2.bf16.msra.mxu0 %v604
      %699 = vmatprep.subr.bf16.mxu0 0
      %700 = vmatpush2.bf16.msra.mxu0 %v603
      %701 = vmatprep.subr.bf16.mxu0 0
      %702 = vmatpush2.bf16.msra.mxu0 %v602
      %703 = vmatprep.subr.bf16.mxu0 0
      %704 = vmatpush2.bf16.msra.mxu0 %v601
      %705 = vmatprep.subr.bf16.mxu0 0
      %706 = vmatpush2.bf16.msra.mxu0 %v600
      %707 = vmatprep.subr.bf16.mxu0 0
      %708 = vmatpush2.bf16.msra.mxu0 %v599
      %709 = vmatprep.mubr.bf16.mxu0 %v444
      %710 = vmatmul.mubr.bf16.gmra.mxu0 %v443
      %v711 = vpop.f32.mrf.mxu0
      %v712 = vadd.f32 %v281, %v711
      %v713 = vpop.f32.mrf.mxu0
      %v714 = vpop.f32.mrf.mxu0
      %v715 = vadd.f32 %v281, %v714
      %v716 = vpop.f32.mrf.mxu0
      %717 = vmatprep.mubr.bf16.mxu0 %v447
      %718 = vmatmul.mubr.bf16.gmra.mxu0 %v446
      %v719 = vpop.f32.mrf.mxu0
      %v720 = vadd.f32 %v281, %v719
      %v721 = vpop.f32.mrf.mxu0
      %v722 = vpop.f32.mrf.mxu0
      %v723 = vadd.f32 %v281, %v722
      %v724 = vpop.f32.mrf.mxu0
      %725 = vmatprep.mubr.bf16.mxu0 %v450
      %726 = vmatmul.mubr.bf16.gmra.mxu0 %v449
      %v727 = vpop.f32.mrf.mxu0
      %v728 = vadd.f32 %v281, %v727
      %v729 = vpop.f32.mrf.mxu0
      %v730 = vpop.f32.mrf.mxu0
      %v731 = vadd.f32 %v281, %v730
      %v732 = vpop.f32.mrf.mxu0
      %733 = vmatprep.mubr.bf16.mxu0 %v453
      %734 = vmatmul.mubr.bf16.gmra.mxu0 %v452
      %v735 = vpop.f32.mrf.mxu0
      %v736 = vadd.f32 %v281, %v735
      %v737 = vpop.f32.mrf.mxu0
      %v738 = vpop.f32.mrf.mxu0
      %v739 = vadd.f32 %v281, %v738
      %v740 = vpop.f32.mrf.mxu0
      %741 = vmatprep.mubr.bf16.mxu0 %v456
      %742 = vmatmul.mubr.bf16.gmra.mxu0 %v455
      %v743 = vpop.f32.mrf.mxu0
      %v744 = vadd.f32 %v281, %v743
      %v745 = vpop.f32.mrf.mxu0
      %v746 = vpop.f32.mrf.mxu0
      %v747 = vadd.f32 %v281, %v746
      %v748 = vpop.f32.mrf.mxu0
      %749 = vmatprep.mubr.bf16.mxu0 %v459
      %750 = vmatmul.mubr.bf16.gmra.mxu0 %v458
      %v751 = vpop.f32.mrf.mxu0
      %v752 = vadd.f32 %v281, %v751
      %v753 = vpop.f32.mrf.mxu0
      %v754 = vpop.f32.mrf.mxu0
      %v755 = vadd.f32 %v281, %v754
      %v756 = vpop.f32.mrf.mxu0
      %757 = vmatprep.mubr.bf16.mxu0 %v462
      %758 = vmatmul.mubr.bf16.gmra.mxu0 %v461
      %v759 = vpop.f32.mrf.mxu0
      %v760 = vadd.f32 %v281, %v759
      %v761 = vpop.f32.mrf.mxu0
      %v762 = vpop.f32.mrf.mxu0
      %v763 = vadd.f32 %v281, %v762
      %v764 = vpop.f32.mrf.mxu0
      %765 = vmatprep.mubr.bf16.mxu0 %v465
      %766 = vmatmul.mubr.bf16.gmra.mxu0 %v464
      %v767 = vpop.f32.mrf.mxu0
      %v768 = vadd.f32 %v281, %v767
      %v769 = vpop.f32.mrf.mxu0
      %v770 = vpop.f32.mrf.mxu0
      %v771 = vadd.f32 %v281, %v770
      %v772 = vpop.f32.mrf.mxu0
      %773 = vmatprep.mubr.bf16.mxu0 %v468
      %774 = vmatmul.mubr.bf16.gmra.mxu0 %v467
      %v775 = vpop.f32.mrf.mxu0
      %v776 = vadd.f32 %v281, %v775
      %v777 = vpop.f32.mrf.mxu0
      %v778 = vpop.f32.mrf.mxu0
      %v779 = vadd.f32 %v281, %v778
      %v780 = vpop.f32.mrf.mxu0
      %781 = vmatprep.mubr.bf16.mxu0 %v471
      %782 = vmatmul.mubr.bf16.gmra.mxu0 %v470
      %v783 = vpop.f32.mrf.mxu0
      %v784 = vadd.f32 %v281, %v783
      %v785 = vpop.f32.mrf.mxu0
      %v786 = vpop.f32.mrf.mxu0
      %v787 = vadd.f32 %v281, %v786
      %v788 = vpop.f32.mrf.mxu0
      %789 = vmatprep.mubr.bf16.mxu0 %v474
      %790 = vmatmul.mubr.bf16.gmra.mxu0 %v473
      %v791 = vpop.f32.mrf.mxu0
      %v792 = vadd.f32 %v281, %v791
      %v793 = vpop.f32.mrf.mxu0
      %v794 = vpop.f32.mrf.mxu0
      %v795 = vadd.f32 %v281, %v794
      %v796 = vpop.f32.mrf.mxu0
      %797 = vmatprep.mubr.bf16.mxu0 %v477
      %798 = vmatmul.mubr.bf16.gmra.mxu0 %v476
      %v799 = vpop.f32.mrf.mxu0
      %v800 = vadd.f32 %v281, %v799
      %v801 = vpop.f32.mrf.mxu0
      %v802 = vpop.f32.mrf.mxu0
      %v803 = vadd.f32 %v281, %v802
      %v804 = vpop.f32.mrf.mxu0
      %805 = vmatprep.mubr.bf16.mxu0 %v480
      %806 = vmatmul.mubr.bf16.gmra.mxu0 %v479
      %v807 = vpop.f32.mrf.mxu0
      %v808 = vadd.f32 %v281, %v807
      %v809 = vpop.f32.mrf.mxu0
      %v810 = vpop.f32.mrf.mxu0
      %v811 = vadd.f32 %v281, %v810
      %v812 = vpop.f32.mrf.mxu0
      %813 = vmatprep.mubr.bf16.mxu0 %v483
      %814 = vmatmul.mubr.bf16.gmra.mxu0 %v482
      %v815 = vpop.f32.mrf.mxu0
      %v816 = vadd.f32 %v281, %v815
      %v817 = vpop.f32.mrf.mxu0
      %v818 = vpop.f32.mrf.mxu0
      %v819 = vadd.f32 %v281, %v818
      %v820 = vpop.f32.mrf.mxu0
      %821 = vmatprep.mubr.bf16.mxu0 %v486
      %822 = vmatmul.mubr.bf16.gmra.mxu0 %v485
      %v823 = vpop.f32.mrf.mxu0
      %v824 = vadd.f32 %v281, %v823
      %v825 = vpop.f32.mrf.mxu0
      %v826 = vpop.f32.mrf.mxu0
      %v827 = vadd.f32 %v281, %v826
      %v828 = vpop.f32.mrf.mxu0
      %829 = vmatprep.mubr.bf16.mxu0 %v489
      %830 = vmatmul.mubr.bf16.gmra.mxu0 %v488
      %v831 = vpop.f32.mrf.mxu0
      %v832 = vadd.f32 %v281, %v831
      %v833 = vpop.f32.mrf.mxu0
      %v834 = vpop.f32.mrf.mxu0
      %v835 = vadd.f32 %v281, %v834
      %v836 = vpop.f32.mrf.mxu0
      %837 = vdwg.mxu0
      %838 = vmatprep.subr.bf16.mxu0 0
      %839 = vmatpush1.bf16.msra.mxu0 0
      %840 = vmatprep.subr.bf16.mxu0 0
      %841 = vmatpush1.bf16.msra.mxu0 0
      %842 = vmatprep.subr.bf16.mxu0 0
      %843 = vmatpush1.bf16.msra.mxu0 0
      %844 = vmatprep.subr.bf16.mxu0 0
      %845 = vmatpush1.bf16.msra.mxu0 0
      %846 = vmatprep.subr.bf16.mxu0 0
      %847 = vmatpush1.bf16.msra.mxu0 0
      %848 = vmatprep.subr.bf16.mxu0 0
      %849 = vmatpush1.bf16.msra.mxu0 0
      %850 = vmatprep.subr.bf16.mxu0 0
      %851 = vmatpush1.bf16.msra.mxu0 0
      %852 = vmatprep.subr.bf16.mxu0 0
      %853 = vmatpush1.bf16.msra.mxu0 %v675
      %854 = vmatprep.subr.bf16.mxu0 0
      %855 = vmatpush2.bf16.msra.mxu0 0
      %856 = vmatprep.subr.bf16.mxu0 0
      %857 = vmatpush2.bf16.msra.mxu0 0
      %858 = vmatprep.subr.bf16.mxu0 0
      %859 = vmatpush2.bf16.msra.mxu0 0
      %860 = vmatprep.subr.bf16.mxu0 0
      %861 = vmatpush2.bf16.msra.mxu0 0
      %862 = vmatprep.subr.bf16.mxu0 0
      %863 = vmatpush2.bf16.msra.mxu0 0
      %864 = vmatprep.subr.bf16.mxu0 0
      %865 = vmatpush2.bf16.msra.mxu0 0
      %866 = vmatprep.subr.bf16.mxu0 0
      %867 = vmatpush2.bf16.msra.mxu0 0
      %868 = vmatprep.subr.bf16.mxu0 0
      %869 = vmatpush2.bf16.msra.mxu0 0
      %870 = vmatprep.mubr.bf16.mxu0 0
      %871 = vmatmul.mubr.bf16.gmra.mxu0 %v626
      %v872 = vpop.f32.mrf.mxu0
      %v873 = vadd.f32 %v712, %v872
      %v874 = vpop.f32.mrf.mxu0
      %v875 = vpop.f32.mrf.mxu0
      %v876 = vadd.f32 %v715, %v875
      %v877 = vpop.f32.mrf.mxu0
      %878 = vmatprep.mubr.bf16.mxu0 0
      %879 = vmatmul.mubr.bf16.gmra.mxu0 %v629
      %v880 = vpop.f32.mrf.mxu0
      %v881 = vadd.f32 %v720, %v880
      %v882 = vpop.f32.mrf.mxu0
      %v883 = vpop.f32.mrf.mxu0
      %v884 = vadd.f32 %v723, %v883
      %v885 = vpop.f32.mrf.mxu0
      %886 = vmatprep.mubr.bf16.mxu0 0
      %887 = vmatmul.mubr.bf16.gmra.mxu0 %v632
      %v888 = vpop.f32.mrf.mxu0
      %v889 = vadd.f32 %v728, %v888
      %v890 = vpop.f32.mrf.mxu0
      %v891 = vpop.f32.mrf.mxu0
      %v892 = vadd.f32 %v731, %v891
      %v893 = vpop.f32.mrf.mxu0
      %894 = vmatprep.mubr.bf16.mxu0 0
      %895 = vmatmul.mubr.bf16.gmra.mxu0 %v635
      %v896 = vpop.f32.mrf.mxu0
      %v897 = vadd.f32 %v736, %v896
      %v898 = vpop.f32.mrf.mxu0
      %v899 = vpop.f32.mrf.mxu0
      %v900 = vadd.f32 %v739, %v899
      %v901 = vpop.f32.mrf.mxu0
      %902 = vmatprep.mubr.bf16.mxu0 0
      %903 = vmatmul.mubr.bf16.gmra.mxu0 %v638
      %v904 = vpop.f32.mrf.mxu0
      %v905 = vadd.f32 %v744, %v904
      %v906 = vpop.f32.mrf.mxu0
      %v907 = vpop.f32.mrf.mxu0
      %v908 = vadd.f32 %v747, %v907
      %v909 = vpop.f32.mrf.mxu0
      %910 = vmatprep.mubr.bf16.mxu0 0
      %911 = vmatmul.mubr.bf16.gmra.mxu0 %v641
      %v912 = vpop.f32.mrf.mxu0
      %v913 = vadd.f32 %v752, %v912
      %v914 = vpop.f32.mrf.mxu0
      %v915 = vpop.f32.mrf.mxu0
      %v916 = vadd.f32 %v755, %v915
      %v917 = vpop.f32.mrf.mxu0
      %918 = vmatprep.mubr.bf16.mxu0 0
      %919 = vmatmul.mubr.bf16.gmra.mxu0 %v644
      %v920 = vpop.f32.mrf.mxu0
      %v921 = vadd.f32 %v760, %v920
      %v922 = vpop.f32.mrf.mxu0
      %v923 = vpop.f32.mrf.mxu0
      %v924 = vadd.f32 %v763, %v923
      %v925 = vpop.f32.mrf.mxu0
      %926 = vmatprep.mubr.bf16.mxu0 0
      %927 = vmatmul.mubr.bf16.gmra.mxu0 %v647
      %v928 = vpop.f32.mrf.mxu0
      %v929 = vadd.f32 %v768, %v928
      %v930 = vpop.f32.mrf.mxu0
      %v931 = vpop.f32.mrf.mxu0
      %v932 = vadd.f32 %v771, %v931
      %v933 = vpop.f32.mrf.mxu0
      %934 = vmatprep.mubr.bf16.mxu0 0
      %935 = vmatmul.mubr.bf16.gmra.mxu0 %v650
      %v936 = vpop.f32.mrf.mxu0
      %v937 = vadd.f32 %v776, %v936
      %v938 = vpop.f32.mrf.mxu0
      %v939 = vpop.f32.mrf.mxu0
      %v940 = vadd.f32 %v779, %v939
      %v941 = vpop.f32.mrf.mxu0
      %942 = vmatprep.mubr.bf16.mxu0 0
      %943 = vmatmul.mubr.bf16.gmra.mxu0 %v653
      %v944 = vpop.f32.mrf.mxu0
      %v945 = vadd.f32 %v784, %v944
      %v946 = vpop.f32.mrf.mxu0
      %v947 = vpop.f32.mrf.mxu0
      %v948 = vadd.f32 %v787, %v947
      %v949 = vpop.f32.mrf.mxu0
      %950 = vmatprep.mubr.bf16.mxu0 0
      %951 = vmatmul.mubr.bf16.gmra.mxu0 %v656
      %v952 = vpop.f32.mrf.mxu0
      %v953 = vadd.f32 %v792, %v952
      %v954 = vpop.f32.mrf.mxu0
      %v955 = vpop.f32.mrf.mxu0
      %v956 = vadd.f32 %v795, %v955
      %v957 = vpop.f32.mrf.mxu0
      %958 = vmatprep.mubr.bf16.mxu0 0
      %959 = vmatmul.mubr.bf16.gmra.mxu0 %v659
      %v960 = vpop.f32.mrf.mxu0
      %v961 = vadd.f32 %v800, %v960
      %v962 = vpop.f32.mrf.mxu0
      %v963 = vpop.f32.mrf.mxu0
      %v964 = vadd.f32 %v803, %v963
      %v965 = vpop.f32.mrf.mxu0
      %966 = vmatprep.mubr.bf16.mxu0 0
      %967 = vmatmul.mubr.bf16.gmra.mxu0 %v662
      %v968 = vpop.f32.mrf.mxu0
      %v969 = vadd.f32 %v808, %v968
      %v970 = vpop.f32.mrf.mxu0
      %v971 = vpop.f32.mrf.mxu0
      %v972 = vadd.f32 %v811, %v971
      %v973 = vpop.f32.mrf.mxu0
      %974 = vmatprep.mubr.bf16.mxu0 0
      %975 = vmatmul.mubr.bf16.gmra.mxu0 %v665
      %v976 = vpop.f32.mrf.mxu0
      %v977 = vadd.f32 %v816, %v976
      %v978 = vpop.f32.mrf.mxu0
      %v979 = vpop.f32.mrf.mxu0
      %v980 = vadd.f32 %v819, %v979
      %v981 = vpop.f32.mrf.mxu0
      %982 = vmatprep.mubr.bf16.mxu0 0
      %983 = vmatmul.mubr.bf16.gmra.mxu0 %v668
      %v984 = vpop.f32.mrf.mxu0
      %v985 = vadd.f32 %v824, %v984
      %v986 = vpop.f32.mrf.mxu0
      %v987 = vpop.f32.mrf.mxu0
      %v988 = vadd.f32 %v827, %v987
      %v989 = vpop.f32.mrf.mxu0
      %990 = vmatprep.mubr.bf16.mxu0 0
      %991 = vmatmul.mubr.bf16.gmra.mxu0 %v671
      %v992 = vpop.f32.mrf.mxu0
      %v993 = vadd.f32 %v832, %v992
      %v994 = vpop.f32.mrf.mxu0
      %v995 = vpop.f32.mrf.mxu0
      %v996 = vadd.f32 %v835, %v995
      %v997 = vpop.f32.mrf.mxu0
      %998 = vdwg.mxu0
      %v999 = vmax.f32 %v873, 0.0
      %v1000 = vmax.f32 %v876, 0.0
      %v1001 = vmax.f32 %v881, 0.0
      %v1002 = vmax.f32 %v884, 0.0
      %v1003 = vmax.f32 %v889, 0.0
      %v1004 = vmax.f32 %v892, 0.0
      %v1005 = vmax.f32 %v897, 0.0
      %v1006 = vmax.f32 %v900, 0.0
      %v1007 = vmax.f32 %v905, 0.0
      %v1008 = vmax.f32 %v908, 0.0
      %v1009 = vmax.f32 %v913, 0.0
      %v1010 = vmax.f32 %v916, 0.0
      %v1011 = vmax.f32 %v921, 0.0
      %v1012 = vmax.f32 %v924, 0.0
      %v1013 = vmax.f32 %v929, 0.0
      %v1014 = vmax.f32 %v932, 0.0
      %v1015 = vmax.f32 %v937, 0.0
      %v1016 = vmax.f32 %v940, 0.0
      %v1017 = vmax.f32 %v945, 0.0
      %v1018 = vmax.f32 %v948, 0.0
      %v1019 = vmax.f32 %v953, 0.0
      %v1020 = vmax.f32 %v956, 0.0
      %v1021 = vmax.f32 %v961, 0.0
      %v1022 = vmax.f32 %v964, 0.0
      %v1023 = vmax.f32 %v969, 0.0
      %v1024 = vmax.f32 %v972, 0.0
      %v1025 = vmax.f32 %v977, 0.0
      %v1026 = vmax.f32 %v980, 0.0
      %v1027 = vmax.f32 %v985, 0.0
      %v1028 = vmax.f32 %v988, 0.0
      %v1029 = vmax.f32 %v993, 0.0
      %v1030 = vmax.f32 %v996, 0.0
      %v1031 = vpack.c.bf16 %v1000, %v999
      %v1032 = vpack.c.bf16 %v1002, %v1001
      %v1033 = vpack.c.bf16 %v1004, %v1003
      %v1034 = vpack.c.bf16 %v1006, %v1005
      %v1035 = vpack.c.bf16 %v1008, %v1007
      %v1036 = vpack.c.bf16 %v1010, %v1009
      %v1037 = vpack.c.bf16 %v1012, %v1011
      %v1038 = vpack.c.bf16 %v1014, %v1013
      %v1039 = vpack.c.bf16 %v1016, %v1015
      %v1040 = vpack.c.bf16 %v1018, %v1017
      %v1041 = vpack.c.bf16 %v1020, %v1019
      %v1042 = vpack.c.bf16 %v1022, %v1021
      %v1043 = vpack.c.bf16 %v1024, %v1023
      %v1044 = vpack.c.bf16 %v1026, %v1025
      %v1045 = vpack.c.bf16 %v1028, %v1027
      %v1046 = vpack.c.bf16 %v1030, %v1029
      %v1063 = vunpack.c.l.b16 %v1031
      %v1064 = vunpack.c.h.b16 %v1031
      %v1065 = vunpack.c.l.b16 %v1032
      %v1066 = vunpack.c.h.b16 %v1032
      %v1067 = vunpack.c.l.b16 %v1033
      %v1068 = vunpack.c.h.b16 %v1033
      %v1069 = vunpack.c.l.b16 %v1034
      %v1070 = vunpack.c.h.b16 %v1034
      %v1071 = vunpack.c.l.b16 %v1035
      %v1072 = vunpack.c.h.b16 %v1035
      %v1073 = vunpack.c.l.b16 %v1036
      %v1074 = vunpack.c.h.b16 %v1036
      %v1075 = vunpack.c.l.b16 %v1037
      %v1076 = vunpack.c.h.b16 %v1037
      %v1077 = vunpack.c.l.b16 %v1038
      %v1078 = vunpack.c.h.b16 %v1038
      %v1079 = vunpack.c.l.b16 %v1039
      %v1080 = vunpack.c.h.b16 %v1039
      %v1081 = vunpack.c.l.b16 %v1040
      %v1082 = vunpack.c.h.b16 %v1040
      %v1083 = vunpack.c.l.b16 %v1041
      %v1084 = vunpack.c.h.b16 %v1041
      %v1085 = vunpack.c.l.b16 %v1042
      %v1086 = vunpack.c.h.b16 %v1042
      %v1087 = vunpack.c.l.b16 %v1043
      %v1088 = vunpack.c.h.b16 %v1043
      %v1089 = vunpack.c.l.b16 %v1044
      %v1090 = vunpack.c.h.b16 %v1044
      %v1091 = vunpack.c.l.b16 %v1045
      %v1092 = vunpack.c.h.b16 %v1045
      %v1093 = vunpack.c.l.b16 %v1046
      %v1094 = vunpack.c.h.b16 %v1046
      %v1095 = vpack.c.b16 %v1063, %v1063
      %v1096 = vpack.c.b16 %v1064, %v1064
      %v1097 = vpack.c.b16 %v1065, %v1065
      %v1098 = vpack.c.b16 %v1066, %v1066
      %v1099 = vpack.c.b16 %v1067, %v1067
      %v1100 = vpack.c.b16 %v1068, %v1068
      %v1101 = vpack.c.b16 %v1069, %v1069
      %v1102 = vpack.c.b16 %v1070, %v1070
      %v1103 = vpack.c.b16 %v1071, %v1071
      %v1104 = vpack.c.b16 %v1072, %v1072
      %v1105 = vpack.c.b16 %v1073, %v1073
      %v1106 = vpack.c.b16 %v1074, %v1074
      %v1107 = vpack.c.b16 %v1075, %v1075
      %v1108 = vpack.c.b16 %v1076, %v1076
      %v1109 = vpack.c.b16 %v1077, %v1077
      %v1110 = vpack.c.b16 %v1078, %v1078
      %v1111 = vpack.c.b16 %v1079, %v1079
      %v1112 = vpack.c.b16 %v1080, %v1080
      %v1113 = vpack.c.b16 %v1081, %v1081
      %v1114 = vpack.c.b16 %v1082, %v1082
      %v1115 = vpack.c.b16 %v1083, %v1083
      %v1116 = vpack.c.b16 %v1084, %v1084
      %v1117 = vpack.c.b16 %v1085, %v1085
      %v1118 = vpack.c.b16 %v1086, %v1086
      %v1119 = vpack.c.b16 %v1087, %v1087
      %v1120 = vpack.c.b16 %v1088, %v1088
      %v1121 = vpack.c.b16 %v1089, %v1089
      %v1122 = vpack.c.b16 %v1090, %v1090
      %v1123 = vpack.c.b16 %v1091, %v1091
      %v1124 = vpack.c.b16 %v1092, %v1092
      %v1125 = vpack.c.b16 %v1093, %v1093
      %v1126 = vpack.c.b16 %v1094, %v1094
      %vm1159 = vcmask 486400
      %1160 = vst.msk [vmem:[%s175] sm:$0xf] %vm1159, %v1095
      %1161 = vst.msk [vmem:[%s175 + $0x4] sm:$0xf] %vm1159, %v1096
      %1162 = vst.msk [vmem:[%s175 + $0x8] sm:$0xf] %vm1159, %v1097
      %1163 = vst.msk [vmem:[%s175 + $0xc] sm:$0xf] %vm1159, %v1098
      %1164 = vst.msk [vmem:[%s175 + $0x10] sm:$0xf] %vm1159, %v1099
      %1165 = vst.msk [vmem:[%s175 + $0x14] sm:$0xf] %vm1159, %v1100
      %1166 = vst.msk [vmem:[%s175 + $0x18] sm:$0xf] %vm1159, %v1101
      %1167 = vst.msk [vmem:[%s175 + $0x1c] sm:$0xf] %vm1159, %v1102
      %1168 = vst.msk [vmem:[%s175 + $0x20] sm:$0xf] %vm1159, %v1103
      %1169 = vst.msk [vmem:[%s175 + $0x24] sm:$0xf] %vm1159, %v1104
      %1170 = vst.msk [vmem:[%s175 + $0x28] sm:$0xf] %vm1159, %v1105
      %1171 = vst.msk [vmem:[%s175 + $0x2c] sm:$0xf] %vm1159, %v1106
      %1172 = vst.msk [vmem:[%s175 + $0x30] sm:$0xf] %vm1159, %v1107
      %1173 = vst.msk [vmem:[%s175 + $0x34] sm:$0xf] %vm1159, %v1108
      %1174 = vst.msk [vmem:[%s175 + $0x38] sm:$0xf] %vm1159, %v1109
      %1175 = vst.msk [vmem:[%s175 + $0x3c] sm:$0xf] %vm1159, %v1110
      %1176 = vst.msk [vmem:[%s175 + $0x40] sm:$0xf] %vm1159, %v1111
      %1177 = vst.msk [vmem:[%s175 + $0x44] sm:$0xf] %vm1159, %v1112
      %1178 = vst.msk [vmem:[%s175 + $0x48] sm:$0xf] %vm1159, %v1113
      %1179 = vst.msk [vmem:[%s175 + $0x4c] sm:$0xf] %vm1159, %v1114
      %1180 = vst.msk [vmem:[%s175 + $0x50] sm:$0xf] %vm1159, %v1115
      %1181 = vst.msk [vmem:[%s175 + $0x54] sm:$0xf] %vm1159, %v1116
      %1182 = vst.msk [vmem:[%s175 + $0x58] sm:$0xf] %vm1159, %v1117
      %1183 = vst.msk [vmem:[%s175 + $0x5c] sm:$0xf] %vm1159, %v1118
      %1184 = vst.msk [vmem:[%s175 + $0x60] sm:$0xf] %vm1159, %v1119
      %1185 = vst.msk [vmem:[%s175 + $0x64] sm:$0xf] %vm1159, %v1120
      %1186 = vst.msk [vmem:[%s175 + $0x68] sm:$0xf] %vm1159, %v1121
      %1187 = vst.msk [vmem:[%s175 + $0x6c] sm:$0xf] %vm1159, %v1122
      %1188 = vst.msk [vmem:[%s175 + $0x70] sm:$0xf] %vm1159, %v1123
      %1189 = vst.msk [vmem:[%s175 + $0x74] sm:$0xf] %vm1159, %v1124
      %1190 = vst.msk [vmem:[%s175 + $0x78] sm:$0xf] %vm1159, %v1125
      %1191 = vst.msk [vmem:[%s175 + $0x7c] sm:$0xf] %vm1159, %v1126
      %s1192 = smul.u32 32, %s14
      %p1193 = scmp.lt.s32.totalorder %s1192, 63
      %s1194 = scalar_select %p1193, %s1192, 63
      %s1195 = smul.addr %s1194, 4
      %s1196 = scalar_lea.vmem %s3, %s1195
      // Predicated region
      $region33: #{_lambda_.17} parent=31 // pred_check
        %p1197 = pneg %p100
      $region34: #{_lambda_.17} parent=31 // pred_check_branch
        %1199 = sbr.rel (%p1197) target = $region36
      $region35: #{_lambda_.17} parent=31 // pred_region
        %s1200 = smul.u32 32, %s14
      $region36: #{_lambda_.17} parent=31 // pred_fallthru
        _
    $region32: #{_lambda_.17} parent=5 // pred_fallthru
      _
    %p1201 = scmp.le.s32.totalorder 2, %s9
    // Predicated region
    $region37: #{_lambda_.17} parent=5 // pred_check
      %p1202 = pneg %p1201
    $region38: #{_lambda_.17} parent=5 // pred_check_branch
      %1204 = sbr.rel (%p1202) target = $region40
    $region39: #{_lambda_.17} parent=5 // pred_region
      %s1205 = ssub.s32 %s9, 2
      // Predicated region
      $region41: #{_lambda_.17} parent=39 // pred_check
        %p1206 = pneg %p106
      $region42: #{_lambda_.17} parent=39 // pred_check_branch
        %1208 = sbr.rel (%p1206) target = $region44
      $region43: #{_lambda_.17} parent=39 // pred_region
        %s1209 = smul.u32 32, %s15
        %p1210 = scmp.lt.s32.totalorder %s1209, 63
        %s1211 = scalar_select %p1210, %s1209, 63
        %s1212 = smul.addr %s1211, 4
        %s1213 = scalar_lea.vmem %s3, %s1212
      $region44: #{_lambda_.17} parent=39 // pred_fallthru
        _
    $region40: #{_lambda_.17} parent=5 // pred_fallthru
      _
  $region6: #{_lambda_.17} parent=0 // loop_footer
    %s13 = sadd.s32 1, %s9
  $region7: #{_lambda_.17} parent=0 // loop_footer_branch
    %8 = sbr.rel target = $region3
  $region8: #{_lambda_.17} parent=0 // loop_exit
    _

// kernel: _lambda_.19
$region0: #{_lambda_.19}
  #allocation0 [shape = 'u32[]', space=smem, size = 0x4, offset = 0x4, fixed_abs, tag = 'smem constant byte address 0x4 - core index']
  #allocation1 [shape = 'u32[144,128]{1,0:T(1,128)}', space=vmem, size = 0x12000, scoped, tag = 'internal scratch']
  %s0 = inlined_call_operand.vmem [shape: bf16[512,30], index: 0, kind: input, shape index: {}]
  %s1 = inlined_call_operand.vmem [shape: bf16[30,60], index: 1, kind: input, shape index: {}]
  %s2 = inlined_call_operand.vmem [shape: f32[1,60], index: 2, kind: input, shape index: {}]
  %s3 = inlined_call_operand.vmem [shape: bf16[512,60], index: 3, kind: output, shape index: {}]
  %s4 = sld [smem:[#allocation0]]
  $region45: #{_lambda_.19} parent=0
    _
  %s6 = ssub.s32 1, %s4
  %s7 = scalar_select 0, %s6, %s4
  loop: start=0, step=1, limit=4
  $region2: #{_lambda_.19} parent=0 // loop_pre_header
    _
  $region3: #{_lambda_.19} parent=0 // loop_header
    %s9 = sphi 0, %s13
    %p10 = scmp.ge.s32.totalorder %s9, 4
    %s19 = sphi 0, %s21
    %s22 = sphi 0, %s19
    %s23 = sphi 0, %s22
    %s39 = sphi 0, %s23
    %s43 = sphi 0, %s43
    %s45 = sphi 0, %s43
    %s46 = sphi 0, %s45
    %s60 = sphi 0, %s46
    %s64 = sphi 0, %s64
    %s66 = sphi 0, %s64
    %s67 = sphi 0, %s66
    %s81 = sphi 0, %s67
    %s87 = sphi 0, %s89
    %s90 = sphi 0, %s87
    %s91 = sphi 0, %s90
    %s107 = sphi 0, %s91
  $region4: #{_lambda_.19} parent=0 // loop_header_branch
    %12 = sbr.rel (%p10) target = $region8
  $region5: #{_lambda_.19} parent=0 // loop_body
    %s14 = ssub.s32 %s9, 1
    %s15 = ssub.s32 %s9, 2
    %s16 = sadd.s32 %s9, 1
    %s17 = ssub.s32 %s9, %s16
    %p18 = scmp.eq.s32.totalorder %s17, 0
    %s20 = sadd.s32 %s19, 1
    %s21 = scalar_select %p18, %s19, %s20
    %p24 = pneg %p18
    %p25 = scmp.eq.s32.totalorder %s9, 1
    %p26 = por %p24, %p25
    %p27 = scmp.ne.s32.totalorder %s19, %s22
    %p28 = scmp.eq.s32.totalorder %s9, 0
    %p29 = por %p27, %p28
    %p30 = scmp.ne.s32.totalorder %s19, %s22
    %p31 = scmp.eq.s32.totalorder %s14, 1
    %p32 = por %p30, %p31
    %p33 = scmp.ne.s32.totalorder %s22, %s23
    %p34 = scmp.eq.s32.totalorder %s14, 0
    %p35 = por %p33, %p34
    %p36 = scmp.ne.s32.totalorder %s22, %s23
    %p37 = scmp.eq.s32.totalorder %s15, 1
    %p38 = por %p36, %p37
    %p40 = scmp.ne.s32.totalorder %s23, %s39
    %p41 = scmp.eq.s32.totalorder %s15, 0
    %p42 = por %p40, %p41
    %s44 = sadd.s32 %s43, 1
    %p47 = scmp.eq.s32.totalorder %s9, 1
    %p48 = scmp.ne.s32.totalorder %s43, %s45
    %p49 = scmp.eq.s32.totalorder %s9, 0
    %p50 = por %p48, %p49
    %p51 = scmp.ne.s32.totalorder %s43, %s45
    %p52 = scmp.eq.s32.totalorder %s14, 1
    %p53 = por %p51, %p52
    %p54 = scmp.ne.s32.totalorder %s45, %s46
    %p55 = scmp.eq.s32.totalorder %s14, 0
    %p56 = por %p54, %p55
    %p57 = scmp.ne.s32.totalorder %s45, %s46
    %p58 = scmp.eq.s32.totalorder %s15, 1
    %p59 = por %p57, %p58
    %p61 = scmp.ne.s32.totalorder %s46, %s60
    %p62 = scmp.eq.s32.totalorder %s15, 0
    %p63 = por %p61, %p62
    %s65 = sadd.s32 %s64, 1
    %p68 = scmp.eq.s32.totalorder %s9, 1
    %p69 = scmp.ne.s32.totalorder %s64, %s66
    %p70 = scmp.eq.s32.totalorder %s9, 0
    %p71 = por %p69, %p70
    %p72 = scmp.ne.s32.totalorder %s64, %s66
    %p73 = scmp.eq.s32.totalorder %s14, 1
    %p74 = por %p72, %p73
    %p75 = scmp.ne.s32.totalorder %s66, %s67
    %p76 = scmp.eq.s32.totalorder %s14, 0
    %p77 = por %p75, %p76
    %p78 = scmp.ne.s32.totalorder %s66, %s67
    %p79 = scmp.eq.s32.totalorder %s15, 1
    %p80 = por %p78, %p79
    %p82 = scmp.ne.s32.totalorder %s67, %s81
    %p83 = scmp.eq.s32.totalorder %s15, 0
    %p84 = por %p82, %p83
    %s85 = ssub.s32 %s9, %s16
    %p86 = scmp.eq.s32.totalorder %s85, 0
    %s88 = sadd.s32 %s87, 1
    %s89 = scalar_select %p86, %s87, %s88
    %p92 = pneg %p86
    %p93 = scmp.eq.s32.totalorder %s9, 1
    %p94 = por %p92, %p93
    %p95 = scmp.ne.s32.totalorder %s87, %s90
    %p96 = scmp.eq.s32.totalorder %s9, 0
    %p97 = por %p95, %p96
    %p98 = scmp.ne.s32.totalorder %s87, %s90
    %p99 = scmp.eq.s32.totalorder %s14, 1
    %p100 = por %p98, %p99
    %p101 = scmp.ne.s32.totalorder %s90, %s91
    %p102 = scmp.eq.s32.totalorder %s14, 0
    %p103 = por %p101, %p102
    %p104 = scmp.ne.s32.totalorder %s90, %s91
    %p105 = scmp.eq.s32.totalorder %s15, 1
    %p106 = por %p104, %p105
    %p108 = scmp.ne.s32.totalorder %s91, %s107
    %p109 = scmp.eq.s32.totalorder %s15, 0
    %p110 = por %p108, %p109
    %p111 = scmp.le.s32.totalorder 1, %s9
    %p112 = scmp.lt.s32.totalorder %s9, 3
    %p113 = pnand %p111, %p112
    %p114 = pneg %p113
    // Predicated region
    $region9: #{_lambda_.19} parent=5 // pred_check
      _
    $region10: #{_lambda_.19} parent=5 // pred_check_branch
      %116 = sbr.rel (%p113) target = $region12
    $region11: #{_lambda_.19} parent=5 // pred_region
      %s117 = ssub.s32 %s9, 1
      // Predicated region
      $region13: #{_lambda_.19} parent=11 // pred_check
        %p118 = pneg %p56
      $region14: #{_lambda_.19} parent=11 // pred_check_branch
        %120 = sbr.rel (%p118) target = $region16
      $region15: #{_lambda_.19} parent=11 // pred_region
        _
      $region16: #{_lambda_.19} parent=11 // pred_fallthru
        _
      // Predicated region
      $region17: #{_lambda_.19} parent=11 // pred_check
        %p121 = pneg %p77
      $region18: #{_lambda_.19} parent=11 // pred_check_branch
        %123 = sbr.rel (%p121) target = $region20
      $region19: #{_lambda_.19} parent=11 // pred_region
        _
      $region20: #{_lambda_.19} parent=11 // pred_fallthru
        _
    $region12: #{_lambda_.19} parent=5 // pred_fallthru
      _
    %p124 = scmp.lt.s32.totalorder %s9, 2
    // Predicated region
    $region21: #{_lambda_.19} parent=5 // pred_check
      %p125 = pneg %p124
    $region22: #{_lambda_.19} parent=5 // pred_check_branch
      %127 = sbr.rel (%p125) target = $region24
    $region23: #{_lambda_.19} parent=5 // pred_region
      // Predicated region
      $region25: #{_lambda_.19} parent=23 // pred_check
        %p128 = pneg %p29
      $region26: #{_lambda_.19} parent=23 // pred_check_branch
        %130 = sbr.rel (%p128) target = $region28
      $region27: #{_lambda_.19} parent=23 // pred_region
        %s131 = smul.u32 32, %s9
        %p132 = scmp.lt.s32.totalorder %s131, 63
        %s133 = scalar_select %p132, %s131, 63
        %s134 = smul.addr %s133, 4
        %s135 = scalar_lea.vmem %s0, %s134
        %s136 = smul.u32 32, %s9
      $region28: #{_lambda_.19} parent=23 // pred_fallthru
        _
    $region24: #{_lambda_.19} parent=5 // pred_fallthru
      _
    %p137 = scmp.le.s32.totalorder 1, %s9
    %p138 = scmp.lt.s32.totalorder %s9, 3
    %p139 = pnand %p137, %p138
    %p140 = pneg %p139
    // Predicated region
    $region29: #{_lambda_.19} parent=5 // pred_check
      _
    $region30: #{_lambda_.19} parent=5 // pred_check_branch
      %142 = sbr.rel (%p139) target = $region32
    $region31: #{_lambda_.19} parent=5 // pred_region
      %s143 = ssub.s32 %s9, 1
      %s144 = smul.u32 32, %s14
      %p145 = scmp.lt.s32.totalorder %s144, 63
      %s146 = scalar_select %p145, %s144, 63
      %s147 = smul.addr %s146, 4
      %s148 = scalar_lea.vmem %s0, %s147
      %p149 = pneg %p35
      %p150 = pneg %p32
      %p151 = pneg %p56
      %p152 = pneg %p53
      %p153 = pneg %p77
      %p154 = pneg %p74
      %p155 = pneg %p103
      %p156 = pneg %p100
      %s157 = smul.u32 32, %s14
      %p158 = scmp.lt.s32.totalorder %s157, 63
      %s159 = scalar_select %p158, %s157, 63
      %s160 = smul.addr %s159, 4
      %s161 = scalar_lea.vmem %s3, %s160
      %s162 = smul.u32 32, %s14
      %p163 = scmp.lt.s32.totalorder %s162, 63
      %s164 = scalar_select %p163, %s162, 63
      %s165 = smul.addr %s164, 4
      %s166 = scalar_lea.vmem %s0, %s165
      %s167 = smul.u32 32, %s14
      %s168 = smul.u32 32, %s14
      %p169 = scmp.lt.s32.totalorder %s168, 63
      %s170 = scalar_select %p169, %s168, 63
      %s171 = smul.addr %s170, 4
      %s172 = scalar_lea.vmem %s3, %s171
      %s173 = smul.u32 32, %s14
      %v175 = vld [vmem:[%s166] sm:$0xf]
      %v176 = vld [vmem:[%s166 + $0x4] sm:$0xf]
      %v177 = vld [vmem:[%s166 + $0x8] sm:$0xf]
      %v178 = vld [vmem:[%s166 + $0xc] sm:$0xf]
      %v179 = vld [vmem:[%s166 + $0x10] sm:$0xf]
      %v180 = vld [vmem:[%s166 + $0x14] sm:$0xf]
      %v181 = vld [vmem:[%s166 + $0x18] sm:$0xf]
      %v182 = vld [vmem:[%s166 + $0x1c] sm:$0xf]
      %v183 = vld [vmem:[%s166 + $0x20] sm:$0xf]
      %v184 = vld [vmem:[%s166 + $0x24] sm:$0xf]
      %v185 = vld [vmem:[%s166 + $0x28] sm:$0xf]
      %v186 = vld [vmem:[%s166 + $0x2c] sm:$0xf]
      %v187 = vld [vmem:[%s166 + $0x30] sm:$0xf]
      %v188 = vld [vmem:[%s166 + $0x34] sm:$0xf]
      %v189 = vld [vmem:[%s166 + $0x38] sm:$0xf]
      %v190 = vld [vmem:[%s166 + $0x3c] sm:$0xf]
      %v191 = vld [vmem:[%s166 + $0x40] sm:$0xf]
      %v192 = vld [vmem:[%s166 + $0x44] sm:$0xf]
      %v193 = vld [vmem:[%s166 + $0x48] sm:$0xf]
      %v194 = vld [vmem:[%s166 + $0x4c] sm:$0xf]
      %v195 = vld [vmem:[%s166 + $0x50] sm:$0xf]
      %v196 = vld [vmem:[%s166 + $0x54] sm:$0xf]
      %v197 = vld [vmem:[%s166 + $0x58] sm:$0xf]
      %v198 = vld [vmem:[%s166 + $0x5c] sm:$0xf]
      %v199 = vld [vmem:[%s166 + $0x60] sm:$0xf]
      %v200 = vld [vmem:[%s166 + $0x64] sm:$0xf]
      %v201 = vld [vmem:[%s166 + $0x68] sm:$0xf]
      %v202 = vld [vmem:[%s166 + $0x6c] sm:$0xf]
      %v203 = vld [vmem:[%s166 + $0x70] sm:$0xf]
      %v204 = vld [vmem:[%s166 + $0x74] sm:$0xf]
      %v205 = vld [vmem:[%s166 + $0x78] sm:$0xf]
      %v206 = vld [vmem:[%s166 + $0x7c] sm:$0xf]
      %v207 = vld [vmem:[%s1] sm:$0xf]
      %v208 = vld [vmem:[%s1 + $0x4] sm:$0xf]
      %v209 = vld [vmem:[%s1 + $0x8] sm:$0xf]
      %v210 = vld [vmem:[%s1 + $0xc] sm:$0x7]
      %v211 = vld [vmem:[%s2] sm:$0x1]
      %v213 = vlaneseq
      %v214 = vshrl.u32 %v213, 7
      %v215 = vsub.s32 0, %v214
      %v216 = vrot.slane %v211, %v215
      %v250 = vunpack.c.l.b16 %v175
      %v251 = vunpack.c.l.b16 %v176
      %v252 = vunpack.c.l.b16 %v177
      %v253 = vunpack.c.l.b16 %v178
      %v254 = vunpack.c.l.b16 %v179
      %v255 = vunpack.c.l.b16 %v180
      %v256 = vunpack.c.l.b16 %v181
      %v257 = vunpack.c.l.b16 %v182
      %v258 = vunpack.c.l.b16 %v183
      %v259 = vunpack.c.l.b16 %v184
      %v260 = vunpack.c.l.b16 %v185
      %v261 = vunpack.c.l.b16 %v186
      %v262 = vunpack.c.l.b16 %v187
      %v263 = vunpack.c.l.b16 %v188
      %v264 = vunpack.c.l.b16 %v189
      %v265 = vunpack.c.l.b16 %v190
      %v266 = vunpack.c.l.b16 %v191
      %v267 = vunpack.c.l.b16 %v192
      %v268 = vunpack.c.l.b16 %v193
      %v269 = vunpack.c.l.b16 %v194
      %v270 = vunpack.c.l.b16 %v195
      %v271 = vunpack.c.l.b16 %v196
      %v272 = vunpack.c.l.b16 %v197
      %v273 = vunpack.c.l.b16 %v198
      %v274 = vunpack.c.l.b16 %v199
      %v275 = vunpack.c.l.b16 %v200
      %v276 = vunpack.c.l.b16 %v201
      %v277 = vunpack.c.l.b16 %v202
      %v278 = vunpack.c.l.b16 %v203
      %v279 = vunpack.c.l.b16 %v204
      %v280 = vunpack.c.l.b16 %v205
      %v281 = vunpack.c.l.b16 %v206
      %v282 = vpack.c.b16 %v251, %v250
      %v283 = vpack.c.b16 %v253, %v252
      %v284 = vpack.c.b16 %v255, %v254
      %v285 = vpack.c.b16 %v257, %v256
      %v286 = vpack.c.b16 %v259, %v258
      %v287 = vpack.c.b16 %v261, %v260
      %v288 = vpack.c.b16 %v263, %v262
      %v289 = vpack.c.b16 %v265, %v264
      %v290 = vpack.c.b16 %v267, %v266
      %v291 = vpack.c.b16 %v269, %v268
      %v292 = vpack.c.b16 %v271, %v270
      %v293 = vpack.c.b16 %v273, %v272
      %v294 = vpack.c.b16 %v275, %v274
      %v295 = vpack.c.b16 %v277, %v276
      %v296 = vpack.c.b16 %v279, %v278
      %v297 = vpack.c.b16 %v281, %v280
      %v302 = vunpack.c.l.b16 %v207
      %v303 = vunpack.c.l.b16 %v208
      %v304 = vunpack.c.l.b16 %v209
      %v305 = vunpack.c.l.b16 %v210
      %v306 = vpack.c.b16 %v303, %v302
      %v307 = vpack.c.b16 %v305, %v304
      %vm309 = vcmask 244736
      %v311 = vsel %vm309, %v282, 0
      %v314 = vsel %vm309, %v283, 0
      %v317 = vsel %vm309, %v284, 0
      %v320 = vsel %vm309, %v285, 0
      %v323 = vsel %vm309, %v286, 0
      %v326 = vsel %vm309, %v287, 0
      %v329 = vsel %vm309, %v288, 0
      %v332 = vsel %vm309, %v289, 0
      %v335 = vsel %vm309, %v290, 0
      %v338 = vsel %vm309, %v291, 0
      %v341 = vsel %vm309, %v292, 0
      %v344 = vsel %vm309, %v293, 0
      %v347 = vsel %vm309, %v294, 0
      %v350 = vsel %vm309, %v295, 0
      %v353 = vsel %vm309, %v296, 0
      %v356 = vsel %vm309, %v297, 0
      %vm358 = vcmask 1046528
      %v360 = vsel %vm358, %v307, 0
      %362 = vmatprep.subr.bf16.mxu0 0
      %363 = vmatpush1.bf16.msra.mxu0 0
      %364 = vmatprep.subr.bf16.mxu0 0
      %365 = vmatpush1.bf16.msra.mxu0 0
      %366 = vmatprep.subr.bf16.mxu0 0
      %367 = vmatpush1.bf16.msra.mxu0 0
      %368 = vmatprep.subr.bf16.mxu0 0
      %369 = vmatpush1.bf16.msra.mxu0 0
      %370 = vmatprep.subr.bf16.mxu0 0
      %371 = vmatpush1.bf16.msra.mxu0 0
      %372 = vmatprep.subr.bf16.mxu0 0
      %373 = vmatpush1.bf16.msra.mxu0 0
      %374 = vmatprep.subr.bf16.mxu0 0
      %375 = vmatpush1.bf16.msra.mxu0 %v360
      %376 = vmatprep.subr.bf16.mxu0 0
      %377 = vmatpush1.bf16.msra.mxu0 %v306
      %378 = vmatprep.subr.bf16.mxu0 0
      %379 = vmatpush2.bf16.msra.mxu0 0
      %380 = vmatprep.subr.bf16.mxu0 0
      %381 = vmatpush2.bf16.msra.mxu0 0
      %382 = vmatprep.subr.bf16.mxu0 0
      %383 = vmatpush2.bf16.msra.mxu0 0
      %384 = vmatprep.subr.bf16.mxu0 0
      %385 = vmatpush2.bf16.msra.mxu0 0
      %386 = vmatprep.subr.bf16.mxu0 0
      %387 = vmatpush2.bf16.msra.mxu0 0
      %388 = vmatprep.subr.bf16.mxu0 0
      %389 = vmatpush2.bf16.msra.mxu0 0
      %390 = vmatprep.subr.bf16.mxu0 0
      %391 = vmatpush2.bf16.msra.mxu0 0
      %392 = vmatprep.subr.bf16.mxu0 0
      %393 = vmatpush2.bf16.msra.mxu0 0
      %394 = vmatprep.mubr.bf16.mxu0 0
      %395 = vmatmul.mubr.bf16.gmra.mxu0 %v311
      %v396 = vpop.f32.mrf.mxu0
      %v397 = vadd.f32 %v216, %v396
      %v398 = vpop.f32.mrf.mxu0
      %v399 = vpop.f32.mrf.mxu0
      %v400 = vadd.f32 %v216, %v399
      %v401 = vpop.f32.mrf.mxu0
      %402 = vmatprep.mubr.bf16.mxu0 0
      %403 = vmatmul.mubr.bf16.gmra.mxu0 %v314
      %v404 = vpop.f32.mrf.mxu0
      %v405 = vadd.f32 %v216, %v404
      %v406 = vpop.f32.mrf.mxu0
      %v407 = vpop.f32.mrf.mxu0
      %v408 = vadd.f32 %v216, %v407
      %v409 = vpop.f32.mrf.mxu0
      %410 = vmatprep.mubr.bf16.mxu0 0
      %411 = vmatmul.mubr.bf16.gmra.mxu0 %v317
      %v412 = vpop.f32.mrf.mxu0
      %v413 = vadd.f32 %v216, %v412
      %v414 = vpop.f32.mrf.mxu0
      %v415 = vpop.f32.mrf.mxu0
      %v416 = vadd.f32 %v216, %v415
      %v417 = vpop.f32.mrf.mxu0
      %418 = vmatprep.mubr.bf16.mxu0 0
      %419 = vmatmul.mubr.bf16.gmra.mxu0 %v320
      %v420 = vpop.f32.mrf.mxu0
      %v421 = vadd.f32 %v216, %v420
      %v422 = vpop.f32.mrf.mxu0
      %v423 = vpop.f32.mrf.mxu0
      %v424 = vadd.f32 %v216, %v423
      %v425 = vpop.f32.mrf.mxu0
      %426 = vmatprep.mubr.bf16.mxu0 0
      %427 = vmatmul.mubr.bf16.gmra.mxu0 %v323
      %v428 = vpop.f32.mrf.mxu0
      %v429 = vadd.f32 %v216, %v428
      %v430 = vpop.f32.mrf.mxu0
      %v431 = vpop.f32.mrf.mxu0
      %v432 = vadd.f32 %v216, %v431
      %v433 = vpop.f32.mrf.mxu0
      %434 = vmatprep.mubr.bf16.mxu0 0
      %435 = vmatmul.mubr.bf16.gmra.mxu0 %v326
      %v436 = vpop.f32.mrf.mxu0
      %v437 = vadd.f32 %v216, %v436
      %v438 = vpop.f32.mrf.mxu0
      %v439 = vpop.f32.mrf.mxu0
      %v440 = vadd.f32 %v216, %v439
      %v441 = vpop.f32.mrf.mxu0
      %442 = vmatprep.mubr.bf16.mxu0 0
      %443 = vmatmul.mubr.bf16.gmra.mxu0 %v329
      %v444 = vpop.f32.mrf.mxu0
      %v445 = vadd.f32 %v216, %v444
      %v446 = vpop.f32.mrf.mxu0
      %v447 = vpop.f32.mrf.mxu0
      %v448 = vadd.f32 %v216, %v447
      %v449 = vpop.f32.mrf.mxu0
      %450 = vmatprep.mubr.bf16.mxu0 0
      %451 = vmatmul.mubr.bf16.gmra.mxu0 %v332
      %v452 = vpop.f32.mrf.mxu0
      %v453 = vadd.f32 %v216, %v452
      %v454 = vpop.f32.mrf.mxu0
      %v455 = vpop.f32.mrf.mxu0
      %v456 = vadd.f32 %v216, %v455
      %v457 = vpop.f32.mrf.mxu0
      %458 = vmatprep.mubr.bf16.mxu0 0
      %459 = vmatmul.mubr.bf16.gmra.mxu0 %v335
      %v460 = vpop.f32.mrf.mxu0
      %v461 = vadd.f32 %v216, %v460
      %v462 = vpop.f32.mrf.mxu0
      %v463 = vpop.f32.mrf.mxu0
      %v464 = vadd.f32 %v216, %v463
      %v465 = vpop.f32.mrf.mxu0
      %466 = vmatprep.mubr.bf16.mxu0 0
      %467 = vmatmul.mubr.bf16.gmra.mxu0 %v338
      %v468 = vpop.f32.mrf.mxu0
      %v469 = vadd.f32 %v216, %v468
      %v470 = vpop.f32.mrf.mxu0
      %v471 = vpop.f32.mrf.mxu0
      %v472 = vadd.f32 %v216, %v471
      %v473 = vpop.f32.mrf.mxu0
      %474 = vmatprep.mubr.bf16.mxu0 0
      %475 = vmatmul.mubr.bf16.gmra.mxu0 %v341
      %v476 = vpop.f32.mrf.mxu0
      %v477 = vadd.f32 %v216, %v476
      %v478 = vpop.f32.mrf.mxu0
      %v479 = vpop.f32.mrf.mxu0
      %v480 = vadd.f32 %v216, %v479
      %v481 = vpop.f32.mrf.mxu0
      %482 = vmatprep.mubr.bf16.mxu0 0
      %483 = vmatmul.mubr.bf16.gmra.mxu0 %v344
      %v484 = vpop.f32.mrf.mxu0
      %v485 = vadd.f32 %v216, %v484
      %v486 = vpop.f32.mrf.mxu0
      %v487 = vpop.f32.mrf.mxu0
      %v488 = vadd.f32 %v216, %v487
      %v489 = vpop.f32.mrf.mxu0
      %490 = vmatprep.mubr.bf16.mxu0 0
      %491 = vmatmul.mubr.bf16.gmra.mxu0 %v347
      %v492 = vpop.f32.mrf.mxu0
      %v493 = vadd.f32 %v216, %v492
      %v494 = vpop.f32.mrf.mxu0
      %v495 = vpop.f32.mrf.mxu0
      %v496 = vadd.f32 %v216, %v495
      %v497 = vpop.f32.mrf.mxu0
      %498 = vmatprep.mubr.bf16.mxu0 0
      %499 = vmatmul.mubr.bf16.gmra.mxu0 %v350
      %v500 = vpop.f32.mrf.mxu0
      %v501 = vadd.f32 %v216, %v500
      %v502 = vpop.f32.mrf.mxu0
      %v503 = vpop.f32.mrf.mxu0
      %v504 = vadd.f32 %v216, %v503
      %v505 = vpop.f32.mrf.mxu0
      %506 = vmatprep.mubr.bf16.mxu0 0
      %507 = vmatmul.mubr.bf16.gmra.mxu0 %v353
      %v508 = vpop.f32.mrf.mxu0
      %v509 = vadd.f32 %v216, %v508
      %v510 = vpop.f32.mrf.mxu0
      %v511 = vpop.f32.mrf.mxu0
      %v512 = vadd.f32 %v216, %v511
      %v513 = vpop.f32.mrf.mxu0
      %514 = vmatprep.mubr.bf16.mxu0 0
      %515 = vmatmul.mubr.bf16.gmra.mxu0 %v356
      %v516 = vpop.f32.mrf.mxu0
      %v517 = vadd.f32 %v216, %v516
      %v518 = vpop.f32.mrf.mxu0
      %v519 = vpop.f32.mrf.mxu0
      %v520 = vadd.f32 %v216, %v519
      %v521 = vpop.f32.mrf.mxu0
      %522 = vdwg.mxu0
      %v523 = vpack.c.bf16 %v400, %v397
      %v524 = vpack.c.bf16 %v408, %v405
      %v525 = vpack.c.bf16 %v416, %v413
      %v526 = vpack.c.bf16 %v424, %v421
      %v527 = vpack.c.bf16 %v432, %v429
      %v528 = vpack.c.bf16 %v440, %v437
      %v529 = vpack.c.bf16 %v448, %v445
      %v530 = vpack.c.bf16 %v456, %v453
      %v531 = vpack.c.bf16 %v464, %v461
      %v532 = vpack.c.bf16 %v472, %v469
      %v533 = vpack.c.bf16 %v480, %v477
      %v534 = vpack.c.bf16 %v488, %v485
      %v535 = vpack.c.bf16 %v496, %v493
      %v536 = vpack.c.bf16 %v504, %v501
      %v537 = vpack.c.bf16 %v512, %v509
      %v538 = vpack.c.bf16 %v520, %v517
      %v555 = vunpack.c.l.b16 %v523
      %v556 = vunpack.c.h.b16 %v523
      %v557 = vunpack.c.l.b16 %v524
      %v558 = vunpack.c.h.b16 %v524
      %v559 = vunpack.c.l.b16 %v525
      %v560 = vunpack.c.h.b16 %v525
      %v561 = vunpack.c.l.b16 %v526
      %v562 = vunpack.c.h.b16 %v526
      %v563 = vunpack.c.l.b16 %v527
      %v564 = vunpack.c.h.b16 %v527
      %v565 = vunpack.c.l.b16 %v528
      %v566 = vunpack.c.h.b16 %v528
      %v567 = vunpack.c.l.b16 %v529
      %v568 = vunpack.c.h.b16 %v529
      %v569 = vunpack.c.l.b16 %v530
      %v570 = vunpack.c.h.b16 %v530
      %v571 = vunpack.c.l.b16 %v531
      %v572 = vunpack.c.h.b16 %v531
      %v573 = vunpack.c.l.b16 %v532
      %v574 = vunpack.c.h.b16 %v532
      %v575 = vunpack.c.l.b16 %v533
      %v576 = vunpack.c.h.b16 %v533
      %v577 = vunpack.c.l.b16 %v534
      %v578 = vunpack.c.h.b16 %v534
      %v579 = vunpack.c.l.b16 %v535
      %v580 = vunpack.c.h.b16 %v535
      %v581 = vunpack.c.l.b16 %v536
      %v582 = vunpack.c.h.b16 %v536
      %v583 = vunpack.c.l.b16 %v537
      %v584 = vunpack.c.h.b16 %v537
      %v585 = vunpack.c.l.b16 %v538
      %v586 = vunpack.c.h.b16 %v538
      %v587 = vpack.c.b16 %v555, %v555
      %v588 = vpack.c.b16 %v556, %v556
      %v589 = vpack.c.b16 %v557, %v557
      %v590 = vpack.c.b16 %v558, %v558
      %v591 = vpack.c.b16 %v559, %v559
      %v592 = vpack.c.b16 %v560, %v560
      %v593 = vpack.c.b16 %v561, %v561
      %v594 = vpack.c.b16 %v562, %v562
      %v595 = vpack.c.b16 %v563, %v563
      %v596 = vpack.c.b16 %v564, %v564
      %v597 = vpack.c.b16 %v565, %v565
      %v598 = vpack.c.b16 %v566, %v566
      %v599 = vpack.c.b16 %v567, %v567
      %v600 = vpack.c.b16 %v568, %v568
      %v601 = vpack.c.b16 %v569, %v569
      %v602 = vpack.c.b16 %v570, %v570
      %v603 = vpack.c.b16 %v571, %v571
      %v604 = vpack.c.b16 %v572, %v572
      %v605 = vpack.c.b16 %v573, %v573
      %v606 = vpack.c.b16 %v574, %v574
      %v607 = vpack.c.b16 %v575, %v575
      %v608 = vpack.c.b16 %v576, %v576
      %v609 = vpack.c.b16 %v577, %v577
      %v610 = vpack.c.b16 %v578, %v578
      %v611 = vpack.c.b16 %v579, %v579
      %v612 = vpack.c.b16 %v580, %v580
      %v613 = vpack.c.b16 %v581, %v581
      %v614 = vpack.c.b16 %v582, %v582
      %v615 = vpack.c.b16 %v583, %v583
      %v616 = vpack.c.b16 %v584, %v584
      %v617 = vpack.c.b16 %v585, %v585
      %v618 = vpack.c.b16 %v586, %v586
      %vm651 = vcmask 486400
      %652 = vst.msk [vmem:[%s172] sm:$0xf] %vm651, %v587
      %653 = vst.msk [vmem:[%s172 + $0x4] sm:$0xf] %vm651, %v588
      %654 = vst.msk [vmem:[%s172 + $0x8] sm:$0xf] %vm651, %v589
      %655 = vst.msk [vmem:[%s172 + $0xc] sm:$0xf] %vm651, %v590
      %656 = vst.msk [vmem:[%s172 + $0x10] sm:$0xf] %vm651, %v591
      %657 = vst.msk [vmem:[%s172 + $0x14] sm:$0xf] %vm651, %v592
      %658 = vst.msk [vmem:[%s172 + $0x18] sm:$0xf] %vm651, %v593
      %659 = vst.msk [vmem:[%s172 + $0x1c] sm:$0xf] %vm651, %v594
      %660 = vst.msk [vmem:[%s172 + $0x20] sm:$0xf] %vm651, %v595
      %661 = vst.msk [vmem:[%s172 + $0x24] sm:$0xf] %vm651, %v596
      %662 = vst.msk [vmem:[%s172 + $0x28] sm:$0xf] %vm651, %v597
      %663 = vst.msk [vmem:[%s172 + $0x2c] sm:$0xf] %vm651, %v598
      %664 = vst.msk [vmem:[%s172 + $0x30] sm:$0xf] %vm651, %v599
      %665 = vst.msk [vmem:[%s172 + $0x34] sm:$0xf] %vm651, %v600
      %666 = vst.msk [vmem:[%s172 + $0x38] sm:$0xf] %vm651, %v601
      %667 = vst.msk [vmem:[%s172 + $0x3c] sm:$0xf] %vm651, %v602
      %668 = vst.msk [vmem:[%s172 + $0x40] sm:$0xf] %vm651, %v603
      %669 = vst.msk [vmem:[%s172 + $0x44] sm:$0xf] %vm651, %v604
      %670 = vst.msk [vmem:[%s172 + $0x48] sm:$0xf] %vm651, %v605
      %671 = vst.msk [vmem:[%s172 + $0x4c] sm:$0xf] %vm651, %v606
      %672 = vst.msk [vmem:[%s172 + $0x50] sm:$0xf] %vm651, %v607
      %673 = vst.msk [vmem:[%s172 + $0x54] sm:$0xf] %vm651, %v608
      %674 = vst.msk [vmem:[%s172 + $0x58] sm:$0xf] %vm651, %v609
      %675 = vst.msk [vmem:[%s172 + $0x5c] sm:$0xf] %vm651, %v610
      %676 = vst.msk [vmem:[%s172 + $0x60] sm:$0xf] %vm651, %v611
      %677 = vst.msk [vmem:[%s172 + $0x64] sm:$0xf] %vm651, %v612
      %678 = vst.msk [vmem:[%s172 + $0x68] sm:$0xf] %vm651, %v613
      %679 = vst.msk [vmem:[%s172 + $0x6c] sm:$0xf] %vm651, %v614
      %680 = vst.msk [vmem:[%s172 + $0x70] sm:$0xf] %vm651, %v615
      %681 = vst.msk [vmem:[%s172 + $0x74] sm:$0xf] %vm651, %v616
      %682 = vst.msk [vmem:[%s172 + $0x78] sm:$0xf] %vm651, %v617
      %683 = vst.msk [vmem:[%s172 + $0x7c] sm:$0xf] %vm651, %v618
      %s684 = smul.u32 32, %s14
      %p685 = scmp.lt.s32.totalorder %s684, 63
      %s686 = scalar_select %p685, %s684, 63
      %s687 = smul.addr %s686, 4
      %s688 = scalar_lea.vmem %s3, %s687
      // Predicated region
      $region33: #{_lambda_.19} parent=31 // pred_check
        %p689 = pneg %p100
      $region34: #{_lambda_.19} parent=31 // pred_check_branch
        %691 = sbr.rel (%p689) target = $region36
      $region35: #{_lambda_.19} parent=31 // pred_region
        %s692 = smul.u32 32, %s14
      $region36: #{_lambda_.19} parent=31 // pred_fallthru
        _
    $region32: #{_lambda_.19} parent=5 // pred_fallthru
      _
    %p693 = scmp.le.s32.totalorder 2, %s9
    // Predicated region
    $region37: #{_lambda_.19} parent=5 // pred_check
      %p694 = pneg %p693
    $region38: #{_lambda_.19} parent=5 // pred_check_branch
      %696 = sbr.rel (%p694) target = $region40
    $region39: #{_lambda_.19} parent=5 // pred_region
      %s697 = ssub.s32 %s9, 2
      // Predicated region
      $region41: #{_lambda_.19} parent=39 // pred_check
        %p698 = pneg %p106
      $region42: #{_lambda_.19} parent=39 // pred_check_branch
        %700 = sbr.rel (%p698) target = $region44
      $region43: #{_lambda_.19} parent=39 // pred_region
        %s701 = smul.u32 32, %s15
        %p702 = scmp.lt.s32.totalorder %s701, 63
        %s703 = scalar_select %p702, %s701, 63
        %s704 = smul.addr %s703, 4
        %s705 = scalar_lea.vmem %s3, %s704
      $region44: #{_lambda_.19} parent=39 // pred_fallthru
        _
    $region40: #{_lambda_.19} parent=5 // pred_fallthru
      _
  $region6: #{_lambda_.19} parent=0 // loop_footer
    %s13 = sadd.s32 1, %s9
  $region7: #{_lambda_.19} parent=0 // loop_footer_branch
    %8 = sbr.rel target = $region3
  $region8: #{_lambda_.19} parent=0 // loop_exit
    _

// kernel: _lambda_.18
$region0: #{_lambda_.18}
  #allocation0 [shape = 'u32[]', space=smem, size = 0x4, offset = 0x4, fixed_abs, tag = 'smem constant byte address 0x4 - core index']
  #allocation1 [shape = 'u32[144,128]{1,0:T(1,128)}', space=vmem, size = 0x12000, scoped, tag = 'internal scratch']
  %s0 = inlined_call_operand.vmem [shape: bf16[512,540], index: 0, kind: input, shape index: {}]
  %s1 = inlined_call_operand.vmem [shape: bf16[540,30], index: 1, kind: input, shape index: {}]
  %s2 = inlined_call_operand.vmem [shape: f32[1,30], index: 2, kind: input, shape index: {}]
  %s3 = inlined_call_operand.vmem [shape: bf16[512,30], index: 3, kind: input, shape index: {}]
  %s4 = inlined_call_operand.vmem [shape: bf16[512,30], index: 4, kind: output, shape index: {}]
  %s5 = sld [smem:[#allocation0]]
  $region49: #{_lambda_.18} parent=0
    _
  %s7 = ssub.s32 1, %s5
  %s8 = scalar_select 0, %s7, %s5
  loop: start=0, step=1, limit=4
  $region2: #{_lambda_.18} parent=0 // loop_pre_header
    _
  $region3: #{_lambda_.18} parent=0 // loop_header
    %s10 = sphi 0, %s14
    %p11 = scmp.ge.s32.totalorder %s10, 4
    %s20 = sphi 0, %s22
    %s23 = sphi 0, %s20
    %s24 = sphi 0, %s23
    %s40 = sphi 0, %s24
    %s44 = sphi 0, %s44
    %s46 = sphi 0, %s44
    %s47 = sphi 0, %s46
    %s61 = sphi 0, %s47
    %s65 = sphi 0, %s65
    %s67 = sphi 0, %s65
    %s68 = sphi 0, %s67
    %s82 = sphi 0, %s68
    %s88 = sphi 0, %s90
    %s91 = sphi 0, %s88
    %s92 = sphi 0, %s91
    %s108 = sphi 0, %s92
    %s114 = sphi 0, %s116
    %s117 = sphi 0, %s114
    %s118 = sphi 0, %s117
    %s134 = sphi 0, %s118
  $region4: #{_lambda_.18} parent=0 // loop_header_branch
    %13 = sbr.rel (%p11) target = $region8
  $region5: #{_lambda_.18} parent=0 // loop_body
    %s15 = ssub.s32 %s10, 1
    %s16 = ssub.s32 %s10, 2
    %s17 = sadd.s32 %s10, 1
    %s18 = ssub.s32 %s10, %s17
    %p19 = scmp.eq.s32.totalorder %s18, 0
    %s21 = sadd.s32 %s20, 1
    %s22 = scalar_select %p19, %s20, %s21
    %p25 = pneg %p19
    %p26 = scmp.eq.s32.totalorder %s10, 1
    %p27 = por %p25, %p26
    %p28 = scmp.ne.s32.totalorder %s20, %s23
    %p29 = scmp.eq.s32.totalorder %s10, 0
    %p30 = por %p28, %p29
    %p31 = scmp.ne.s32.totalorder %s20, %s23
    %p32 = scmp.eq.s32.totalorder %s15, 1
    %p33 = por %p31, %p32
    %p34 = scmp.ne.s32.totalorder %s23, %s24
    %p35 = scmp.eq.s32.totalorder %s15, 0
    %p36 = por %p34, %p35
    %p37 = scmp.ne.s32.totalorder %s23, %s24
    %p38 = scmp.eq.s32.totalorder %s16, 1
    %p39 = por %p37, %p38
    %p41 = scmp.ne.s32.totalorder %s24, %s40
    %p42 = scmp.eq.s32.totalorder %s16, 0
    %p43 = por %p41, %p42
    %s45 = sadd.s32 %s44, 1
    %p48 = scmp.eq.s32.totalorder %s10, 1
    %p49 = scmp.ne.s32.totalorder %s44, %s46
    %p50 = scmp.eq.s32.totalorder %s10, 0
    %p51 = por %p49, %p50
    %p52 = scmp.ne.s32.totalorder %s44, %s46
    %p53 = scmp.eq.s32.totalorder %s15, 1
    %p54 = por %p52, %p53
    %p55 = scmp.ne.s32.totalorder %s46, %s47
    %p56 = scmp.eq.s32.totalorder %s15, 0
    %p57 = por %p55, %p56
    %p58 = scmp.ne.s32.totalorder %s46, %s47
    %p59 = scmp.eq.s32.totalorder %s16, 1
    %p60 = por %p58, %p59
    %p62 = scmp.ne.s32.totalorder %s47, %s61
    %p63 = scmp.eq.s32.totalorder %s16, 0
    %p64 = por %p62, %p63
    %s66 = sadd.s32 %s65, 1
    %p69 = scmp.eq.s32.totalorder %s10, 1
    %p70 = scmp.ne.s32.totalorder %s65, %s67
    %p71 = scmp.eq.s32.totalorder %s10, 0
    %p72 = por %p70, %p71
    %p73 = scmp.ne.s32.totalorder %s65, %s67
    %p74 = scmp.eq.s32.totalorder %s15, 1
    %p75 = por %p73, %p74
    %p76 = scmp.ne.s32.totalorder %s67, %s68
    %p77 = scmp.eq.s32.totalorder %s15, 0
    %p78 = por %p76, %p77
    %p79 = scmp.ne.s32.totalorder %s67, %s68
    %p80 = scmp.eq.s32.totalorder %s16, 1
    %p81 = por %p79, %p80
    %p83 = scmp.ne.s32.totalorder %s68, %s82
    %p84 = scmp.eq.s32.totalorder %s16, 0
    %p85 = por %p83, %p84
    %s86 = ssub.s32 %s10, %s17
    %p87 = scmp.eq.s32.totalorder %s86, 0
    %s89 = sadd.s32 %s88, 1
    %s90 = scalar_select %p87, %s88, %s89
    %p93 = pneg %p87
    %p94 = scmp.eq.s32.totalorder %s10, 1
    %p95 = por %p93, %p94
    %p96 = scmp.ne.s32.totalorder %s88, %s91
    %p97 = scmp.eq.s32.totalorder %s10, 0
    %p98 = por %p96, %p97
    %p99 = scmp.ne.s32.totalorder %s88, %s91
    %p100 = scmp.eq.s32.totalorder %s15, 1
    %p101 = por %p99, %p100
    %p102 = scmp.ne.s32.totalorder %s91, %s92
    %p103 = scmp.eq.s32.totalorder %s15, 0
    %p104 = por %p102, %p103
    %p105 = scmp.ne.s32.totalorder %s91, %s92
    %p106 = scmp.eq.s32.totalorder %s16, 1
    %p107 = por %p105, %p106
    %p109 = scmp.ne.s32.totalorder %s92, %s108
    %p110 = scmp.eq.s32.totalorder %s16, 0
    %p111 = por %p109, %p110
    %s112 = ssub.s32 %s10, %s17
    %p113 = scmp.eq.s32.totalorder %s112, 0
    %s115 = sadd.s32 %s114, 1
    %s116 = scalar_select %p113, %s114, %s115
    %p119 = pneg %p113
    %p120 = scmp.eq.s32.totalorder %s10, 1
    %p121 = por %p119, %p120
    %p122 = scmp.ne.s32.totalorder %s114, %s117
    %p123 = scmp.eq.s32.totalorder %s10, 0
    %p124 = por %p122, %p123
    %p125 = scmp.ne.s32.totalorder %s114, %s117
    %p126 = scmp.eq.s32.totalorder %s15, 1
    %p127 = por %p125, %p126
    %p128 = scmp.ne.s32.totalorder %s117, %s118
    %p129 = scmp.eq.s32.totalorder %s15, 0
    %p130 = por %p128, %p129
    %p131 = scmp.ne.s32.totalorder %s117, %s118
    %p132 = scmp.eq.s32.totalorder %s16, 1
    %p133 = por %p131, %p132
    %p135 = scmp.ne.s32.totalorder %s118, %s134
    %p136 = scmp.eq.s32.totalorder %s16, 0
    %p137 = por %p135, %p136
    %p138 = scmp.le.s32.totalorder 1, %s10
    %p139 = scmp.lt.s32.totalorder %s10, 3
    %p140 = pnand %p138, %p139
    %p141 = pneg %p140
    // Predicated region
    $region9: #{_lambda_.18} parent=5 // pred_check
      _
    $region10: #{_lambda_.18} parent=5 // pred_check_branch
      %143 = sbr.rel (%p140) target = $region12
    $region11: #{_lambda_.18} parent=5 // pred_region
      %s144 = ssub.s32 %s10, 1
      // Predicated region
      $region13: #{_lambda_.18} parent=11 // pred_check
        %p145 = pneg %p57
      $region14: #{_lambda_.18} parent=11 // pred_check_branch
        %147 = sbr.rel (%p145) target = $region16
      $region15: #{_lambda_.18} parent=11 // pred_region
        _
      $region16: #{_lambda_.18} parent=11 // pred_fallthru
        _
      // Predicated region
      $region17: #{_lambda_.18} parent=11 // pred_check
        %p148 = pneg %p78
      $region18: #{_lambda_.18} parent=11 // pred_check_branch
        %150 = sbr.rel (%p148) target = $region20
      $region19: #{_lambda_.18} parent=11 // pred_region
        _
      $region20: #{_lambda_.18} parent=11 // pred_fallthru
        _
    $region12: #{_lambda_.18} parent=5 // pred_fallthru
      _
    %p151 = scmp.lt.s32.totalorder %s10, 2
    // Predicated region
    $region21: #{_lambda_.18} parent=5 // pred_check
      %p152 = pneg %p151
    $region22: #{_lambda_.18} parent=5 // pred_check_branch
      %154 = sbr.rel (%p152) target = $region24
    $region23: #{_lambda_.18} parent=5 // pred_region
      // Predicated region
      $region25: #{_lambda_.18} parent=23 // pred_check
        %p155 = pneg %p30
      $region26: #{_lambda_.18} parent=23 // pred_check_branch
        %157 = sbr.rel (%p155) target = $region28
      $region27: #{_lambda_.18} parent=23 // pred_region
        %s158 = smul.u32 32, %s10
        %p159 = scmp.lt.s32.totalorder %s158, 63
        %s160 = scalar_select %p159, %s158, 63
        %s161 = smul.addr %s160, 5
        %s162 = smul.addr %s161, 4
        %s163 = scalar_lea.vmem %s0, %s162
        %s164 = smul.u32 32, %s10
      $region28: #{_lambda_.18} parent=23 // pred_fallthru
        _
      // Predicated region
      $region29: #{_lambda_.18} parent=23 // pred_check
        %p165 = pneg %p98
      $region30: #{_lambda_.18} parent=23 // pred_check_branch
        %167 = sbr.rel (%p165) target = $region32
      $region31: #{_lambda_.18} parent=23 // pred_region
        %s168 = smul.u32 32, %s10
        %p169 = scmp.lt.s32.totalorder %s168, 63
        %s170 = scalar_select %p169, %s168, 63
        %s171 = smul.addr %s170, 4
        %s172 = scalar_lea.vmem %s3, %s171
        %s173 = smul.u32 32, %s10
      $region32: #{_lambda_.18} parent=23 // pred_fallthru
        _
    $region24: #{_lambda_.18} parent=5 // pred_fallthru
      _
    %p174 = scmp.le.s32.totalorder 1, %s10
    %p175 = scmp.lt.s32.totalorder %s10, 3
    %p176 = pnand %p174, %p175
    %p177 = pneg %p176
    // Predicated region
    $region33: #{_lambda_.18} parent=5 // pred_check
      _
    $region34: #{_lambda_.18} parent=5 // pred_check_branch
      %179 = sbr.rel (%p176) target = $region36
    $region35: #{_lambda_.18} parent=5 // pred_region
      %s180 = ssub.s32 %s10, 1
      %s181 = smul.u32 32, %s15
      %p182 = scmp.lt.s32.totalorder %s181, 63
      %s183 = scalar_select %p182, %s181, 63
      %s184 = smul.addr %s183, 5
      %s185 = smul.addr %s184, 4
      %s186 = scalar_lea.vmem %s0, %s185
      %p187 = pneg %p36
      %p188 = pneg %p33
      %p189 = pneg %p57
      %p190 = pneg %p54
      %p191 = pneg %p78
      %p192 = pneg %p75
      %s193 = smul.u32 32, %s15
      %p194 = scmp.lt.s32.totalorder %s193, 63
      %s195 = scalar_select %p194, %s193, 63
      %s196 = smul.addr %s195, 4
      %s197 = scalar_lea.vmem %s3, %s196
      %p198 = pneg %p104
      %p199 = pneg %p101
      %p200 = pneg %p130
      %p201 = pneg %p127
      %s202 = smul.u32 32, %s15
      %p203 = scmp.lt.s32.totalorder %s202, 63
      %s204 = scalar_select %p203, %s202, 63
      %s205 = smul.addr %s204, 4
      %s206 = scalar_lea.vmem %s4, %s205
      %s207 = smul.u32 32, %s15
      %p208 = scmp.lt.s32.totalorder %s207, 63
      %s209 = scalar_select %p208, %s207, 63
      %s210 = smul.addr %s209, 5
      %s211 = smul.addr %s210, 4
      %s212 = scalar_lea.vmem %s0, %s211
      %s213 = smul.u32 32, %s15
      %s214 = smul.u32 32, %s15
      %p215 = scmp.lt.s32.totalorder %s214, 63
      %s216 = scalar_select %p215, %s214, 63
      %s217 = smul.addr %s216, 4
      %s218 = scalar_lea.vmem %s3, %s217
      %s219 = smul.u32 32, %s15
      %s220 = smul.u32 32, %s15
      %p221 = scmp.lt.s32.totalorder %s220, 63
      %s222 = scalar_select %p221, %s220, 63
      %s223 = smul.addr %s222, 4
      %s224 = scalar_lea.vmem %s4, %s223
      %s225 = smul.u32 32, %s15
      %v227 = vld [vmem:[%s212] sm:$0xff]
      %v228 = vld [vmem:[%s212 + $0x8] sm:$0xff]
      %v229 = vld [vmem:[%s212 + $0x10] sm:$0xf]
      %v230 = vld [vmem:[%s212 + $0x14] sm:$0xff]
      %v231 = vld [vmem:[%s212 + $0x1c] sm:$0xff]
      %v232 = vld [vmem:[%s212 + $0x24] sm:$0xf]
      %v233 = vld [vmem:[%s212 + $0x28] sm:$0xff]
      %v234 = vld [vmem:[%s212 + $0x30] sm:$0xff]
      %v235 = vld [vmem:[%s212 + $0x38] sm:$0xf]
      %v236 = vld [vmem:[%s212 + $0x3c] sm:$0xff]
      %v237 = vld [vmem:[%s212 + $0x44] sm:$0xff]
      %v238 = vld [vmem:[%s212 + $0x4c] sm:$0xf]
      %v239 = vld [vmem:[%s212 + $0x50] sm:$0xff]
      %v240 = vld [vmem:[%s212 + $0x58] sm:$0xff]
      %v241 = vld [vmem:[%s212 + $0x60] sm:$0xf]
      %v242 = vld [vmem:[%s212 + $0x64] sm:$0xff]
      %v243 = vld [vmem:[%s212 + $0x6c] sm:$0xff]
      %v244 = vld [vmem:[%s212 + $0x74] sm:$0xf]
      %v245 = vld [vmem:[%s212 + $0x78] sm:$0xff]
      %v246 = vld [vmem:[%s212 + $0x80] sm:$0xff]
      %v247 = vld [vmem:[%s212 + $0x88] sm:$0xf]
      %v248 = vld [vmem:[%s212 + $0x8c] sm:$0xff]
      %v249 = vld [vmem:[%s212 + $0x94] sm:$0xff]
      %v250 = vld [vmem:[%s212 + $0x9c] sm:$0xf]
      %v251 = vld [vmem:[%s212 + $0xa0] sm:$0xff]
      %v252 = vld [vmem:[%s212 + $0xa8] sm:$0xff]
      %v253 = vld [vmem:[%s212 + $0xb0] sm:$0xf]
      %v254 = vld [vmem:[%s212 + $0xb4] sm:$0xff]
      %v255 = vld [vmem:[%s212 + $0xbc] sm:$0xff]
      %v256 = vld [vmem:[%s212 + $0xc4] sm:$0xf]
      %v257 = vld [vmem:[%s212 + $0xc8] sm:$0xff]
      %v258 = vld [vmem:[%s212 + $0xd0] sm:$0xff]
      %v259 = vld [vmem:[%s212 + $0xd8] sm:$0xf]
      %v260 = vld [vmem:[%s212 + $0xdc] sm:$0xff]
      %v261 = vld [vmem:[%s212 + $0xe4] sm:$0xff]
      %v262 = vld [vmem:[%s212 + $0xec] sm:$0xf]
      %v263 = vld [vmem:[%s212 + $0xf0] sm:$0xff]
      %v264 = vld [vmem:[%s212 + $0xf8] sm:$0xff]
      %v265 = vld [vmem:[%s212 + $0x100] sm:$0xf]
      %v266 = vld [vmem:[%s212 + $0x104] sm:$0xff]
      %v267 = vld [vmem:[%s212 + $0x10c] sm:$0xff]
      %v268 = vld [vmem:[%s212 + $0x114] sm:$0xf]
      %v269 = vld [vmem:[%s212 + $0x118] sm:$0xff]
      %v270 = vld [vmem:[%s212 + $0x120] sm:$0xff]
      %v271 = vld [vmem:[%s212 + $0x128] sm:$0xf]
      %v272 = vld [vmem:[%s212 + $0x12c] sm:$0xff]
      %v273 = vld [vmem:[%s212 + $0x134] sm:$0xff]
      %v274 = vld [vmem:[%s212 + $0x13c] sm:$0xf]
      %v275 = vld [vmem:[%s212 + $0x140] sm:$0xff]
      %v276 = vld [vmem:[%s212 + $0x148] sm:$0xff]
      %v277 = vld [vmem:[%s212 + $0x150] sm:$0xf]
      %v278 = vld [vmem:[%s212 + $0x154] sm:$0xff]
      %v279 = vld [vmem:[%s212 + $0x15c] sm:$0xff]
      %v280 = vld [vmem:[%s212 + $0x164] sm:$0xf]
      %v281 = vld [vmem:[%s212 + $0x168] sm:$0xff]
      %v282 = vld [vmem:[%s212 + $0x170] sm:$0xff]
      %v283 = vld [vmem:[%s212 + $0x178] sm:$0xf]
      %v284 = vld [vmem:[%s212 + $0x17c] sm:$0xff]
      %v285 = vld [vmem:[%s212 + $0x184] sm:$0xff]
      %v286 = vld [vmem:[%s212 + $0x18c] sm:$0xf]
      %v287 = vld [vmem:[%s212 + $0x190] sm:$0xff]
      %v288 = vld [vmem:[%s212 + $0x198] sm:$0xff]
      %v289 = vld [vmem:[%s212 + $0x1a0] sm:$0xf]
      %v290 = vld [vmem:[%s212 + $0x1a4] sm:$0xff]
      %v291 = vld [vmem:[%s212 + $0x1ac] sm:$0xff]
      %v292 = vld [vmem:[%s212 + $0x1b4] sm:$0xf]
      %v293 = vld [vmem:[%s212 + $0x1b8] sm:$0xff]
      %v294 = vld [vmem:[%s212 + $0x1c0] sm:$0xff]
      %v295 = vld [vmem:[%s212 + $0x1c8] sm:$0xf]
      %v296 = vld [vmem:[%s212 + $0x1cc] sm:$0xff]
      %v297 = vld [vmem:[%s212 + $0x1d4] sm:$0xff]
      %v298 = vld [vmem:[%s212 + $0x1dc] sm:$0xf]
      %v299 = vld [vmem:[%s212 + $0x1e0] sm:$0xff]
      %v300 = vld [vmem:[%s212 + $0x1e8] sm:$0xff]
      %v301 = vld [vmem:[%s212 + $0x1f0] sm:$0xf]
      %v302 = vld [vmem:[%s212 + $0x1f4] sm:$0xff]
      %v303 = vld [vmem:[%s212 + $0x1fc] sm:$0xff]
      %v304 = vld [vmem:[%s212 + $0x204] sm:$0xf]
      %v305 = vld [vmem:[%s212 + $0x208] sm:$0xff]
      %v306 = vld [vmem:[%s212 + $0x210] sm:$0xff]
      %v307 = vld [vmem:[%s212 + $0x218] sm:$0xf]
      %v308 = vld [vmem:[%s212 + $0x21c] sm:$0xff]
      %v309 = vld [vmem:[%s212 + $0x224] sm:$0xff]
      %v310 = vld [vmem:[%s212 + $0x22c] sm:$0xf]
      %v311 = vld [vmem:[%s212 + $0x230] sm:$0xff]
      %v312 = vld [vmem:[%s212 + $0x238] sm:$0xff]
      %v313 = vld [vmem:[%s212 + $0x240] sm:$0xf]
      %v314 = vld [vmem:[%s212 + $0x244] sm:$0xff]
      %v315 = vld [vmem:[%s212 + $0x24c] sm:$0xff]
      %v316 = vld [vmem:[%s212 + $0x254] sm:$0xf]
      %v317 = vld [vmem:[%s212 + $0x258] sm:$0xff]
      %v318 = vld [vmem:[%s212 + $0x260] sm:$0xff]
      %v319 = vld [vmem:[%s212 + $0x268] sm:$0xf]
      %v320 = vld [vmem:[%s212 + $0x26c] sm:$0xff]
      %v321 = vld [vmem:[%s212 + $0x274] sm:$0xff]
      %v322 = vld [vmem:[%s212 + $0x27c] sm:$0xf]
      %v323 = vld [vmem:[%s1] sm:$0xf]
      %v324 = vld [vmem:[%s1 + $0x4] sm:$0xf]
      %v325 = vld [vmem:[%s1 + $0x8] sm:$0xf]
      %v326 = vld [vmem:[%s1 + $0xc] sm:$0xf]
      %v327 = vld [vmem:[%s1 + $0x10] sm:$0xf]
      %v328 = vld [vmem:[%s1 + $0x14] sm:$0xf]
      %v329 = vld [vmem:[%s1 + $0x18] sm:$0xf]
      %v330 = vld [vmem:[%s1 + $0x1c] sm:$0xf]
      %v331 = vld [vmem:[%s1 + $0x20] sm:$0xf]
      %v332 = vld [vmem:[%s1 + $0x24] sm:$0xf]
      %v333 = vld [vmem:[%s1 + $0x28] sm:$0xf]
      %v334 = vld [vmem:[%s1 + $0x2c] sm:$0xf]
      %v335 = vld [vmem:[%s1 + $0x30] sm:$0xf]
      %v336 = vld [vmem:[%s1 + $0x34] sm:$0xf]
      %v337 = vld [vmem:[%s1 + $0x38] sm:$0xf]
      %v338 = vld [vmem:[%s1 + $0x3c] sm:$0xf]
      %v339 = vld [vmem:[%s1 + $0x40] sm:$0xf]
      %v340 = vld [vmem:[%s1 + $0x44] sm:$0xf]
      %v341 = vld [vmem:[%s1 + $0x48] sm:$0xf]
      %v342 = vld [vmem:[%s1 + $0x4c] sm:$0xf]
      %v343 = vld [vmem:[%s1 + $0x50] sm:$0xf]
      %v344 = vld [vmem:[%s1 + $0x54] sm:$0xf]
      %v345 = vld [vmem:[%s1 + $0x58] sm:$0xf]
      %v346 = vld [vmem:[%s1 + $0x5c] sm:$0xf]
      %v347 = vld [vmem:[%s1 + $0x60] sm:$0xf]
      %v348 = vld [vmem:[%s1 + $0x64] sm:$0xf]
      %v349 = vld [vmem:[%s1 + $0x68] sm:$0xf]
      %v350 = vld [vmem:[%s1 + $0x6c] sm:$0xf]
      %v351 = vld [vmem:[%s1 + $0x70] sm:$0xf]
      %v352 = vld [vmem:[%s1 + $0x74] sm:$0xf]
      %v353 = vld [vmem:[%s1 + $0x78] sm:$0xf]
      %v354 = vld [vmem:[%s1 + $0x7c] sm:$0xf]
      %v355 = vld [vmem:[%s1 + $0x80] sm:$0xf]
      %v356 = vld [vmem:[%s1 + $0x84] sm:$0xf]
      %v357 = vld [vmem:[%s1 + $0x88] sm:$0xf]
      %v358 = vld [vmem:[%s1 + $0x8c] sm:$0xf]
      %v359 = vld [vmem:[%s1 + $0x90] sm:$0xf]
      %v360 = vld [vmem:[%s1 + $0x94] sm:$0xf]
      %v361 = vld [vmem:[%s1 + $0x98] sm:$0xf]
      %v362 = vld [vmem:[%s1 + $0x9c] sm:$0xf]
      %v363 = vld [vmem:[%s1 + $0xa0] sm:$0xf]
      %v364 = vld [vmem:[%s1 + $0xa4] sm:$0xf]
      %v365 = vld [vmem:[%s1 + $0xa8] sm:$0xf]
      %v366 = vld [vmem:[%s1 + $0xac] sm:$0xf]
      %v367 = vld [vmem:[%s1 + $0xb0] sm:$0xf]
      %v368 = vld [vmem:[%s1 + $0xb4] sm:$0xf]
      %v369 = vld [vmem:[%s1 + $0xb8] sm:$0xf]
      %v370 = vld [vmem:[%s1 + $0xbc] sm:$0xf]
      %v371 = vld [vmem:[%s1 + $0xc0] sm:$0xf]
      %v372 = vld [vmem:[%s1 + $0xc4] sm:$0xf]
      %v373 = vld [vmem:[%s1 + $0xc8] sm:$0xf]
      %v374 = vld [vmem:[%s1 + $0xcc] sm:$0xf]
      %v375 = vld [vmem:[%s1 + $0xd0] sm:$0xf]
      %v376 = vld [vmem:[%s1 + $0xd4] sm:$0xf]
      %v377 = vld [vmem:[%s1 + $0xd8] sm:$0xf]
      %v378 = vld [vmem:[%s1 + $0xdc] sm:$0xf]
      %v379 = vld [vmem:[%s1 + $0xe0] sm:$0xf]
      %v380 = vld [vmem:[%s1 + $0xe4] sm:$0xf]
      %v381 = vld [vmem:[%s1 + $0xe8] sm:$0xf]
      %v382 = vld [vmem:[%s1 + $0xec] sm:$0xf]
      %v383 = vld [vmem:[%s1 + $0xf0] sm:$0xf]
      %v384 = vld [vmem:[%s1 + $0xf4] sm:$0xf]
      %v385 = vld [vmem:[%s1 + $0xf8] sm:$0xf]
      %v386 = vld [vmem:[%s1 + $0xfc] sm:$0xf]
      %v387 = vld [vmem:[%s1 + $0x100] sm:$0xf]
      %v388 = vld [vmem:[%s1 + $0x104] sm:$0xf]
      %v389 = vld [vmem:[%s1 + $0x108] sm:$0xf]
      %v390 = vld [vmem:[%s1 + $0x10c] sm:$0x3]
      %v391 = vld [vmem:[%s2] sm:$0x1]
      %v393 = vlaneseq
      %v394 = vshrl.u32 %v393, 7
      %v395 = vsub.s32 0, %v394
      %v396 = vrot.slane %v391, %v395
      %v494 = vunpack.c.l.b16 %v227
      %v495 = vunpack.c.h.b16 %v227
      %v496 = vunpack.c.l.b16 %v228
      %v497 = vunpack.c.h.b16 %v228
      %v498 = vunpack.c.l.b16 %v229
      %v499 = vunpack.c.l.b16 %v230
      %v500 = vunpack.c.h.b16 %v230
      %v501 = vunpack.c.l.b16 %v231
      %v502 = vunpack.c.h.b16 %v231
      %v503 = vunpack.c.l.b16 %v232
      %v504 = vunpack.c.l.b16 %v233
      %v505 = vunpack.c.h.b16 %v233
      %v506 = vunpack.c.l.b16 %v234
      %v507 = vunpack.c.h.b16 %v234
      %v508 = vunpack.c.l.b16 %v235
      %v509 = vunpack.c.l.b16 %v236
      %v510 = vunpack.c.h.b16 %v236
      %v511 = vunpack.c.l.b16 %v237
      %v512 = vunpack.c.h.b16 %v237
      %v513 = vunpack.c.l.b16 %v238
      %v514 = vunpack.c.l.b16 %v239
      %v515 = vunpack.c.h.b16 %v239
      %v516 = vunpack.c.l.b16 %v240
      %v517 = vunpack.c.h.b16 %v240
      %v518 = vunpack.c.l.b16 %v241
      %v519 = vunpack.c.l.b16 %v242
      %v520 = vunpack.c.h.b16 %v242
      %v521 = vunpack.c.l.b16 %v243
      %v522 = vunpack.c.h.b16 %v243
      %v523 = vunpack.c.l.b16 %v244
      %v524 = vunpack.c.l.b16 %v245
      %v525 = vunpack.c.h.b16 %v245
      %v526 = vunpack.c.l.b16 %v246
      %v527 = vunpack.c.h.b16 %v246
      %v528 = vunpack.c.l.b16 %v247
      %v529 = vunpack.c.l.b16 %v248
      %v530 = vunpack.c.h.b16 %v248
      %v531 = vunpack.c.l.b16 %v249
      %v532 = vunpack.c.h.b16 %v249
      %v533 = vunpack.c.l.b16 %v250
      %v534 = vunpack.c.l.b16 %v251
      %v535 = vunpack.c.h.b16 %v251
      %v536 = vunpack.c.l.b16 %v252
      %v537 = vunpack.c.h.b16 %v252
      %v538 = vunpack.c.l.b16 %v253
      %v539 = vunpack.c.l.b16 %v254
      %v540 = vunpack.c.h.b16 %v254
      %v541 = vunpack.c.l.b16 %v255
      %v542 = vunpack.c.h.b16 %v255
      %v543 = vunpack.c.l.b16 %v256
      %v544 = vunpack.c.l.b16 %v257
      %v545 = vunpack.c.h.b16 %v257
      %v546 = vunpack.c.l.b16 %v258
      %v547 = vunpack.c.h.b16 %v258
      %v548 = vunpack.c.l.b16 %v259
      %v549 = vunpack.c.l.b16 %v260
      %v550 = vunpack.c.h.b16 %v260
      %v551 = vunpack.c.l.b16 %v261
      %v552 = vunpack.c.h.b16 %v261
      %v553 = vunpack.c.l.b16 %v262
      %v554 = vunpack.c.l.b16 %v263
      %v555 = vunpack.c.h.b16 %v263
      %v556 = vunpack.c.l.b16 %v264
      %v557 = vunpack.c.h.b16 %v264
      %v558 = vunpack.c.l.b16 %v265
      %v559 = vunpack.c.l.b16 %v266
      %v560 = vunpack.c.h.b16 %v266
      %v561 = vunpack.c.l.b16 %v267
      %v562 = vunpack.c.h.b16 %v267
      %v563 = vunpack.c.l.b16 %v268
      %v564 = vunpack.c.l.b16 %v269
      %v565 = vunpack.c.h.b16 %v269
      %v566 = vunpack.c.l.b16 %v270
      %v567 = vunpack.c.h.b16 %v270
      %v568 = vunpack.c.l.b16 %v271
      %v569 = vunpack.c.l.b16 %v272
      %v570 = vunpack.c.h.b16 %v272
      %v571 = vunpack.c.l.b16 %v273
      %v572 = vunpack.c.h.b16 %v273
      %v573 = vunpack.c.l.b16 %v274
      %v574 = vunpack.c.l.b16 %v275
      %v575 = vunpack.c.h.b16 %v275
      %v576 = vunpack.c.l.b16 %v276
      %v577 = vunpack.c.h.b16 %v276
      %v578 = vunpack.c.l.b16 %v277
      %v579 = vunpack.c.l.b16 %v278
      %v580 = vunpack.c.h.b16 %v278
      %v581 = vunpack.c.l.b16 %v279
      %v582 = vunpack.c.h.b16 %v279
      %v583 = vunpack.c.l.b16 %v280
      %v584 = vunpack.c.l.b16 %v281
      %v585 = vunpack.c.h.b16 %v281
      %v586 = vunpack.c.l.b16 %v282
      %v587 = vunpack.c.h.b16 %v282
      %v588 = vunpack.c.l.b16 %v283
      %v589 = vunpack.c.l.b16 %v284
      %v590 = vunpack.c.h.b16 %v284
      %v591 = vunpack.c.l.b16 %v285
      %v592 = vunpack.c.h.b16 %v285
      %v593 = vunpack.c.l.b16 %v286
      %v594 = vunpack.c.l.b16 %v287
      %v595 = vunpack.c.h.b16 %v287
      %v596 = vunpack.c.l.b16 %v288
      %v597 = vunpack.c.h.b16 %v288
      %v598 = vunpack.c.l.b16 %v289
      %v599 = vunpack.c.l.b16 %v290
      %v600 = vunpack.c.h.b16 %v290
      %v601 = vunpack.c.l.b16 %v291
      %v602 = vunpack.c.h.b16 %v291
      %v603 = vunpack.c.l.b16 %v292
      %v604 = vunpack.c.l.b16 %v293
      %v605 = vunpack.c.h.b16 %v293
      %v606 = vunpack.c.l.b16 %v294
      %v607 = vunpack.c.h.b16 %v294
      %v608 = vunpack.c.l.b16 %v295
      %v609 = vunpack.c.l.b16 %v296
      %v610 = vunpack.c.h.b16 %v296
      %v611 = vunpack.c.l.b16 %v297
      %v612 = vunpack.c.h.b16 %v297
      %v613 = vunpack.c.l.b16 %v298
      %v614 = vunpack.c.l.b16 %v299
      %v615 = vunpack.c.h.b16 %v299
      %v616 = vunpack.c.l.b16 %v300
      %v617 = vunpack.c.h.b16 %v300
      %v618 = vunpack.c.l.b16 %v301
      %v619 = vunpack.c.l.b16 %v302
      %v620 = vunpack.c.h.b16 %v302
      %v621 = vunpack.c.l.b16 %v303
      %v622 = vunpack.c.h.b16 %v303
      %v623 = vunpack.c.l.b16 %v304
      %v624 = vunpack.c.l.b16 %v305
      %v625 = vunpack.c.h.b16 %v305
      %v626 = vunpack.c.l.b16 %v306
      %v627 = vunpack.c.h.b16 %v306
      %v628 = vunpack.c.l.b16 %v307
      %v629 = vunpack.c.l.b16 %v308
      %v630 = vunpack.c.h.b16 %v308
      %v631 = vunpack.c.l.b16 %v309
      %v632 = vunpack.c.h.b16 %v309
      %v633 = vunpack.c.l.b16 %v310
      %v634 = vunpack.c.l.b16 %v311
      %v635 = vunpack.c.h.b16 %v311
      %v636 = vunpack.c.l.b16 %v312
      %v637 = vunpack.c.h.b16 %v312
      %v638 = vunpack.c.l.b16 %v313
      %v639 = vunpack.c.l.b16 %v314
      %v640 = vunpack.c.h.b16 %v314
      %v641 = vunpack.c.l.b16 %v315
      %v642 = vunpack.c.h.b16 %v315
      %v643 = vunpack.c.l.b16 %v316
      %v644 = vunpack.c.l.b16 %v317
      %v645 = vunpack.c.h.b16 %v317
      %v646 = vunpack.c.l.b16 %v318
      %v647 = vunpack.c.h.b16 %v318
      %v648 = vunpack.c.l.b16 %v319
      %v649 = vunpack.c.l.b16 %v320
      %v650 = vunpack.c.h.b16 %v320
      %v651 = vunpack.c.l.b16 %v321
      %v652 = vunpack.c.h.b16 %v321
      %v653 = vunpack.c.l.b16 %v322
      %v654 = vpack.c.b16 %v499, %v494
      %v655 = vpack.c.b16 %v500, %v495
      %v656 = vpack.c.b16 %v501, %v496
      %v657 = vpack.c.b16 %v502, %v497
      %v658 = vpack.c.b16 %v503, %v498
      %v659 = vpack.c.b16 %v509, %v504
      %v660 = vpack.c.b16 %v510, %v505
      %v661 = vpack.c.b16 %v511, %v506
      %v662 = vpack.c.b16 %v512, %v507
      %v663 = vpack.c.b16 %v513, %v508
      %v664 = vpack.c.b16 %v519, %v514
      %v665 = vpack.c.b16 %v520, %v515
      %v666 = vpack.c.b16 %v521, %v516
      %v667 = vpack.c.b16 %v522, %v517
      %v668 = vpack.c.b16 %v523, %v518
      %v669 = vpack.c.b16 %v529, %v524
      %v670 = vpack.c.b16 %v530, %v525
      %v671 = vpack.c.b16 %v531, %v526
      %v672 = vpack.c.b16 %v532, %v527
      %v673 = vpack.c.b16 %v533, %v528
      %v674 = vpack.c.b16 %v539, %v534
      %v675 = vpack.c.b16 %v540, %v535
      %v676 = vpack.c.b16 %v541, %v536
      %v677 = vpack.c.b16 %v542, %v537
      %v678 = vpack.c.b16 %v543, %v538
      %v679 = vpack.c.b16 %v549, %v544
      %v680 = vpack.c.b16 %v550, %v545
      %v681 = vpack.c.b16 %v551, %v546
      %v682 = vpack.c.b16 %v552, %v547
      %v683 = vpack.c.b16 %v553, %v548
      %v684 = vpack.c.b16 %v559, %v554
      %v685 = vpack.c.b16 %v560, %v555
      %v686 = vpack.c.b16 %v561, %v556
      %v687 = vpack.c.b16 %v562, %v557
      %v688 = vpack.c.b16 %v563, %v558
      %v689 = vpack.c.b16 %v569, %v564
      %v690 = vpack.c.b16 %v570, %v565
      %v691 = vpack.c.b16 %v571, %v566
      %v692 = vpack.c.b16 %v572, %v567
      %v693 = vpack.c.b16 %v573, %v568
      %v694 = vpack.c.b16 %v579, %v574
      %v695 = vpack.c.b16 %v580, %v575
      %v696 = vpack.c.b16 %v581, %v576
      %v697 = vpack.c.b16 %v582, %v577
      %v698 = vpack.c.b16 %v583, %v578
      %v699 = vpack.c.b16 %v589, %v584
      %v700 = vpack.c.b16 %v590, %v585
      %v701 = vpack.c.b16 %v591, %v586
      %v702 = vpack.c.b16 %v592, %v587
      %v703 = vpack.c.b16 %v593, %v588
      %v704 = vpack.c.b16 %v599, %v594
      %v705 = vpack.c.b16 %v600, %v595
      %v706 = vpack.c.b16 %v601, %v596
      %v707 = vpack.c.b16 %v602, %v597
      %v708 = vpack.c.b16 %v603, %v598
      %v709 = vpack.c.b16 %v609, %v604
      %v710 = vpack.c.b16 %v610, %v605
      %v711 = vpack.c.b16 %v611, %v606
      %v712 = vpack.c.b16 %v612, %v607
      %v713 = vpack.c.b16 %v613, %v608
      %v714 = vpack.c.b16 %v619, %v614
      %v715 = vpack.c.b16 %v620, %v615
      %v716 = vpack.c.b16 %v621, %v616
      %v717 = vpack.c.b16 %v622, %v617
      %v718 = vpack.c.b16 %v623, %v618
      %v719 = vpack.c.b16 %v629, %v624
      %v720 = vpack.c.b16 %v630, %v625
      %v721 = vpack.c.b16 %v631, %v626
      %v722 = vpack.c.b16 %v632, %v627
      %v723 = vpack.c.b16 %v633, %v628
      %v724 = vpack.c.b16 %v639, %v634
      %v725 = vpack.c.b16 %v640, %v635
      %v726 = vpack.c.b16 %v641, %v636
      %v727 = vpack.c.b16 %v642, %v637
      %v728 = vpack.c.b16 %v643, %v638
      %v729 = vpack.c.b16 %v649, %v644
      %v730 = vpack.c.b16 %v650, %v645
      %v731 = vpack.c.b16 %v651, %v646
      %v732 = vpack.c.b16 %v652, %v647
      %v733 = vpack.c.b16 %v653, %v648
      %v866 = vunpack.c.l.b16 %v323
      %v867 = vunpack.c.l.b16 %v324
      %v868 = vunpack.c.l.b16 %v325
      %v869 = vunpack.c.l.b16 %v326
      %v870 = vunpack.c.l.b16 %v327
      %v871 = vunpack.c.l.b16 %v328
      %v872 = vunpack.c.l.b16 %v329
      %v873 = vunpack.c.l.b16 %v330
      %v874 = vunpack.c.l.b16 %v331
      %v875 = vunpack.c.l.b16 %v332
      %v876 = vunpack.c.l.b16 %v333
      %v877 = vunpack.c.l.b16 %v334
      %v878 = vunpack.c.l.b16 %v335
      %v879 = vunpack.c.l.b16 %v336
      %v880 = vunpack.c.l.b16 %v337
      %v881 = vunpack.c.l.b16 %v338
      %v882 = vunpack.c.l.b16 %v339
      %v883 = vunpack.c.l.b16 %v340
      %v884 = vunpack.c.l.b16 %v341
      %v885 = vunpack.c.l.b16 %v342
      %v886 = vunpack.c.l.b16 %v343
      %v887 = vunpack.c.l.b16 %v344
      %v888 = vunpack.c.l.b16 %v345
      %v889 = vunpack.c.l.b16 %v346
      %v890 = vunpack.c.l.b16 %v347
      %v891 = vunpack.c.l.b16 %v348
      %v892 = vunpack.c.l.b16 %v349
      %v893 = vunpack.c.l.b16 %v350
      %v894 = vunpack.c.l.b16 %v351
      %v895 = vunpack.c.l.b16 %v352
      %v896 = vunpack.c.l.b16 %v353
      %v897 = vunpack.c.l.b16 %v354
      %v898 = vunpack.c.l.b16 %v355
      %v899 = vunpack.c.l.b16 %v356
      %v900 = vunpack.c.l.b16 %v357
      %v901 = vunpack.c.l.b16 %v358
      %v902 = vunpack.c.l.b16 %v359
      %v903 = vunpack.c.l.b16 %v360
      %v904 = vunpack.c.l.b16 %v361
      %v905 = vunpack.c.l.b16 %v362
      %v906 = vunpack.c.l.b16 %v363
      %v907 = vunpack.c.l.b16 %v364
      %v908 = vunpack.c.l.b16 %v365
      %v909 = vunpack.c.l.b16 %v366
      %v910 = vunpack.c.l.b16 %v367
      %v911 = vunpack.c.l.b16 %v368
      %v912 = vunpack.c.l.b16 %v369
      %v913 = vunpack.c.l.b16 %v370
      %v914 = vunpack.c.l.b16 %v371
      %v915 = vunpack.c.l.b16 %v372
      %v916 = vunpack.c.l.b16 %v373
      %v917 = vunpack.c.l.b16 %v374
      %v918 = vunpack.c.l.b16 %v375
      %v919 = vunpack.c.l.b16 %v376
      %v920 = vunpack.c.l.b16 %v377
      %v921 = vunpack.c.l.b16 %v378
      %v922 = vunpack.c.l.b16 %v379
      %v923 = vunpack.c.l.b16 %v380
      %v924 = vunpack.c.l.b16 %v381
      %v925 = vunpack.c.l.b16 %v382
      %v926 = vunpack.c.l.b16 %v383
      %v927 = vunpack.c.l.b16 %v384
      %v928 = vunpack.c.l.b16 %v385
      %v929 = vunpack.c.l.b16 %v386
      %v930 = vunpack.c.l.b16 %v387
      %v931 = vunpack.c.l.b16 %v388
      %v932 = vunpack.c.l.b16 %v389
      %v933 = vunpack.c.l.b16 %v390
      %v934 = vpack.c.b16 %v867, %v866
      %v935 = vpack.c.b16 %v869, %v868
      %v936 = vpack.c.b16 %v871, %v870
      %v937 = vpack.c.b16 %v873, %v872
      %v938 = vpack.c.b16 %v875, %v874
      %v939 = vpack.c.b16 %v877, %v876
      %v940 = vpack.c.b16 %v879, %v878
      %v941 = vpack.c.b16 %v881, %v880
      %v942 = vpack.c.b16 %v883, %v882
      %v943 = vpack.c.b16 %v885, %v884
      %v944 = vpack.c.b16 %v887, %v886
      %v945 = vpack.c.b16 %v889, %v888
      %v946 = vpack.c.b16 %v891, %v890
      %v947 = vpack.c.b16 %v893, %v892
      %v948 = vpack.c.b16 %v895, %v894
      %v949 = vpack.c.b16 %v897, %v896
      %v950 = vpack.c.b16 %v899, %v898
      %v951 = vpack.c.b16 %v901, %v900
      %v952 = vpack.c.b16 %v903, %v902
      %v953 = vpack.c.b16 %v905, %v904
      %v954 = vpack.c.b16 %v907, %v906
      %v955 = vpack.c.b16 %v909, %v908
      %v956 = vpack.c.b16 %v911, %v910
      %v957 = vpack.c.b16 %v913, %v912
      %v958 = vpack.c.b16 %v915, %v914
      %v959 = vpack.c.b16 %v917, %v916
      %v960 = vpack.c.b16 %v919, %v918
      %v961 = vpack.c.b16 %v921, %v920
      %v962 = vpack.c.b16 %v923, %v922
      %v963 = vpack.c.b16 %v925, %v924
      %v964 = vpack.c.b16 %v927, %v926
      %v965 = vpack.c.b16 %v929, %v928
      %v966 = vpack.c.b16 %v931, %v930
      %v967 = vpack.c.b16 %v933, %v932
      %vm1001 = vcmask 228352
      %v1003 = vsel %vm1001, %v658, 0
      %v1006 = vsel %vm1001, %v663, 0
      %v1009 = vsel %vm1001, %v668, 0
      %v1012 = vsel %vm1001, %v673, 0
      %v1015 = vsel %vm1001, %v678, 0
      %v1018 = vsel %vm1001, %v683, 0
      %v1021 = vsel %vm1001, %v688, 0
      %v1024 = vsel %vm1001, %v693, 0
      %v1027 = vsel %vm1001, %v698, 0
      %v1030 = vsel %vm1001, %v703, 0
      %v1033 = vsel %vm1001, %v708, 0
      %v1036 = vsel %vm1001, %v713, 0
      %v1039 = vsel %vm1001, %v718, 0
      %v1042 = vsel %vm1001, %v723, 0
      %v1045 = vsel %vm1001, %v728, 0
      %v1048 = vsel %vm1001, %v733, 0
      %vm1050 = vcmask 1045504
      %v1052 = vsel %vm1050, %v967, 0
      %1054 = vmatprep.subr.bf16.mxu0 0
      %1055 = vmatpush1.bf16.msra.mxu0 %v941
      %1056 = vmatprep.subr.bf16.mxu0 0
      %1057 = vmatpush1.bf16.msra.mxu0 %v940
      %1058 = vmatprep.subr.bf16.mxu0 0
      %1059 = vmatpush1.bf16.msra.mxu0 %v939
      %1060 = vmatprep.subr.bf16.mxu0 0
      %1061 = vmatpush1.bf16.msra.mxu0 %v938
      %1062 = vmatprep.subr.bf16.mxu0 0
      %1063 = vmatpush1.bf16.msra.mxu0 %v937
      %1064 = vmatprep.subr.bf16.mxu0 0
      %1065 = vmatpush1.bf16.msra.mxu0 %v936
      %1066 = vmatprep.subr.bf16.mxu0 0
      %1067 = vmatpush1.bf16.msra.mxu0 %v935
      %1068 = vmatprep.subr.bf16.mxu0 0
      %1069 = vmatpush1.bf16.msra.mxu0 %v934
      %1070 = vmatprep.subr.bf16.mxu0 0
      %1071 = vmatpush2.bf16.msra.mxu0 %v949
      %1072 = vmatprep.subr.bf16.mxu0 0
      %1073 = vmatpush2.bf16.msra.mxu0 %v948
      %1074 = vmatprep.subr.bf16.mxu0 0
      %1075 = vmatpush2.bf16.msra.mxu0 %v947
      %1076 = vmatprep.subr.bf16.mxu0 0
      %1077 = vmatpush2.bf16.msra.mxu0 %v946
      %1078 = vmatprep.subr.bf16.mxu0 0
      %1079 = vmatpush2.bf16.msra.mxu0 %v945
      %1080 = vmatprep.subr.bf16.mxu0 0
      %1081 = vmatpush2.bf16.msra.mxu0 %v944
      %1082 = vmatprep.subr.bf16.mxu0 0
      %1083 = vmatpush2.bf16.msra.mxu0 %v943
      %1084 = vmatprep.subr.bf16.mxu0 0
      %1085 = vmatpush2.bf16.msra.mxu0 %v942
      %1086 = vmatprep.mubr.bf16.mxu0 %v655
      %1087 = vmatmul.mubr.bf16.gmra.mxu0 %v654
      %v1088 = vpop.f32.mrf.mxu0
      %v1089 = vadd.f32 %v396, %v1088
      %v1090 = vpop.f32.mrf.mxu0
      %v1091 = vpop.f32.mrf.mxu0
      %v1092 = vadd.f32 %v396, %v1091
      %v1093 = vpop.f32.mrf.mxu0
      %1094 = vmatprep.mubr.bf16.mxu0 %v660
      %1095 = vmatmul.mubr.bf16.gmra.mxu0 %v659
      %v1096 = vpop.f32.mrf.mxu0
      %v1097 = vadd.f32 %v396, %v1096
      %v1098 = vpop.f32.mrf.mxu0
      %v1099 = vpop.f32.mrf.mxu0
      %v1100 = vadd.f32 %v396, %v1099
      %v1101 = vpop.f32.mrf.mxu0
      %1102 = vmatprep.mubr.bf16.mxu0 %v665
      %1103 = vmatmul.mubr.bf16.gmra.mxu0 %v664
      %v1104 = vpop.f32.mrf.mxu0
      %v1105 = vadd.f32 %v396, %v1104
      %v1106 = vpop.f32.mrf.mxu0
      %v1107 = vpop.f32.mrf.mxu0
      %v1108 = vadd.f32 %v396, %v1107
      %v1109 = vpop.f32.mrf.mxu0
      %1110 = vmatprep.mubr.bf16.mxu0 %v670
      %1111 = vmatmul.mubr.bf16.gmra.mxu0 %v669
      %v1112 = vpop.f32.mrf.mxu0
      %v1113 = vadd.f32 %v396, %v1112
      %v1114 = vpop.f32.mrf.mxu0
      %v1115 = vpop.f32.mrf.mxu0
      %v1116 = vadd.f32 %v396, %v1115
      %v1117 = vpop.f32.mrf.mxu0
      %1118 = vmatprep.mubr.bf16.mxu0 %v675
      %1119 = vmatmul.mubr.bf16.gmra.mxu0 %v674
      %v1120 = vpop.f32.mrf.mxu0
      %v1121 = vadd.f32 %v396, %v1120
      %v1122 = vpop.f32.mrf.mxu0
      %v1123 = vpop.f32.mrf.mxu0
      %v1124 = vadd.f32 %v396, %v1123
      %v1125 = vpop.f32.mrf.mxu0
      %1126 = vmatprep.mubr.bf16.mxu0 %v680
      %1127 = vmatmul.mubr.bf16.gmra.mxu0 %v679
      %v1128 = vpop.f32.mrf.mxu0
      %v1129 = vadd.f32 %v396, %v1128
      %v1130 = vpop.f32.mrf.mxu0
      %v1131 = vpop.f32.mrf.mxu0
      %v1132 = vadd.f32 %v396, %v1131
      %v1133 = vpop.f32.mrf.mxu0
      %1134 = vmatprep.mubr.bf16.mxu0 %v685
      %1135 = vmatmul.mubr.bf16.gmra.mxu0 %v684
      %v1136 = vpop.f32.mrf.mxu0
      %v1137 = vadd.f32 %v396, %v1136
      %v1138 = vpop.f32.mrf.mxu0
      %v1139 = vpop.f32.mrf.mxu0
      %v1140 = vadd.f32 %v396, %v1139
      %v1141 = vpop.f32.mrf.mxu0
      %1142 = vmatprep.mubr.bf16.mxu0 %v690
      %1143 = vmatmul.mubr.bf16.gmra.mxu0 %v689
      %v1144 = vpop.f32.mrf.mxu0
      %v1145 = vadd.f32 %v396, %v1144
      %v1146 = vpop.f32.mrf.mxu0
      %v1147 = vpop.f32.mrf.mxu0
      %v1148 = vadd.f32 %v396, %v1147
      %v1149 = vpop.f32.mrf.mxu0
      %1150 = vmatprep.mubr.bf16.mxu0 %v695
      %1151 = vmatmul.mubr.bf16.gmra.mxu0 %v694
      %v1152 = vpop.f32.mrf.mxu0
      %v1153 = vadd.f32 %v396, %v1152
      %v1154 = vpop.f32.mrf.mxu0
      %v1155 = vpop.f32.mrf.mxu0
      %v1156 = vadd.f32 %v396, %v1155
      %v1157 = vpop.f32.mrf.mxu0
      %1158 = vmatprep.mubr.bf16.mxu0 %v700
      %1159 = vmatmul.mubr.bf16.gmra.mxu0 %v699
      %v1160 = vpop.f32.mrf.mxu0
      %v1161 = vadd.f32 %v396, %v1160
      %v1162 = vpop.f32.mrf.mxu0
      %v1163 = vpop.f32.mrf.mxu0
      %v1164 = vadd.f32 %v396, %v1163
      %v1165 = vpop.f32.mrf.mxu0
      %1166 = vmatprep.mubr.bf16.mxu0 %v705
      %1167 = vmatmul.mubr.bf16.gmra.mxu0 %v704
      %v1168 = vpop.f32.mrf.mxu0
      %v1169 = vadd.f32 %v396, %v1168
      %v1170 = vpop.f32.mrf.mxu0
      %v1171 = vpop.f32.mrf.mxu0
      %v1172 = vadd.f32 %v396, %v1171
      %v1173 = vpop.f32.mrf.mxu0
      %1174 = vmatprep.mubr.bf16.mxu0 %v710
      %1175 = vmatmul.mubr.bf16.gmra.mxu0 %v709
      %v1176 = vpop.f32.mrf.mxu0
      %v1177 = vadd.f32 %v396, %v1176
      %v1178 = vpop.f32.mrf.mxu0
      %v1179 = vpop.f32.mrf.mxu0
      %v1180 = vadd.f32 %v396, %v1179
      %v1181 = vpop.f32.mrf.mxu0
      %1182 = vmatprep.mubr.bf16.mxu0 %v715
      %1183 = vmatmul.mubr.bf16.gmra.mxu0 %v714
      %v1184 = vpop.f32.mrf.mxu0
      %v1185 = vadd.f32 %v396, %v1184
      %v1186 = vpop.f32.mrf.mxu0
      %v1187 = vpop.f32.mrf.mxu0
      %v1188 = vadd.f32 %v396, %v1187
      %v1189 = vpop.f32.mrf.mxu0
      %1190 = vmatprep.mubr.bf16.mxu0 %v720
      %1191 = vmatmul.mubr.bf16.gmra.mxu0 %v719
      %v1192 = vpop.f32.mrf.mxu0
      %v1193 = vadd.f32 %v396, %v1192
      %v1194 = vpop.f32.mrf.mxu0
      %v1195 = vpop.f32.mrf.mxu0
      %v1196 = vadd.f32 %v396, %v1195
      %v1197 = vpop.f32.mrf.mxu0
      %1198 = vmatprep.mubr.bf16.mxu0 %v725
      %1199 = vmatmul.mubr.bf16.gmra.mxu0 %v724
      %v1200 = vpop.f32.mrf.mxu0
      %v1201 = vadd.f32 %v396, %v1200
      %v1202 = vpop.f32.mrf.mxu0
      %v1203 = vpop.f32.mrf.mxu0
      %v1204 = vadd.f32 %v396, %v1203
      %v1205 = vpop.f32.mrf.mxu0
      %1206 = vmatprep.mubr.bf16.mxu0 %v730
      %1207 = vmatmul.mubr.bf16.gmra.mxu0 %v729
      %v1208 = vpop.f32.mrf.mxu0
      %v1209 = vadd.f32 %v396, %v1208
      %v1210 = vpop.f32.mrf.mxu0
      %v1211 = vpop.f32.mrf.mxu0
      %v1212 = vadd.f32 %v396, %v1211
      %v1213 = vpop.f32.mrf.mxu0
      %1214 = vdwg.mxu0
      %1215 = vmatprep.subr.bf16.mxu0 0
      %1216 = vmatpush1.bf16.msra.mxu0 %v957
      %1217 = vmatprep.subr.bf16.mxu0 0
      %1218 = vmatpush1.bf16.msra.mxu0 %v956
      %1219 = vmatprep.subr.bf16.mxu0 0
      %1220 = vmatpush1.bf16.msra.mxu0 %v955
      %1221 = vmatprep.subr.bf16.mxu0 0
      %1222 = vmatpush1.bf16.msra.mxu0 %v954
      %1223 = vmatprep.subr.bf16.mxu0 0
      %1224 = vmatpush1.bf16.msra.mxu0 %v953
      %1225 = vmatprep.subr.bf16.mxu0 0
      %1226 = vmatpush1.bf16.msra.mxu0 %v952
      %1227 = vmatprep.subr.bf16.mxu0 0
      %1228 = vmatpush1.bf16.msra.mxu0 %v951
      %1229 = vmatprep.subr.bf16.mxu0 0
      %1230 = vmatpush1.bf16.msra.mxu0 %v950
      %1231 = vmatprep.subr.bf16.mxu0 0
      %1232 = vmatpush2.bf16.msra.mxu0 %v965
      %1233 = vmatprep.subr.bf16.mxu0 0
      %1234 = vmatpush2.bf16.msra.mxu0 %v964
      %1235 = vmatprep.subr.bf16.mxu0 0
      %1236 = vmatpush2.bf16.msra.mxu0 %v963
      %1237 = vmatprep.subr.bf16.mxu0 0
      %1238 = vmatpush2.bf16.msra.mxu0 %v962
      %1239 = vmatprep.subr.bf16.mxu0 0
      %1240 = vmatpush2.bf16.msra.mxu0 %v961
      %1241 = vmatprep.subr.bf16.mxu0 0
      %1242 = vmatpush2.bf16.msra.mxu0 %v960
      %1243 = vmatprep.subr.bf16.mxu0 0
      %1244 = vmatpush2.bf16.msra.mxu0 %v959
      %1245 = vmatprep.subr.bf16.mxu0 0
      %1246 = vmatpush2.bf16.msra.mxu0 %v958
      %1247 = vmatprep.mubr.bf16.mxu0 %v657
      %1248 = vmatmul.mubr.bf16.gmra.mxu0 %v656
      %v1249 = vpop.f32.mrf.mxu0
      %v1250 = vadd.f32 %v1089, %v1249
      %v1251 = vpop.f32.mrf.mxu0
      %v1252 = vpop.f32.mrf.mxu0
      %v1253 = vadd.f32 %v1092, %v1252
      %v1254 = vpop.f32.mrf.mxu0
      %1255 = vmatprep.mubr.bf16.mxu0 %v662
      %1256 = vmatmul.mubr.bf16.gmra.mxu0 %v661
      %v1257 = vpop.f32.mrf.mxu0
      %v1258 = vadd.f32 %v1097, %v1257
      %v1259 = vpop.f32.mrf.mxu0
      %v1260 = vpop.f32.mrf.mxu0
      %v1261 = vadd.f32 %v1100, %v1260
      %v1262 = vpop.f32.mrf.mxu0
      %1263 = vmatprep.mubr.bf16.mxu0 %v667
      %1264 = vmatmul.mubr.bf16.gmra.mxu0 %v666
      %v1265 = vpop.f32.mrf.mxu0
      %v1266 = vadd.f32 %v1105, %v1265
      %v1267 = vpop.f32.mrf.mxu0
      %v1268 = vpop.f32.mrf.mxu0
      %v1269 = vadd.f32 %v1108, %v1268
      %v1270 = vpop.f32.mrf.mxu0
      %1271 = vmatprep.mubr.bf16.mxu0 %v672
      %1272 = vmatmul.mubr.bf16.gmra.mxu0 %v671
      %v1273 = vpop.f32.mrf.mxu0
      %v1274 = vadd.f32 %v1113, %v1273
      %v1275 = vpop.f32.mrf.mxu0
      %v1276 = vpop.f32.mrf.mxu0
      %v1277 = vadd.f32 %v1116, %v1276
      %v1278 = vpop.f32.mrf.mxu0
      %1279 = vmatprep.mubr.bf16.mxu0 %v677
      %1280 = vmatmul.mubr.bf16.gmra.mxu0 %v676
      %v1281 = vpop.f32.mrf.mxu0
      %v1282 = vadd.f32 %v1121, %v1281
      %v1283 = vpop.f32.mrf.mxu0
      %v1284 = vpop.f32.mrf.mxu0
      %v1285 = vadd.f32 %v1124, %v1284
      %v1286 = vpop.f32.mrf.mxu0
      %1287 = vmatprep.mubr.bf16.mxu0 %v682
      %1288 = vmatmul.mubr.bf16.gmra.mxu0 %v681
      %v1289 = vpop.f32.mrf.mxu0
      %v1290 = vadd.f32 %v1129, %v1289
      %v1291 = vpop.f32.mrf.mxu0
      %v1292 = vpop.f32.mrf.mxu0
      %v1293 = vadd.f32 %v1132, %v1292
      %v1294 = vpop.f32.mrf.mxu0
      %1295 = vmatprep.mubr.bf16.mxu0 %v687
      %1296 = vmatmul.mubr.bf16.gmra.mxu0 %v686
      %v1297 = vpop.f32.mrf.mxu0
      %v1298 = vadd.f32 %v1137, %v1297
      %v1299 = vpop.f32.mrf.mxu0
      %v1300 = vpop.f32.mrf.mxu0
      %v1301 = vadd.f32 %v1140, %v1300
      %v1302 = vpop.f32.mrf.mxu0
      %1303 = vmatprep.mubr.bf16.mxu0 %v692
      %1304 = vmatmul.mubr.bf16.gmra.mxu0 %v691
      %v1305 = vpop.f32.mrf.mxu0
      %v1306 = vadd.f32 %v1145, %v1305
      %v1307 = vpop.f32.mrf.mxu0
      %v1308 = vpop.f32.mrf.mxu0
      %v1309 = vadd.f32 %v1148, %v1308
      %v1310 = vpop.f32.mrf.mxu0
      %1311 = vmatprep.mubr.bf16.mxu0 %v697
      %1312 = vmatmul.mubr.bf16.gmra.mxu0 %v696
      %v1313 = vpop.f32.mrf.mxu0
      %v1314 = vadd.f32 %v1153, %v1313
      %v1315 = vpop.f32.mrf.mxu0
      %v1316 = vpop.f32.mrf.mxu0
      %v1317 = vadd.f32 %v1156, %v1316
      %v1318 = vpop.f32.mrf.mxu0
      %1319 = vmatprep.mubr.bf16.mxu0 %v702
      %1320 = vmatmul.mubr.bf16.gmra.mxu0 %v701
      %v1321 = vpop.f32.mrf.mxu0
      %v1322 = vadd.f32 %v1161, %v1321
      %v1323 = vpop.f32.mrf.mxu0
      %v1324 = vpop.f32.mrf.mxu0
      %v1325 = vadd.f32 %v1164, %v1324
      %v1326 = vpop.f32.mrf.mxu0
      %1327 = vmatprep.mubr.bf16.mxu0 %v707
      %1328 = vmatmul.mubr.bf16.gmra.mxu0 %v706
      %v1329 = vpop.f32.mrf.mxu0
      %v1330 = vadd.f32 %v1169, %v1329
      %v1331 = vpop.f32.mrf.mxu0
      %v1332 = vpop.f32.mrf.mxu0
      %v1333 = vadd.f32 %v1172, %v1332
      %v1334 = vpop.f32.mrf.mxu0
      %1335 = vmatprep.mubr.bf16.mxu0 %v712
      %1336 = vmatmul.mubr.bf16.gmra.mxu0 %v711
      %v1337 = vpop.f32.mrf.mxu0
      %v1338 = vadd.f32 %v1177, %v1337
      %v1339 = vpop.f32.mrf.mxu0
      %v1340 = vpop.f32.mrf.mxu0
      %v1341 = vadd.f32 %v1180, %v1340
      %v1342 = vpop.f32.mrf.mxu0
      %1343 = vmatprep.mubr.bf16.mxu0 %v717
      %1344 = vmatmul.mubr.bf16.gmra.mxu0 %v716
      %v1345 = vpop.f32.mrf.mxu0
      %v1346 = vadd.f32 %v1185, %v1345
      %v1347 = vpop.f32.mrf.mxu0
      %v1348 = vpop.f32.mrf.mxu0
      %v1349 = vadd.f32 %v1188, %v1348
      %v1350 = vpop.f32.mrf.mxu0
      %1351 = vmatprep.mubr.bf16.mxu0 %v722
      %1352 = vmatmul.mubr.bf16.gmra.mxu0 %v721
      %v1353 = vpop.f32.mrf.mxu0
      %v1354 = vadd.f32 %v1193, %v1353
      %v1355 = vpop.f32.mrf.mxu0
      %v1356 = vpop.f32.mrf.mxu0
      %v1357 = vadd.f32 %v1196, %v1356
      %v1358 = vpop.f32.mrf.mxu0
      %1359 = vmatprep.mubr.bf16.mxu0 %v727
      %1360 = vmatmul.mubr.bf16.gmra.mxu0 %v726
      %v1361 = vpop.f32.mrf.mxu0
      %v1362 = vadd.f32 %v1201, %v1361
      %v1363 = vpop.f32.mrf.mxu0
      %v1364 = vpop.f32.mrf.mxu0
      %v1365 = vadd.f32 %v1204, %v1364
      %v1366 = vpop.f32.mrf.mxu0
      %1367 = vmatprep.mubr.bf16.mxu0 %v732
      %1368 = vmatmul.mubr.bf16.gmra.mxu0 %v731
      %v1369 = vpop.f32.mrf.mxu0
      %v1370 = vadd.f32 %v1209, %v1369
      %v1371 = vpop.f32.mrf.mxu0
      %v1372 = vpop.f32.mrf.mxu0
      %v1373 = vadd.f32 %v1212, %v1372
      %v1374 = vpop.f32.mrf.mxu0
      %1375 = vdwg.mxu0
      %1376 = vmatprep.subr.bf16.mxu0 0
      %1377 = vmatpush1.bf16.msra.mxu0 0
      %1378 = vmatprep.subr.bf16.mxu0 0
      %1379 = vmatpush1.bf16.msra.mxu0 0
      %1380 = vmatprep.subr.bf16.mxu0 0
      %1381 = vmatpush1.bf16.msra.mxu0 0
      %1382 = vmatprep.subr.bf16.mxu0 0
      %1383 = vmatpush1.bf16.msra.mxu0 0
      %1384 = vmatprep.subr.bf16.mxu0 0
      %1385 = vmatpush1.bf16.msra.mxu0 0
      %1386 = vmatprep.subr.bf16.mxu0 0
      %1387 = vmatpush1.bf16.msra.mxu0 0
      %1388 = vmatprep.subr.bf16.mxu0 0
      %1389 = vmatpush1.bf16.msra.mxu0 %v1052
      %1390 = vmatprep.subr.bf16.mxu0 0
      %1391 = vmatpush1.bf16.msra.mxu0 %v966
      %1392 = vmatprep.subr.bf16.mxu0 0
      %1393 = vmatpush2.bf16.msra.mxu0 0
      %1394 = vmatprep.subr.bf16.mxu0 0
      %1395 = vmatpush2.bf16.msra.mxu0 0
      %1396 = vmatprep.subr.bf16.mxu0 0
      %1397 = vmatpush2.bf16.msra.mxu0 0
      %1398 = vmatprep.subr.bf16.mxu0 0
      %1399 = vmatpush2.bf16.msra.mxu0 0
      %1400 = vmatprep.subr.bf16.mxu0 0
      %1401 = vmatpush2.bf16.msra.mxu0 0
      %1402 = vmatprep.subr.bf16.mxu0 0
      %1403 = vmatpush2.bf16.msra.mxu0 0
      %1404 = vmatprep.subr.bf16.mxu0 0
      %1405 = vmatpush2.bf16.msra.mxu0 0
      %1406 = vmatprep.subr.bf16.mxu0 0
      %1407 = vmatpush2.bf16.msra.mxu0 0
      %1408 = vmatprep.mubr.bf16.mxu0 0
      %1409 = vmatmul.mubr.bf16.gmra.mxu0 %v1003
      %v1410 = vpop.f32.mrf.mxu0
      %v1411 = vadd.f32 %v1250, %v1410
      %v1412 = vpop.f32.mrf.mxu0
      %v1413 = vpop.f32.mrf.mxu0
      %v1414 = vadd.f32 %v1253, %v1413
      %v1415 = vpop.f32.mrf.mxu0
      %1416 = vmatprep.mubr.bf16.mxu0 0
      %1417 = vmatmul.mubr.bf16.gmra.mxu0 %v1006
      %v1418 = vpop.f32.mrf.mxu0
      %v1419 = vadd.f32 %v1258, %v1418
      %v1420 = vpop.f32.mrf.mxu0
      %v1421 = vpop.f32.mrf.mxu0
      %v1422 = vadd.f32 %v1261, %v1421
      %v1423 = vpop.f32.mrf.mxu0
      %1424 = vmatprep.mubr.bf16.mxu0 0
      %1425 = vmatmul.mubr.bf16.gmra.mxu0 %v1009
      %v1426 = vpop.f32.mrf.mxu0
      %v1427 = vadd.f32 %v1266, %v1426
      %v1428 = vpop.f32.mrf.mxu0
      %v1429 = vpop.f32.mrf.mxu0
      %v1430 = vadd.f32 %v1269, %v1429
      %v1431 = vpop.f32.mrf.mxu0
      %1432 = vmatprep.mubr.bf16.mxu0 0
      %1433 = vmatmul.mubr.bf16.gmra.mxu0 %v1012
      %v1434 = vpop.f32.mrf.mxu0
      %v1435 = vadd.f32 %v1274, %v1434
      %v1436 = vpop.f32.mrf.mxu0
      %v1437 = vpop.f32.mrf.mxu0
      %v1438 = vadd.f32 %v1277, %v1437
      %v1439 = vpop.f32.mrf.mxu0
      %1440 = vmatprep.mubr.bf16.mxu0 0
      %1441 = vmatmul.mubr.bf16.gmra.mxu0 %v1015
      %v1442 = vpop.f32.mrf.mxu0
      %v1443 = vadd.f32 %v1282, %v1442
      %v1444 = vpop.f32.mrf.mxu0
      %v1445 = vpop.f32.mrf.mxu0
      %v1446 = vadd.f32 %v1285, %v1445
      %v1447 = vpop.f32.mrf.mxu0
      %1448 = vmatprep.mubr.bf16.mxu0 0
      %1449 = vmatmul.mubr.bf16.gmra.mxu0 %v1018
      %v1450 = vpop.f32.mrf.mxu0
      %v1451 = vadd.f32 %v1290, %v1450
      %v1452 = vpop.f32.mrf.mxu0
      %v1453 = vpop.f32.mrf.mxu0
      %v1454 = vadd.f32 %v1293, %v1453
      %v1455 = vpop.f32.mrf.mxu0
      %1456 = vmatprep.mubr.bf16.mxu0 0
      %1457 = vmatmul.mubr.bf16.gmra.mxu0 %v1021
      %v1458 = vpop.f32.mrf.mxu0
      %v1459 = vadd.f32 %v1298, %v1458
      %v1460 = vpop.f32.mrf.mxu0
      %v1461 = vpop.f32.mrf.mxu0
      %v1462 = vadd.f32 %v1301, %v1461
      %v1463 = vpop.f32.mrf.mxu0
      %1464 = vmatprep.mubr.bf16.mxu0 0
      %1465 = vmatmul.mubr.bf16.gmra.mxu0 %v1024
      %v1466 = vpop.f32.mrf.mxu0
      %v1467 = vadd.f32 %v1306, %v1466
      %v1468 = vpop.f32.mrf.mxu0
      %v1469 = vpop.f32.mrf.mxu0
      %v1470 = vadd.f32 %v1309, %v1469
      %v1471 = vpop.f32.mrf.mxu0
      %1472 = vmatprep.mubr.bf16.mxu0 0
      %1473 = vmatmul.mubr.bf16.gmra.mxu0 %v1027
      %v1474 = vpop.f32.mrf.mxu0
      %v1475 = vadd.f32 %v1314, %v1474
      %v1476 = vpop.f32.mrf.mxu0
      %v1477 = vpop.f32.mrf.mxu0
      %v1478 = vadd.f32 %v1317, %v1477
      %v1479 = vpop.f32.mrf.mxu0
      %1480 = vmatprep.mubr.bf16.mxu0 0
      %1481 = vmatmul.mubr.bf16.gmra.mxu0 %v1030
      %v1482 = vpop.f32.mrf.mxu0
      %v1483 = vadd.f32 %v1322, %v1482
      %v1484 = vpop.f32.mrf.mxu0
      %v1485 = vpop.f32.mrf.mxu0
      %v1486 = vadd.f32 %v1325, %v1485
      %v1487 = vpop.f32.mrf.mxu0
      %1488 = vmatprep.mubr.bf16.mxu0 0
      %1489 = vmatmul.mubr.bf16.gmra.mxu0 %v1033
      %v1490 = vpop.f32.mrf.mxu0
      %v1491 = vadd.f32 %v1330, %v1490
      %v1492 = vpop.f32.mrf.mxu0
      %v1493 = vpop.f32.mrf.mxu0
      %v1494 = vadd.f32 %v1333, %v1493
      %v1495 = vpop.f32.mrf.mxu0
      %1496 = vmatprep.mubr.bf16.mxu0 0
      %1497 = vmatmul.mubr.bf16.gmra.mxu0 %v1036
      %v1498 = vpop.f32.mrf.mxu0
      %v1499 = vadd.f32 %v1338, %v1498
      %v1500 = vpop.f32.mrf.mxu0
      %v1501 = vpop.f32.mrf.mxu0
      %v1502 = vadd.f32 %v1341, %v1501
      %v1503 = vpop.f32.mrf.mxu0
      %1504 = vmatprep.mubr.bf16.mxu0 0
      %1505 = vmatmul.mubr.bf16.gmra.mxu0 %v1039
      %v1506 = vpop.f32.mrf.mxu0
      %v1507 = vadd.f32 %v1346, %v1506
      %v1508 = vpop.f32.mrf.mxu0
      %v1509 = vpop.f32.mrf.mxu0
      %v1510 = vadd.f32 %v1349, %v1509
      %v1511 = vpop.f32.mrf.mxu0
      %1512 = vmatprep.mubr.bf16.mxu0 0
      %1513 = vmatmul.mubr.bf16.gmra.mxu0 %v1042
      %v1514 = vpop.f32.mrf.mxu0
      %v1515 = vadd.f32 %v1354, %v1514
      %v1516 = vpop.f32.mrf.mxu0
      %v1517 = vpop.f32.mrf.mxu0
      %v1518 = vadd.f32 %v1357, %v1517
      %v1519 = vpop.f32.mrf.mxu0
      %1520 = vmatprep.mubr.bf16.mxu0 0
      %1521 = vmatmul.mubr.bf16.gmra.mxu0 %v1045
      %v1522 = vpop.f32.mrf.mxu0
      %v1523 = vadd.f32 %v1362, %v1522
      %v1524 = vpop.f32.mrf.mxu0
      %v1525 = vpop.f32.mrf.mxu0
      %v1526 = vadd.f32 %v1365, %v1525
      %v1527 = vpop.f32.mrf.mxu0
      %1528 = vmatprep.mubr.bf16.mxu0 0
      %1529 = vmatmul.mubr.bf16.gmra.mxu0 %v1048
      %v1530 = vpop.f32.mrf.mxu0
      %v1531 = vadd.f32 %v1370, %v1530
      %v1532 = vpop.f32.mrf.mxu0
      %v1533 = vpop.f32.mrf.mxu0
      %v1534 = vadd.f32 %v1373, %v1533
      %v1535 = vpop.f32.mrf.mxu0
      %1536 = vdwg.mxu0
      %v1537 = vld [vmem:[%s218] sm:$0xf]
      %v1538 = vld [vmem:[%s218 + $0x4] sm:$0xf]
      %v1539 = vld [vmem:[%s218 + $0x8] sm:$0xf]
      %v1540 = vld [vmem:[%s218 + $0xc] sm:$0xf]
      %v1541 = vld [vmem:[%s218 + $0x10] sm:$0xf]
      %v1542 = vld [vmem:[%s218 + $0x14] sm:$0xf]
      %v1543 = vld [vmem:[%s218 + $0x18] sm:$0xf]
      %v1544 = vld [vmem:[%s218 + $0x1c] sm:$0xf]
      %v1545 = vld [vmem:[%s218 + $0x20] sm:$0xf]
      %v1546 = vld [vmem:[%s218 + $0x24] sm:$0xf]
      %v1547 = vld [vmem:[%s218 + $0x28] sm:$0xf]
      %v1548 = vld [vmem:[%s218 + $0x2c] sm:$0xf]
      %v1549 = vld [vmem:[%s218 + $0x30] sm:$0xf]
      %v1550 = vld [vmem:[%s218 + $0x34] sm:$0xf]
      %v1551 = vld [vmem:[%s218 + $0x38] sm:$0xf]
      %v1552 = vld [vmem:[%s218 + $0x3c] sm:$0xf]
      %v1553 = vld [vmem:[%s218 + $0x40] sm:$0xf]
      %v1554 = vld [vmem:[%s218 + $0x44] sm:$0xf]
      %v1555 = vld [vmem:[%s218 + $0x48] sm:$0xf]
      %v1556 = vld [vmem:[%s218 + $0x4c] sm:$0xf]
      %v1557 = vld [vmem:[%s218 + $0x50] sm:$0xf]
      %v1558 = vld [vmem:[%s218 + $0x54] sm:$0xf]
      %v1559 = vld [vmem:[%s218 + $0x58] sm:$0xf]
      %v1560 = vld [vmem:[%s218 + $0x5c] sm:$0xf]
      %v1561 = vld [vmem:[%s218 + $0x60] sm:$0xf]
      %v1562 = vld [vmem:[%s218 + $0x64] sm:$0xf]
      %v1563 = vld [vmem:[%s218 + $0x68] sm:$0xf]
      %v1564 = vld [vmem:[%s218 + $0x6c] sm:$0xf]
      %v1565 = vld [vmem:[%s218 + $0x70] sm:$0xf]
      %v1566 = vld [vmem:[%s218 + $0x74] sm:$0xf]
      %v1567 = vld [vmem:[%s218 + $0x78] sm:$0xf]
      %v1568 = vld [vmem:[%s218 + $0x7c] sm:$0xf]
      %v1569 = vunpack.c.l.bf16 %v1537
      %v1570 = vunpack.c.l.bf16 %v1538
      %v1571 = vunpack.c.l.bf16 %v1539
      %v1572 = vunpack.c.l.bf16 %v1540
      %v1573 = vunpack.c.l.bf16 %v1541
      %v1574 = vunpack.c.l.bf16 %v1542
      %v1575 = vunpack.c.l.bf16 %v1543
      %v1576 = vunpack.c.l.bf16 %v1544
      %v1577 = vunpack.c.l.bf16 %v1545
      %v1578 = vunpack.c.l.bf16 %v1546
      %v1579 = vunpack.c.l.bf16 %v1547
      %v1580 = vunpack.c.l.bf16 %v1548
      %v1581 = vunpack.c.l.bf16 %v1549
      %v1582 = vunpack.c.l.bf16 %v1550
      %v1583 = vunpack.c.l.bf16 %v1551
      %v1584 = vunpack.c.l.bf16 %v1552
      %v1585 = vunpack.c.l.bf16 %v1553
      %v1586 = vunpack.c.l.bf16 %v1554
      %v1587 = vunpack.c.l.bf16 %v1555
      %v1588 = vunpack.c.l.bf16 %v1556
      %v1589 = vunpack.c.l.bf16 %v1557
      %v1590 = vunpack.c.l.bf16 %v1558
      %v1591 = vunpack.c.l.bf16 %v1559
      %v1592 = vunpack.c.l.bf16 %v1560
      %v1593 = vunpack.c.l.bf16 %v1561
      %v1594 = vunpack.c.l.bf16 %v1562
      %v1595 = vunpack.c.l.bf16 %v1563
      %v1596 = vunpack.c.l.bf16 %v1564
      %v1597 = vunpack.c.l.bf16 %v1565
      %v1598 = vunpack.c.l.bf16 %v1566
      %v1599 = vunpack.c.l.bf16 %v1567
      %v1600 = vunpack.c.l.bf16 %v1568
      %v1601 = vadd.f32 %v1411, %v1569
      %v1602 = vadd.f32 %v1414, %v1570
      %v1603 = vadd.f32 %v1419, %v1571
      %v1604 = vadd.f32 %v1422, %v1572
      %v1605 = vadd.f32 %v1427, %v1573
      %v1606 = vadd.f32 %v1430, %v1574
      %v1607 = vadd.f32 %v1435, %v1575
      %v1608 = vadd.f32 %v1438, %v1576
      %v1609 = vadd.f32 %v1443, %v1577
      %v1610 = vadd.f32 %v1446, %v1578
      %v1611 = vadd.f32 %v1451, %v1579
      %v1612 = vadd.f32 %v1454, %v1580
      %v1613 = vadd.f32 %v1459, %v1581
      %v1614 = vadd.f32 %v1462, %v1582
      %v1615 = vadd.f32 %v1467, %v1583
      %v1616 = vadd.f32 %v1470, %v1584
      %v1617 = vadd.f32 %v1475, %v1585
      %v1618 = vadd.f32 %v1478, %v1586
      %v1619 = vadd.f32 %v1483, %v1587
      %v1620 = vadd.f32 %v1486, %v1588
      %v1621 = vadd.f32 %v1491, %v1589
      %v1622 = vadd.f32 %v1494, %v1590
      %v1623 = vadd.f32 %v1499, %v1591
      %v1624 = vadd.f32 %v1502, %v1592
      %v1625 = vadd.f32 %v1507, %v1593
      %v1626 = vadd.f32 %v1510, %v1594
      %v1627 = vadd.f32 %v1515, %v1595
      %v1628 = vadd.f32 %v1518, %v1596
      %v1629 = vadd.f32 %v1523, %v1597
      %v1630 = vadd.f32 %v1526, %v1598
      %v1631 = vadd.f32 %v1531, %v1599
      %v1632 = vadd.f32 %v1534, %v1600
      %v1633 = vpack.c.bf16 %v1602, %v1601
      %v1634 = vpack.c.bf16 %v1604, %v1603
      %v1635 = vpack.c.bf16 %v1606, %v1605
      %v1636 = vpack.c.bf16 %v1608, %v1607
      %v1637 = vpack.c.bf16 %v1610, %v1609
      %v1638 = vpack.c.bf16 %v1612, %v1611
      %v1639 = vpack.c.bf16 %v1614, %v1613
      %v1640 = vpack.c.bf16 %v1616, %v1615
      %v1641 = vpack.c.bf16 %v1618, %v1617
      %v1642 = vpack.c.bf16 %v1620, %v1619
      %v1643 = vpack.c.bf16 %v1622, %v1621
      %v1644 = vpack.c.bf16 %v1624, %v1623
      %v1645 = vpack.c.bf16 %v1626, %v1625
      %v1646 = vpack.c.bf16 %v1628, %v1627
      %v1647 = vpack.c.bf16 %v1630, %v1629
      %v1648 = vpack.c.bf16 %v1632, %v1631
      %v1665 = vunpack.c.l.b16 %v1633
      %v1666 = vunpack.c.h.b16 %v1633
      %v1667 = vunpack.c.l.b16 %v1634
      %v1668 = vunpack.c.h.b16 %v1634
      %v1669 = vunpack.c.l.b16 %v1635
      %v1670 = vunpack.c.h.b16 %v1635
      %v1671 = vunpack.c.l.b16 %v1636
      %v1672 = vunpack.c.h.b16 %v1636
      %v1673 = vunpack.c.l.b16 %v1637
      %v1674 = vunpack.c.h.b16 %v1637
      %v1675 = vunpack.c.l.b16 %v1638
      %v1676 = vunpack.c.h.b16 %v1638
      %v1677 = vunpack.c.l.b16 %v1639
      %v1678 = vunpack.c.h.b16 %v1639
      %v1679 = vunpack.c.l.b16 %v1640
      %v1680 = vunpack.c.h.b16 %v1640
      %v1681 = vunpack.c.l.b16 %v1641
      %v1682 = vunpack.c.h.b16 %v1641
      %v1683 = vunpack.c.l.b16 %v1642
      %v1684 = vunpack.c.h.b16 %v1642
      %v1685 = vunpack.c.l.b16 %v1643
      %v1686 = vunpack.c.h.b16 %v1643
      %v1687 = vunpack.c.l.b16 %v1644
      %v1688 = vunpack.c.h.b16 %v1644
      %v1689 = vunpack.c.l.b16 %v1645
      %v1690 = vunpack.c.h.b16 %v1645
      %v1691 = vunpack.c.l.b16 %v1646
      %v1692 = vunpack.c.h.b16 %v1646
      %v1693 = vunpack.c.l.b16 %v1647
      %v1694 = vunpack.c.h.b16 %v1647
      %v1695 = vunpack.c.l.b16 %v1648
      %v1696 = vunpack.c.h.b16 %v1648
      %v1697 = vpack.c.b16 %v1665, %v1665
      %v1698 = vpack.c.b16 %v1666, %v1666
      %v1699 = vpack.c.b16 %v1667, %v1667
      %v1700 = vpack.c.b16 %v1668, %v1668
      %v1701 = vpack.c.b16 %v1669, %v1669
      %v1702 = vpack.c.b16 %v1670, %v1670
      %v1703 = vpack.c.b16 %v1671, %v1671
      %v1704 = vpack.c.b16 %v1672, %v1672
      %v1705 = vpack.c.b16 %v1673, %v1673
      %v1706 = vpack.c.b16 %v1674, %v1674
      %v1707 = vpack.c.b16 %v1675, %v1675
      %v1708 = vpack.c.b16 %v1676, %v1676
      %v1709 = vpack.c.b16 %v1677, %v1677
      %v1710 = vpack.c.b16 %v1678, %v1678
      %v1711 = vpack.c.b16 %v1679, %v1679
      %v1712 = vpack.c.b16 %v1680, %v1680
      %v1713 = vpack.c.b16 %v1681, %v1681
      %v1714 = vpack.c.b16 %v1682, %v1682
      %v1715 = vpack.c.b16 %v1683, %v1683
      %v1716 = vpack.c.b16 %v1684, %v1684
      %v1717 = vpack.c.b16 %v1685, %v1685
      %v1718 = vpack.c.b16 %v1686, %v1686
      %v1719 = vpack.c.b16 %v1687, %v1687
      %v1720 = vpack.c.b16 %v1688, %v1688
      %v1721 = vpack.c.b16 %v1689, %v1689
      %v1722 = vpack.c.b16 %v1690, %v1690
      %v1723 = vpack.c.b16 %v1691, %v1691
      %v1724 = vpack.c.b16 %v1692, %v1692
      %v1725 = vpack.c.b16 %v1693, %v1693
      %v1726 = vpack.c.b16 %v1694, %v1694
      %v1727 = vpack.c.b16 %v1695, %v1695
      %v1728 = vpack.c.b16 %v1696, %v1696
      %vm1761 = vcmask 240640
      %1762 = vst.msk [vmem:[%s224] sm:$0xf] %vm1761, %v1697
      %1763 = vst.msk [vmem:[%s224 + $0x4] sm:$0xf] %vm1761, %v1698
      %1764 = vst.msk [vmem:[%s224 + $0x8] sm:$0xf] %vm1761, %v1699
      %1765 = vst.msk [vmem:[%s224 + $0xc] sm:$0xf] %vm1761, %v1700
      %1766 = vst.msk [vmem:[%s224 + $0x10] sm:$0xf] %vm1761, %v1701
      %1767 = vst.msk [vmem:[%s224 + $0x14] sm:$0xf] %vm1761, %v1702
      %1768 = vst.msk [vmem:[%s224 + $0x18] sm:$0xf] %vm1761, %v1703
      %1769 = vst.msk [vmem:[%s224 + $0x1c] sm:$0xf] %vm1761, %v1704
      %1770 = vst.msk [vmem:[%s224 + $0x20] sm:$0xf] %vm1761, %v1705
      %1771 = vst.msk [vmem:[%s224 + $0x24] sm:$0xf] %vm1761, %v1706
      %1772 = vst.msk [vmem:[%s224 + $0x28] sm:$0xf] %vm1761, %v1707
      %1773 = vst.msk [vmem:[%s224 + $0x2c] sm:$0xf] %vm1761, %v1708
      %1774 = vst.msk [vmem:[%s224 + $0x30] sm:$0xf] %vm1761, %v1709
      %1775 = vst.msk [vmem:[%s224 + $0x34] sm:$0xf] %vm1761, %v1710
      %1776 = vst.msk [vmem:[%s224 + $0x38] sm:$0xf] %vm1761, %v1711
      %1777 = vst.msk [vmem:[%s224 + $0x3c] sm:$0xf] %vm1761, %v1712
      %1778 = vst.msk [vmem:[%s224 + $0x40] sm:$0xf] %vm1761, %v1713
      %1779 = vst.msk [vmem:[%s224 + $0x44] sm:$0xf] %vm1761, %v1714
      %1780 = vst.msk [vmem:[%s224 + $0x48] sm:$0xf] %vm1761, %v1715
      %1781 = vst.msk [vmem:[%s224 + $0x4c] sm:$0xf] %vm1761, %v1716
      %1782 = vst.msk [vmem:[%s224 + $0x50] sm:$0xf] %vm1761, %v1717
      %1783 = vst.msk [vmem:[%s224 + $0x54] sm:$0xf] %vm1761, %v1718
      %1784 = vst.msk [vmem:[%s224 + $0x58] sm:$0xf] %vm1761, %v1719
      %1785 = vst.msk [vmem:[%s224 + $0x5c] sm:$0xf] %vm1761, %v1720
      %1786 = vst.msk [vmem:[%s224 + $0x60] sm:$0xf] %vm1761, %v1721
      %1787 = vst.msk [vmem:[%s224 + $0x64] sm:$0xf] %vm1761, %v1722
      %1788 = vst.msk [vmem:[%s224 + $0x68] sm:$0xf] %vm1761, %v1723
      %1789 = vst.msk [vmem:[%s224 + $0x6c] sm:$0xf] %vm1761, %v1724
      %1790 = vst.msk [vmem:[%s224 + $0x70] sm:$0xf] %vm1761, %v1725
      %1791 = vst.msk [vmem:[%s224 + $0x74] sm:$0xf] %vm1761, %v1726
      %1792 = vst.msk [vmem:[%s224 + $0x78] sm:$0xf] %vm1761, %v1727
      %1793 = vst.msk [vmem:[%s224 + $0x7c] sm:$0xf] %vm1761, %v1728
      %s1794 = smul.u32 32, %s15
      %p1795 = scmp.lt.s32.totalorder %s1794, 63
      %s1796 = scalar_select %p1795, %s1794, 63
      %s1797 = smul.addr %s1796, 4
      %s1798 = scalar_lea.vmem %s4, %s1797
      // Predicated region
      $region37: #{_lambda_.18} parent=35 // pred_check
        %p1799 = pneg %p127
      $region38: #{_lambda_.18} parent=35 // pred_check_branch
        %1801 = sbr.rel (%p1799) target = $region40
      $region39: #{_lambda_.18} parent=35 // pred_region
        %s1802 = smul.u32 32, %s15
      $region40: #{_lambda_.18} parent=35 // pred_fallthru
        _
    $region36: #{_lambda_.18} parent=5 // pred_fallthru
      _
    %p1803 = scmp.le.s32.totalorder 2, %s10
    // Predicated region
    $region41: #{_lambda_.18} parent=5 // pred_check
      %p1804 = pneg %p1803
    $region42: #{_lambda_.18} parent=5 // pred_check_branch
      %1806 = sbr.rel (%p1804) target = $region44
    $region43: #{_lambda_.18} parent=5 // pred_region
      %s1807 = ssub.s32 %s10, 2
      // Predicated region
      $region45: #{_lambda_.18} parent=43 // pred_check
        %p1808 = pneg %p133
      $region46: #{_lambda_.18} parent=43 // pred_check_branch
        %1810 = sbr.rel (%p1808) target = $region48
      $region47: #{_lambda_.18} parent=43 // pred_region
        %s1811 = smul.u32 32, %s16
        %p1812 = scmp.lt.s32.totalorder %s1811, 63
        %s1813 = scalar_select %p1812, %s1811, 63
        %s1814 = smul.addr %s1813, 4
        %s1815 = scalar_lea.vmem %s4, %s1814
      $region48: #{_lambda_.18} parent=43 // pred_fallthru
        _
    $region44: #{_lambda_.18} parent=5 // pred_fallthru
      _
  $region6: #{_lambda_.18} parent=0 // loop_footer
    %s14 = sadd.s32 1, %s10
  $region7: #{_lambda_.18} parent=0 // loop_footer_branch
    %9 = sbr.rel target = $region3
  $region8: #{_lambda_.18} parent=0 // loop_exit
    _

// kernel: _lambda_.22
$region0: #{_lambda_.22}
  #allocation0 [shape = 'u32[]', space=smem, size = 0x4, offset = 0x4, fixed_abs, tag = 'smem constant byte address 0x4 - core index']
  #allocation1 [shape = 'u32[144,128]{1,0:T(1,128)}', space=vmem, size = 0x12000, scoped, tag = 'internal scratch']
  %s0 = inlined_call_operand.vmem [shape: bf16[2,256,10], index: 0, kind: input, shape index: {}]
  %s1 = inlined_call_operand.vmem [shape: bf16[2,256,10], index: 1, kind: input, shape index: {}]
  %s2 = inlined_call_operand.vmem [shape: bf16[2,256,10], index: 2, kind: output, shape index: {}]
  %s3 = sld [smem:[#allocation0]]
  $region41: #{_lambda_.22} parent=0
    _
  %s5 = ssub.s32 1, %s3
  %s6 = scalar_select 0, %s5, %s3
  loop: start=0, step=1, limit=4
  $region2: #{_lambda_.22} parent=0 // loop_pre_header
    _
  $region3: #{_lambda_.22} parent=0 // loop_header
    %s8 = sphi 0, %s12
    %p9 = scmp.ge.s32.totalorder %s8, 4
    %s18 = sphi 0, %s20
    %s21 = sphi 0, %s18
    %s22 = sphi 0, %s21
    %s38 = sphi 0, %s22
    %s44 = sphi 0, %s46
    %s47 = sphi 0, %s44
    %s48 = sphi 0, %s47
    %s64 = sphi 0, %s48
    %s70 = sphi 0, %s72
    %s73 = sphi 0, %s70
    %s74 = sphi 0, %s73
    %s90 = sphi 0, %s74
  $region4: #{_lambda_.22} parent=0 // loop_header_branch
    %11 = sbr.rel (%p9) target = $region8
  $region5: #{_lambda_.22} parent=0 // loop_body
    %s13 = ssub.s32 %s8, 1
    %s14 = ssub.s32 %s8, 2
    %s15 = sadd.s32 %s8, 1
    %s16 = ssub.s32 %s8, %s15
    %p17 = scmp.eq.s32.totalorder %s16, 0
    %s19 = sadd.s32 %s18, 1
    %s20 = scalar_select %p17, %s18, %s19
    %p23 = pneg %p17
    %p24 = scmp.eq.s32.totalorder %s8, 1
    %p25 = por %p23, %p24
    %p26 = scmp.ne.s32.totalorder %s18, %s21
    %p27 = scmp.eq.s32.totalorder %s8, 0
    %p28 = por %p26, %p27
    %p29 = scmp.ne.s32.totalorder %s18, %s21
    %p30 = scmp.eq.s32.totalorder %s13, 1
    %p31 = por %p29, %p30
    %p32 = scmp.ne.s32.totalorder %s21, %s22
    %p33 = scmp.eq.s32.totalorder %s13, 0
    %p34 = por %p32, %p33
    %p35 = scmp.ne.s32.totalorder %s21, %s22
    %p36 = scmp.eq.s32.totalorder %s14, 1
    %p37 = por %p35, %p36
    %p39 = scmp.ne.s32.totalorder %s22, %s38
    %p40 = scmp.eq.s32.totalorder %s14, 0
    %p41 = por %p39, %p40
    %s42 = ssub.s32 %s8, %s15
    %p43 = scmp.eq.s32.totalorder %s42, 0
    %s45 = sadd.s32 %s44, 1
    %s46 = scalar_select %p43, %s44, %s45
    %p49 = pneg %p43
    %p50 = scmp.eq.s32.totalorder %s8, 1
    %p51 = por %p49, %p50
    %p52 = scmp.ne.s32.totalorder %s44, %s47
    %p53 = scmp.eq.s32.totalorder %s8, 0
    %p54 = por %p52, %p53
    %p55 = scmp.ne.s32.totalorder %s44, %s47
    %p56 = scmp.eq.s32.totalorder %s13, 1
    %p57 = por %p55, %p56
    %p58 = scmp.ne.s32.totalorder %s47, %s48
    %p59 = scmp.eq.s32.totalorder %s13, 0
    %p60 = por %p58, %p59
    %p61 = scmp.ne.s32.totalorder %s47, %s48
    %p62 = scmp.eq.s32.totalorder %s14, 1
    %p63 = por %p61, %p62
    %p65 = scmp.ne.s32.totalorder %s48, %s64
    %p66 = scmp.eq.s32.totalorder %s14, 0
    %p67 = por %p65, %p66
    %s68 = ssub.s32 %s8, %s15
    %p69 = scmp.eq.s32.totalorder %s68, 0
    %s71 = sadd.s32 %s70, 1
    %s72 = scalar_select %p69, %s70, %s71
    %p75 = pneg %p69
    %p76 = scmp.eq.s32.totalorder %s8, 1
    %p77 = por %p75, %p76
    %p78 = scmp.ne.s32.totalorder %s70, %s73
    %p79 = scmp.eq.s32.totalorder %s8, 0
    %p80 = por %p78, %p79
    %p81 = scmp.ne.s32.totalorder %s70, %s73
    %p82 = scmp.eq.s32.totalorder %s13, 1
    %p83 = por %p81, %p82
    %p84 = scmp.ne.s32.totalorder %s73, %s74
    %p85 = scmp.eq.s32.totalorder %s13, 0
    %p86 = por %p84, %p85
    %p87 = scmp.ne.s32.totalorder %s73, %s74
    %p88 = scmp.eq.s32.totalorder %s14, 1
    %p89 = por %p87, %p88
    %p91 = scmp.ne.s32.totalorder %s74, %s90
    %p92 = scmp.eq.s32.totalorder %s14, 0
    %p93 = por %p91, %p92
    %p94 = scmp.le.s32.totalorder 1, %s8
    %p95 = scmp.lt.s32.totalorder %s8, 3
    %p96 = pnand %p94, %p95
    %p97 = pneg %p96
    // Predicated region
    $region9: #{_lambda_.22} parent=5 // pred_check
      _
    $region10: #{_lambda_.22} parent=5 // pred_check_branch
      %99 = sbr.rel (%p96) target = $region12
    $region11: #{_lambda_.22} parent=5 // pred_region
      %s100 = ssub.s32 %s8, 1
    $region12: #{_lambda_.22} parent=5 // pred_fallthru
      _
    %p101 = scmp.lt.s32.totalorder %s8, 2
    // Predicated region
    $region13: #{_lambda_.22} parent=5 // pred_check
      %p102 = pneg %p101
    $region14: #{_lambda_.22} parent=5 // pred_check_branch
      %104 = sbr.rel (%p102) target = $region16
    $region15: #{_lambda_.22} parent=5 // pred_region
      // Predicated region
      $region17: #{_lambda_.22} parent=15 // pred_check
        %p105 = pneg %p28
      $region18: #{_lambda_.22} parent=15 // pred_check_branch
        %107 = sbr.rel (%p105) target = $region20
      $region19: #{_lambda_.22} parent=15 // pred_region
        %p108 = scmp.lt.s32.totalorder %s8, 1
        %s109 = scalar_select %p108, %s8, 1
        %s110 = smul.addr %s109, 32
        %s111 = smul.addr %s110, 4
        %s112 = scalar_lea.vmem %s0, %s111
      $region20: #{_lambda_.22} parent=15 // pred_fallthru
        _
      // Predicated region
      $region21: #{_lambda_.22} parent=15 // pred_check
        %p113 = pneg %p54
      $region22: #{_lambda_.22} parent=15 // pred_check_branch
        %115 = sbr.rel (%p113) target = $region24
      $region23: #{_lambda_.22} parent=15 // pred_region
        %p116 = scmp.lt.s32.totalorder %s8, 1
        %s117 = scalar_select %p116, %s8, 1
        %s118 = smul.addr %s117, 32
        %s119 = smul.addr %s118, 4
        %s120 = scalar_lea.vmem %s1, %s119
      $region24: #{_lambda_.22} parent=15 // pred_fallthru
        _
    $region16: #{_lambda_.22} parent=5 // pred_fallthru
      _
    %p121 = scmp.le.s32.totalorder 1, %s8
    %p122 = scmp.lt.s32.totalorder %s8, 3
    %p123 = pnand %p121, %p122
    %p124 = pneg %p123
    // Predicated region
    $region25: #{_lambda_.22} parent=5 // pred_check
      _
    $region26: #{_lambda_.22} parent=5 // pred_check_branch
      %126 = sbr.rel (%p123) target = $region28
    $region27: #{_lambda_.22} parent=5 // pred_region
      %s127 = ssub.s32 %s8, 1
      %p128 = scmp.lt.s32.totalorder %s13, 1
      %s129 = scalar_select %p128, %s13, 1
      %s130 = smul.addr %s129, 32
      %s131 = smul.addr %s130, 4
      %s132 = scalar_lea.vmem %s0, %s131
      %p133 = pneg %p34
      %p134 = pneg %p31
      %p135 = scmp.lt.s32.totalorder %s13, 1
      %s136 = scalar_select %p135, %s13, 1
      %s137 = smul.addr %s136, 32
      %s138 = smul.addr %s137, 4
      %s139 = scalar_lea.vmem %s1, %s138
      %p140 = pneg %p60
      %p141 = pneg %p57
      %p142 = pneg %p86
      %p143 = pneg %p83
      %p144 = scmp.lt.s32.totalorder %s13, 1
      %s145 = scalar_select %p144, %s13, 1
      %s146 = smul.addr %s145, 32
      %s147 = smul.addr %s146, 4
      %s148 = scalar_lea.vmem %s2, %s147
      %p149 = scmp.lt.s32.totalorder %s13, 1
      %s150 = scalar_select %p149, %s13, 1
      %s151 = smul.addr %s150, 32
      %s152 = smul.addr %s151, 4
      %s153 = scalar_lea.vmem %s0, %s152
      %p154 = scmp.lt.s32.totalorder %s13, 1
      %s155 = scalar_select %p154, %s13, 1
      %s156 = smul.addr %s155, 32
      %s157 = smul.addr %s156, 4
      %s158 = scalar_lea.vmem %s1, %s157
      %p159 = scmp.lt.s32.totalorder %s13, 1
      %s160 = scalar_select %p159, %s13, 1
      %s161 = smul.addr %s160, 32
      %s162 = smul.addr %s161, 4
      %s163 = scalar_lea.vmem %s2, %s162
      %v165 = vld [vmem:[%s153] sm:$0xf]
      %v166 = vld [vmem:[%s153 + $0x4] sm:$0xf]
      %v167 = vld [vmem:[%s153 + $0x8] sm:$0xf]
      %v168 = vld [vmem:[%s153 + $0xc] sm:$0xf]
      %v169 = vld [vmem:[%s153 + $0x10] sm:$0xf]
      %v170 = vld [vmem:[%s153 + $0x14] sm:$0xf]
      %v171 = vld [vmem:[%s153 + $0x18] sm:$0xf]
      %v172 = vld [vmem:[%s153 + $0x1c] sm:$0xf]
      %v173 = vld [vmem:[%s153 + $0x20] sm:$0xf]
      %v174 = vld [vmem:[%s153 + $0x24] sm:$0xf]
      %v175 = vld [vmem:[%s153 + $0x28] sm:$0xf]
      %v176 = vld [vmem:[%s153 + $0x2c] sm:$0xf]
      %v177 = vld [vmem:[%s153 + $0x30] sm:$0xf]
      %v178 = vld [vmem:[%s153 + $0x34] sm:$0xf]
      %v179 = vld [vmem:[%s153 + $0x38] sm:$0xf]
      %v180 = vld [vmem:[%s153 + $0x3c] sm:$0xf]
      %v181 = vld [vmem:[%s153 + $0x40] sm:$0xf]
      %v182 = vld [vmem:[%s153 + $0x44] sm:$0xf]
      %v183 = vld [vmem:[%s153 + $0x48] sm:$0xf]
      %v184 = vld [vmem:[%s153 + $0x4c] sm:$0xf]
      %v185 = vld [vmem:[%s153 + $0x50] sm:$0xf]
      %v186 = vld [vmem:[%s153 + $0x54] sm:$0xf]
      %v187 = vld [vmem:[%s153 + $0x58] sm:$0xf]
      %v188 = vld [vmem:[%s153 + $0x5c] sm:$0xf]
      %v189 = vld [vmem:[%s153 + $0x60] sm:$0xf]
      %v190 = vld [vmem:[%s153 + $0x64] sm:$0xf]
      %v191 = vld [vmem:[%s153 + $0x68] sm:$0xf]
      %v192 = vld [vmem:[%s153 + $0x6c] sm:$0xf]
      %v193 = vld [vmem:[%s153 + $0x70] sm:$0xf]
      %v194 = vld [vmem:[%s153 + $0x74] sm:$0xf]
      %v195 = vld [vmem:[%s153 + $0x78] sm:$0xf]
      %v196 = vld [vmem:[%s153 + $0x7c] sm:$0xf]
      %v197 = vld [vmem:[%s158] sm:$0xf]
      %v198 = vld [vmem:[%s158 + $0x4] sm:$0xf]
      %v199 = vld [vmem:[%s158 + $0x8] sm:$0xf]
      %v200 = vld [vmem:[%s158 + $0xc] sm:$0xf]
      %v201 = vld [vmem:[%s158 + $0x10] sm:$0xf]
      %v202 = vld [vmem:[%s158 + $0x14] sm:$0xf]
      %v203 = vld [vmem:[%s158 + $0x18] sm:$0xf]
      %v204 = vld [vmem:[%s158 + $0x1c] sm:$0xf]
      %v205 = vld [vmem:[%s158 + $0x20] sm:$0xf]
      %v206 = vld [vmem:[%s158 + $0x24] sm:$0xf]
      %v207 = vld [vmem:[%s158 + $0x28] sm:$0xf]
      %v208 = vld [vmem:[%s158 + $0x2c] sm:$0xf]
      %v209 = vld [vmem:[%s158 + $0x30] sm:$0xf]
      %v210 = vld [vmem:[%s158 + $0x34] sm:$0xf]
      %v211 = vld [vmem:[%s158 + $0x38] sm:$0xf]
      %v212 = vld [vmem:[%s158 + $0x3c] sm:$0xf]
      %v213 = vld [vmem:[%s158 + $0x40] sm:$0xf]
      %v214 = vld [vmem:[%s158 + $0x44] sm:$0xf]
      %v215 = vld [vmem:[%s158 + $0x48] sm:$0xf]
      %v216 = vld [vmem:[%s158 + $0x4c] sm:$0xf]
      %v217 = vld [vmem:[%s158 + $0x50] sm:$0xf]
      %v218 = vld [vmem:[%s158 + $0x54] sm:$0xf]
      %v219 = vld [vmem:[%s158 + $0x58] sm:$0xf]
      %v220 = vld [vmem:[%s158 + $0x5c] sm:$0xf]
      %v221 = vld [vmem:[%s158 + $0x60] sm:$0xf]
      %v222 = vld [vmem:[%s158 + $0x64] sm:$0xf]
      %v223 = vld [vmem:[%s158 + $0x68] sm:$0xf]
      %v224 = vld [vmem:[%s158 + $0x6c] sm:$0xf]
      %v225 = vld [vmem:[%s158 + $0x70] sm:$0xf]
      %v226 = vld [vmem:[%s158 + $0x74] sm:$0xf]
      %v227 = vld [vmem:[%s158 + $0x78] sm:$0xf]
      %v228 = vld [vmem:[%s158 + $0x7c] sm:$0xf]
      %v261 = vunpack.c.l.b16 %v165
      %v262 = vunpack.c.l.b16 %v166
      %v263 = vunpack.c.l.b16 %v167
      %v264 = vunpack.c.l.b16 %v168
      %v265 = vunpack.c.l.b16 %v169
      %v266 = vunpack.c.l.b16 %v170
      %v267 = vunpack.c.l.b16 %v171
      %v268 = vunpack.c.l.b16 %v172
      %v269 = vunpack.c.l.b16 %v173
      %v270 = vunpack.c.l.b16 %v174
      %v271 = vunpack.c.l.b16 %v175
      %v272 = vunpack.c.l.b16 %v176
      %v273 = vunpack.c.l.b16 %v177
      %v274 = vunpack.c.l.b16 %v178
      %v275 = vunpack.c.l.b16 %v179
      %v276 = vunpack.c.l.b16 %v180
      %v277 = vunpack.c.l.b16 %v181
      %v278 = vunpack.c.l.b16 %v182
      %v279 = vunpack.c.l.b16 %v183
      %v280 = vunpack.c.l.b16 %v184
      %v281 = vunpack.c.l.b16 %v185
      %v282 = vunpack.c.l.b16 %v186
      %v283 = vunpack.c.l.b16 %v187
      %v284 = vunpack.c.l.b16 %v188
      %v285 = vunpack.c.l.b16 %v189
      %v286 = vunpack.c.l.b16 %v190
      %v287 = vunpack.c.l.b16 %v191
      %v288 = vunpack.c.l.b16 %v192
      %v289 = vunpack.c.l.b16 %v193
      %v290 = vunpack.c.l.b16 %v194
      %v291 = vunpack.c.l.b16 %v195
      %v292 = vunpack.c.l.b16 %v196
      %v293 = vpack.c.b16 %v262, %v261
      %v294 = vpack.c.b16 %v264, %v263
      %v295 = vpack.c.b16 %v266, %v265
      %v296 = vpack.c.b16 %v268, %v267
      %v297 = vpack.c.b16 %v270, %v269
      %v298 = vpack.c.b16 %v272, %v271
      %v299 = vpack.c.b16 %v274, %v273
      %v300 = vpack.c.b16 %v276, %v275
      %v301 = vpack.c.b16 %v278, %v277
      %v302 = vpack.c.b16 %v280, %v279
      %v303 = vpack.c.b16 %v282, %v281
      %v304 = vpack.c.b16 %v284, %v283
      %v305 = vpack.c.b16 %v286, %v285
      %v306 = vpack.c.b16 %v288, %v287
      %v307 = vpack.c.b16 %v290, %v289
      %v308 = vpack.c.b16 %v292, %v291
      %vm309 = vcmask 80896
      %v311 = vsel %vm309, %v293, 0
      %v314 = vsel %vm309, %v294, 0
      %v317 = vsel %vm309, %v295, 0
      %v320 = vsel %vm309, %v296, 0
      %v323 = vsel %vm309, %v297, 0
      %v326 = vsel %vm309, %v298, 0
      %v329 = vsel %vm309, %v299, 0
      %v332 = vsel %vm309, %v300, 0
      %v335 = vsel %vm309, %v301, 0
      %v338 = vsel %vm309, %v302, 0
      %v341 = vsel %vm309, %v303, 0
      %v344 = vsel %vm309, %v304, 0
      %v347 = vsel %vm309, %v305, 0
      %v350 = vsel %vm309, %v306, 0
      %v353 = vsel %vm309, %v307, 0
      %v356 = vsel %vm309, %v308, 0
      %358 = vmatprep.subr.bf16.mxu0 0
      %359 = vmatpush1.bf16.xpose.msra.mxu0 %v332
      %360 = vmatprep.subr.bf16.mxu0 0
      %361 = vmatpush1.bf16.xpose.msra.mxu0 %v329
      %362 = vmatprep.subr.bf16.mxu0 0
      %363 = vmatpush1.bf16.xpose.msra.mxu0 %v326
      %364 = vmatprep.subr.bf16.mxu0 0
      %365 = vmatpush1.bf16.xpose.msra.mxu0 %v323
      %366 = vmatprep.subr.bf16.mxu0 0
      %367 = vmatpush1.bf16.xpose.msra.mxu0 %v320
      %368 = vmatprep.subr.bf16.mxu0 0
      %369 = vmatpush1.bf16.xpose.msra.mxu0 %v317
      %370 = vmatprep.subr.bf16.mxu0 0
      %371 = vmatpush1.bf16.xpose.msra.mxu0 %v314
      %372 = vmatprep.subr.bf16.mxu0 0
      %373 = vmatpush1.bf16.xpose.msra.mxu0 %v311
      %374 = vmatprep.subr.bf16.mxu0 0
      %375 = vmatpush2.bf16.xpose.msra.mxu0 %v356
      %376 = vmatprep.subr.bf16.mxu0 0
      %377 = vmatpush2.bf16.xpose.msra.mxu0 %v353
      %378 = vmatprep.subr.bf16.mxu0 0
      %379 = vmatpush2.bf16.xpose.msra.mxu0 %v350
      %380 = vmatprep.subr.bf16.mxu0 0
      %381 = vmatpush2.bf16.xpose.msra.mxu0 %v347
      %382 = vmatprep.subr.bf16.mxu0 0
      %383 = vmatpush2.bf16.xpose.msra.mxu0 %v344
      %384 = vmatprep.subr.bf16.mxu0 0
      %385 = vmatpush2.bf16.xpose.msra.mxu0 %v341
      %386 = vmatprep.subr.bf16.mxu0 0
      %387 = vmatpush2.bf16.xpose.msra.mxu0 %v338
      %388 = vmatprep.subr.bf16.mxu0 0
      %389 = vmatpush2.bf16.xpose.msra.mxu0 %v335
      %390 = vmatprep.mubr.bf16.mxu0 0
      %391 = vmatmul.mubr.bf16.gmra.mxu0 %v311
      %v392 = vpop.f32.mrf.mxu0
      %v393 = vadd.f32 0.0, %v392
      %v394 = vpop.f32.mrf.mxu0
      %v395 = vadd.f32 0.0, %v394
      %v396 = vpop.f32.mrf.mxu0
      %v397 = vadd.f32 0.0, %v396
      %v398 = vpop.f32.mrf.mxu0
      %v399 = vadd.f32 0.0, %v398
      %400 = vmatprep.mubr.bf16.mxu0 0
      %401 = vmatmul.mubr.bf16.gmra.mxu0 %v314
      %v402 = vpop.f32.mrf.mxu0
      %v403 = vadd.f32 0.0, %v402
      %v404 = vpop.f32.mrf.mxu0
      %v405 = vadd.f32 0.0, %v404
      %v406 = vpop.f32.mrf.mxu0
      %v407 = vadd.f32 0.0, %v406
      %v408 = vpop.f32.mrf.mxu0
      %v409 = vadd.f32 0.0, %v408
      %410 = vmatprep.mubr.bf16.mxu0 0
      %411 = vmatmul.mubr.bf16.gmra.mxu0 %v317
      %v412 = vpop.f32.mrf.mxu0
      %v413 = vadd.f32 0.0, %v412
      %v414 = vpop.f32.mrf.mxu0
      %v415 = vadd.f32 0.0, %v414
      %v416 = vpop.f32.mrf.mxu0
      %v417 = vadd.f32 0.0, %v416
      %v418 = vpop.f32.mrf.mxu0
      %v419 = vadd.f32 0.0, %v418
      %420 = vmatprep.mubr.bf16.mxu0 0
      %421 = vmatmul.mubr.bf16.gmra.mxu0 %v320
      %v422 = vpop.f32.mrf.mxu0
      %v423 = vadd.f32 0.0, %v422
      %v424 = vpop.f32.mrf.mxu0
      %v425 = vadd.f32 0.0, %v424
      %v426 = vpop.f32.mrf.mxu0
      %v427 = vadd.f32 0.0, %v426
      %v428 = vpop.f32.mrf.mxu0
      %v429 = vadd.f32 0.0, %v428
      %430 = vmatprep.mubr.bf16.mxu0 0
      %431 = vmatmul.mubr.bf16.gmra.mxu0 %v323
      %v432 = vpop.f32.mrf.mxu0
      %v433 = vadd.f32 0.0, %v432
      %v434 = vpop.f32.mrf.mxu0
      %v435 = vadd.f32 0.0, %v434
      %v436 = vpop.f32.mrf.mxu0
      %v437 = vadd.f32 0.0, %v436
      %v438 = vpop.f32.mrf.mxu0
      %v439 = vadd.f32 0.0, %v438
      %440 = vmatprep.mubr.bf16.mxu0 0
      %441 = vmatmul.mubr.bf16.gmra.mxu0 %v326
      %v442 = vpop.f32.mrf.mxu0
      %v443 = vadd.f32 0.0, %v442
      %v444 = vpop.f32.mrf.mxu0
      %v445 = vadd.f32 0.0, %v444
      %v446 = vpop.f32.mrf.mxu0
      %v447 = vadd.f32 0.0, %v446
      %v448 = vpop.f32.mrf.mxu0
      %v449 = vadd.f32 0.0, %v448
      %450 = vmatprep.mubr.bf16.mxu0 0
      %451 = vmatmul.mubr.bf16.gmra.mxu0 %v329
      %v452 = vpop.f32.mrf.mxu0
      %v453 = vadd.f32 0.0, %v452
      %v454 = vpop.f32.mrf.mxu0
      %v455 = vadd.f32 0.0, %v454
      %v456 = vpop.f32.mrf.mxu0
      %v457 = vadd.f32 0.0, %v456
      %v458 = vpop.f32.mrf.mxu0
      %v459 = vadd.f32 0.0, %v458
      %460 = vmatprep.mubr.bf16.mxu0 0
      %461 = vmatmul.mubr.bf16.gmra.mxu0 %v332
      %v462 = vpop.f32.mrf.mxu0
      %v463 = vadd.f32 0.0, %v462
      %v464 = vpop.f32.mrf.mxu0
      %v465 = vadd.f32 0.0, %v464
      %v466 = vpop.f32.mrf.mxu0
      %v467 = vadd.f32 0.0, %v466
      %v468 = vpop.f32.mrf.mxu0
      %v469 = vadd.f32 0.0, %v468
      %470 = vmatprep.mubr.bf16.mxu0 0
      %471 = vmatmul.mubr.bf16.gmra.mxu0 %v335
      %v472 = vpop.f32.mrf.mxu0
      %v473 = vadd.f32 0.0, %v472
      %v474 = vpop.f32.mrf.mxu0
      %v475 = vadd.f32 0.0, %v474
      %v476 = vpop.f32.mrf.mxu0
      %v477 = vadd.f32 0.0, %v476
      %v478 = vpop.f32.mrf.mxu0
      %v479 = vadd.f32 0.0, %v478
      %480 = vmatprep.mubr.bf16.mxu0 0
      %481 = vmatmul.mubr.bf16.gmra.mxu0 %v338
      %v482 = vpop.f32.mrf.mxu0
      %v483 = vadd.f32 0.0, %v482
      %v484 = vpop.f32.mrf.mxu0
      %v485 = vadd.f32 0.0, %v484
      %v486 = vpop.f32.mrf.mxu0
      %v487 = vadd.f32 0.0, %v486
      %v488 = vpop.f32.mrf.mxu0
      %v489 = vadd.f32 0.0, %v488
      %490 = vmatprep.mubr.bf16.mxu0 0
      %491 = vmatmul.mubr.bf16.gmra.mxu0 %v341
      %v492 = vpop.f32.mrf.mxu0
      %v493 = vadd.f32 0.0, %v492
      %v494 = vpop.f32.mrf.mxu0
      %v495 = vadd.f32 0.0, %v494
      %v496 = vpop.f32.mrf.mxu0
      %v497 = vadd.f32 0.0, %v496
      %v498 = vpop.f32.mrf.mxu0
      %v499 = vadd.f32 0.0, %v498
      %500 = vmatprep.mubr.bf16.mxu0 0
      %501 = vmatmul.mubr.bf16.gmra.mxu0 %v344
      %v502 = vpop.f32.mrf.mxu0
      %v503 = vadd.f32 0.0, %v502
      %v504 = vpop.f32.mrf.mxu0
      %v505 = vadd.f32 0.0, %v504
      %v506 = vpop.f32.mrf.mxu0
      %v507 = vadd.f32 0.0, %v506
      %v508 = vpop.f32.mrf.mxu0
      %v509 = vadd.f32 0.0, %v508
      %510 = vmatprep.mubr.bf16.mxu0 0
      %511 = vmatmul.mubr.bf16.gmra.mxu0 %v347
      %v512 = vpop.f32.mrf.mxu0
      %v513 = vadd.f32 0.0, %v512
      %v514 = vpop.f32.mrf.mxu0
      %v515 = vadd.f32 0.0, %v514
      %v516 = vpop.f32.mrf.mxu0
      %v517 = vadd.f32 0.0, %v516
      %v518 = vpop.f32.mrf.mxu0
      %v519 = vadd.f32 0.0, %v518
      %520 = vmatprep.mubr.bf16.mxu0 0
      %521 = vmatmul.mubr.bf16.gmra.mxu0 %v350
      %v522 = vpop.f32.mrf.mxu0
      %v523 = vadd.f32 0.0, %v522
      %v524 = vpop.f32.mrf.mxu0
      %v525 = vadd.f32 0.0, %v524
      %v526 = vpop.f32.mrf.mxu0
      %v527 = vadd.f32 0.0, %v526
      %v528 = vpop.f32.mrf.mxu0
      %v529 = vadd.f32 0.0, %v528
      %530 = vmatprep.mubr.bf16.mxu0 0
      %531 = vmatmul.mubr.bf16.gmra.mxu0 %v353
      %v532 = vpop.f32.mrf.mxu0
      %v533 = vadd.f32 0.0, %v532
      %v534 = vpop.f32.mrf.mxu0
      %v535 = vadd.f32 0.0, %v534
      %v536 = vpop.f32.mrf.mxu0
      %v537 = vadd.f32 0.0, %v536
      %v538 = vpop.f32.mrf.mxu0
      %v539 = vadd.f32 0.0, %v538
      %540 = vmatprep.mubr.bf16.mxu0 0
      %541 = vmatmul.mubr.bf16.gmra.mxu0 %v356
      %v542 = vpop.f32.mrf.mxu0
      %v543 = vadd.f32 0.0, %v542
      %v544 = vpop.f32.mrf.mxu0
      %v545 = vadd.f32 0.0, %v544
      %v546 = vpop.f32.mrf.mxu0
      %v547 = vadd.f32 0.0, %v546
      %v548 = vpop.f32.mrf.mxu0
      %v549 = vadd.f32 0.0, %v548
      %550 = vdwg.mxu0
      %v551 = vmax.f32 %v393, %v395
      %552 = vmax.xlane.f32.xlu0 %v551
      %v553 = vpop.xlane.xlu0 %552
      %v554 = vmax.f32 %v397, %v399
      %555 = vmax.xlane.f32.xlu0 %v554
      %v556 = vpop.xlane.xlu0 %555
      %v557 = vmax.f32 %v403, %v405
      %558 = vmax.xlane.f32.xlu0 %v557
      %v559 = vpop.xlane.xlu0 %558
      %v560 = vmax.f32 %v407, %v409
      %561 = vmax.xlane.f32.xlu0 %v560
      %v562 = vpop.xlane.xlu0 %561
      %v563 = vmax.f32 %v413, %v415
      %564 = vmax.xlane.f32.xlu0 %v563
      %v565 = vpop.xlane.xlu0 %564
      %v566 = vmax.f32 %v417, %v419
      %567 = vmax.xlane.f32.xlu0 %v566
      %v568 = vpop.xlane.xlu0 %567
      %v569 = vmax.f32 %v423, %v425
      %570 = vmax.xlane.f32.xlu0 %v569
      %v571 = vpop.xlane.xlu0 %570
      %v572 = vmax.f32 %v427, %v429
      %573 = vmax.xlane.f32.xlu0 %v572
      %v574 = vpop.xlane.xlu0 %573
      %v575 = vmax.f32 %v433, %v435
      %576 = vmax.xlane.f32.xlu0 %v575
      %v577 = vpop.xlane.xlu0 %576
      %v578 = vmax.f32 %v437, %v439
      %579 = vmax.xlane.f32.xlu0 %v578
      %v580 = vpop.xlane.xlu0 %579
      %v581 = vmax.f32 %v443, %v445
      %582 = vmax.xlane.f32.xlu0 %v581
      %v583 = vpop.xlane.xlu0 %582
      %v584 = vmax.f32 %v447, %v449
      %585 = vmax.xlane.f32.xlu0 %v584
      %v586 = vpop.xlane.xlu0 %585
      %v587 = vmax.f32 %v453, %v455
      %588 = vmax.xlane.f32.xlu0 %v587
      %v589 = vpop.xlane.xlu0 %588
      %v590 = vmax.f32 %v457, %v459
      %591 = vmax.xlane.f32.xlu0 %v590
      %v592 = vpop.xlane.xlu0 %591
      %v593 = vmax.f32 %v463, %v465
      %594 = vmax.xlane.f32.xlu0 %v593
      %v595 = vpop.xlane.xlu0 %594
      %v596 = vmax.f32 %v467, %v469
      %597 = vmax.xlane.f32.xlu0 %v596
      %v598 = vpop.xlane.xlu0 %597
      %v599 = vmax.f32 %v473, %v475
      %600 = vmax.xlane.f32.xlu0 %v599
      %v601 = vpop.xlane.xlu0 %600
      %v602 = vmax.f32 %v477, %v479
      %603 = vmax.xlane.f32.xlu0 %v602
      %v604 = vpop.xlane.xlu0 %603
      %v605 = vmax.f32 %v483, %v485
      %606 = vmax.xlane.f32.xlu0 %v605
      %v607 = vpop.xlane.xlu0 %606
      %v608 = vmax.f32 %v487, %v489
      %609 = vmax.xlane.f32.xlu0 %v608
      %v610 = vpop.xlane.xlu0 %609
      %v611 = vmax.f32 %v493, %v495
      %612 = vmax.xlane.f32.xlu0 %v611
      %v613 = vpop.xlane.xlu0 %612
      %v614 = vmax.f32 %v497, %v499
      %615 = vmax.xlane.f32.xlu0 %v614
      %v616 = vpop.xlane.xlu0 %615
      %v617 = vmax.f32 %v503, %v505
      %618 = vmax.xlane.f32.xlu0 %v617
      %v619 = vpop.xlane.xlu0 %618
      %v620 = vmax.f32 %v507, %v509
      %621 = vmax.xlane.f32.xlu0 %v620
      %v622 = vpop.xlane.xlu0 %621
      %v623 = vmax.f32 %v513, %v515
      %624 = vmax.xlane.f32.xlu0 %v623
      %v625 = vpop.xlane.xlu0 %624
      %v626 = vmax.f32 %v517, %v519
      %627 = vmax.xlane.f32.xlu0 %v626
      %v628 = vpop.xlane.xlu0 %627
      %v629 = vmax.f32 %v523, %v525
      %630 = vmax.xlane.f32.xlu0 %v629
      %v631 = vpop.xlane.xlu0 %630
      %v632 = vmax.f32 %v527, %v529
      %633 = vmax.xlane.f32.xlu0 %v632
      %v634 = vpop.xlane.xlu0 %633
      %v635 = vmax.f32 %v533, %v535
      %636 = vmax.xlane.f32.xlu0 %v635
      %v637 = vpop.xlane.xlu0 %636
      %v638 = vmax.f32 %v537, %v539
      %639 = vmax.xlane.f32.xlu0 %v638
      %v640 = vpop.xlane.xlu0 %639
      %v641 = vmax.f32 %v543, %v545
      %642 = vmax.xlane.f32.xlu0 %v641
      %v643 = vpop.xlane.xlu0 %642
      %v644 = vmax.f32 %v547, %v549
      %645 = vmax.xlane.f32.xlu0 %v644
      %v646 = vpop.xlane.xlu0 %645
      %v647 = vsub.f32 %v393, %v553
      %v648 = vsub.f32 %v395, %v553
      %v649 = vsub.f32 %v397, %v556
      %v650 = vsub.f32 %v399, %v556
      %v651 = vsub.f32 %v403, %v559
      %v652 = vsub.f32 %v405, %v559
      %v653 = vsub.f32 %v407, %v562
      %v654 = vsub.f32 %v409, %v562
      %v655 = vsub.f32 %v413, %v565
      %v656 = vsub.f32 %v415, %v565
      %v657 = vsub.f32 %v417, %v568
      %v658 = vsub.f32 %v419, %v568
      %v659 = vsub.f32 %v423, %v571
      %v660 = vsub.f32 %v425, %v571
      %v661 = vsub.f32 %v427, %v574
      %v662 = vsub.f32 %v429, %v574
      %v663 = vsub.f32 %v433, %v577
      %v664 = vsub.f32 %v435, %v577
      %v665 = vsub.f32 %v437, %v580
      %v666 = vsub.f32 %v439, %v580
      %v667 = vsub.f32 %v443, %v583
      %v668 = vsub.f32 %v445, %v583
      %v669 = vsub.f32 %v447, %v586
      %v670 = vsub.f32 %v449, %v586
      %v671 = vsub.f32 %v453, %v589
      %v672 = vsub.f32 %v455, %v589
      %v673 = vsub.f32 %v457, %v592
      %v674 = vsub.f32 %v459, %v592
      %v675 = vsub.f32 %v463, %v595
      %v676 = vsub.f32 %v465, %v595
      %v677 = vsub.f32 %v467, %v598
      %v678 = vsub.f32 %v469, %v598
      %v679 = vsub.f32 %v473, %v601
      %v680 = vsub.f32 %v475, %v601
      %v681 = vsub.f32 %v477, %v604
      %v682 = vsub.f32 %v479, %v604
      %v683 = vsub.f32 %v483, %v607
      %v684 = vsub.f32 %v485, %v607
      %v685 = vsub.f32 %v487, %v610
      %v686 = vsub.f32 %v489, %v610
      %v687 = vsub.f32 %v493, %v613
      %v688 = vsub.f32 %v495, %v613
      %v689 = vsub.f32 %v497, %v616
      %v690 = vsub.f32 %v499, %v616
      %v691 = vsub.f32 %v503, %v619
      %v692 = vsub.f32 %v505, %v619
      %v693 = vsub.f32 %v507, %v622
      %v694 = vsub.f32 %v509, %v622
      %v695 = vsub.f32 %v513, %v625
      %v696 = vsub.f32 %v515, %v625
      %v697 = vsub.f32 %v517, %v628
      %v698 = vsub.f32 %v519, %v628
      %v699 = vsub.f32 %v523, %v631
      %v700 = vsub.f32 %v525, %v631
      %v701 = vsub.f32 %v527, %v634
      %v702 = vsub.f32 %v529, %v634
      %v703 = vsub.f32 %v533, %v637
      %v704 = vsub.f32 %v535, %v637
      %v705 = vsub.f32 %v537, %v640
      %v706 = vsub.f32 %v539, %v640
      %v707 = vsub.f32 %v543, %v643
      %v708 = vsub.f32 %v545, %v643
      %v709 = vsub.f32 %v547, %v646
      %v710 = vsub.f32 %v549, %v646
      %v711 = vmul.f32 %v647, 1.442695
      %v712 = vpow.pop %v711
      %v713 = vmul.f32 %v648, 1.442695
      %v714 = vpow.pop %v713
      %v715 = vmul.f32 %v649, 1.442695
      %v716 = vpow.pop %v715
      %v717 = vmul.f32 %v650, 1.442695
      %v718 = vpow.pop %v717
      %v719 = vmul.f32 %v651, 1.442695
      %v720 = vpow.pop %v719
      %v721 = vmul.f32 %v652, 1.442695
      %v722 = vpow.pop %v721
      %v723 = vmul.f32 %v653, 1.442695
      %v724 = vpow.pop %v723
      %v725 = vmul.f32 %v654, 1.442695
      %v726 = vpow.pop %v725
      %v727 = vmul.f32 %v655, 1.442695
      %v728 = vpow.pop %v727
      %v729 = vmul.f32 %v656, 1.442695
      %v730 = vpow.pop %v729
      %v731 = vmul.f32 %v657, 1.442695
      %v732 = vpow.pop %v731
      %v733 = vmul.f32 %v658, 1.442695
      %v734 = vpow.pop %v733
      %v735 = vmul.f32 %v659, 1.442695
      %v736 = vpow.pop %v735
      %v737 = vmul.f32 %v660, 1.442695
      %v738 = vpow.pop %v737
      %v739 = vmul.f32 %v661, 1.442695
      %v740 = vpow.pop %v739
      %v741 = vmul.f32 %v662, 1.442695
      %v742 = vpow.pop %v741
      %v743 = vmul.f32 %v663, 1.442695
      %v744 = vpow.pop %v743
      %v745 = vmul.f32 %v664, 1.442695
      %v746 = vpow.pop %v745
      %v747 = vmul.f32 %v665, 1.442695
      %v748 = vpow.pop %v747
      %v749 = vmul.f32 %v666, 1.442695
      %v750 = vpow.pop %v749
      %v751 = vmul.f32 %v667, 1.442695
      %v752 = vpow.pop %v751
      %v753 = vmul.f32 %v668, 1.442695
      %v754 = vpow.pop %v753
      %v755 = vmul.f32 %v669, 1.442695
      %v756 = vpow.pop %v755
      %v757 = vmul.f32 %v670, 1.442695
      %v758 = vpow.pop %v757
      %v759 = vmul.f32 %v671, 1.442695
      %v760 = vpow.pop %v759
      %v761 = vmul.f32 %v672, 1.442695
      %v762 = vpow.pop %v761
      %v763 = vmul.f32 %v673, 1.442695
      %v764 = vpow.pop %v763
      %v765 = vmul.f32 %v674, 1.442695
      %v766 = vpow.pop %v765
      %v767 = vmul.f32 %v675, 1.442695
      %v768 = vpow.pop %v767
      %v769 = vmul.f32 %v676, 1.442695
      %v770 = vpow.pop %v769
      %v771 = vmul.f32 %v677, 1.442695
      %v772 = vpow.pop %v771
      %v773 = vmul.f32 %v678, 1.442695
      %v774 = vpow.pop %v773
      %v775 = vmul.f32 %v679, 1.442695
      %v776 = vpow.pop %v775
      %v777 = vmul.f32 %v680, 1.442695
      %v778 = vpow.pop %v777
      %v779 = vmul.f32 %v681, 1.442695
      %v780 = vpow.pop %v779
      %v781 = vmul.f32 %v682, 1.442695
      %v782 = vpow.pop %v781
      %v783 = vmul.f32 %v683, 1.442695
      %v784 = vpow.pop %v783
      %v785 = vmul.f32 %v684, 1.442695
      %v786 = vpow.pop %v785
      %v787 = vmul.f32 %v685, 1.442695
      %v788 = vpow.pop %v787
      %v789 = vmul.f32 %v686, 1.442695
      %v790 = vpow.pop %v789
      %v791 = vmul.f32 %v687, 1.442695
      %v792 = vpow.pop %v791
      %v793 = vmul.f32 %v688, 1.442695
      %v794 = vpow.pop %v793
      %v795 = vmul.f32 %v689, 1.442695
      %v796 = vpow.pop %v795
      %v797 = vmul.f32 %v690, 1.442695
      %v798 = vpow.pop %v797
      %v799 = vmul.f32 %v691, 1.442695
      %v800 = vpow.pop %v799
      %v801 = vmul.f32 %v692, 1.442695
      %v802 = vpow.pop %v801
      %v803 = vmul.f32 %v693, 1.442695
      %v804 = vpow.pop %v803
      %v805 = vmul.f32 %v694, 1.442695
      %v806 = vpow.pop %v805
      %v807 = vmul.f32 %v695, 1.442695
      %v808 = vpow.pop %v807
      %v809 = vmul.f32 %v696, 1.442695
      %v810 = vpow.pop %v809
      %v811 = vmul.f32 %v697, 1.442695
      %v812 = vpow.pop %v811
      %v813 = vmul.f32 %v698, 1.442695
      %v814 = vpow.pop %v813
      %v815 = vmul.f32 %v699, 1.442695
      %v816 = vpow.pop %v815
      %v817 = vmul.f32 %v700, 1.442695
      %v818 = vpow.pop %v817
      %v819 = vmul.f32 %v701, 1.442695
      %v820 = vpow.pop %v819
      %v821 = vmul.f32 %v702, 1.442695
      %v822 = vpow.pop %v821
      %v823 = vmul.f32 %v703, 1.442695
      %v824 = vpow.pop %v823
      %v825 = vmul.f32 %v704, 1.442695
      %v826 = vpow.pop %v825
      %v827 = vmul.f32 %v705, 1.442695
      %v828 = vpow.pop %v827
      %v829 = vmul.f32 %v706, 1.442695
      %v830 = vpow.pop %v829
      %v831 = vmul.f32 %v707, 1.442695
      %v832 = vpow.pop %v831
      %v833 = vmul.f32 %v708, 1.442695
      %v834 = vpow.pop %v833
      %v835 = vmul.f32 %v709, 1.442695
      %v836 = vpow.pop %v835
      %v837 = vmul.f32 %v710, 1.442695
      %v838 = vpow.pop %v837
      %v839 = vadd.f32 %v712, %v714
      %840 = vadd.xlane.f32.xlu0 %v839
      %v841 = vpop.xlane.xlu0 %840
      %v842 = vadd.f32 %v716, %v718
      %843 = vadd.xlane.f32.xlu0 %v842
      %v844 = vpop.xlane.xlu0 %843
      %v845 = vadd.f32 %v720, %v722
      %846 = vadd.xlane.f32.xlu0 %v845
      %v847 = vpop.xlane.xlu0 %846
      %v848 = vadd.f32 %v724, %v726
      %849 = vadd.xlane.f32.xlu0 %v848
      %v850 = vpop.xlane.xlu0 %849
      %v851 = vadd.f32 %v728, %v730
      %852 = vadd.xlane.f32.xlu0 %v851
      %v853 = vpop.xlane.xlu0 %852
      %v854 = vadd.f32 %v732, %v734
      %855 = vadd.xlane.f32.xlu0 %v854
      %v856 = vpop.xlane.xlu0 %855
      %v857 = vadd.f32 %v736, %v738
      %858 = vadd.xlane.f32.xlu0 %v857
      %v859 = vpop.xlane.xlu0 %858
      %v860 = vadd.f32 %v740, %v742
      %861 = vadd.xlane.f32.xlu0 %v860
      %v862 = vpop.xlane.xlu0 %861
      %v863 = vadd.f32 %v744, %v746
      %864 = vadd.xlane.f32.xlu0 %v863
      %v865 = vpop.xlane.xlu0 %864
      %v866 = vadd.f32 %v748, %v750
      %867 = vadd.xlane.f32.xlu0 %v866
      %v868 = vpop.xlane.xlu0 %867
      %v869 = vadd.f32 %v752, %v754
      %870 = vadd.xlane.f32.xlu0 %v869
      %v871 = vpop.xlane.xlu0 %870
      %v872 = vadd.f32 %v756, %v758
      %873 = vadd.xlane.f32.xlu0 %v872
      %v874 = vpop.xlane.xlu0 %873
      %v875 = vadd.f32 %v760, %v762
      %876 = vadd.xlane.f32.xlu0 %v875
      %v877 = vpop.xlane.xlu0 %876
      %v878 = vadd.f32 %v764, %v766
      %879 = vadd.xlane.f32.xlu0 %v878
      %v880 = vpop.xlane.xlu0 %879
      %v881 = vadd.f32 %v768, %v770
      %882 = vadd.xlane.f32.xlu0 %v881
      %v883 = vpop.xlane.xlu0 %882
      %v884 = vadd.f32 %v772, %v774
      %885 = vadd.xlane.f32.xlu0 %v884
      %v886 = vpop.xlane.xlu0 %885
      %v887 = vadd.f32 %v776, %v778
      %888 = vadd.xlane.f32.xlu0 %v887
      %v889 = vpop.xlane.xlu0 %888
      %v890 = vadd.f32 %v780, %v782
      %891 = vadd.xlane.f32.xlu0 %v890
      %v892 = vpop.xlane.xlu0 %891
      %v893 = vadd.f32 %v784, %v786
      %894 = vadd.xlane.f32.xlu0 %v893
      %v895 = vpop.xlane.xlu0 %894
      %v896 = vadd.f32 %v788, %v790
      %897 = vadd.xlane.f32.xlu0 %v896
      %v898 = vpop.xlane.xlu0 %897
      %v899 = vadd.f32 %v792, %v794
      %900 = vadd.xlane.f32.xlu0 %v899
      %v901 = vpop.xlane.xlu0 %900
      %v902 = vadd.f32 %v796, %v798
      %903 = vadd.xlane.f32.xlu0 %v902
      %v904 = vpop.xlane.xlu0 %903
      %v905 = vadd.f32 %v800, %v802
      %906 = vadd.xlane.f32.xlu0 %v905
      %v907 = vpop.xlane.xlu0 %906
      %v908 = vadd.f32 %v804, %v806
      %909 = vadd.xlane.f32.xlu0 %v908
      %v910 = vpop.xlane.xlu0 %909
      %v911 = vadd.f32 %v808, %v810
      %912 = vadd.xlane.f32.xlu0 %v911
      %v913 = vpop.xlane.xlu0 %912
      %v914 = vadd.f32 %v812, %v814
      %915 = vadd.xlane.f32.xlu0 %v914
      %v916 = vpop.xlane.xlu0 %915
      %v917 = vadd.f32 %v816, %v818
      %918 = vadd.xlane.f32.xlu0 %v917
      %v919 = vpop.xlane.xlu0 %918
      %v920 = vadd.f32 %v820, %v822
      %921 = vadd.xlane.f32.xlu0 %v920
      %v922 = vpop.xlane.xlu0 %921
      %v923 = vadd.f32 %v824, %v826
      %924 = vadd.xlane.f32.xlu0 %v923
      %v925 = vpop.xlane.xlu0 %924
      %v926 = vadd.f32 %v828, %v830
      %927 = vadd.xlane.f32.xlu0 %v926
      %v928 = vpop.xlane.xlu0 %927
      %v929 = vadd.f32 %v832, %v834
      %930 = vadd.xlane.f32.xlu0 %v929
      %v931 = vpop.xlane.xlu0 %930
      %v932 = vadd.f32 %v836, %v838
      %933 = vadd.xlane.f32.xlu0 %v932
      %v934 = vpop.xlane.xlu0 %933
      %v935 = vrcp.pop %v841
      %v936 = vrcp.pop %v844
      %v937 = vrcp.pop %v847
      %v938 = vrcp.pop %v850
      %v939 = vrcp.pop %v853
      %v940 = vrcp.pop %v856
      %v941 = vrcp.pop %v859
      %v942 = vrcp.pop %v862
      %v943 = vrcp.pop %v865
      %v944 = vrcp.pop %v868
      %v945 = vrcp.pop %v871
      %v946 = vrcp.pop %v874
      %v947 = vrcp.pop %v877
      %v948 = vrcp.pop %v880
      %v949 = vrcp.pop %v883
      %v950 = vrcp.pop %v886
      %v951 = vrcp.pop %v889
      %v952 = vrcp.pop %v892
      %v953 = vrcp.pop %v895
      %v954 = vrcp.pop %v898
      %v955 = vrcp.pop %v901
      %v956 = vrcp.pop %v904
      %v957 = vrcp.pop %v907
      %v958 = vrcp.pop %v910
      %v959 = vrcp.pop %v913
      %v960 = vrcp.pop %v916
      %v961 = vrcp.pop %v919
      %v962 = vrcp.pop %v922
      %v963 = vrcp.pop %v925
      %v964 = vrcp.pop %v928
      %v965 = vrcp.pop %v931
      %v966 = vrcp.pop %v934
      %v967 = vmul.f32 %v712, %v935
      %v968 = vmul.f32 %v714, %v935
      %v969 = vmul.f32 %v716, %v936
      %v970 = vmul.f32 %v718, %v936
      %v971 = vmul.f32 %v720, %v937
      %v972 = vmul.f32 %v722, %v937
      %v973 = vmul.f32 %v724, %v938
      %v974 = vmul.f32 %v726, %v938
      %v975 = vmul.f32 %v728, %v939
      %v976 = vmul.f32 %v730, %v939
      %v977 = vmul.f32 %v732, %v940
      %v978 = vmul.f32 %v734, %v940
      %v979 = vmul.f32 %v736, %v941
      %v980 = vmul.f32 %v738, %v941
      %v981 = vmul.f32 %v740, %v942
      %v982 = vmul.f32 %v742, %v942
      %v983 = vmul.f32 %v744, %v943
      %v984 = vmul.f32 %v746, %v943
      %v985 = vmul.f32 %v748, %v944
      %v986 = vmul.f32 %v750, %v944
      %v987 = vmul.f32 %v752, %v945
      %v988 = vmul.f32 %v754, %v945
      %v989 = vmul.f32 %v756, %v946
      %v990 = vmul.f32 %v758, %v946
      %v991 = vmul.f32 %v760, %v947
      %v992 = vmul.f32 %v762, %v947
      %v993 = vmul.f32 %v764, %v948
      %v994 = vmul.f32 %v766, %v948
      %v995 = vmul.f32 %v768, %v949
      %v996 = vmul.f32 %v770, %v949
      %v997 = vmul.f32 %v772, %v950
      %v998 = vmul.f32 %v774, %v950
      %v999 = vmul.f32 %v776, %v951
      %v1000 = vmul.f32 %v778, %v951
      %v1001 = vmul.f32 %v780, %v952
      %v1002 = vmul.f32 %v782, %v952
      %v1003 = vmul.f32 %v784, %v953
      %v1004 = vmul.f32 %v786, %v953
      %v1005 = vmul.f32 %v788, %v954
      %v1006 = vmul.f32 %v790, %v954
      %v1007 = vmul.f32 %v792, %v955
      %v1008 = vmul.f32 %v794, %v955
      %v1009 = vmul.f32 %v796, %v956
      %v1010 = vmul.f32 %v798, %v956
      %v1011 = vmul.f32 %v800, %v957
      %v1012 = vmul.f32 %v802, %v957
      %v1013 = vmul.f32 %v804, %v958
      %v1014 = vmul.f32 %v806, %v958
      %v1015 = vmul.f32 %v808, %v959
      %v1016 = vmul.f32 %v810, %v959
      %v1017 = vmul.f32 %v812, %v960
      %v1018 = vmul.f32 %v814, %v960
      %v1019 = vmul.f32 %v816, %v961
      %v1020 = vmul.f32 %v818, %v961
      %v1021 = vmul.f32 %v820, %v962
      %v1022 = vmul.f32 %v822, %v962
      %v1023 = vmul.f32 %v824, %v963
      %v1024 = vmul.f32 %v826, %v963
      %v1025 = vmul.f32 %v828, %v964
      %v1026 = vmul.f32 %v830, %v964
      %v1027 = vmul.f32 %v832, %v965
      %v1028 = vmul.f32 %v834, %v965
      %v1029 = vmul.f32 %v836, %v966
      %v1030 = vmul.f32 %v838, %v966
      %v1031 = vpack.c.bf16 %v969, %v967
      %v1032 = vpack.c.bf16 %v970, %v968
      %v1033 = vpack.c.bf16 %v973, %v971
      %v1034 = vpack.c.bf16 %v974, %v972
      %v1035 = vpack.c.bf16 %v977, %v975
      %v1036 = vpack.c.bf16 %v978, %v976
      %v1037 = vpack.c.bf16 %v981, %v979
      %v1038 = vpack.c.bf16 %v982, %v980
      %v1039 = vpack.c.bf16 %v985, %v983
      %v1040 = vpack.c.bf16 %v986, %v984
      %v1041 = vpack.c.bf16 %v989, %v987
      %v1042 = vpack.c.bf16 %v990, %v988
      %v1043 = vpack.c.bf16 %v993, %v991
      %v1044 = vpack.c.bf16 %v994, %v992
      %v1045 = vpack.c.bf16 %v997, %v995
      %v1046 = vpack.c.bf16 %v998, %v996
      %v1047 = vpack.c.bf16 %v1001, %v999
      %v1048 = vpack.c.bf16 %v1002, %v1000
      %v1049 = vpack.c.bf16 %v1005, %v1003
      %v1050 = vpack.c.bf16 %v1006, %v1004
      %v1051 = vpack.c.bf16 %v1009, %v1007
      %v1052 = vpack.c.bf16 %v1010, %v1008
      %v1053 = vpack.c.bf16 %v1013, %v1011
      %v1054 = vpack.c.bf16 %v1014, %v1012
      %v1055 = vpack.c.bf16 %v1017, %v1015
      %v1056 = vpack.c.bf16 %v1018, %v1016
      %v1057 = vpack.c.bf16 %v1021, %v1019
      %v1058 = vpack.c.bf16 %v1022, %v1020
      %v1059 = vpack.c.bf16 %v1025, %v1023
      %v1060 = vpack.c.bf16 %v1026, %v1024
      %v1061 = vpack.c.bf16 %v1029, %v1027
      %v1062 = vpack.c.bf16 %v1030, %v1028
      %v1095 = vunpack.c.l.b16 %v197
      %v1096 = vunpack.c.l.b16 %v198
      %v1097 = vunpack.c.l.b16 %v199
      %v1098 = vunpack.c.l.b16 %v200
      %v1099 = vunpack.c.l.b16 %v201
      %v1100 = vunpack.c.l.b16 %v202
      %v1101 = vunpack.c.l.b16 %v203
      %v1102 = vunpack.c.l.b16 %v204
      %v1103 = vunpack.c.l.b16 %v205
      %v1104 = vunpack.c.l.b16 %v206
      %v1105 = vunpack.c.l.b16 %v207
      %v1106 = vunpack.c.l.b16 %v208
      %v1107 = vunpack.c.l.b16 %v209
      %v1108 = vunpack.c.l.b16 %v210
      %v1109 = vunpack.c.l.b16 %v211
      %v1110 = vunpack.c.l.b16 %v212
      %v1111 = vunpack.c.l.b16 %v213
      %v1112 = vunpack.c.l.b16 %v214
      %v1113 = vunpack.c.l.b16 %v215
      %v1114 = vunpack.c.l.b16 %v216
      %v1115 = vunpack.c.l.b16 %v217
      %v1116 = vunpack.c.l.b16 %v218
      %v1117 = vunpack.c.l.b16 %v219
      %v1118 = vunpack.c.l.b16 %v220
      %v1119 = vunpack.c.l.b16 %v221
      %v1120 = vunpack.c.l.b16 %v222
      %v1121 = vunpack.c.l.b16 %v223
      %v1122 = vunpack.c.l.b16 %v224
      %v1123 = vunpack.c.l.b16 %v225
      %v1124 = vunpack.c.l.b16 %v226
      %v1125 = vunpack.c.l.b16 %v227
      %v1126 = vunpack.c.l.b16 %v228
      %v1127 = vpack.c.b16 %v1096, %v1095
      %v1128 = vpack.c.b16 %v1098, %v1097
      %v1129 = vpack.c.b16 %v1100, %v1099
      %v1130 = vpack.c.b16 %v1102, %v1101
      %v1131 = vpack.c.b16 %v1104, %v1103
      %v1132 = vpack.c.b16 %v1106, %v1105
      %v1133 = vpack.c.b16 %v1108, %v1107
      %v1134 = vpack.c.b16 %v1110, %v1109
      %v1135 = vpack.c.b16 %v1112, %v1111
      %v1136 = vpack.c.b16 %v1114, %v1113
      %v1137 = vpack.c.b16 %v1116, %v1115
      %v1138 = vpack.c.b16 %v1118, %v1117
      %v1139 = vpack.c.b16 %v1120, %v1119
      %v1140 = vpack.c.b16 %v1122, %v1121
      %v1141 = vpack.c.b16 %v1124, %v1123
      %v1142 = vpack.c.b16 %v1126, %v1125
      %1159 = vmatprep.subr.bf16.mxu0 0
      %1160 = vmatpush1.bf16.msra.mxu0 %v1134
      %1161 = vmatprep.subr.bf16.mxu0 0
      %1162 = vmatpush1.bf16.msra.mxu0 %v1133
      %1163 = vmatprep.subr.bf16.mxu0 0
      %1164 = vmatpush1.bf16.msra.mxu0 %v1132
      %1165 = vmatprep.subr.bf16.mxu0 0
      %1166 = vmatpush1.bf16.msra.mxu0 %v1131
      %1167 = vmatprep.subr.bf16.mxu0 0
      %1168 = vmatpush1.bf16.msra.mxu0 %v1130
      %1169 = vmatprep.subr.bf16.mxu0 0
      %1170 = vmatpush1.bf16.msra.mxu0 %v1129
      %1171 = vmatprep.subr.bf16.mxu0 0
      %1172 = vmatpush1.bf16.msra.mxu0 %v1128
      %1173 = vmatprep.subr.bf16.mxu0 0
      %1174 = vmatpush1.bf16.msra.mxu0 %v1127
      %1175 = vmatprep.subr.bf16.mxu0 0
      %1176 = vmatpush2.bf16.msra.mxu0 %v1142
      %1177 = vmatprep.subr.bf16.mxu0 0
      %1178 = vmatpush2.bf16.msra.mxu0 %v1141
      %1179 = vmatprep.subr.bf16.mxu0 0
      %1180 = vmatpush2.bf16.msra.mxu0 %v1140
      %1181 = vmatprep.subr.bf16.mxu0 0
      %1182 = vmatpush2.bf16.msra.mxu0 %v1139
      %1183 = vmatprep.subr.bf16.mxu0 0
      %1184 = vmatpush2.bf16.msra.mxu0 %v1138
      %1185 = vmatprep.subr.bf16.mxu0 0
      %1186 = vmatpush2.bf16.msra.mxu0 %v1137
      %1187 = vmatprep.subr.bf16.mxu0 0
      %1188 = vmatpush2.bf16.msra.mxu0 %v1136
      %1189 = vmatprep.subr.bf16.mxu0 0
      %1190 = vmatpush2.bf16.msra.mxu0 %v1135
      %1191 = vmatprep.mubr.bf16.mxu0 %v1032
      %1192 = vmatmul.mubr.bf16.gmra.mxu0 %v1031
      %v1193 = vpop.f32.mrf.mxu0
      %v1194 = vadd.f32 0.0, %v1193
      %v1195 = vpop.f32.mrf.mxu0
      %v1196 = vpop.f32.mrf.mxu0
      %v1197 = vadd.f32 0.0, %v1196
      %v1198 = vpop.f32.mrf.mxu0
      %1199 = vmatprep.mubr.bf16.mxu0 %v1034
      %1200 = vmatmul.mubr.bf16.gmra.mxu0 %v1033
      %v1201 = vpop.f32.mrf.mxu0
      %v1202 = vadd.f32 0.0, %v1201
      %v1203 = vpop.f32.mrf.mxu0
      %v1204 = vpop.f32.mrf.mxu0
      %v1205 = vadd.f32 0.0, %v1204
      %v1206 = vpop.f32.mrf.mxu0
      %1207 = vmatprep.mubr.bf16.mxu0 %v1036
      %1208 = vmatmul.mubr.bf16.gmra.mxu0 %v1035
      %v1209 = vpop.f32.mrf.mxu0
      %v1210 = vadd.f32 0.0, %v1209
      %v1211 = vpop.f32.mrf.mxu0
      %v1212 = vpop.f32.mrf.mxu0
      %v1213 = vadd.f32 0.0, %v1212
      %v1214 = vpop.f32.mrf.mxu0
      %1215 = vmatprep.mubr.bf16.mxu0 %v1038
      %1216 = vmatmul.mubr.bf16.gmra.mxu0 %v1037
      %v1217 = vpop.f32.mrf.mxu0
      %v1218 = vadd.f32 0.0, %v1217
      %v1219 = vpop.f32.mrf.mxu0
      %v1220 = vpop.f32.mrf.mxu0
      %v1221 = vadd.f32 0.0, %v1220
      %v1222 = vpop.f32.mrf.mxu0
      %1223 = vmatprep.mubr.bf16.mxu0 %v1040
      %1224 = vmatmul.mubr.bf16.gmra.mxu0 %v1039
      %v1225 = vpop.f32.mrf.mxu0
      %v1226 = vadd.f32 0.0, %v1225
      %v1227 = vpop.f32.mrf.mxu0
      %v1228 = vpop.f32.mrf.mxu0
      %v1229 = vadd.f32 0.0, %v1228
      %v1230 = vpop.f32.mrf.mxu0
      %1231 = vmatprep.mubr.bf16.mxu0 %v1042
      %1232 = vmatmul.mubr.bf16.gmra.mxu0 %v1041
      %v1233 = vpop.f32.mrf.mxu0
      %v1234 = vadd.f32 0.0, %v1233
      %v1235 = vpop.f32.mrf.mxu0
      %v1236 = vpop.f32.mrf.mxu0
      %v1237 = vadd.f32 0.0, %v1236
      %v1238 = vpop.f32.mrf.mxu0
      %1239 = vmatprep.mubr.bf16.mxu0 %v1044
      %1240 = vmatmul.mubr.bf16.gmra.mxu0 %v1043
      %v1241 = vpop.f32.mrf.mxu0
      %v1242 = vadd.f32 0.0, %v1241
      %v1243 = vpop.f32.mrf.mxu0
      %v1244 = vpop.f32.mrf.mxu0
      %v1245 = vadd.f32 0.0, %v1244
      %v1246 = vpop.f32.mrf.mxu0
      %1247 = vmatprep.mubr.bf16.mxu0 %v1046
      %1248 = vmatmul.mubr.bf16.gmra.mxu0 %v1045
      %v1249 = vpop.f32.mrf.mxu0
      %v1250 = vadd.f32 0.0, %v1249
      %v1251 = vpop.f32.mrf.mxu0
      %v1252 = vpop.f32.mrf.mxu0
      %v1253 = vadd.f32 0.0, %v1252
      %v1254 = vpop.f32.mrf.mxu0
      %1255 = vmatprep.mubr.bf16.mxu0 %v1048
      %1256 = vmatmul.mubr.bf16.gmra.mxu0 %v1047
      %v1257 = vpop.f32.mrf.mxu0
      %v1258 = vadd.f32 0.0, %v1257
      %v1259 = vpop.f32.mrf.mxu0
      %v1260 = vpop.f32.mrf.mxu0
      %v1261 = vadd.f32 0.0, %v1260
      %v1262 = vpop.f32.mrf.mxu0
      %1263 = vmatprep.mubr.bf16.mxu0 %v1050
      %1264 = vmatmul.mubr.bf16.gmra.mxu0 %v1049
      %v1265 = vpop.f32.mrf.mxu0
      %v1266 = vadd.f32 0.0, %v1265
      %v1267 = vpop.f32.mrf.mxu0
      %v1268 = vpop.f32.mrf.mxu0
      %v1269 = vadd.f32 0.0, %v1268
      %v1270 = vpop.f32.mrf.mxu0
      %1271 = vmatprep.mubr.bf16.mxu0 %v1052
      %1272 = vmatmul.mubr.bf16.gmra.mxu0 %v1051
      %v1273 = vpop.f32.mrf.mxu0
      %v1274 = vadd.f32 0.0, %v1273
      %v1275 = vpop.f32.mrf.mxu0
      %v1276 = vpop.f32.mrf.mxu0
      %v1277 = vadd.f32 0.0, %v1276
      %v1278 = vpop.f32.mrf.mxu0
      %1279 = vmatprep.mubr.bf16.mxu0 %v1054
      %1280 = vmatmul.mubr.bf16.gmra.mxu0 %v1053
      %v1281 = vpop.f32.mrf.mxu0
      %v1282 = vadd.f32 0.0, %v1281
      %v1283 = vpop.f32.mrf.mxu0
      %v1284 = vpop.f32.mrf.mxu0
      %v1285 = vadd.f32 0.0, %v1284
      %v1286 = vpop.f32.mrf.mxu0
      %1287 = vmatprep.mubr.bf16.mxu0 %v1056
      %1288 = vmatmul.mubr.bf16.gmra.mxu0 %v1055
      %v1289 = vpop.f32.mrf.mxu0
      %v1290 = vadd.f32 0.0, %v1289
      %v1291 = vpop.f32.mrf.mxu0
      %v1292 = vpop.f32.mrf.mxu0
      %v1293 = vadd.f32 0.0, %v1292
      %v1294 = vpop.f32.mrf.mxu0
      %1295 = vmatprep.mubr.bf16.mxu0 %v1058
      %1296 = vmatmul.mubr.bf16.gmra.mxu0 %v1057
      %v1297 = vpop.f32.mrf.mxu0
      %v1298 = vadd.f32 0.0, %v1297
      %v1299 = vpop.f32.mrf.mxu0
      %v1300 = vpop.f32.mrf.mxu0
      %v1301 = vadd.f32 0.0, %v1300
      %v1302 = vpop.f32.mrf.mxu0
      %1303 = vmatprep.mubr.bf16.mxu0 %v1060
      %1304 = vmatmul.mubr.bf16.gmra.mxu0 %v1059
      %v1305 = vpop.f32.mrf.mxu0
      %v1306 = vadd.f32 0.0, %v1305
      %v1307 = vpop.f32.mrf.mxu0
      %v1308 = vpop.f32.mrf.mxu0
      %v1309 = vadd.f32 0.0, %v1308
      %v1310 = vpop.f32.mrf.mxu0
      %1311 = vmatprep.mubr.bf16.mxu0 %v1062
      %1312 = vmatmul.mubr.bf16.gmra.mxu0 %v1061
      %v1313 = vpop.f32.mrf.mxu0
      %v1314 = vadd.f32 0.0, %v1313
      %v1315 = vpop.f32.mrf.mxu0
      %v1316 = vpop.f32.mrf.mxu0
      %v1317 = vadd.f32 0.0, %v1316
      %v1318 = vpop.f32.mrf.mxu0
      %1319 = vdwg.mxu0
      %v1320 = vpack.c.bf16 %v1197, %v1194
      %v1321 = vpack.c.bf16 %v1205, %v1202
      %v1322 = vpack.c.bf16 %v1213, %v1210
      %v1323 = vpack.c.bf16 %v1221, %v1218
      %v1324 = vpack.c.bf16 %v1229, %v1226
      %v1325 = vpack.c.bf16 %v1237, %v1234
      %v1326 = vpack.c.bf16 %v1245, %v1242
      %v1327 = vpack.c.bf16 %v1253, %v1250
      %v1328 = vpack.c.bf16 %v1261, %v1258
      %v1329 = vpack.c.bf16 %v1269, %v1266
      %v1330 = vpack.c.bf16 %v1277, %v1274
      %v1331 = vpack.c.bf16 %v1285, %v1282
      %v1332 = vpack.c.bf16 %v1293, %v1290
      %v1333 = vpack.c.bf16 %v1301, %v1298
      %v1334 = vpack.c.bf16 %v1309, %v1306
      %v1335 = vpack.c.bf16 %v1317, %v1314
      %v1352 = vunpack.c.l.b16 %v1320
      %v1353 = vunpack.c.h.b16 %v1320
      %v1354 = vunpack.c.l.b16 %v1321
      %v1355 = vunpack.c.h.b16 %v1321
      %v1356 = vunpack.c.l.b16 %v1322
      %v1357 = vunpack.c.h.b16 %v1322
      %v1358 = vunpack.c.l.b16 %v1323
      %v1359 = vunpack.c.h.b16 %v1323
      %v1360 = vunpack.c.l.b16 %v1324
      %v1361 = vunpack.c.h.b16 %v1324
      %v1362 = vunpack.c.l.b16 %v1325
      %v1363 = vunpack.c.h.b16 %v1325
      %v1364 = vunpack.c.l.b16 %v1326
      %v1365 = vunpack.c.h.b16 %v1326
      %v1366 = vunpack.c.l.b16 %v1327
      %v1367 = vunpack.c.h.b16 %v1327
      %v1368 = vunpack.c.l.b16 %v1328
      %v1369 = vunpack.c.h.b16 %v1328
      %v1370 = vunpack.c.l.b16 %v1329
      %v1371 = vunpack.c.h.b16 %v1329
      %v1372 = vunpack.c.l.b16 %v1330
      %v1373 = vunpack.c.h.b16 %v1330
      %v1374 = vunpack.c.l.b16 %v1331
      %v1375 = vunpack.c.h.b16 %v1331
      %v1376 = vunpack.c.l.b16 %v1332
      %v1377 = vunpack.c.h.b16 %v1332
      %v1378 = vunpack.c.l.b16 %v1333
      %v1379 = vunpack.c.h.b16 %v1333
      %v1380 = vunpack.c.l.b16 %v1334
      %v1381 = vunpack.c.h.b16 %v1334
      %v1382 = vunpack.c.l.b16 %v1335
      %v1383 = vunpack.c.h.b16 %v1335
      %v1384 = vpack.c.b16 %v1352, %v1352
      %v1385 = vpack.c.b16 %v1353, %v1353
      %v1386 = vpack.c.b16 %v1354, %v1354
      %v1387 = vpack.c.b16 %v1355, %v1355
      %v1388 = vpack.c.b16 %v1356, %v1356
      %v1389 = vpack.c.b16 %v1357, %v1357
      %v1390 = vpack.c.b16 %v1358, %v1358
      %v1391 = vpack.c.b16 %v1359, %v1359
      %v1392 = vpack.c.b16 %v1360, %v1360
      %v1393 = vpack.c.b16 %v1361, %v1361
      %v1394 = vpack.c.b16 %v1362, %v1362
      %v1395 = vpack.c.b16 %v1363, %v1363
      %v1396 = vpack.c.b16 %v1364, %v1364
      %v1397 = vpack.c.b16 %v1365, %v1365
      %v1398 = vpack.c.b16 %v1366, %v1366
      %v1399 = vpack.c.b16 %v1367, %v1367
      %v1400 = vpack.c.b16 %v1368, %v1368
      %v1401 = vpack.c.b16 %v1369, %v1369
      %v1402 = vpack.c.b16 %v1370, %v1370
      %v1403 = vpack.c.b16 %v1371, %v1371
      %v1404 = vpack.c.b16 %v1372, %v1372
      %v1405 = vpack.c.b16 %v1373, %v1373
      %v1406 = vpack.c.b16 %v1374, %v1374
      %v1407 = vpack.c.b16 %v1375, %v1375
      %v1408 = vpack.c.b16 %v1376, %v1376
      %v1409 = vpack.c.b16 %v1377, %v1377
      %v1410 = vpack.c.b16 %v1378, %v1378
      %v1411 = vpack.c.b16 %v1379, %v1379
      %v1412 = vpack.c.b16 %v1380, %v1380
      %v1413 = vpack.c.b16 %v1381, %v1381
      %v1414 = vpack.c.b16 %v1382, %v1382
      %v1415 = vpack.c.b16 %v1383, %v1383
      %vm1448 = vcmask 76800
      %1449 = vst.msk [vmem:[%s163] sm:$0xf] %vm1448, %v1384
      %1450 = vst.msk [vmem:[%s163 + $0x4] sm:$0xf] %vm1448, %v1385
      %1451 = vst.msk [vmem:[%s163 + $0x8] sm:$0xf] %vm1448, %v1386
      %1452 = vst.msk [vmem:[%s163 + $0xc] sm:$0xf] %vm1448, %v1387
      %1453 = vst.msk [vmem:[%s163 + $0x10] sm:$0xf] %vm1448, %v1388
      %1454 = vst.msk [vmem:[%s163 + $0x14] sm:$0xf] %vm1448, %v1389
      %1455 = vst.msk [vmem:[%s163 + $0x18] sm:$0xf] %vm1448, %v1390
      %1456 = vst.msk [vmem:[%s163 + $0x1c] sm:$0xf] %vm1448, %v1391
      %1457 = vst.msk [vmem:[%s163 + $0x20] sm:$0xf] %vm1448, %v1392
      %1458 = vst.msk [vmem:[%s163 + $0x24] sm:$0xf] %vm1448, %v1393
      %1459 = vst.msk [vmem:[%s163 + $0x28] sm:$0xf] %vm1448, %v1394
      %1460 = vst.msk [vmem:[%s163 + $0x2c] sm:$0xf] %vm1448, %v1395
      %1461 = vst.msk [vmem:[%s163 + $0x30] sm:$0xf] %vm1448, %v1396
      %1462 = vst.msk [vmem:[%s163 + $0x34] sm:$0xf] %vm1448, %v1397
      %1463 = vst.msk [vmem:[%s163 + $0x38] sm:$0xf] %vm1448, %v1398
      %1464 = vst.msk [vmem:[%s163 + $0x3c] sm:$0xf] %vm1448, %v1399
      %1465 = vst.msk [vmem:[%s163 + $0x40] sm:$0xf] %vm1448, %v1400
      %1466 = vst.msk [vmem:[%s163 + $0x44] sm:$0xf] %vm1448, %v1401
      %1467 = vst.msk [vmem:[%s163 + $0x48] sm:$0xf] %vm1448, %v1402
      %1468 = vst.msk [vmem:[%s163 + $0x4c] sm:$0xf] %vm1448, %v1403
      %1469 = vst.msk [vmem:[%s163 + $0x50] sm:$0xf] %vm1448, %v1404
      %1470 = vst.msk [vmem:[%s163 + $0x54] sm:$0xf] %vm1448, %v1405
      %1471 = vst.msk [vmem:[%s163 + $0x58] sm:$0xf] %vm1448, %v1406
      %1472 = vst.msk [vmem:[%s163 + $0x5c] sm:$0xf] %vm1448, %v1407
      %1473 = vst.msk [vmem:[%s163 + $0x60] sm:$0xf] %vm1448, %v1408
      %1474 = vst.msk [vmem:[%s163 + $0x64] sm:$0xf] %vm1448, %v1409
      %1475 = vst.msk [vmem:[%s163 + $0x68] sm:$0xf] %vm1448, %v1410
      %1476 = vst.msk [vmem:[%s163 + $0x6c] sm:$0xf] %vm1448, %v1411
      %1477 = vst.msk [vmem:[%s163 + $0x70] sm:$0xf] %vm1448, %v1412
      %1478 = vst.msk [vmem:[%s163 + $0x74] sm:$0xf] %vm1448, %v1413
      %1479 = vst.msk [vmem:[%s163 + $0x78] sm:$0xf] %vm1448, %v1414
      %1480 = vst.msk [vmem:[%s163 + $0x7c] sm:$0xf] %vm1448, %v1415
      %p1481 = scmp.lt.s32.totalorder %s13, 1
      %s1482 = scalar_select %p1481, %s13, 1
      %s1483 = smul.addr %s1482, 32
      %s1484 = smul.addr %s1483, 4
      %s1485 = scalar_lea.vmem %s2, %s1484
      // Predicated region
      $region29: #{_lambda_.22} parent=27 // pred_check
        %p1486 = pneg %p83
      $region30: #{_lambda_.22} parent=27 // pred_check_branch
        %1488 = sbr.rel (%p1486) target = $region32
      $region31: #{_lambda_.22} parent=27 // pred_region
        _
      $region32: #{_lambda_.22} parent=27 // pred_fallthru
        _
    $region28: #{_lambda_.22} parent=5 // pred_fallthru
      _
    %p1489 = scmp.le.s32.totalorder 2, %s8
    // Predicated region
    $region33: #{_lambda_.22} parent=5 // pred_check
      %p1490 = pneg %p1489
    $region34: #{_lambda_.22} parent=5 // pred_check_branch
      %1492 = sbr.rel (%p1490) target = $region36
    $region35: #{_lambda_.22} parent=5 // pred_region
      %s1493 = ssub.s32 %s8, 2
      // Predicated region
      $region37: #{_lambda_.22} parent=35 // pred_check
        %p1494 = pneg %p89
      $region38: #{_lambda_.22} parent=35 // pred_check_branch
        %1496 = sbr.rel (%p1494) target = $region40
      $region39: #{_lambda_.22} parent=35 // pred_region
        %p1497 = scmp.lt.s32.totalorder %s14, 1
        %s1498 = scalar_select %p1497, %s14, 1
        %s1499 = smul.addr %s1498, 32
        %s1500 = smul.addr %s1499, 4
        %s1501 = scalar_lea.vmem %s2, %s1500
      $region40: #{_lambda_.22} parent=35 // pred_fallthru
        _
    $region36: #{_lambda_.22} parent=5 // pred_fallthru
      _
  $region6: #{_lambda_.22} parent=0 // loop_footer
    %s12 = sadd.s32 1, %s8
  $region7: #{_lambda_.22} parent=0 // loop_footer_branch
    %7 = sbr.rel target = $region3
  $region8: #{_lambda_.22} parent=0 // loop_exit
    _

// kernel: _lambda_.21
$region0: #{_lambda_.21}
  #allocation0 [shape = 'u32[]', space=smem, size = 0x4, offset = 0x4, fixed_abs, tag = 'smem constant byte address 0x4 - core index']
  #allocation1 [shape = 'u32[144,128]{1,0:T(1,128)}', space=vmem, size = 0x12000, scoped, tag = 'internal scratch']
  %s0 = inlined_call_operand.vmem [shape: bf16[8,64,10], index: 0, kind: input, shape index: {}]
  %s1 = inlined_call_operand.vmem [shape: bf16[8,64,10], index: 1, kind: input, shape index: {}]
  %s2 = inlined_call_operand.vmem [shape: bf16[8,64,10], index: 2, kind: output, shape index: {}]
  %s3 = sld [smem:[#allocation0]]
  $region41: #{_lambda_.21} parent=0
    _
  %s5 = ssub.s32 1, %s3
  %s6 = scalar_select 0, %s5, %s3
  loop: start=0, step=1, limit=4
  $region2: #{_lambda_.21} parent=0 // loop_pre_header
    _
  $region3: #{_lambda_.21} parent=0 // loop_header
    %s8 = sphi 0, %s12
    %p9 = scmp.ge.s32.totalorder %s8, 4
    %s18 = sphi 0, %s20
    %s21 = sphi 0, %s18
    %s22 = sphi 0, %s21
    %s38 = sphi 0, %s22
    %s44 = sphi 0, %s46
    %s47 = sphi 0, %s44
    %s48 = sphi 0, %s47
    %s64 = sphi 0, %s48
    %s70 = sphi 0, %s72
    %s73 = sphi 0, %s70
    %s74 = sphi 0, %s73
    %s90 = sphi 0, %s74
  $region4: #{_lambda_.21} parent=0 // loop_header_branch
    %11 = sbr.rel (%p9) target = $region8
  $region5: #{_lambda_.21} parent=0 // loop_body
    %s13 = ssub.s32 %s8, 1
    %s14 = ssub.s32 %s8, 2
    %s15 = sadd.s32 %s8, 1
    %s16 = ssub.s32 %s8, %s15
    %p17 = scmp.eq.s32.totalorder %s16, 0
    %s19 = sadd.s32 %s18, 1
    %s20 = scalar_select %p17, %s18, %s19
    %p23 = pneg %p17
    %p24 = scmp.eq.s32.totalorder %s8, 1
    %p25 = por %p23, %p24
    %p26 = scmp.ne.s32.totalorder %s18, %s21
    %p27 = scmp.eq.s32.totalorder %s8, 0
    %p28 = por %p26, %p27
    %p29 = scmp.ne.s32.totalorder %s18, %s21
    %p30 = scmp.eq.s32.totalorder %s13, 1
    %p31 = por %p29, %p30
    %p32 = scmp.ne.s32.totalorder %s21, %s22
    %p33 = scmp.eq.s32.totalorder %s13, 0
    %p34 = por %p32, %p33
    %p35 = scmp.ne.s32.totalorder %s21, %s22
    %p36 = scmp.eq.s32.totalorder %s14, 1
    %p37 = por %p35, %p36
    %p39 = scmp.ne.s32.totalorder %s22, %s38
    %p40 = scmp.eq.s32.totalorder %s14, 0
    %p41 = por %p39, %p40
    %s42 = ssub.s32 %s8, %s15
    %p43 = scmp.eq.s32.totalorder %s42, 0
    %s45 = sadd.s32 %s44, 1
    %s46 = scalar_select %p43, %s44, %s45
    %p49 = pneg %p43
    %p50 = scmp.eq.s32.totalorder %s8, 1
    %p51 = por %p49, %p50
    %p52 = scmp.ne.s32.totalorder %s44, %s47
    %p53 = scmp.eq.s32.totalorder %s8, 0
    %p54 = por %p52, %p53
    %p55 = scmp.ne.s32.totalorder %s44, %s47
    %p56 = scmp.eq.s32.totalorder %s13, 1
    %p57 = por %p55, %p56
    %p58 = scmp.ne.s32.totalorder %s47, %s48
    %p59 = scmp.eq.s32.totalorder %s13, 0
    %p60 = por %p58, %p59
    %p61 = scmp.ne.s32.totalorder %s47, %s48
    %p62 = scmp.eq.s32.totalorder %s14, 1
    %p63 = por %p61, %p62
    %p65 = scmp.ne.s32.totalorder %s48, %s64
    %p66 = scmp.eq.s32.totalorder %s14, 0
    %p67 = por %p65, %p66
    %s68 = ssub.s32 %s8, %s15
    %p69 = scmp.eq.s32.totalorder %s68, 0
    %s71 = sadd.s32 %s70, 1
    %s72 = scalar_select %p69, %s70, %s71
    %p75 = pneg %p69
    %p76 = scmp.eq.s32.totalorder %s8, 1
    %p77 = por %p75, %p76
    %p78 = scmp.ne.s32.totalorder %s70, %s73
    %p79 = scmp.eq.s32.totalorder %s8, 0
    %p80 = por %p78, %p79
    %p81 = scmp.ne.s32.totalorder %s70, %s73
    %p82 = scmp.eq.s32.totalorder %s13, 1
    %p83 = por %p81, %p82
    %p84 = scmp.ne.s32.totalorder %s73, %s74
    %p85 = scmp.eq.s32.totalorder %s13, 0
    %p86 = por %p84, %p85
    %p87 = scmp.ne.s32.totalorder %s73, %s74
    %p88 = scmp.eq.s32.totalorder %s14, 1
    %p89 = por %p87, %p88
    %p91 = scmp.ne.s32.totalorder %s74, %s90
    %p92 = scmp.eq.s32.totalorder %s14, 0
    %p93 = por %p91, %p92
    %p94 = scmp.le.s32.totalorder 1, %s8
    %p95 = scmp.lt.s32.totalorder %s8, 3
    %p96 = pnand %p94, %p95
    %p97 = pneg %p96
    // Predicated region
    $region9: #{_lambda_.21} parent=5 // pred_check
      _
    $region10: #{_lambda_.21} parent=5 // pred_check_branch
      %99 = sbr.rel (%p96) target = $region12
    $region11: #{_lambda_.21} parent=5 // pred_region
      %s100 = ssub.s32 %s8, 1
    $region12: #{_lambda_.21} parent=5 // pred_fallthru
      _
    %p101 = scmp.lt.s32.totalorder %s8, 2
    // Predicated region
    $region13: #{_lambda_.21} parent=5 // pred_check
      %p102 = pneg %p101
    $region14: #{_lambda_.21} parent=5 // pred_check_branch
      %104 = sbr.rel (%p102) target = $region16
    $region15: #{_lambda_.21} parent=5 // pred_region
      // Predicated region
      $region17: #{_lambda_.21} parent=15 // pred_check
        %p105 = pneg %p28
      $region18: #{_lambda_.21} parent=15 // pred_check_branch
        %107 = sbr.rel (%p105) target = $region20
      $region19: #{_lambda_.21} parent=15 // pred_region
        %s108 = smul.u32 4, %s8
        %p109 = scmp.lt.s32.totalorder %s108, 7
        %s110 = scalar_select %p109, %s108, 7
        %s111 = smul.addr %s110, 8
        %s112 = smul.addr %s111, 4
        %s113 = scalar_lea.vmem %s0, %s112
        %s114 = smul.u32 4, %s8
      $region20: #{_lambda_.21} parent=15 // pred_fallthru
        _
      // Predicated region
      $region21: #{_lambda_.21} parent=15 // pred_check
        %p115 = pneg %p54
      $region22: #{_lambda_.21} parent=15 // pred_check_branch
        %117 = sbr.rel (%p115) target = $region24
      $region23: #{_lambda_.21} parent=15 // pred_region
        %s118 = smul.u32 4, %s8
        %p119 = scmp.lt.s32.totalorder %s118, 7
        %s120 = scalar_select %p119, %s118, 7
        %s121 = smul.addr %s120, 8
        %s122 = smul.addr %s121, 4
        %s123 = scalar_lea.vmem %s1, %s122
        %s124 = smul.u32 4, %s8
      $region24: #{_lambda_.21} parent=15 // pred_fallthru
        _
    $region16: #{_lambda_.21} parent=5 // pred_fallthru
      _
    %p125 = scmp.le.s32.totalorder 1, %s8
    %p126 = scmp.lt.s32.totalorder %s8, 3
    %p127 = pnand %p125, %p126
    %p128 = pneg %p127
    // Predicated region
    $region25: #{_lambda_.21} parent=5 // pred_check
      _
    $region26: #{_lambda_.21} parent=5 // pred_check_branch
      %130 = sbr.rel (%p127) target = $region28
    $region27: #{_lambda_.21} parent=5 // pred_region
      %s131 = ssub.s32 %s8, 1
      %s132 = smul.u32 4, %s13
      %p133 = scmp.lt.s32.totalorder %s132, 7
      %s134 = scalar_select %p133, %s132, 7
      %s135 = smul.addr %s134, 8
      %s136 = smul.addr %s135, 4
      %s137 = scalar_lea.vmem %s0, %s136
      %p138 = pneg %p34
      %p139 = pneg %p31
      %s140 = smul.u32 4, %s13
      %p141 = scmp.lt.s32.totalorder %s140, 7
      %s142 = scalar_select %p141, %s140, 7
      %s143 = smul.addr %s142, 8
      %s144 = smul.addr %s143, 4
      %s145 = scalar_lea.vmem %s1, %s144
      %p146 = pneg %p60
      %p147 = pneg %p57
      %p148 = pneg %p86
      %p149 = pneg %p83
      %s150 = smul.u32 4, %s13
      %p151 = scmp.lt.s32.totalorder %s150, 7
      %s152 = scalar_select %p151, %s150, 7
      %s153 = smul.addr %s152, 8
      %s154 = smul.addr %s153, 4
      %s155 = scalar_lea.vmem %s2, %s154
      %s156 = smul.u32 4, %s13
      %p157 = scmp.lt.s32.totalorder %s156, 7
      %s158 = scalar_select %p157, %s156, 7
      %s159 = smul.addr %s158, 8
      %s160 = smul.addr %s159, 4
      %s161 = scalar_lea.vmem %s0, %s160
      %s162 = smul.u32 4, %s13
      %s163 = smul.u32 4, %s13
      %p164 = scmp.lt.s32.totalorder %s163, 7
      %s165 = scalar_select %p164, %s163, 7
      %s166 = smul.addr %s165, 8
      %s167 = smul.addr %s166, 4
      %s168 = scalar_lea.vmem %s1, %s167
      %s169 = smul.u32 4, %s13
      %s170 = smul.u32 4, %s13
      %p171 = scmp.lt.s32.totalorder %s170, 7
      %s172 = scalar_select %p171, %s170, 7
      %s173 = smul.addr %s172, 8
      %s174 = smul.addr %s173, 4
      %s175 = scalar_lea.vmem %s2, %s174
      %s176 = smul.u32 4, %s13
      %v178 = vld [vmem:[%s161] sm:$0xf]
      %v179 = vld [vmem:[%s161 + $0x4] sm:$0xf]
      %v180 = vld [vmem:[%s161 + $0x8] sm:$0xf]
      %v181 = vld [vmem:[%s161 + $0xc] sm:$0xf]
      %v182 = vld [vmem:[%s161 + $0x10] sm:$0xf]
      %v183 = vld [vmem:[%s161 + $0x14] sm:$0xf]
      %v184 = vld [vmem:[%s161 + $0x18] sm:$0xf]
      %v185 = vld [vmem:[%s161 + $0x1c] sm:$0xf]
      %v186 = vld [vmem:[%s161 + $0x20] sm:$0xf]
      %v187 = vld [vmem:[%s161 + $0x24] sm:$0xf]
      %v188 = vld [vmem:[%s161 + $0x28] sm:$0xf]
      %v189 = vld [vmem:[%s161 + $0x2c] sm:$0xf]
      %v190 = vld [vmem:[%s161 + $0x30] sm:$0xf]
      %v191 = vld [vmem:[%s161 + $0x34] sm:$0xf]
      %v192 = vld [vmem:[%s161 + $0x38] sm:$0xf]
      %v193 = vld [vmem:[%s161 + $0x3c] sm:$0xf]
      %v194 = vld [vmem:[%s161 + $0x40] sm:$0xf]
      %v195 = vld [vmem:[%s161 + $0x44] sm:$0xf]
      %v196 = vld [vmem:[%s161 + $0x48] sm:$0xf]
      %v197 = vld [vmem:[%s161 + $0x4c] sm:$0xf]
      %v198 = vld [vmem:[%s161 + $0x50] sm:$0xf]
      %v199 = vld [vmem:[%s161 + $0x54] sm:$0xf]
      %v200 = vld [vmem:[%s161 + $0x58] sm:$0xf]
      %v201 = vld [vmem:[%s161 + $0x5c] sm:$0xf]
      %v202 = vld [vmem:[%s161 + $0x60] sm:$0xf]
      %v203 = vld [vmem:[%s161 + $0x64] sm:$0xf]
      %v204 = vld [vmem:[%s161 + $0x68] sm:$0xf]
      %v205 = vld [vmem:[%s161 + $0x6c] sm:$0xf]
      %v206 = vld [vmem:[%s161 + $0x70] sm:$0xf]
      %v207 = vld [vmem:[%s161 + $0x74] sm:$0xf]
      %v208 = vld [vmem:[%s161 + $0x78] sm:$0xf]
      %v209 = vld [vmem:[%s161 + $0x7c] sm:$0xf]
      %v210 = vld [vmem:[%s168] sm:$0xf]
      %v211 = vld [vmem:[%s168 + $0x4] sm:$0xf]
      %v212 = vld [vmem:[%s168 + $0x8] sm:$0xf]
      %v213 = vld [vmem:[%s168 + $0xc] sm:$0xf]
      %v214 = vld [vmem:[%s168 + $0x10] sm:$0xf]
      %v215 = vld [vmem:[%s168 + $0x14] sm:$0xf]
      %v216 = vld [vmem:[%s168 + $0x18] sm:$0xf]
      %v217 = vld [vmem:[%s168 + $0x1c] sm:$0xf]
      %v218 = vld [vmem:[%s168 + $0x20] sm:$0xf]
      %v219 = vld [vmem:[%s168 + $0x24] sm:$0xf]
      %v220 = vld [vmem:[%s168 + $0x28] sm:$0xf]
      %v221 = vld [vmem:[%s168 + $0x2c] sm:$0xf]
      %v222 = vld [vmem:[%s168 + $0x30] sm:$0xf]
      %v223 = vld [vmem:[%s168 + $0x34] sm:$0xf]
      %v224 = vld [vmem:[%s168 + $0x38] sm:$0xf]
      %v225 = vld [vmem:[%s168 + $0x3c] sm:$0xf]
      %v226 = vld [vmem:[%s168 + $0x40] sm:$0xf]
      %v227 = vld [vmem:[%s168 + $0x44] sm:$0xf]
      %v228 = vld [vmem:[%s168 + $0x48] sm:$0xf]
      %v229 = vld [vmem:[%s168 + $0x4c] sm:$0xf]
      %v230 = vld [vmem:[%s168 + $0x50] sm:$0xf]
      %v231 = vld [vmem:[%s168 + $0x54] sm:$0xf]
      %v232 = vld [vmem:[%s168 + $0x58] sm:$0xf]
      %v233 = vld [vmem:[%s168 + $0x5c] sm:$0xf]
      %v234 = vld [vmem:[%s168 + $0x60] sm:$0xf]
      %v235 = vld [vmem:[%s168 + $0x64] sm:$0xf]
      %v236 = vld [vmem:[%s168 + $0x68] sm:$0xf]
      %v237 = vld [vmem:[%s168 + $0x6c] sm:$0xf]
      %v238 = vld [vmem:[%s168 + $0x70] sm:$0xf]
      %v239 = vld [vmem:[%s168 + $0x74] sm:$0xf]
      %v240 = vld [vmem:[%s168 + $0x78] sm:$0xf]
      %v241 = vld [vmem:[%s168 + $0x7c] sm:$0xf]
      %v250 = vunpack.c.l.b16 %v178
      %v251 = vunpack.c.l.b16 %v179
      %v252 = vunpack.c.l.b16 %v180
      %v253 = vunpack.c.l.b16 %v181
      %v254 = vunpack.c.l.b16 %v182
      %v255 = vunpack.c.l.b16 %v183
      %v256 = vunpack.c.l.b16 %v184
      %v257 = vunpack.c.l.b16 %v185
      %v258 = vpack.c.b16 %v251, %v250
      %v259 = vpack.c.b16 %v253, %v252
      %v260 = vpack.c.b16 %v255, %v254
      %v261 = vpack.c.b16 %v257, %v256
      %vm262 = vcmask 80896
      %v264 = vsel %vm262, %v258, 0
      %v267 = vsel %vm262, %v259, 0
      %v270 = vsel %vm262, %v260, 0
      %v273 = vsel %vm262, %v261, 0
      %275 = vmatprep.subr.bf16.mxu0 0
      %276 = vmatpush1.bf16.xpose.msra.mxu0 0
      %277 = vmatprep.subr.bf16.mxu0 0
      %278 = vmatpush1.bf16.xpose.msra.mxu0 0
      %279 = vmatprep.subr.bf16.mxu0 0
      %280 = vmatpush1.bf16.xpose.msra.mxu0 0
      %281 = vmatprep.subr.bf16.mxu0 0
      %282 = vmatpush1.bf16.xpose.msra.mxu0 0
      %283 = vmatprep.subr.bf16.mxu0 0
      %284 = vmatpush1.bf16.xpose.msra.mxu0 %v273
      %285 = vmatprep.subr.bf16.mxu0 0
      %286 = vmatpush1.bf16.xpose.msra.mxu0 %v270
      %287 = vmatprep.subr.bf16.mxu0 0
      %288 = vmatpush1.bf16.xpose.msra.mxu0 %v267
      %289 = vmatprep.subr.bf16.mxu0 0
      %290 = vmatpush1.bf16.xpose.msra.mxu0 %v264
      %291 = vmatprep.subr.bf16.mxu0 0
      %292 = vmatpush2.bf16.xpose.msra.mxu0 0
      %293 = vmatprep.subr.bf16.mxu0 0
      %294 = vmatpush2.bf16.xpose.msra.mxu0 0
      %295 = vmatprep.subr.bf16.mxu0 0
      %296 = vmatpush2.bf16.xpose.msra.mxu0 0
      %297 = vmatprep.subr.bf16.mxu0 0
      %298 = vmatpush2.bf16.xpose.msra.mxu0 0
      %299 = vmatprep.subr.bf16.mxu0 0
      %300 = vmatpush2.bf16.xpose.msra.mxu0 0
      %301 = vmatprep.subr.bf16.mxu0 0
      %302 = vmatpush2.bf16.xpose.msra.mxu0 0
      %303 = vmatprep.subr.bf16.mxu0 0
      %304 = vmatpush2.bf16.xpose.msra.mxu0 0
      %305 = vmatprep.subr.bf16.mxu0 0
      %306 = vmatpush2.bf16.xpose.msra.mxu0 0
      %307 = vmatprep.mubr.bf16.mxu0 0
      %308 = vmatmul.mubr.bf16.gmra.mxu0 %v264
      %v309 = vpop.f32.mrf.mxu0
      %v310 = vadd.f32 0.0, %v309
      %v311 = vpop.f32.mrf.mxu0
      %v312 = vpop.f32.mrf.mxu0
      %v313 = vadd.f32 0.0, %v312
      %v314 = vpop.f32.mrf.mxu0
      %315 = vmatprep.mubr.bf16.mxu0 0
      %316 = vmatmul.mubr.bf16.gmra.mxu0 %v267
      %v317 = vpop.f32.mrf.mxu0
      %v318 = vadd.f32 0.0, %v317
      %v319 = vpop.f32.mrf.mxu0
      %v320 = vpop.f32.mrf.mxu0
      %v321 = vadd.f32 0.0, %v320
      %v322 = vpop.f32.mrf.mxu0
      %323 = vmatprep.mubr.bf16.mxu0 0
      %324 = vmatmul.mubr.bf16.gmra.mxu0 %v270
      %v325 = vpop.f32.mrf.mxu0
      %v326 = vadd.f32 0.0, %v325
      %v327 = vpop.f32.mrf.mxu0
      %v328 = vpop.f32.mrf.mxu0
      %v329 = vadd.f32 0.0, %v328
      %v330 = vpop.f32.mrf.mxu0
      %331 = vmatprep.mubr.bf16.mxu0 0
      %332 = vmatmul.mubr.bf16.gmra.mxu0 %v273
      %v333 = vpop.f32.mrf.mxu0
      %v334 = vadd.f32 0.0, %v333
      %v335 = vpop.f32.mrf.mxu0
      %v336 = vpop.f32.mrf.mxu0
      %v337 = vadd.f32 0.0, %v336
      %v338 = vpop.f32.mrf.mxu0
      %339 = vdwg.mxu0
      %v348 = vunpack.c.l.b16 %v186
      %v349 = vunpack.c.l.b16 %v187
      %v350 = vunpack.c.l.b16 %v188
      %v351 = vunpack.c.l.b16 %v189
      %v352 = vunpack.c.l.b16 %v190
      %v353 = vunpack.c.l.b16 %v191
      %v354 = vunpack.c.l.b16 %v192
      %v355 = vunpack.c.l.b16 %v193
      %v356 = vpack.c.b16 %v349, %v348
      %v357 = vpack.c.b16 %v351, %v350
      %v358 = vpack.c.b16 %v353, %v352
      %v359 = vpack.c.b16 %v355, %v354
      %v361 = vsel %vm262, %v356, 0
      %v364 = vsel %vm262, %v357, 0
      %v367 = vsel %vm262, %v358, 0
      %v370 = vsel %vm262, %v359, 0
      %372 = vmatprep.subr.bf16.mxu0 0
      %373 = vmatpush1.bf16.xpose.msra.mxu0 0
      %374 = vmatprep.subr.bf16.mxu0 0
      %375 = vmatpush1.bf16.xpose.msra.mxu0 0
      %376 = vmatprep.subr.bf16.mxu0 0
      %377 = vmatpush1.bf16.xpose.msra.mxu0 0
      %378 = vmatprep.subr.bf16.mxu0 0
      %379 = vmatpush1.bf16.xpose.msra.mxu0 0
      %380 = vmatprep.subr.bf16.mxu0 0
      %381 = vmatpush1.bf16.xpose.msra.mxu0 %v370
      %382 = vmatprep.subr.bf16.mxu0 0
      %383 = vmatpush1.bf16.xpose.msra.mxu0 %v367
      %384 = vmatprep.subr.bf16.mxu0 0
      %385 = vmatpush1.bf16.xpose.msra.mxu0 %v364
      %386 = vmatprep.subr.bf16.mxu0 0
      %387 = vmatpush1.bf16.xpose.msra.mxu0 %v361
      %388 = vmatprep.subr.bf16.mxu0 0
      %389 = vmatpush2.bf16.xpose.msra.mxu0 0
      %390 = vmatprep.subr.bf16.mxu0 0
      %391 = vmatpush2.bf16.xpose.msra.mxu0 0
      %392 = vmatprep.subr.bf16.mxu0 0
      %393 = vmatpush2.bf16.xpose.msra.mxu0 0
      %394 = vmatprep.subr.bf16.mxu0 0
      %395 = vmatpush2.bf16.xpose.msra.mxu0 0
      %396 = vmatprep.subr.bf16.mxu0 0
      %397 = vmatpush2.bf16.xpose.msra.mxu0 0
      %398 = vmatprep.subr.bf16.mxu0 0
      %399 = vmatpush2.bf16.xpose.msra.mxu0 0
      %400 = vmatprep.subr.bf16.mxu0 0
      %401 = vmatpush2.bf16.xpose.msra.mxu0 0
      %402 = vmatprep.subr.bf16.mxu0 0
      %403 = vmatpush2.bf16.xpose.msra.mxu0 0
      %404 = vmatprep.mubr.bf16.mxu0 0
      %405 = vmatmul.mubr.bf16.gmra.mxu0 %v361
      %v406 = vpop.f32.mrf.mxu0
      %v407 = vadd.f32 0.0, %v406
      %v408 = vpop.f32.mrf.mxu0
      %v409 = vpop.f32.mrf.mxu0
      %v410 = vadd.f32 0.0, %v409
      %v411 = vpop.f32.mrf.mxu0
      %412 = vmatprep.mubr.bf16.mxu0 0
      %413 = vmatmul.mubr.bf16.gmra.mxu0 %v364
      %v414 = vpop.f32.mrf.mxu0
      %v415 = vadd.f32 0.0, %v414
      %v416 = vpop.f32.mrf.mxu0
      %v417 = vpop.f32.mrf.mxu0
      %v418 = vadd.f32 0.0, %v417
      %v419 = vpop.f32.mrf.mxu0
      %420 = vmatprep.mubr.bf16.mxu0 0
      %421 = vmatmul.mubr.bf16.gmra.mxu0 %v367
      %v422 = vpop.f32.mrf.mxu0
      %v423 = vadd.f32 0.0, %v422
      %v424 = vpop.f32.mrf.mxu0
      %v425 = vpop.f32.mrf.mxu0
      %v426 = vadd.f32 0.0, %v425
      %v427 = vpop.f32.mrf.mxu0
      %428 = vmatprep.mubr.bf16.mxu0 0
      %429 = vmatmul.mubr.bf16.gmra.mxu0 %v370
      %v430 = vpop.f32.mrf.mxu0
      %v431 = vadd.f32 0.0, %v430
      %v432 = vpop.f32.mrf.mxu0
      %v433 = vpop.f32.mrf.mxu0
      %v434 = vadd.f32 0.0, %v433
      %v435 = vpop.f32.mrf.mxu0
      %436 = vdwg.mxu0
      %v445 = vunpack.c.l.b16 %v194
      %v446 = vunpack.c.l.b16 %v195
      %v447 = vunpack.c.l.b16 %v196
      %v448 = vunpack.c.l.b16 %v197
      %v449 = vunpack.c.l.b16 %v198
      %v450 = vunpack.c.l.b16 %v199
      %v451 = vunpack.c.l.b16 %v200
      %v452 = vunpack.c.l.b16 %v201
      %v453 = vpack.c.b16 %v446, %v445
      %v454 = vpack.c.b16 %v448, %v447
      %v455 = vpack.c.b16 %v450, %v449
      %v456 = vpack.c.b16 %v452, %v451
      %v458 = vsel %vm262, %v453, 0
      %v461 = vsel %vm262, %v454, 0
      %v464 = vsel %vm262, %v455, 0
      %v467 = vsel %vm262, %v456, 0
      %469 = vmatprep.subr.bf16.mxu0 0
      %470 = vmatpush1.bf16.xpose.msra.mxu0 0
      %471 = vmatprep.subr.bf16.mxu0 0
      %472 = vmatpush1.bf16.xpose.msra.mxu0 0
      %473 = vmatprep.subr.bf16.mxu0 0
      %474 = vmatpush1.bf16.xpose.msra.mxu0 0
      %475 = vmatprep.subr.bf16.mxu0 0
      %476 = vmatpush1.bf16.xpose.msra.mxu0 0
      %477 = vmatprep.subr.bf16.mxu0 0
      %478 = vmatpush1.bf16.xpose.msra.mxu0 %v467
      %479 = vmatprep.subr.bf16.mxu0 0
      %480 = vmatpush1.bf16.xpose.msra.mxu0 %v464
      %481 = vmatprep.subr.bf16.mxu0 0
      %482 = vmatpush1.bf16.xpose.msra.mxu0 %v461
      %483 = vmatprep.subr.bf16.mxu0 0
      %484 = vmatpush1.bf16.xpose.msra.mxu0 %v458
      %485 = vmatprep.subr.bf16.mxu0 0
      %486 = vmatpush2.bf16.xpose.msra.mxu0 0
      %487 = vmatprep.subr.bf16.mxu0 0
      %488 = vmatpush2.bf16.xpose.msra.mxu0 0
      %489 = vmatprep.subr.bf16.mxu0 0
      %490 = vmatpush2.bf16.xpose.msra.mxu0 0
      %491 = vmatprep.subr.bf16.mxu0 0
      %492 = vmatpush2.bf16.xpose.msra.mxu0 0
      %493 = vmatprep.subr.bf16.mxu0 0
      %494 = vmatpush2.bf16.xpose.msra.mxu0 0
      %495 = vmatprep.subr.bf16.mxu0 0
      %496 = vmatpush2.bf16.xpose.msra.mxu0 0
      %497 = vmatprep.subr.bf16.mxu0 0
      %498 = vmatpush2.bf16.xpose.msra.mxu0 0
      %499 = vmatprep.subr.bf16.mxu0 0
      %500 = vmatpush2.bf16.xpose.msra.mxu0 0
      %501 = vmatprep.mubr.bf16.mxu0 0
      %502 = vmatmul.mubr.bf16.gmra.mxu0 %v458
      %v503 = vpop.f32.mrf.mxu0
      %v504 = vadd.f32 0.0, %v503
      %v505 = vpop.f32.mrf.mxu0
      %v506 = vpop.f32.mrf.mxu0
      %v507 = vadd.f32 0.0, %v506
      %v508 = vpop.f32.mrf.mxu0
      %509 = vmatprep.mubr.bf16.mxu0 0
      %510 = vmatmul.mubr.bf16.gmra.mxu0 %v461
      %v511 = vpop.f32.mrf.mxu0
      %v512 = vadd.f32 0.0, %v511
      %v513 = vpop.f32.mrf.mxu0
      %v514 = vpop.f32.mrf.mxu0
      %v515 = vadd.f32 0.0, %v514
      %v516 = vpop.f32.mrf.mxu0
      %517 = vmatprep.mubr.bf16.mxu0 0
      %518 = vmatmul.mubr.bf16.gmra.mxu0 %v464
      %v519 = vpop.f32.mrf.mxu0
      %v520 = vadd.f32 0.0, %v519
      %v521 = vpop.f32.mrf.mxu0
      %v522 = vpop.f32.mrf.mxu0
      %v523 = vadd.f32 0.0, %v522
      %v524 = vpop.f32.mrf.mxu0
      %525 = vmatprep.mubr.bf16.mxu0 0
      %526 = vmatmul.mubr.bf16.gmra.mxu0 %v467
      %v527 = vpop.f32.mrf.mxu0
      %v528 = vadd.f32 0.0, %v527
      %v529 = vpop.f32.mrf.mxu0
      %v530 = vpop.f32.mrf.mxu0
      %v531 = vadd.f32 0.0, %v530
      %v532 = vpop.f32.mrf.mxu0
      %533 = vdwg.mxu0
      %v542 = vunpack.c.l.b16 %v202
      %v543 = vunpack.c.l.b16 %v203
      %v544 = vunpack.c.l.b16 %v204
      %v545 = vunpack.c.l.b16 %v205
      %v546 = vunpack.c.l.b16 %v206
      %v547 = vunpack.c.l.b16 %v207
      %v548 = vunpack.c.l.b16 %v208
      %v549 = vunpack.c.l.b16 %v209
      %v550 = vpack.c.b16 %v543, %v542
      %v551 = vpack.c.b16 %v545, %v544
      %v552 = vpack.c.b16 %v547, %v546
      %v553 = vpack.c.b16 %v549, %v548
      %v555 = vsel %vm262, %v550, 0
      %v558 = vsel %vm262, %v551, 0
      %v561 = vsel %vm262, %v552, 0
      %v564 = vsel %vm262, %v553, 0
      %566 = vmatprep.subr.bf16.mxu0 0
      %567 = vmatpush1.bf16.xpose.msra.mxu0 0
      %568 = vmatprep.subr.bf16.mxu0 0
      %569 = vmatpush1.bf16.xpose.msra.mxu0 0
      %570 = vmatprep.subr.bf16.mxu0 0
      %571 = vmatpush1.bf16.xpose.msra.mxu0 0
      %572 = vmatprep.subr.bf16.mxu0 0
      %573 = vmatpush1.bf16.xpose.msra.mxu0 0
      %574 = vmatprep.subr.bf16.mxu0 0
      %575 = vmatpush1.bf16.xpose.msra.mxu0 %v564
      %576 = vmatprep.subr.bf16.mxu0 0
      %577 = vmatpush1.bf16.xpose.msra.mxu0 %v561
      %578 = vmatprep.subr.bf16.mxu0 0
      %579 = vmatpush1.bf16.xpose.msra.mxu0 %v558
      %580 = vmatprep.subr.bf16.mxu0 0
      %581 = vmatpush1.bf16.xpose.msra.mxu0 %v555
      %582 = vmatprep.subr.bf16.mxu0 0
      %583 = vmatpush2.bf16.xpose.msra.mxu0 0
      %584 = vmatprep.subr.bf16.mxu0 0
      %585 = vmatpush2.bf16.xpose.msra.mxu0 0
      %586 = vmatprep.subr.bf16.mxu0 0
      %587 = vmatpush2.bf16.xpose.msra.mxu0 0
      %588 = vmatprep.subr.bf16.mxu0 0
      %589 = vmatpush2.bf16.xpose.msra.mxu0 0
      %590 = vmatprep.subr.bf16.mxu0 0
      %591 = vmatpush2.bf16.xpose.msra.mxu0 0
      %592 = vmatprep.subr.bf16.mxu0 0
      %593 = vmatpush2.bf16.xpose.msra.mxu0 0
      %594 = vmatprep.subr.bf16.mxu0 0
      %595 = vmatpush2.bf16.xpose.msra.mxu0 0
      %596 = vmatprep.subr.bf16.mxu0 0
      %597 = vmatpush2.bf16.xpose.msra.mxu0 0
      %598 = vmatprep.mubr.bf16.mxu0 0
      %599 = vmatmul.mubr.bf16.gmra.mxu0 %v555
      %v600 = vpop.f32.mrf.mxu0
      %v601 = vadd.f32 0.0, %v600
      %v602 = vpop.f32.mrf.mxu0
      %v603 = vpop.f32.mrf.mxu0
      %v604 = vadd.f32 0.0, %v603
      %v605 = vpop.f32.mrf.mxu0
      %606 = vmatprep.mubr.bf16.mxu0 0
      %607 = vmatmul.mubr.bf16.gmra.mxu0 %v558
      %v608 = vpop.f32.mrf.mxu0
      %v609 = vadd.f32 0.0, %v608
      %v610 = vpop.f32.mrf.mxu0
      %v611 = vpop.f32.mrf.mxu0
      %v612 = vadd.f32 0.0, %v611
      %v613 = vpop.f32.mrf.mxu0
      %614 = vmatprep.mubr.bf16.mxu0 0
      %615 = vmatmul.mubr.bf16.gmra.mxu0 %v561
      %v616 = vpop.f32.mrf.mxu0
      %v617 = vadd.f32 0.0, %v616
      %v618 = vpop.f32.mrf.mxu0
      %v619 = vpop.f32.mrf.mxu0
      %v620 = vadd.f32 0.0, %v619
      %v621 = vpop.f32.mrf.mxu0
      %622 = vmatprep.mubr.bf16.mxu0 0
      %623 = vmatmul.mubr.bf16.gmra.mxu0 %v564
      %v624 = vpop.f32.mrf.mxu0
      %v625 = vadd.f32 0.0, %v624
      %v626 = vpop.f32.mrf.mxu0
      %v627 = vpop.f32.mrf.mxu0
      %v628 = vadd.f32 0.0, %v627
      %v629 = vpop.f32.mrf.mxu0
      %630 = vdwg.mxu0
      %vm631 = vcmask 523264
      %v632 = vsel %vm631, %v310, -inf
      %633 = vmax.xlane.f32.xlu0 %v632
      %v634 = vpop.xlane.xlu0 %633
      %v635 = vsel %vm631, %v313, -inf
      %636 = vmax.xlane.f32.xlu0 %v635
      %v637 = vpop.xlane.xlu0 %636
      %v638 = vsel %vm631, %v318, -inf
      %639 = vmax.xlane.f32.xlu0 %v638
      %v640 = vpop.xlane.xlu0 %639
      %v641 = vsel %vm631, %v321, -inf
      %642 = vmax.xlane.f32.xlu0 %v641
      %v643 = vpop.xlane.xlu0 %642
      %v644 = vsel %vm631, %v326, -inf
      %645 = vmax.xlane.f32.xlu0 %v644
      %v646 = vpop.xlane.xlu0 %645
      %v647 = vsel %vm631, %v329, -inf
      %648 = vmax.xlane.f32.xlu0 %v647
      %v649 = vpop.xlane.xlu0 %648
      %v650 = vsel %vm631, %v334, -inf
      %651 = vmax.xlane.f32.xlu0 %v650
      %v652 = vpop.xlane.xlu0 %651
      %v653 = vsel %vm631, %v337, -inf
      %654 = vmax.xlane.f32.xlu0 %v653
      %v655 = vpop.xlane.xlu0 %654
      %v656 = vsel %vm631, %v407, -inf
      %657 = vmax.xlane.f32.xlu0 %v656
      %v658 = vpop.xlane.xlu0 %657
      %v659 = vsel %vm631, %v410, -inf
      %660 = vmax.xlane.f32.xlu0 %v659
      %v661 = vpop.xlane.xlu0 %660
      %v662 = vsel %vm631, %v415, -inf
      %663 = vmax.xlane.f32.xlu0 %v662
      %v664 = vpop.xlane.xlu0 %663
      %v665 = vsel %vm631, %v418, -inf
      %666 = vmax.xlane.f32.xlu0 %v665
      %v667 = vpop.xlane.xlu0 %666
      %v668 = vsel %vm631, %v423, -inf
      %669 = vmax.xlane.f32.xlu0 %v668
      %v670 = vpop.xlane.xlu0 %669
      %v671 = vsel %vm631, %v426, -inf
      %672 = vmax.xlane.f32.xlu0 %v671
      %v673 = vpop.xlane.xlu0 %672
      %v674 = vsel %vm631, %v431, -inf
      %675 = vmax.xlane.f32.xlu0 %v674
      %v676 = vpop.xlane.xlu0 %675
      %v677 = vsel %vm631, %v434, -inf
      %678 = vmax.xlane.f32.xlu0 %v677
      %v679 = vpop.xlane.xlu0 %678
      %v680 = vsel %vm631, %v504, -inf
      %681 = vmax.xlane.f32.xlu0 %v680
      %v682 = vpop.xlane.xlu0 %681
      %v683 = vsel %vm631, %v507, -inf
      %684 = vmax.xlane.f32.xlu0 %v683
      %v685 = vpop.xlane.xlu0 %684
      %v686 = vsel %vm631, %v512, -inf
      %687 = vmax.xlane.f32.xlu0 %v686
      %v688 = vpop.xlane.xlu0 %687
      %v689 = vsel %vm631, %v515, -inf
      %690 = vmax.xlane.f32.xlu0 %v689
      %v691 = vpop.xlane.xlu0 %690
      %v692 = vsel %vm631, %v520, -inf
      %693 = vmax.xlane.f32.xlu0 %v692
      %v694 = vpop.xlane.xlu0 %693
      %v695 = vsel %vm631, %v523, -inf
      %696 = vmax.xlane.f32.xlu0 %v695
      %v697 = vpop.xlane.xlu0 %696
      %v698 = vsel %vm631, %v528, -inf
      %699 = vmax.xlane.f32.xlu0 %v698
      %v700 = vpop.xlane.xlu0 %699
      %v701 = vsel %vm631, %v531, -inf
      %702 = vmax.xlane.f32.xlu0 %v701
      %v703 = vpop.xlane.xlu0 %702
      %v704 = vsel %vm631, %v601, -inf
      %705 = vmax.xlane.f32.xlu0 %v704
      %v706 = vpop.xlane.xlu0 %705
      %v707 = vsel %vm631, %v604, -inf
      %708 = vmax.xlane.f32.xlu0 %v707
      %v709 = vpop.xlane.xlu0 %708
      %v710 = vsel %vm631, %v609, -inf
      %711 = vmax.xlane.f32.xlu0 %v710
      %v712 = vpop.xlane.xlu0 %711
      %v713 = vsel %vm631, %v612, -inf
      %714 = vmax.xlane.f32.xlu0 %v713
      %v715 = vpop.xlane.xlu0 %714
      %v716 = vsel %vm631, %v617, -inf
      %717 = vmax.xlane.f32.xlu0 %v716
      %v718 = vpop.xlane.xlu0 %717
      %v719 = vsel %vm631, %v620, -inf
      %720 = vmax.xlane.f32.xlu0 %v719
      %v721 = vpop.xlane.xlu0 %720
      %v722 = vsel %vm631, %v625, -inf
      %723 = vmax.xlane.f32.xlu0 %v722
      %v724 = vpop.xlane.xlu0 %723
      %v725 = vsel %vm631, %v628, -inf
      %726 = vmax.xlane.f32.xlu0 %v725
      %v727 = vpop.xlane.xlu0 %726
      %v728 = vsub.f32 %v310, %v634
      %v729 = vsub.f32 %v313, %v637
      %v730 = vsub.f32 %v318, %v640
      %v731 = vsub.f32 %v321, %v643
      %v732 = vsub.f32 %v326, %v646
      %v733 = vsub.f32 %v329, %v649
      %v734 = vsub.f32 %v334, %v652
      %v735 = vsub.f32 %v337, %v655
      %v736 = vsub.f32 %v407, %v658
      %v737 = vsub.f32 %v410, %v661
      %v738 = vsub.f32 %v415, %v664
      %v739 = vsub.f32 %v418, %v667
      %v740 = vsub.f32 %v423, %v670
      %v741 = vsub.f32 %v426, %v673
      %v742 = vsub.f32 %v431, %v676
      %v743 = vsub.f32 %v434, %v679
      %v744 = vsub.f32 %v504, %v682
      %v745 = vsub.f32 %v507, %v685
      %v746 = vsub.f32 %v512, %v688
      %v747 = vsub.f32 %v515, %v691
      %v748 = vsub.f32 %v520, %v694
      %v749 = vsub.f32 %v523, %v697
      %v750 = vsub.f32 %v528, %v700
      %v751 = vsub.f32 %v531, %v703
      %v752 = vsub.f32 %v601, %v706
      %v753 = vsub.f32 %v604, %v709
      %v754 = vsub.f32 %v609, %v712
      %v755 = vsub.f32 %v612, %v715
      %v756 = vsub.f32 %v617, %v718
      %v757 = vsub.f32 %v620, %v721
      %v758 = vsub.f32 %v625, %v724
      %v759 = vsub.f32 %v628, %v727
      %v760 = vmul.f32 %v728, 1.442695
      %v761 = vpow.pop %v760
      %v762 = vmul.f32 %v729, 1.442695
      %v763 = vpow.pop %v762
      %v764 = vmul.f32 %v730, 1.442695
      %v765 = vpow.pop %v764
      %v766 = vmul.f32 %v731, 1.442695
      %v767 = vpow.pop %v766
      %v768 = vmul.f32 %v732, 1.442695
      %v769 = vpow.pop %v768
      %v770 = vmul.f32 %v733, 1.442695
      %v771 = vpow.pop %v770
      %v772 = vmul.f32 %v734, 1.442695
      %v773 = vpow.pop %v772
      %v774 = vmul.f32 %v735, 1.442695
      %v775 = vpow.pop %v774
      %v776 = vmul.f32 %v736, 1.442695
      %v777 = vpow.pop %v776
      %v778 = vmul.f32 %v737, 1.442695
      %v779 = vpow.pop %v778
      %v780 = vmul.f32 %v738, 1.442695
      %v781 = vpow.pop %v780
      %v782 = vmul.f32 %v739, 1.442695
      %v783 = vpow.pop %v782
      %v784 = vmul.f32 %v740, 1.442695
      %v785 = vpow.pop %v784
      %v786 = vmul.f32 %v741, 1.442695
      %v787 = vpow.pop %v786
      %v788 = vmul.f32 %v742, 1.442695
      %v789 = vpow.pop %v788
      %v790 = vmul.f32 %v743, 1.442695
      %v791 = vpow.pop %v790
      %v792 = vmul.f32 %v744, 1.442695
      %v793 = vpow.pop %v792
      %v794 = vmul.f32 %v745, 1.442695
      %v795 = vpow.pop %v794
      %v796 = vmul.f32 %v746, 1.442695
      %v797 = vpow.pop %v796
      %v798 = vmul.f32 %v747, 1.442695
      %v799 = vpow.pop %v798
      %v800 = vmul.f32 %v748, 1.442695
      %v801 = vpow.pop %v800
      %v802 = vmul.f32 %v749, 1.442695
      %v803 = vpow.pop %v802
      %v804 = vmul.f32 %v750, 1.442695
      %v805 = vpow.pop %v804
      %v806 = vmul.f32 %v751, 1.442695
      %v807 = vpow.pop %v806
      %v808 = vmul.f32 %v752, 1.442695
      %v809 = vpow.pop %v808
      %v810 = vmul.f32 %v753, 1.442695
      %v811 = vpow.pop %v810
      %v812 = vmul.f32 %v754, 1.442695
      %v813 = vpow.pop %v812
      %v814 = vmul.f32 %v755, 1.442695
      %v815 = vpow.pop %v814
      %v816 = vmul.f32 %v756, 1.442695
      %v817 = vpow.pop %v816
      %v818 = vmul.f32 %v757, 1.442695
      %v819 = vpow.pop %v818
      %v820 = vmul.f32 %v758, 1.442695
      %v821 = vpow.pop %v820
      %v822 = vmul.f32 %v759, 1.442695
      %v823 = vpow.pop %v822
      %v824 = vsel %vm631, %v761, 0.0
      %825 = vadd.xlane.f32.xlu0 %v824
      %v826 = vpop.xlane.xlu0 %825
      %v827 = vsel %vm631, %v763, 0.0
      %828 = vadd.xlane.f32.xlu0 %v827
      %v829 = vpop.xlane.xlu0 %828
      %v830 = vsel %vm631, %v765, 0.0
      %831 = vadd.xlane.f32.xlu0 %v830
      %v832 = vpop.xlane.xlu0 %831
      %v833 = vsel %vm631, %v767, 0.0
      %834 = vadd.xlane.f32.xlu0 %v833
      %v835 = vpop.xlane.xlu0 %834
      %v836 = vsel %vm631, %v769, 0.0
      %837 = vadd.xlane.f32.xlu0 %v836
      %v838 = vpop.xlane.xlu0 %837
      %v839 = vsel %vm631, %v771, 0.0
      %840 = vadd.xlane.f32.xlu0 %v839
      %v841 = vpop.xlane.xlu0 %840
      %v842 = vsel %vm631, %v773, 0.0
      %843 = vadd.xlane.f32.xlu0 %v842
      %v844 = vpop.xlane.xlu0 %843
      %v845 = vsel %vm631, %v775, 0.0
      %846 = vadd.xlane.f32.xlu0 %v845
      %v847 = vpop.xlane.xlu0 %846
      %v848 = vsel %vm631, %v777, 0.0
      %849 = vadd.xlane.f32.xlu0 %v848
      %v850 = vpop.xlane.xlu0 %849
      %v851 = vsel %vm631, %v779, 0.0
      %852 = vadd.xlane.f32.xlu0 %v851
      %v853 = vpop.xlane.xlu0 %852
      %v854 = vsel %vm631, %v781, 0.0
      %855 = vadd.xlane.f32.xlu0 %v854
      %v856 = vpop.xlane.xlu0 %855
      %v857 = vsel %vm631, %v783, 0.0
      %858 = vadd.xlane.f32.xlu0 %v857
      %v859 = vpop.xlane.xlu0 %858
      %v860 = vsel %vm631, %v785, 0.0
      %861 = vadd.xlane.f32.xlu0 %v860
      %v862 = vpop.xlane.xlu0 %861
      %v863 = vsel %vm631, %v787, 0.0
      %864 = vadd.xlane.f32.xlu0 %v863
      %v865 = vpop.xlane.xlu0 %864
      %v866 = vsel %vm631, %v789, 0.0
      %867 = vadd.xlane.f32.xlu0 %v866
      %v868 = vpop.xlane.xlu0 %867
      %v869 = vsel %vm631, %v791, 0.0
      %870 = vadd.xlane.f32.xlu0 %v869
      %v871 = vpop.xlane.xlu0 %870
      %v872 = vsel %vm631, %v793, 0.0
      %873 = vadd.xlane.f32.xlu0 %v872
      %v874 = vpop.xlane.xlu0 %873
      %v875 = vsel %vm631, %v795, 0.0
      %876 = vadd.xlane.f32.xlu0 %v875
      %v877 = vpop.xlane.xlu0 %876
      %v878 = vsel %vm631, %v797, 0.0
      %879 = vadd.xlane.f32.xlu0 %v878
      %v880 = vpop.xlane.xlu0 %879
      %v881 = vsel %vm631, %v799, 0.0
      %882 = vadd.xlane.f32.xlu0 %v881
      %v883 = vpop.xlane.xlu0 %882
      %v884 = vsel %vm631, %v801, 0.0
      %885 = vadd.xlane.f32.xlu0 %v884
      %v886 = vpop.xlane.xlu0 %885
      %v887 = vsel %vm631, %v803, 0.0
      %888 = vadd.xlane.f32.xlu0 %v887
      %v889 = vpop.xlane.xlu0 %888
      %v890 = vsel %vm631, %v805, 0.0
      %891 = vadd.xlane.f32.xlu0 %v890
      %v892 = vpop.xlane.xlu0 %891
      %v893 = vsel %vm631, %v807, 0.0
      %894 = vadd.xlane.f32.xlu0 %v893
      %v895 = vpop.xlane.xlu0 %894
      %v896 = vsel %vm631, %v809, 0.0
      %897 = vadd.xlane.f32.xlu0 %v896
      %v898 = vpop.xlane.xlu0 %897
      %v899 = vsel %vm631, %v811, 0.0
      %900 = vadd.xlane.f32.xlu0 %v899
      %v901 = vpop.xlane.xlu0 %900
      %v902 = vsel %vm631, %v813, 0.0
      %903 = vadd.xlane.f32.xlu0 %v902
      %v904 = vpop.xlane.xlu0 %903
      %v905 = vsel %vm631, %v815, 0.0
      %906 = vadd.xlane.f32.xlu0 %v905
      %v907 = vpop.xlane.xlu0 %906
      %v908 = vsel %vm631, %v817, 0.0
      %909 = vadd.xlane.f32.xlu0 %v908
      %v910 = vpop.xlane.xlu0 %909
      %v911 = vsel %vm631, %v819, 0.0
      %912 = vadd.xlane.f32.xlu0 %v911
      %v913 = vpop.xlane.xlu0 %912
      %v914 = vsel %vm631, %v821, 0.0
      %915 = vadd.xlane.f32.xlu0 %v914
      %v916 = vpop.xlane.xlu0 %915
      %v917 = vsel %vm631, %v823, 0.0
      %918 = vadd.xlane.f32.xlu0 %v917
      %v919 = vpop.xlane.xlu0 %918
      %v920 = vrcp.pop %v826
      %v921 = vrcp.pop %v829
      %v922 = vrcp.pop %v832
      %v923 = vrcp.pop %v835
      %v924 = vrcp.pop %v838
      %v925 = vrcp.pop %v841
      %v926 = vrcp.pop %v844
      %v927 = vrcp.pop %v847
      %v928 = vrcp.pop %v850
      %v929 = vrcp.pop %v853
      %v930 = vrcp.pop %v856
      %v931 = vrcp.pop %v859
      %v932 = vrcp.pop %v862
      %v933 = vrcp.pop %v865
      %v934 = vrcp.pop %v868
      %v935 = vrcp.pop %v871
      %v936 = vrcp.pop %v874
      %v937 = vrcp.pop %v877
      %v938 = vrcp.pop %v880
      %v939 = vrcp.pop %v883
      %v940 = vrcp.pop %v886
      %v941 = vrcp.pop %v889
      %v942 = vrcp.pop %v892
      %v943 = vrcp.pop %v895
      %v944 = vrcp.pop %v898
      %v945 = vrcp.pop %v901
      %v946 = vrcp.pop %v904
      %v947 = vrcp.pop %v907
      %v948 = vrcp.pop %v910
      %v949 = vrcp.pop %v913
      %v950 = vrcp.pop %v916
      %v951 = vrcp.pop %v919
      %v952 = vmul.f32 %v761, %v920
      %v953 = vmul.f32 %v763, %v921
      %v954 = vmul.f32 %v765, %v922
      %v955 = vmul.f32 %v767, %v923
      %v956 = vmul.f32 %v769, %v924
      %v957 = vmul.f32 %v771, %v925
      %v958 = vmul.f32 %v773, %v926
      %v959 = vmul.f32 %v775, %v927
      %v960 = vmul.f32 %v777, %v928
      %v961 = vmul.f32 %v779, %v929
      %v962 = vmul.f32 %v781, %v930
      %v963 = vmul.f32 %v783, %v931
      %v964 = vmul.f32 %v785, %v932
      %v965 = vmul.f32 %v787, %v933
      %v966 = vmul.f32 %v789, %v934
      %v967 = vmul.f32 %v791, %v935
      %v968 = vmul.f32 %v793, %v936
      %v969 = vmul.f32 %v795, %v937
      %v970 = vmul.f32 %v797, %v938
      %v971 = vmul.f32 %v799, %v939
      %v972 = vmul.f32 %v801, %v940
      %v973 = vmul.f32 %v803, %v941
      %v974 = vmul.f32 %v805, %v942
      %v975 = vmul.f32 %v807, %v943
      %v976 = vmul.f32 %v809, %v944
      %v977 = vmul.f32 %v811, %v945
      %v978 = vmul.f32 %v813, %v946
      %v979 = vmul.f32 %v815, %v947
      %v980 = vmul.f32 %v817, %v948
      %v981 = vmul.f32 %v819, %v949
      %v982 = vmul.f32 %v821, %v950
      %v983 = vmul.f32 %v823, %v951
      %v984 = vpack.c.bf16 %v953, %v952
      %v985 = vpack.c.bf16 %v955, %v954
      %v986 = vpack.c.bf16 %v957, %v956
      %v987 = vpack.c.bf16 %v959, %v958
      %v988 = vpack.c.bf16 %v961, %v960
      %v989 = vpack.c.bf16 %v963, %v962
      %v990 = vpack.c.bf16 %v965, %v964
      %v991 = vpack.c.bf16 %v967, %v966
      %v992 = vpack.c.bf16 %v969, %v968
      %v993 = vpack.c.bf16 %v971, %v970
      %v994 = vpack.c.bf16 %v973, %v972
      %v995 = vpack.c.bf16 %v975, %v974
      %v996 = vpack.c.bf16 %v977, %v976
      %v997 = vpack.c.bf16 %v979, %v978
      %v998 = vpack.c.bf16 %v981, %v980
      %v999 = vpack.c.bf16 %v983, %v982
      %v1008 = vunpack.c.l.b16 %v210
      %v1009 = vunpack.c.l.b16 %v211
      %v1010 = vunpack.c.l.b16 %v212
      %v1011 = vunpack.c.l.b16 %v213
      %v1012 = vunpack.c.l.b16 %v214
      %v1013 = vunpack.c.l.b16 %v215
      %v1014 = vunpack.c.l.b16 %v216
      %v1015 = vunpack.c.l.b16 %v217
      %v1016 = vpack.c.b16 %v1009, %v1008
      %v1017 = vpack.c.b16 %v1011, %v1010
      %v1018 = vpack.c.b16 %v1013, %v1012
      %v1019 = vpack.c.b16 %v1015, %v1014
      %v1025 = vsel %vm631, %v984, 0
      %v1028 = vsel %vm631, %v985, 0
      %v1031 = vsel %vm631, %v986, 0
      %v1034 = vsel %vm631, %v987, 0
      %1036 = vmatprep.subr.bf16.mxu0 0
      %1037 = vmatpush1.bf16.msra.mxu0 0
      %1038 = vmatprep.subr.bf16.mxu0 0
      %1039 = vmatpush1.bf16.msra.mxu0 0
      %1040 = vmatprep.subr.bf16.mxu0 0
      %1041 = vmatpush1.bf16.msra.mxu0 0
      %1042 = vmatprep.subr.bf16.mxu0 0
      %1043 = vmatpush1.bf16.msra.mxu0 0
      %1044 = vmatprep.subr.bf16.mxu0 0
      %1045 = vmatpush1.bf16.msra.mxu0 %v1019
      %1046 = vmatprep.subr.bf16.mxu0 0
      %1047 = vmatpush1.bf16.msra.mxu0 %v1018
      %1048 = vmatprep.subr.bf16.mxu0 0
      %1049 = vmatpush1.bf16.msra.mxu0 %v1017
      %1050 = vmatprep.subr.bf16.mxu0 0
      %1051 = vmatpush1.bf16.msra.mxu0 %v1016
      %1052 = vmatprep.subr.bf16.mxu0 0
      %1053 = vmatpush2.bf16.msra.mxu0 0
      %1054 = vmatprep.subr.bf16.mxu0 0
      %1055 = vmatpush2.bf16.msra.mxu0 0
      %1056 = vmatprep.subr.bf16.mxu0 0
      %1057 = vmatpush2.bf16.msra.mxu0 0
      %1058 = vmatprep.subr.bf16.mxu0 0
      %1059 = vmatpush2.bf16.msra.mxu0 0
      %1060 = vmatprep.subr.bf16.mxu0 0
      %1061 = vmatpush2.bf16.msra.mxu0 0
      %1062 = vmatprep.subr.bf16.mxu0 0
      %1063 = vmatpush2.bf16.msra.mxu0 0
      %1064 = vmatprep.subr.bf16.mxu0 0
      %1065 = vmatpush2.bf16.msra.mxu0 0
      %1066 = vmatprep.subr.bf16.mxu0 0
      %1067 = vmatpush2.bf16.msra.mxu0 0
      %1068 = vmatprep.mubr.bf16.mxu0 0
      %1069 = vmatmul.mubr.bf16.gmra.mxu0 %v1025
      %v1070 = vpop.f32.mrf.mxu0
      %v1071 = vadd.f32 0.0, %v1070
      %v1072 = vpop.f32.mrf.mxu0
      %v1073 = vpop.f32.mrf.mxu0
      %v1074 = vadd.f32 0.0, %v1073
      %v1075 = vpop.f32.mrf.mxu0
      %1076 = vmatprep.mubr.bf16.mxu0 0
      %1077 = vmatmul.mubr.bf16.gmra.mxu0 %v1028
      %v1078 = vpop.f32.mrf.mxu0
      %v1079 = vadd.f32 0.0, %v1078
      %v1080 = vpop.f32.mrf.mxu0
      %v1081 = vpop.f32.mrf.mxu0
      %v1082 = vadd.f32 0.0, %v1081
      %v1083 = vpop.f32.mrf.mxu0
      %1084 = vmatprep.mubr.bf16.mxu0 0
      %1085 = vmatmul.mubr.bf16.gmra.mxu0 %v1031
      %v1086 = vpop.f32.mrf.mxu0
      %v1087 = vadd.f32 0.0, %v1086
      %v1088 = vpop.f32.mrf.mxu0
      %v1089 = vpop.f32.mrf.mxu0
      %v1090 = vadd.f32 0.0, %v1089
      %v1091 = vpop.f32.mrf.mxu0
      %1092 = vmatprep.mubr.bf16.mxu0 0
      %1093 = vmatmul.mubr.bf16.gmra.mxu0 %v1034
      %v1094 = vpop.f32.mrf.mxu0
      %v1095 = vadd.f32 0.0, %v1094
      %v1096 = vpop.f32.mrf.mxu0
      %v1097 = vpop.f32.mrf.mxu0
      %v1098 = vadd.f32 0.0, %v1097
      %v1099 = vpop.f32.mrf.mxu0
      %1100 = vdwg.mxu0
      %v1109 = vunpack.c.l.b16 %v218
      %v1110 = vunpack.c.l.b16 %v219
      %v1111 = vunpack.c.l.b16 %v220
      %v1112 = vunpack.c.l.b16 %v221
      %v1113 = vunpack.c.l.b16 %v222
      %v1114 = vunpack.c.l.b16 %v223
      %v1115 = vunpack.c.l.b16 %v224
      %v1116 = vunpack.c.l.b16 %v225
      %v1117 = vpack.c.b16 %v1110, %v1109
      %v1118 = vpack.c.b16 %v1112, %v1111
      %v1119 = vpack.c.b16 %v1114, %v1113
      %v1120 = vpack.c.b16 %v1116, %v1115
      %v1126 = vsel %vm631, %v988, 0
      %v1129 = vsel %vm631, %v989, 0
      %v1132 = vsel %vm631, %v990, 0
      %v1135 = vsel %vm631, %v991, 0
      %1137 = vmatprep.subr.bf16.mxu0 0
      %1138 = vmatpush1.bf16.msra.mxu0 0
      %1139 = vmatprep.subr.bf16.mxu0 0
      %1140 = vmatpush1.bf16.msra.mxu0 0
      %1141 = vmatprep.subr.bf16.mxu0 0
      %1142 = vmatpush1.bf16.msra.mxu0 0
      %1143 = vmatprep.subr.bf16.mxu0 0
      %1144 = vmatpush1.bf16.msra.mxu0 0
      %1145 = vmatprep.subr.bf16.mxu0 0
      %1146 = vmatpush1.bf16.msra.mxu0 %v1120
      %1147 = vmatprep.subr.bf16.mxu0 0
      %1148 = vmatpush1.bf16.msra.mxu0 %v1119
      %1149 = vmatprep.subr.bf16.mxu0 0
      %1150 = vmatpush1.bf16.msra.mxu0 %v1118
      %1151 = vmatprep.subr.bf16.mxu0 0
      %1152 = vmatpush1.bf16.msra.mxu0 %v1117
      %1153 = vmatprep.subr.bf16.mxu0 0
      %1154 = vmatpush2.bf16.msra.mxu0 0
      %1155 = vmatprep.subr.bf16.mxu0 0
      %1156 = vmatpush2.bf16.msra.mxu0 0
      %1157 = vmatprep.subr.bf16.mxu0 0
      %1158 = vmatpush2.bf16.msra.mxu0 0
      %1159 = vmatprep.subr.bf16.mxu0 0
      %1160 = vmatpush2.bf16.msra.mxu0 0
      %1161 = vmatprep.subr.bf16.mxu0 0
      %1162 = vmatpush2.bf16.msra.mxu0 0
      %1163 = vmatprep.subr.bf16.mxu0 0
      %1164 = vmatpush2.bf16.msra.mxu0 0
      %1165 = vmatprep.subr.bf16.mxu0 0
      %1166 = vmatpush2.bf16.msra.mxu0 0
      %1167 = vmatprep.subr.bf16.mxu0 0
      %1168 = vmatpush2.bf16.msra.mxu0 0
      %1169 = vmatprep.mubr.bf16.mxu0 0
      %1170 = vmatmul.mubr.bf16.gmra.mxu0 %v1126
      %v1171 = vpop.f32.mrf.mxu0
      %v1172 = vadd.f32 0.0, %v1171
      %v1173 = vpop.f32.mrf.mxu0
      %v1174 = vpop.f32.mrf.mxu0
      %v1175 = vadd.f32 0.0, %v1174
      %v1176 = vpop.f32.mrf.mxu0
      %1177 = vmatprep.mubr.bf16.mxu0 0
      %1178 = vmatmul.mubr.bf16.gmra.mxu0 %v1129
      %v1179 = vpop.f32.mrf.mxu0
      %v1180 = vadd.f32 0.0, %v1179
      %v1181 = vpop.f32.mrf.mxu0
      %v1182 = vpop.f32.mrf.mxu0
      %v1183 = vadd.f32 0.0, %v1182
      %v1184 = vpop.f32.mrf.mxu0
      %1185 = vmatprep.mubr.bf16.mxu0 0
      %1186 = vmatmul.mubr.bf16.gmra.mxu0 %v1132
      %v1187 = vpop.f32.mrf.mxu0
      %v1188 = vadd.f32 0.0, %v1187
      %v1189 = vpop.f32.mrf.mxu0
      %v1190 = vpop.f32.mrf.mxu0
      %v1191 = vadd.f32 0.0, %v1190
      %v1192 = vpop.f32.mrf.mxu0
      %1193 = vmatprep.mubr.bf16.mxu0 0
      %1194 = vmatmul.mubr.bf16.gmra.mxu0 %v1135
      %v1195 = vpop.f32.mrf.mxu0
      %v1196 = vadd.f32 0.0, %v1195
      %v1197 = vpop.f32.mrf.mxu0
      %v1198 = vpop.f32.mrf.mxu0
      %v1199 = vadd.f32 0.0, %v1198
      %v1200 = vpop.f32.mrf.mxu0
      %1201 = vdwg.mxu0
      %v1210 = vunpack.c.l.b16 %v226
      %v1211 = vunpack.c.l.b16 %v227
      %v1212 = vunpack.c.l.b16 %v228
      %v1213 = vunpack.c.l.b16 %v229
      %v1214 = vunpack.c.l.b16 %v230
      %v1215 = vunpack.c.l.b16 %v231
      %v1216 = vunpack.c.l.b16 %v232
      %v1217 = vunpack.c.l.b16 %v233
      %v1218 = vpack.c.b16 %v1211, %v1210
      %v1219 = vpack.c.b16 %v1213, %v1212
      %v1220 = vpack.c.b16 %v1215, %v1214
      %v1221 = vpack.c.b16 %v1217, %v1216
      %v1227 = vsel %vm631, %v992, 0
      %v1230 = vsel %vm631, %v993, 0
      %v1233 = vsel %vm631, %v994, 0
      %v1236 = vsel %vm631, %v995, 0
      %1238 = vmatprep.subr.bf16.mxu0 0
      %1239 = vmatpush1.bf16.msra.mxu0 0
      %1240 = vmatprep.subr.bf16.mxu0 0
      %1241 = vmatpush1.bf16.msra.mxu0 0
      %1242 = vmatprep.subr.bf16.mxu0 0
      %1243 = vmatpush1.bf16.msra.mxu0 0
      %1244 = vmatprep.subr.bf16.mxu0 0
      %1245 = vmatpush1.bf16.msra.mxu0 0
      %1246 = vmatprep.subr.bf16.mxu0 0
      %1247 = vmatpush1.bf16.msra.mxu0 %v1221
      %1248 = vmatprep.subr.bf16.mxu0 0
      %1249 = vmatpush1.bf16.msra.mxu0 %v1220
      %1250 = vmatprep.subr.bf16.mxu0 0
      %1251 = vmatpush1.bf16.msra.mxu0 %v1219
      %1252 = vmatprep.subr.bf16.mxu0 0
      %1253 = vmatpush1.bf16.msra.mxu0 %v1218
      %1254 = vmatprep.subr.bf16.mxu0 0
      %1255 = vmatpush2.bf16.msra.mxu0 0
      %1256 = vmatprep.subr.bf16.mxu0 0
      %1257 = vmatpush2.bf16.msra.mxu0 0
      %1258 = vmatprep.subr.bf16.mxu0 0
      %1259 = vmatpush2.bf16.msra.mxu0 0
      %1260 = vmatprep.subr.bf16.mxu0 0
      %1261 = vmatpush2.bf16.msra.mxu0 0
      %1262 = vmatprep.subr.bf16.mxu0 0
      %1263 = vmatpush2.bf16.msra.mxu0 0
      %1264 = vmatprep.subr.bf16.mxu0 0
      %1265 = vmatpush2.bf16.msra.mxu0 0
      %1266 = vmatprep.subr.bf16.mxu0 0
      %1267 = vmatpush2.bf16.msra.mxu0 0
      %1268 = vmatprep.subr.bf16.mxu0 0
      %1269 = vmatpush2.bf16.msra.mxu0 0
      %1270 = vmatprep.mubr.bf16.mxu0 0
      %1271 = vmatmul.mubr.bf16.gmra.mxu0 %v1227
      %v1272 = vpop.f32.mrf.mxu0
      %v1273 = vadd.f32 0.0, %v1272
      %v1274 = vpop.f32.mrf.mxu0
      %v1275 = vpop.f32.mrf.mxu0
      %v1276 = vadd.f32 0.0, %v1275
      %v1277 = vpop.f32.mrf.mxu0
      %1278 = vmatprep.mubr.bf16.mxu0 0
      %1279 = vmatmul.mubr.bf16.gmra.mxu0 %v1230
      %v1280 = vpop.f32.mrf.mxu0
      %v1281 = vadd.f32 0.0, %v1280
      %v1282 = vpop.f32.mrf.mxu0
      %v1283 = vpop.f32.mrf.mxu0
      %v1284 = vadd.f32 0.0, %v1283
      %v1285 = vpop.f32.mrf.mxu0
      %1286 = vmatprep.mubr.bf16.mxu0 0
      %1287 = vmatmul.mubr.bf16.gmra.mxu0 %v1233
      %v1288 = vpop.f32.mrf.mxu0
      %v1289 = vadd.f32 0.0, %v1288
      %v1290 = vpop.f32.mrf.mxu0
      %v1291 = vpop.f32.mrf.mxu0
      %v1292 = vadd.f32 0.0, %v1291
      %v1293 = vpop.f32.mrf.mxu0
      %1294 = vmatprep.mubr.bf16.mxu0 0
      %1295 = vmatmul.mubr.bf16.gmra.mxu0 %v1236
      %v1296 = vpop.f32.mrf.mxu0
      %v1297 = vadd.f32 0.0, %v1296
      %v1298 = vpop.f32.mrf.mxu0
      %v1299 = vpop.f32.mrf.mxu0
      %v1300 = vadd.f32 0.0, %v1299
      %v1301 = vpop.f32.mrf.mxu0
      %1302 = vdwg.mxu0
      %v1311 = vunpack.c.l.b16 %v234
      %v1312 = vunpack.c.l.b16 %v235
      %v1313 = vunpack.c.l.b16 %v236
      %v1314 = vunpack.c.l.b16 %v237
      %v1315 = vunpack.c.l.b16 %v238
      %v1316 = vunpack.c.l.b16 %v239
      %v1317 = vunpack.c.l.b16 %v240
      %v1318 = vunpack.c.l.b16 %v241
      %v1319 = vpack.c.b16 %v1312, %v1311
      %v1320 = vpack.c.b16 %v1314, %v1313
      %v1321 = vpack.c.b16 %v1316, %v1315
      %v1322 = vpack.c.b16 %v1318, %v1317
      %v1328 = vsel %vm631, %v996, 0
      %v1331 = vsel %vm631, %v997, 0
      %v1334 = vsel %vm631, %v998, 0
      %v1337 = vsel %vm631, %v999, 0
      %1339 = vmatprep.subr.bf16.mxu0 0
      %1340 = vmatpush1.bf16.msra.mxu0 0
      %1341 = vmatprep.subr.bf16.mxu0 0
      %1342 = vmatpush1.bf16.msra.mxu0 0
      %1343 = vmatprep.subr.bf16.mxu0 0
      %1344 = vmatpush1.bf16.msra.mxu0 0
      %1345 = vmatprep.subr.bf16.mxu0 0
      %1346 = vmatpush1.bf16.msra.mxu0 0
      %1347 = vmatprep.subr.bf16.mxu0 0
      %1348 = vmatpush1.bf16.msra.mxu0 %v1322
      %1349 = vmatprep.subr.bf16.mxu0 0
      %1350 = vmatpush1.bf16.msra.mxu0 %v1321
      %1351 = vmatprep.subr.bf16.mxu0 0
      %1352 = vmatpush1.bf16.msra.mxu0 %v1320
      %1353 = vmatprep.subr.bf16.mxu0 0
      %1354 = vmatpush1.bf16.msra.mxu0 %v1319
      %1355 = vmatprep.subr.bf16.mxu0 0
      %1356 = vmatpush2.bf16.msra.mxu0 0
      %1357 = vmatprep.subr.bf16.mxu0 0
      %1358 = vmatpush2.bf16.msra.mxu0 0
      %1359 = vmatprep.subr.bf16.mxu0 0
      %1360 = vmatpush2.bf16.msra.mxu0 0
      %1361 = vmatprep.subr.bf16.mxu0 0
      %1362 = vmatpush2.bf16.msra.mxu0 0
      %1363 = vmatprep.subr.bf16.mxu0 0
      %1364 = vmatpush2.bf16.msra.mxu0 0
      %1365 = vmatprep.subr.bf16.mxu0 0
      %1366 = vmatpush2.bf16.msra.mxu0 0
      %1367 = vmatprep.subr.bf16.mxu0 0
      %1368 = vmatpush2.bf16.msra.mxu0 0
      %1369 = vmatprep.subr.bf16.mxu0 0
      %1370 = vmatpush2.bf16.msra.mxu0 0
      %1371 = vmatprep.mubr.bf16.mxu0 0
      %1372 = vmatmul.mubr.bf16.gmra.mxu0 %v1328
      %v1373 = vpop.f32.mrf.mxu0
      %v1374 = vadd.f32 0.0, %v1373
      %v1375 = vpop.f32.mrf.mxu0
      %v1376 = vpop.f32.mrf.mxu0
      %v1377 = vadd.f32 0.0, %v1376
      %v1378 = vpop.f32.mrf.mxu0
      %1379 = vmatprep.mubr.bf16.mxu0 0
      %1380 = vmatmul.mubr.bf16.gmra.mxu0 %v1331
      %v1381 = vpop.f32.mrf.mxu0
      %v1382 = vadd.f32 0.0, %v1381
      %v1383 = vpop.f32.mrf.mxu0
      %v1384 = vpop.f32.mrf.mxu0
      %v1385 = vadd.f32 0.0, %v1384
      %v1386 = vpop.f32.mrf.mxu0
      %1387 = vmatprep.mubr.bf16.mxu0 0
      %1388 = vmatmul.mubr.bf16.gmra.mxu0 %v1334
      %v1389 = vpop.f32.mrf.mxu0
      %v1390 = vadd.f32 0.0, %v1389
      %v1391 = vpop.f32.mrf.mxu0
      %v1392 = vpop.f32.mrf.mxu0
      %v1393 = vadd.f32 0.0, %v1392
      %v1394 = vpop.f32.mrf.mxu0
      %1395 = vmatprep.mubr.bf16.mxu0 0
      %1396 = vmatmul.mubr.bf16.gmra.mxu0 %v1337
      %v1397 = vpop.f32.mrf.mxu0
      %v1398 = vadd.f32 0.0, %v1397
      %v1399 = vpop.f32.mrf.mxu0
      %v1400 = vpop.f32.mrf.mxu0
      %v1401 = vadd.f32 0.0, %v1400
      %v1402 = vpop.f32.mrf.mxu0
      %1403 = vdwg.mxu0
      %v1404 = vpack.c.bf16 %v1074, %v1071
      %v1405 = vpack.c.bf16 %v1082, %v1079
      %v1406 = vpack.c.bf16 %v1090, %v1087
      %v1407 = vpack.c.bf16 %v1098, %v1095
      %v1408 = vpack.c.bf16 %v1175, %v1172
      %v1409 = vpack.c.bf16 %v1183, %v1180
      %v1410 = vpack.c.bf16 %v1191, %v1188
      %v1411 = vpack.c.bf16 %v1199, %v1196
      %v1412 = vpack.c.bf16 %v1276, %v1273
      %v1413 = vpack.c.bf16 %v1284, %v1281
      %v1414 = vpack.c.bf16 %v1292, %v1289
      %v1415 = vpack.c.bf16 %v1300, %v1297
      %v1416 = vpack.c.bf16 %v1377, %v1374
      %v1417 = vpack.c.bf16 %v1385, %v1382
      %v1418 = vpack.c.bf16 %v1393, %v1390
      %v1419 = vpack.c.bf16 %v1401, %v1398
      %v1436 = vunpack.c.l.b16 %v1404
      %v1437 = vunpack.c.h.b16 %v1404
      %v1438 = vunpack.c.l.b16 %v1405
      %v1439 = vunpack.c.h.b16 %v1405
      %v1440 = vunpack.c.l.b16 %v1406
      %v1441 = vunpack.c.h.b16 %v1406
      %v1442 = vunpack.c.l.b16 %v1407
      %v1443 = vunpack.c.h.b16 %v1407
      %v1444 = vunpack.c.l.b16 %v1408
      %v1445 = vunpack.c.h.b16 %v1408
      %v1446 = vunpack.c.l.b16 %v1409
      %v1447 = vunpack.c.h.b16 %v1409
      %v1448 = vunpack.c.l.b16 %v1410
      %v1449 = vunpack.c.h.b16 %v1410
      %v1450 = vunpack.c.l.b16 %v1411
      %v1451 = vunpack.c.h.b16 %v1411
      %v1452 = vunpack.c.l.b16 %v1412
      %v1453 = vunpack.c.h.b16 %v1412
      %v1454 = vunpack.c.l.b16 %v1413
      %v1455 = vunpack.c.h.b16 %v1413
      %v1456 = vunpack.c.l.b16 %v1414
      %v1457 = vunpack.c.h.b16 %v1414
      %v1458 = vunpack.c.l.b16 %v1415
      %v1459 = vunpack.c.h.b16 %v1415
      %v1460 = vunpack.c.l.b16 %v1416
      %v1461 = vunpack.c.h.b16 %v1416
      %v1462 = vunpack.c.l.b16 %v1417
      %v1463 = vunpack.c.h.b16 %v1417
      %v1464 = vunpack.c.l.b16 %v1418
      %v1465 = vunpack.c.h.b16 %v1418
      %v1466 = vunpack.c.l.b16 %v1419
      %v1467 = vunpack.c.h.b16 %v1419
      %v1468 = vpack.c.b16 %v1436, %v1436
      %v1469 = vpack.c.b16 %v1437, %v1437
      %v1470 = vpack.c.b16 %v1438, %v1438
      %v1471 = vpack.c.b16 %v1439, %v1439
      %v1472 = vpack.c.b16 %v1440, %v1440
      %v1473 = vpack.c.b16 %v1441, %v1441
      %v1474 = vpack.c.b16 %v1442, %v1442
      %v1475 = vpack.c.b16 %v1443, %v1443
      %v1476 = vpack.c.b16 %v1444, %v1444
      %v1477 = vpack.c.b16 %v1445, %v1445
      %v1478 = vpack.c.b16 %v1446, %v1446
      %v1479 = vpack.c.b16 %v1447, %v1447
      %v1480 = vpack.c.b16 %v1448, %v1448
      %v1481 = vpack.c.b16 %v1449, %v1449
      %v1482 = vpack.c.b16 %v1450, %v1450
      %v1483 = vpack.c.b16 %v1451, %v1451
      %v1484 = vpack.c.b16 %v1452, %v1452
      %v1485 = vpack.c.b16 %v1453, %v1453
      %v1486 = vpack.c.b16 %v1454, %v1454
      %v1487 = vpack.c.b16 %v1455, %v1455
      %v1488 = vpack.c.b16 %v1456, %v1456
      %v1489 = vpack.c.b16 %v1457, %v1457
      %v1490 = vpack.c.b16 %v1458, %v1458
      %v1491 = vpack.c.b16 %v1459, %v1459
      %v1492 = vpack.c.b16 %v1460, %v1460
      %v1493 = vpack.c.b16 %v1461, %v1461
      %v1494 = vpack.c.b16 %v1462, %v1462
      %v1495 = vpack.c.b16 %v1463, %v1463
      %v1496 = vpack.c.b16 %v1464, %v1464
      %v1497 = vpack.c.b16 %v1465, %v1465
      %v1498 = vpack.c.b16 %v1466, %v1466
      %v1499 = vpack.c.b16 %v1467, %v1467
      %vm1532 = vcmask 76800
      %1533 = vst.msk [vmem:[%s175] sm:$0xf] %vm1532, %v1468
      %1534 = vst.msk [vmem:[%s175 + $0x4] sm:$0xf] %vm1532, %v1469
      %1535 = vst.msk [vmem:[%s175 + $0x8] sm:$0xf] %vm1532, %v1470
      %1536 = vst.msk [vmem:[%s175 + $0xc] sm:$0xf] %vm1532, %v1471
      %1537 = vst.msk [vmem:[%s175 + $0x10] sm:$0xf] %vm1532, %v1472
      %1538 = vst.msk [vmem:[%s175 + $0x14] sm:$0xf] %vm1532, %v1473
      %1539 = vst.msk [vmem:[%s175 + $0x18] sm:$0xf] %vm1532, %v1474
      %1540 = vst.msk [vmem:[%s175 + $0x1c] sm:$0xf] %vm1532, %v1475
      %1541 = vst.msk [vmem:[%s175 + $0x20] sm:$0xf] %vm1532, %v1476
      %1542 = vst.msk [vmem:[%s175 + $0x24] sm:$0xf] %vm1532, %v1477
      %1543 = vst.msk [vmem:[%s175 + $0x28] sm:$0xf] %vm1532, %v1478
      %1544 = vst.msk [vmem:[%s175 + $0x2c] sm:$0xf] %vm1532, %v1479
      %1545 = vst.msk [vmem:[%s175 + $0x30] sm:$0xf] %vm1532, %v1480
      %1546 = vst.msk [vmem:[%s175 + $0x34] sm:$0xf] %vm1532, %v1481
      %1547 = vst.msk [vmem:[%s175 + $0x38] sm:$0xf] %vm1532, %v1482
      %1548 = vst.msk [vmem:[%s175 + $0x3c] sm:$0xf] %vm1532, %v1483
      %1549 = vst.msk [vmem:[%s175 + $0x40] sm:$0xf] %vm1532, %v1484
      %1550 = vst.msk [vmem:[%s175 + $0x44] sm:$0xf] %vm1532, %v1485
      %1551 = vst.msk [vmem:[%s175 + $0x48] sm:$0xf] %vm1532, %v1486
      %1552 = vst.msk [vmem:[%s175 + $0x4c] sm:$0xf] %vm1532, %v1487
      %1553 = vst.msk [vmem:[%s175 + $0x50] sm:$0xf] %vm1532, %v1488
      %1554 = vst.msk [vmem:[%s175 + $0x54] sm:$0xf] %vm1532, %v1489
      %1555 = vst.msk [vmem:[%s175 + $0x58] sm:$0xf] %vm1532, %v1490
      %1556 = vst.msk [vmem:[%s175 + $0x5c] sm:$0xf] %vm1532, %v1491
      %1557 = vst.msk [vmem:[%s175 + $0x60] sm:$0xf] %vm1532, %v1492
      %1558 = vst.msk [vmem:[%s175 + $0x64] sm:$0xf] %vm1532, %v1493
      %1559 = vst.msk [vmem:[%s175 + $0x68] sm:$0xf] %vm1532, %v1494
      %1560 = vst.msk [vmem:[%s175 + $0x6c] sm:$0xf] %vm1532, %v1495
      %1561 = vst.msk [vmem:[%s175 + $0x70] sm:$0xf] %vm1532, %v1496
      %1562 = vst.msk [vmem:[%s175 + $0x74] sm:$0xf] %vm1532, %v1497
      %1563 = vst.msk [vmem:[%s175 + $0x78] sm:$0xf] %vm1532, %v1498
      %1564 = vst.msk [vmem:[%s175 + $0x7c] sm:$0xf] %vm1532, %v1499
      %s1565 = smul.u32 4, %s13
      %p1566 = scmp.lt.s32.totalorder %s1565, 7
      %s1567 = scalar_select %p1566, %s1565, 7
      %s1568 = smul.addr %s1567, 8
      %s1569 = smul.addr %s1568, 4
      %s1570 = scalar_lea.vmem %s2, %s1569
      // Predicated region
      $region29: #{_lambda_.21} parent=27 // pred_check
        %p1571 = pneg %p83
      $region30: #{_lambda_.21} parent=27 // pred_check_branch
        %1573 = sbr.rel (%p1571) target = $region32
      $region31: #{_lambda_.21} parent=27 // pred_region
        %s1574 = smul.u32 4, %s13
      $region32: #{_lambda_.21} parent=27 // pred_fallthru
        _
    $region28: #{_lambda_.21} parent=5 // pred_fallthru
      _
    %p1575 = scmp.le.s32.totalorder 2, %s8
    // Predicated region
    $region33: #{_lambda_.21} parent=5 // pred_check
      %p1576 = pneg %p1575
    $region34: #{_lambda_.21} parent=5 // pred_check_branch
      %1578 = sbr.rel (%p1576) target = $region36
    $region35: #{_lambda_.21} parent=5 // pred_region
      %s1579 = ssub.s32 %s8, 2
      // Predicated region
      $region37: #{_lambda_.21} parent=35 // pred_check
        %p1580 = pneg %p89
      $region38: #{_lambda_.21} parent=35 // pred_check_branch
        %1582 = sbr.rel (%p1580) target = $region40
      $region39: #{_lambda_.21} parent=35 // pred_region
        %s1583 = smul.u32 4, %s14
        %p1584 = scmp.lt.s32.totalorder %s1583, 7
        %s1585 = scalar_select %p1584, %s1583, 7
        %s1586 = smul.addr %s1585, 8
        %s1587 = smul.addr %s1586, 4
        %s1588 = scalar_lea.vmem %s2, %s1587
      $region40: #{_lambda_.21} parent=35 // pred_fallthru
        _
    $region36: #{_lambda_.21} parent=5 // pred_fallthru
      _
  $region6: #{_lambda_.21} parent=0 // loop_footer
    %s12 = sadd.s32 1, %s8
  $region7: #{_lambda_.21} parent=0 // loop_footer_branch
    %7 = sbr.rel target = $region3
  $region8: #{_lambda_.21} parent=0 // loop_exit
    _

// kernel: _lambda_.20
$region0: #{_lambda_.20}
  #allocation0 [shape = 'u32[]', space=smem, size = 0x4, offset = 0x4, fixed_abs, tag = 'smem constant byte address 0x4 - core index']
  #allocation1 [shape = 'u32[144,128]{1,0:T(1,128)}', space=vmem, size = 0x12000, scoped, tag = 'internal scratch']
  %s0 = inlined_call_operand.vmem [shape: bf16[32,16,10], index: 0, kind: input, shape index: {}]
  %s1 = inlined_call_operand.vmem [shape: bf16[32,16,10], index: 1, kind: input, shape index: {}]
  %s2 = inlined_call_operand.vmem [shape: bf16[32,16,10], index: 2, kind: output, shape index: {}]
  %s3 = sld [smem:[#allocation0]]
  $region41: #{_lambda_.20} parent=0
    _
  %s5 = ssub.s32 1, %s3
  %s6 = scalar_select 0, %s5, %s3
  loop: start=0, step=1, limit=4
  $region2: #{_lambda_.20} parent=0 // loop_pre_header
    _
  $region3: #{_lambda_.20} parent=0 // loop_header
    %s8 = sphi 0, %s12
    %p9 = scmp.ge.s32.totalorder %s8, 4
    %s18 = sphi 0, %s20
    %s21 = sphi 0, %s18
    %s22 = sphi 0, %s21
    %s38 = sphi 0, %s22
    %s44 = sphi 0, %s46
    %s47 = sphi 0, %s44
    %s48 = sphi 0, %s47
    %s64 = sphi 0, %s48
    %s70 = sphi 0, %s72
    %s73 = sphi 0, %s70
    %s74 = sphi 0, %s73
    %s90 = sphi 0, %s74
  $region4: #{_lambda_.20} parent=0 // loop_header_branch
    %11 = sbr.rel (%p9) target = $region8
  $region5: #{_lambda_.20} parent=0 // loop_body
    %s13 = ssub.s32 %s8, 1
    %s14 = ssub.s32 %s8, 2
    %s15 = sadd.s32 %s8, 1
    %s16 = ssub.s32 %s8, %s15
    %p17 = scmp.eq.s32.totalorder %s16, 0
    %s19 = sadd.s32 %s18, 1
    %s20 = scalar_select %p17, %s18, %s19
    %p23 = pneg %p17
    %p24 = scmp.eq.s32.totalorder %s8, 1
    %p25 = por %p23, %p24
    %p26 = scmp.ne.s32.totalorder %s18, %s21
    %p27 = scmp.eq.s32.totalorder %s8, 0
    %p28 = por %p26, %p27
    %p29 = scmp.ne.s32.totalorder %s18, %s21
    %p30 = scmp.eq.s32.totalorder %s13, 1
    %p31 = por %p29, %p30
    %p32 = scmp.ne.s32.totalorder %s21, %s22
    %p33 = scmp.eq.s32.totalorder %s13, 0
    %p34 = por %p32, %p33
    %p35 = scmp.ne.s32.totalorder %s21, %s22
    %p36 = scmp.eq.s32.totalorder %s14, 1
    %p37 = por %p35, %p36
    %p39 = scmp.ne.s32.totalorder %s22, %s38
    %p40 = scmp.eq.s32.totalorder %s14, 0
    %p41 = por %p39, %p40
    %s42 = ssub.s32 %s8, %s15
    %p43 = scmp.eq.s32.totalorder %s42, 0
    %s45 = sadd.s32 %s44, 1
    %s46 = scalar_select %p43, %s44, %s45
    %p49 = pneg %p43
    %p50 = scmp.eq.s32.totalorder %s8, 1
    %p51 = por %p49, %p50
    %p52 = scmp.ne.s32.totalorder %s44, %s47
    %p53 = scmp.eq.s32.totalorder %s8, 0
    %p54 = por %p52, %p53
    %p55 = scmp.ne.s32.totalorder %s44, %s47
    %p56 = scmp.eq.s32.totalorder %s13, 1
    %p57 = por %p55, %p56
    %p58 = scmp.ne.s32.totalorder %s47, %s48
    %p59 = scmp.eq.s32.totalorder %s13, 0
    %p60 = por %p58, %p59
    %p61 = scmp.ne.s32.totalorder %s47, %s48
    %p62 = scmp.eq.s32.totalorder %s14, 1
    %p63 = por %p61, %p62
    %p65 = scmp.ne.s32.totalorder %s48, %s64
    %p66 = scmp.eq.s32.totalorder %s14, 0
    %p67 = por %p65, %p66
    %s68 = ssub.s32 %s8, %s15
    %p69 = scmp.eq.s32.totalorder %s68, 0
    %s71 = sadd.s32 %s70, 1
    %s72 = scalar_select %p69, %s70, %s71
    %p75 = pneg %p69
    %p76 = scmp.eq.s32.totalorder %s8, 1
    %p77 = por %p75, %p76
    %p78 = scmp.ne.s32.totalorder %s70, %s73
    %p79 = scmp.eq.s32.totalorder %s8, 0
    %p80 = por %p78, %p79
    %p81 = scmp.ne.s32.totalorder %s70, %s73
    %p82 = scmp.eq.s32.totalorder %s13, 1
    %p83 = por %p81, %p82
    %p84 = scmp.ne.s32.totalorder %s73, %s74
    %p85 = scmp.eq.s32.totalorder %s13, 0
    %p86 = por %p84, %p85
    %p87 = scmp.ne.s32.totalorder %s73, %s74
    %p88 = scmp.eq.s32.totalorder %s14, 1
    %p89 = por %p87, %p88
    %p91 = scmp.ne.s32.totalorder %s74, %s90
    %p92 = scmp.eq.s32.totalorder %s14, 0
    %p93 = por %p91, %p92
    %p94 = scmp.le.s32.totalorder 1, %s8
    %p95 = scmp.lt.s32.totalorder %s8, 3
    %p96 = pnand %p94, %p95
    %p97 = pneg %p96
    // Predicated region
    $region9: #{_lambda_.20} parent=5 // pred_check
      _
    $region10: #{_lambda_.20} parent=5 // pred_check_branch
      %99 = sbr.rel (%p96) target = $region12
    $region11: #{_lambda_.20} parent=5 // pred_region
      %s100 = ssub.s32 %s8, 1
    $region12: #{_lambda_.20} parent=5 // pred_fallthru
      _
    %p101 = scmp.lt.s32.totalorder %s8, 2
    // Predicated region
    $region13: #{_lambda_.20} parent=5 // pred_check
      %p102 = pneg %p101
    $region14: #{_lambda_.20} parent=5 // pred_check_branch
      %104 = sbr.rel (%p102) target = $region16
    $region15: #{_lambda_.20} parent=5 // pred_region
      // Predicated region
      $region17: #{_lambda_.20} parent=15 // pred_check
        %p105 = pneg %p28
      $region18: #{_lambda_.20} parent=15 // pred_check_branch
        %107 = sbr.rel (%p105) target = $region20
      $region19: #{_lambda_.20} parent=15 // pred_region
        %s108 = smul.u32 16, %s8
        %p109 = scmp.lt.s32.totalorder %s108, 31
        %s110 = scalar_select %p109, %s108, 31
        %s111 = smul.addr %s110, 2
        %s112 = smul.addr %s111, 4
        %s113 = scalar_lea.vmem %s0, %s112
        %s114 = smul.u32 16, %s8
      $region20: #{_lambda_.20} parent=15 // pred_fallthru
        _
      // Predicated region
      $region21: #{_lambda_.20} parent=15 // pred_check
        %p115 = pneg %p54
      $region22: #{_lambda_.20} parent=15 // pred_check_branch
        %117 = sbr.rel (%p115) target = $region24
      $region23: #{_lambda_.20} parent=15 // pred_region
        %s118 = smul.u32 16, %s8
        %p119 = scmp.lt.s32.totalorder %s118, 31
        %s120 = scalar_select %p119, %s118, 31
        %s121 = smul.addr %s120, 2
        %s122 = smul.addr %s121, 4
        %s123 = scalar_lea.vmem %s1, %s122
        %s124 = smul.u32 16, %s8
      $region24: #{_lambda_.20} parent=15 // pred_fallthru
        _
    $region16: #{_lambda_.20} parent=5 // pred_fallthru
      _
    %p125 = scmp.le.s32.totalorder 1, %s8
    %p126 = scmp.lt.s32.totalorder %s8, 3
    %p127 = pnand %p125, %p126
    %p128 = pneg %p127
    // Predicated region
    $region25: #{_lambda_.20} parent=5 // pred_check
      _
    $region26: #{_lambda_.20} parent=5 // pred_check_branch
      %130 = sbr.rel (%p127) target = $region28
    $region27: #{_lambda_.20} parent=5 // pred_region
      %s131 = ssub.s32 %s8, 1
      %s132 = smul.u32 16, %s13
      %p133 = scmp.lt.s32.totalorder %s132, 31
      %s134 = scalar_select %p133, %s132, 31
      %s135 = smul.addr %s134, 2
      %s136 = smul.addr %s135, 4
      %s137 = scalar_lea.vmem %s0, %s136
      %p138 = pneg %p34
      %p139 = pneg %p31
      %s140 = smul.u32 16, %s13
      %p141 = scmp.lt.s32.totalorder %s140, 31
      %s142 = scalar_select %p141, %s140, 31
      %s143 = smul.addr %s142, 2
      %s144 = smul.addr %s143, 4
      %s145 = scalar_lea.vmem %s1, %s144
      %p146 = pneg %p60
      %p147 = pneg %p57
      %p148 = pneg %p86
      %p149 = pneg %p83
      %s150 = smul.u32 16, %s13
      %p151 = scmp.lt.s32.totalorder %s150, 31
      %s152 = scalar_select %p151, %s150, 31
      %s153 = smul.addr %s152, 2
      %s154 = smul.addr %s153, 4
      %s155 = scalar_lea.vmem %s2, %s154
      %s156 = smul.u32 16, %s13
      %p157 = scmp.lt.s32.totalorder %s156, 31
      %s158 = scalar_select %p157, %s156, 31
      %s159 = smul.addr %s158, 2
      %s160 = smul.addr %s159, 4
      %s161 = scalar_lea.vmem %s0, %s160
      %s162 = smul.u32 16, %s13
      %s163 = smul.u32 16, %s13
      %p164 = scmp.lt.s32.totalorder %s163, 31
      %s165 = scalar_select %p164, %s163, 31
      %s166 = smul.addr %s165, 2
      %s167 = smul.addr %s166, 4
      %s168 = scalar_lea.vmem %s1, %s167
      %s169 = smul.u32 16, %s13
      %s170 = smul.u32 16, %s13
      %p171 = scmp.lt.s32.totalorder %s170, 31
      %s172 = scalar_select %p171, %s170, 31
      %s173 = smul.addr %s172, 2
      %s174 = smul.addr %s173, 4
      %s175 = scalar_lea.vmem %s2, %s174
      %s176 = smul.u32 16, %s13
      %v178 = vld [vmem:[%s161] sm:$0xf]
      %v179 = vld [vmem:[%s161 + $0x4] sm:$0xf]
      %v180 = vld [vmem:[%s161 + $0x8] sm:$0xf]
      %v181 = vld [vmem:[%s161 + $0xc] sm:$0xf]
      %v182 = vld [vmem:[%s161 + $0x10] sm:$0xf]
      %v183 = vld [vmem:[%s161 + $0x14] sm:$0xf]
      %v184 = vld [vmem:[%s161 + $0x18] sm:$0xf]
      %v185 = vld [vmem:[%s161 + $0x1c] sm:$0xf]
      %v186 = vld [vmem:[%s161 + $0x20] sm:$0xf]
      %v187 = vld [vmem:[%s161 + $0x24] sm:$0xf]
      %v188 = vld [vmem:[%s161 + $0x28] sm:$0xf]
      %v189 = vld [vmem:[%s161 + $0x2c] sm:$0xf]
      %v190 = vld [vmem:[%s161 + $0x30] sm:$0xf]
      %v191 = vld [vmem:[%s161 + $0x34] sm:$0xf]
      %v192 = vld [vmem:[%s161 + $0x38] sm:$0xf]
      %v193 = vld [vmem:[%s161 + $0x3c] sm:$0xf]
      %v194 = vld [vmem:[%s161 + $0x40] sm:$0xf]
      %v195 = vld [vmem:[%s161 + $0x44] sm:$0xf]
      %v196 = vld [vmem:[%s161 + $0x48] sm:$0xf]
      %v197 = vld [vmem:[%s161 + $0x4c] sm:$0xf]
      %v198 = vld [vmem:[%s161 + $0x50] sm:$0xf]
      %v199 = vld [vmem:[%s161 + $0x54] sm:$0xf]
      %v200 = vld [vmem:[%s161 + $0x58] sm:$0xf]
      %v201 = vld [vmem:[%s161 + $0x5c] sm:$0xf]
      %v202 = vld [vmem:[%s161 + $0x60] sm:$0xf]
      %v203 = vld [vmem:[%s161 + $0x64] sm:$0xf]
      %v204 = vld [vmem:[%s161 + $0x68] sm:$0xf]
      %v205 = vld [vmem:[%s161 + $0x6c] sm:$0xf]
      %v206 = vld [vmem:[%s161 + $0x70] sm:$0xf]
      %v207 = vld [vmem:[%s161 + $0x74] sm:$0xf]
      %v208 = vld [vmem:[%s161 + $0x78] sm:$0xf]
      %v209 = vld [vmem:[%s161 + $0x7c] sm:$0xf]
      %v210 = vld [vmem:[%s168] sm:$0xf]
      %v211 = vld [vmem:[%s168 + $0x4] sm:$0xf]
      %v212 = vld [vmem:[%s168 + $0x8] sm:$0xf]
      %v213 = vld [vmem:[%s168 + $0xc] sm:$0xf]
      %v214 = vld [vmem:[%s168 + $0x10] sm:$0xf]
      %v215 = vld [vmem:[%s168 + $0x14] sm:$0xf]
      %v216 = vld [vmem:[%s168 + $0x18] sm:$0xf]
      %v217 = vld [vmem:[%s168 + $0x1c] sm:$0xf]
      %v218 = vld [vmem:[%s168 + $0x20] sm:$0xf]
      %v219 = vld [vmem:[%s168 + $0x24] sm:$0xf]
      %v220 = vld [vmem:[%s168 + $0x28] sm:$0xf]
      %v221 = vld [vmem:[%s168 + $0x2c] sm:$0xf]
      %v222 = vld [vmem:[%s168 + $0x30] sm:$0xf]
      %v223 = vld [vmem:[%s168 + $0x34] sm:$0xf]
      %v224 = vld [vmem:[%s168 + $0x38] sm:$0xf]
      %v225 = vld [vmem:[%s168 + $0x3c] sm:$0xf]
      %v226 = vld [vmem:[%s168 + $0x40] sm:$0xf]
      %v227 = vld [vmem:[%s168 + $0x44] sm:$0xf]
      %v228 = vld [vmem:[%s168 + $0x48] sm:$0xf]
      %v229 = vld [vmem:[%s168 + $0x4c] sm:$0xf]
      %v230 = vld [vmem:[%s168 + $0x50] sm:$0xf]
      %v231 = vld [vmem:[%s168 + $0x54] sm:$0xf]
      %v232 = vld [vmem:[%s168 + $0x58] sm:$0xf]
      %v233 = vld [vmem:[%s168 + $0x5c] sm:$0xf]
      %v234 = vld [vmem:[%s168 + $0x60] sm:$0xf]
      %v235 = vld [vmem:[%s168 + $0x64] sm:$0xf]
      %v236 = vld [vmem:[%s168 + $0x68] sm:$0xf]
      %v237 = vld [vmem:[%s168 + $0x6c] sm:$0xf]
      %v238 = vld [vmem:[%s168 + $0x70] sm:$0xf]
      %v239 = vld [vmem:[%s168 + $0x74] sm:$0xf]
      %v240 = vld [vmem:[%s168 + $0x78] sm:$0xf]
      %v241 = vld [vmem:[%s168 + $0x7c] sm:$0xf]
      %v244 = vunpack.c.l.b16 %v178
      %v245 = vunpack.c.l.b16 %v179
      %v246 = vpack.c.b16 %v245, %v244
      %vm247 = vcmask 80896
      %v249 = vsel %vm247, %v246, 0
      %251 = vmatprep.subr.bf16.mxu0 0
      %252 = vmatpush1.bf16.xpose.msra.mxu0 0
      %253 = vmatprep.subr.bf16.mxu0 0
      %254 = vmatpush1.bf16.xpose.msra.mxu0 0
      %255 = vmatprep.subr.bf16.mxu0 0
      %256 = vmatpush1.bf16.xpose.msra.mxu0 0
      %257 = vmatprep.subr.bf16.mxu0 0
      %258 = vmatpush1.bf16.xpose.msra.mxu0 0
      %259 = vmatprep.subr.bf16.mxu0 0
      %260 = vmatpush1.bf16.xpose.msra.mxu0 0
      %261 = vmatprep.subr.bf16.mxu0 0
      %262 = vmatpush1.bf16.xpose.msra.mxu0 0
      %263 = vmatprep.subr.bf16.mxu0 0
      %264 = vmatpush1.bf16.xpose.msra.mxu0 0
      %265 = vmatprep.subr.bf16.mxu0 0
      %266 = vmatpush1.bf16.xpose.msra.mxu0 %v249
      %267 = vmatprep.subr.bf16.mxu0 0
      %268 = vmatpush2.bf16.xpose.msra.mxu0 0
      %269 = vmatprep.subr.bf16.mxu0 0
      %270 = vmatpush2.bf16.xpose.msra.mxu0 0
      %271 = vmatprep.subr.bf16.mxu0 0
      %272 = vmatpush2.bf16.xpose.msra.mxu0 0
      %273 = vmatprep.subr.bf16.mxu0 0
      %274 = vmatpush2.bf16.xpose.msra.mxu0 0
      %275 = vmatprep.subr.bf16.mxu0 0
      %276 = vmatpush2.bf16.xpose.msra.mxu0 0
      %277 = vmatprep.subr.bf16.mxu0 0
      %278 = vmatpush2.bf16.xpose.msra.mxu0 0
      %279 = vmatprep.subr.bf16.mxu0 0
      %280 = vmatpush2.bf16.xpose.msra.mxu0 0
      %281 = vmatprep.subr.bf16.mxu0 0
      %282 = vmatpush2.bf16.xpose.msra.mxu0 0
      %283 = vmatprep.mubr.bf16.mxu0 0
      %284 = vmatmul.mubr.bf16.gmra.mxu0 %v249
      %v285 = vpop.f32.mrf.mxu0
      %v286 = vadd.f32 0.0, %v285
      %v287 = vpop.f32.mrf.mxu0
      %v288 = vpop.f32.mrf.mxu0
      %v289 = vadd.f32 0.0, %v288
      %v290 = vpop.f32.mrf.mxu0
      %291 = vdwg.mxu0
      %v294 = vunpack.c.l.b16 %v180
      %v295 = vunpack.c.l.b16 %v181
      %v296 = vpack.c.b16 %v295, %v294
      %v298 = vsel %vm247, %v296, 0
      %300 = vmatprep.subr.bf16.mxu0 0
      %301 = vmatpush1.bf16.xpose.msra.mxu0 0
      %302 = vmatprep.subr.bf16.mxu0 0
      %303 = vmatpush1.bf16.xpose.msra.mxu0 0
      %304 = vmatprep.subr.bf16.mxu0 0
      %305 = vmatpush1.bf16.xpose.msra.mxu0 0
      %306 = vmatprep.subr.bf16.mxu0 0
      %307 = vmatpush1.bf16.xpose.msra.mxu0 0
      %308 = vmatprep.subr.bf16.mxu0 0
      %309 = vmatpush1.bf16.xpose.msra.mxu0 0
      %310 = vmatprep.subr.bf16.mxu0 0
      %311 = vmatpush1.bf16.xpose.msra.mxu0 0
      %312 = vmatprep.subr.bf16.mxu0 0
      %313 = vmatpush1.bf16.xpose.msra.mxu0 0
      %314 = vmatprep.subr.bf16.mxu0 0
      %315 = vmatpush1.bf16.xpose.msra.mxu0 %v298
      %316 = vmatprep.subr.bf16.mxu0 0
      %317 = vmatpush2.bf16.xpose.msra.mxu0 0
      %318 = vmatprep.subr.bf16.mxu0 0
      %319 = vmatpush2.bf16.xpose.msra.mxu0 0
      %320 = vmatprep.subr.bf16.mxu0 0
      %321 = vmatpush2.bf16.xpose.msra.mxu0 0
      %322 = vmatprep.subr.bf16.mxu0 0
      %323 = vmatpush2.bf16.xpose.msra.mxu0 0
      %324 = vmatprep.subr.bf16.mxu0 0
      %325 = vmatpush2.bf16.xpose.msra.mxu0 0
      %326 = vmatprep.subr.bf16.mxu0 0
      %327 = vmatpush2.bf16.xpose.msra.mxu0 0
      %328 = vmatprep.subr.bf16.mxu0 0
      %329 = vmatpush2.bf16.xpose.msra.mxu0 0
      %330 = vmatprep.subr.bf16.mxu0 0
      %331 = vmatpush2.bf16.xpose.msra.mxu0 0
      %332 = vmatprep.mubr.bf16.mxu0 0
      %333 = vmatmul.mubr.bf16.gmra.mxu0 %v298
      %v334 = vpop.f32.mrf.mxu0
      %v335 = vadd.f32 0.0, %v334
      %v336 = vpop.f32.mrf.mxu0
      %v337 = vpop.f32.mrf.mxu0
      %v338 = vadd.f32 0.0, %v337
      %v339 = vpop.f32.mrf.mxu0
      %340 = vdwg.mxu0
      %v343 = vunpack.c.l.b16 %v182
      %v344 = vunpack.c.l.b16 %v183
      %v345 = vpack.c.b16 %v344, %v343
      %v347 = vsel %vm247, %v345, 0
      %349 = vmatprep.subr.bf16.mxu0 0
      %350 = vmatpush1.bf16.xpose.msra.mxu0 0
      %351 = vmatprep.subr.bf16.mxu0 0
      %352 = vmatpush1.bf16.xpose.msra.mxu0 0
      %353 = vmatprep.subr.bf16.mxu0 0
      %354 = vmatpush1.bf16.xpose.msra.mxu0 0
      %355 = vmatprep.subr.bf16.mxu0 0
      %356 = vmatpush1.bf16.xpose.msra.mxu0 0
      %357 = vmatprep.subr.bf16.mxu0 0
      %358 = vmatpush1.bf16.xpose.msra.mxu0 0
      %359 = vmatprep.subr.bf16.mxu0 0
      %360 = vmatpush1.bf16.xpose.msra.mxu0 0
      %361 = vmatprep.subr.bf16.mxu0 0
      %362 = vmatpush1.bf16.xpose.msra.mxu0 0
      %363 = vmatprep.subr.bf16.mxu0 0
      %364 = vmatpush1.bf16.xpose.msra.mxu0 %v347
      %365 = vmatprep.subr.bf16.mxu0 0
      %366 = vmatpush2.bf16.xpose.msra.mxu0 0
      %367 = vmatprep.subr.bf16.mxu0 0
      %368 = vmatpush2.bf16.xpose.msra.mxu0 0
      %369 = vmatprep.subr.bf16.mxu0 0
      %370 = vmatpush2.bf16.xpose.msra.mxu0 0
      %371 = vmatprep.subr.bf16.mxu0 0
      %372 = vmatpush2.bf16.xpose.msra.mxu0 0
      %373 = vmatprep.subr.bf16.mxu0 0
      %374 = vmatpush2.bf16.xpose.msra.mxu0 0
      %375 = vmatprep.subr.bf16.mxu0 0
      %376 = vmatpush2.bf16.xpose.msra.mxu0 0
      %377 = vmatprep.subr.bf16.mxu0 0
      %378 = vmatpush2.bf16.xpose.msra.mxu0 0
      %379 = vmatprep.subr.bf16.mxu0 0
      %380 = vmatpush2.bf16.xpose.msra.mxu0 0
      %381 = vmatprep.mubr.bf16.mxu0 0
      %382 = vmatmul.mubr.bf16.gmra.mxu0 %v347
      %v383 = vpop.f32.mrf.mxu0
      %v384 = vadd.f32 0.0, %v383
      %v385 = vpop.f32.mrf.mxu0
      %v386 = vpop.f32.mrf.mxu0
      %v387 = vadd.f32 0.0, %v386
      %v388 = vpop.f32.mrf.mxu0
      %389 = vdwg.mxu0
      %v392 = vunpack.c.l.b16 %v184
      %v393 = vunpack.c.l.b16 %v185
      %v394 = vpack.c.b16 %v393, %v392
      %v396 = vsel %vm247, %v394, 0
      %398 = vmatprep.subr.bf16.mxu0 0
      %399 = vmatpush1.bf16.xpose.msra.mxu0 0
      %400 = vmatprep.subr.bf16.mxu0 0
      %401 = vmatpush1.bf16.xpose.msra.mxu0 0
      %402 = vmatprep.subr.bf16.mxu0 0
      %403 = vmatpush1.bf16.xpose.msra.mxu0 0
      %404 = vmatprep.subr.bf16.mxu0 0
      %405 = vmatpush1.bf16.xpose.msra.mxu0 0
      %406 = vmatprep.subr.bf16.mxu0 0
      %407 = vmatpush1.bf16.xpose.msra.mxu0 0
      %408 = vmatprep.subr.bf16.mxu0 0
      %409 = vmatpush1.bf16.xpose.msra.mxu0 0
      %410 = vmatprep.subr.bf16.mxu0 0
      %411 = vmatpush1.bf16.xpose.msra.mxu0 0
      %412 = vmatprep.subr.bf16.mxu0 0
      %413 = vmatpush1.bf16.xpose.msra.mxu0 %v396
      %414 = vmatprep.subr.bf16.mxu0 0
      %415 = vmatpush2.bf16.xpose.msra.mxu0 0
      %416 = vmatprep.subr.bf16.mxu0 0
      %417 = vmatpush2.bf16.xpose.msra.mxu0 0
      %418 = vmatprep.subr.bf16.mxu0 0
      %419 = vmatpush2.bf16.xpose.msra.mxu0 0
      %420 = vmatprep.subr.bf16.mxu0 0
      %421 = vmatpush2.bf16.xpose.msra.mxu0 0
      %422 = vmatprep.subr.bf16.mxu0 0
      %423 = vmatpush2.bf16.xpose.msra.mxu0 0
      %424 = vmatprep.subr.bf16.mxu0 0
      %425 = vmatpush2.bf16.xpose.msra.mxu0 0
      %426 = vmatprep.subr.bf16.mxu0 0
      %427 = vmatpush2.bf16.xpose.msra.mxu0 0
      %428 = vmatprep.subr.bf16.mxu0 0
      %429 = vmatpush2.bf16.xpose.msra.mxu0 0
      %430 = vmatprep.mubr.bf16.mxu0 0
      %431 = vmatmul.mubr.bf16.gmra.mxu0 %v396
      %v432 = vpop.f32.mrf.mxu0
      %v433 = vadd.f32 0.0, %v432
      %v434 = vpop.f32.mrf.mxu0
      %v435 = vpop.f32.mrf.mxu0
      %v436 = vadd.f32 0.0, %v435
      %v437 = vpop.f32.mrf.mxu0
      %438 = vdwg.mxu0
      %v441 = vunpack.c.l.b16 %v186
      %v442 = vunpack.c.l.b16 %v187
      %v443 = vpack.c.b16 %v442, %v441
      %v445 = vsel %vm247, %v443, 0
      %447 = vmatprep.subr.bf16.mxu0 0
      %448 = vmatpush1.bf16.xpose.msra.mxu0 0
      %449 = vmatprep.subr.bf16.mxu0 0
      %450 = vmatpush1.bf16.xpose.msra.mxu0 0
      %451 = vmatprep.subr.bf16.mxu0 0
      %452 = vmatpush1.bf16.xpose.msra.mxu0 0
      %453 = vmatprep.subr.bf16.mxu0 0
      %454 = vmatpush1.bf16.xpose.msra.mxu0 0
      %455 = vmatprep.subr.bf16.mxu0 0
      %456 = vmatpush1.bf16.xpose.msra.mxu0 0
      %457 = vmatprep.subr.bf16.mxu0 0
      %458 = vmatpush1.bf16.xpose.msra.mxu0 0
      %459 = vmatprep.subr.bf16.mxu0 0
      %460 = vmatpush1.bf16.xpose.msra.mxu0 0
      %461 = vmatprep.subr.bf16.mxu0 0
      %462 = vmatpush1.bf16.xpose.msra.mxu0 %v445
      %463 = vmatprep.subr.bf16.mxu0 0
      %464 = vmatpush2.bf16.xpose.msra.mxu0 0
      %465 = vmatprep.subr.bf16.mxu0 0
      %466 = vmatpush2.bf16.xpose.msra.mxu0 0
      %467 = vmatprep.subr.bf16.mxu0 0
      %468 = vmatpush2.bf16.xpose.msra.mxu0 0
      %469 = vmatprep.subr.bf16.mxu0 0
      %470 = vmatpush2.bf16.xpose.msra.mxu0 0
      %471 = vmatprep.subr.bf16.mxu0 0
      %472 = vmatpush2.bf16.xpose.msra.mxu0 0
      %473 = vmatprep.subr.bf16.mxu0 0
      %474 = vmatpush2.bf16.xpose.msra.mxu0 0
      %475 = vmatprep.subr.bf16.mxu0 0
      %476 = vmatpush2.bf16.xpose.msra.mxu0 0
      %477 = vmatprep.subr.bf16.mxu0 0
      %478 = vmatpush2.bf16.xpose.msra.mxu0 0
      %479 = vmatprep.mubr.bf16.mxu0 0
      %480 = vmatmul.mubr.bf16.gmra.mxu0 %v445
      %v481 = vpop.f32.mrf.mxu0
      %v482 = vadd.f32 0.0, %v481
      %v483 = vpop.f32.mrf.mxu0
      %v484 = vpop.f32.mrf.mxu0
      %v485 = vadd.f32 0.0, %v484
      %v486 = vpop.f32.mrf.mxu0
      %487 = vdwg.mxu0
      %v490 = vunpack.c.l.b16 %v188
      %v491 = vunpack.c.l.b16 %v189
      %v492 = vpack.c.b16 %v491, %v490
      %v494 = vsel %vm247, %v492, 0
      %496 = vmatprep.subr.bf16.mxu0 0
      %497 = vmatpush1.bf16.xpose.msra.mxu0 0
      %498 = vmatprep.subr.bf16.mxu0 0
      %499 = vmatpush1.bf16.xpose.msra.mxu0 0
      %500 = vmatprep.subr.bf16.mxu0 0
      %501 = vmatpush1.bf16.xpose.msra.mxu0 0
      %502 = vmatprep.subr.bf16.mxu0 0
      %503 = vmatpush1.bf16.xpose.msra.mxu0 0
      %504 = vmatprep.subr.bf16.mxu0 0
      %505 = vmatpush1.bf16.xpose.msra.mxu0 0
      %506 = vmatprep.subr.bf16.mxu0 0
      %507 = vmatpush1.bf16.xpose.msra.mxu0 0
      %508 = vmatprep.subr.bf16.mxu0 0
      %509 = vmatpush1.bf16.xpose.msra.mxu0 0
      %510 = vmatprep.subr.bf16.mxu0 0
      %511 = vmatpush1.bf16.xpose.msra.mxu0 %v494
      %512 = vmatprep.subr.bf16.mxu0 0
      %513 = vmatpush2.bf16.xpose.msra.mxu0 0
      %514 = vmatprep.subr.bf16.mxu0 0
      %515 = vmatpush2.bf16.xpose.msra.mxu0 0
      %516 = vmatprep.subr.bf16.mxu0 0
      %517 = vmatpush2.bf16.xpose.msra.mxu0 0
      %518 = vmatprep.subr.bf16.mxu0 0
      %519 = vmatpush2.bf16.xpose.msra.mxu0 0
      %520 = vmatprep.subr.bf16.mxu0 0
      %521 = vmatpush2.bf16.xpose.msra.mxu0 0
      %522 = vmatprep.subr.bf16.mxu0 0
      %523 = vmatpush2.bf16.xpose.msra.mxu0 0
      %524 = vmatprep.subr.bf16.mxu0 0
      %525 = vmatpush2.bf16.xpose.msra.mxu0 0
      %526 = vmatprep.subr.bf16.mxu0 0
      %527 = vmatpush2.bf16.xpose.msra.mxu0 0
      %528 = vmatprep.mubr.bf16.mxu0 0
      %529 = vmatmul.mubr.bf16.gmra.mxu0 %v494
      %v530 = vpop.f32.mrf.mxu0
      %v531 = vadd.f32 0.0, %v530
      %v532 = vpop.f32.mrf.mxu0
      %v533 = vpop.f32.mrf.mxu0
      %v534 = vadd.f32 0.0, %v533
      %v535 = vpop.f32.mrf.mxu0
      %536 = vdwg.mxu0
      %v539 = vunpack.c.l.b16 %v190
      %v540 = vunpack.c.l.b16 %v191
      %v541 = vpack.c.b16 %v540, %v539
      %v543 = vsel %vm247, %v541, 0
      %545 = vmatprep.subr.bf16.mxu0 0
      %546 = vmatpush1.bf16.xpose.msra.mxu0 0
      %547 = vmatprep.subr.bf16.mxu0 0
      %548 = vmatpush1.bf16.xpose.msra.mxu0 0
      %549 = vmatprep.subr.bf16.mxu0 0
      %550 = vmatpush1.bf16.xpose.msra.mxu0 0
      %551 = vmatprep.subr.bf16.mxu0 0
      %552 = vmatpush1.bf16.xpose.msra.mxu0 0
      %553 = vmatprep.subr.bf16.mxu0 0
      %554 = vmatpush1.bf16.xpose.msra.mxu0 0
      %555 = vmatprep.subr.bf16.mxu0 0
      %556 = vmatpush1.bf16.xpose.msra.mxu0 0
      %557 = vmatprep.subr.bf16.mxu0 0
      %558 = vmatpush1.bf16.xpose.msra.mxu0 0
      %559 = vmatprep.subr.bf16.mxu0 0
      %560 = vmatpush1.bf16.xpose.msra.mxu0 %v543
      %561 = vmatprep.subr.bf16.mxu0 0
      %562 = vmatpush2.bf16.xpose.msra.mxu0 0
      %563 = vmatprep.subr.bf16.mxu0 0
      %564 = vmatpush2.bf16.xpose.msra.mxu0 0
      %565 = vmatprep.subr.bf16.mxu0 0
      %566 = vmatpush2.bf16.xpose.msra.mxu0 0
      %567 = vmatprep.subr.bf16.mxu0 0
      %568 = vmatpush2.bf16.xpose.msra.mxu0 0
      %569 = vmatprep.subr.bf16.mxu0 0
      %570 = vmatpush2.bf16.xpose.msra.mxu0 0
      %571 = vmatprep.subr.bf16.mxu0 0
      %572 = vmatpush2.bf16.xpose.msra.mxu0 0
      %573 = vmatprep.subr.bf16.mxu0 0
      %574 = vmatpush2.bf16.xpose.msra.mxu0 0
      %575 = vmatprep.subr.bf16.mxu0 0
      %576 = vmatpush2.bf16.xpose.msra.mxu0 0
      %577 = vmatprep.mubr.bf16.mxu0 0
      %578 = vmatmul.mubr.bf16.gmra.mxu0 %v543
      %v579 = vpop.f32.mrf.mxu0
      %v580 = vadd.f32 0.0, %v579
      %v581 = vpop.f32.mrf.mxu0
      %v582 = vpop.f32.mrf.mxu0
      %v583 = vadd.f32 0.0, %v582
      %v584 = vpop.f32.mrf.mxu0
      %585 = vdwg.mxu0
      %v588 = vunpack.c.l.b16 %v192
      %v589 = vunpack.c.l.b16 %v193
      %v590 = vpack.c.b16 %v589, %v588
      %v592 = vsel %vm247, %v590, 0
      %594 = vmatprep.subr.bf16.mxu0 0
      %595 = vmatpush1.bf16.xpose.msra.mxu0 0
      %596 = vmatprep.subr.bf16.mxu0 0
      %597 = vmatpush1.bf16.xpose.msra.mxu0 0
      %598 = vmatprep.subr.bf16.mxu0 0
      %599 = vmatpush1.bf16.xpose.msra.mxu0 0
      %600 = vmatprep.subr.bf16.mxu0 0
      %601 = vmatpush1.bf16.xpose.msra.mxu0 0
      %602 = vmatprep.subr.bf16.mxu0 0
      %603 = vmatpush1.bf16.xpose.msra.mxu0 0
      %604 = vmatprep.subr.bf16.mxu0 0
      %605 = vmatpush1.bf16.xpose.msra.mxu0 0
      %606 = vmatprep.subr.bf16.mxu0 0
      %607 = vmatpush1.bf16.xpose.msra.mxu0 0
      %608 = vmatprep.subr.bf16.mxu0 0
      %609 = vmatpush1.bf16.xpose.msra.mxu0 %v592
      %610 = vmatprep.subr.bf16.mxu0 0
      %611 = vmatpush2.bf16.xpose.msra.mxu0 0
      %612 = vmatprep.subr.bf16.mxu0 0
      %613 = vmatpush2.bf16.xpose.msra.mxu0 0
      %614 = vmatprep.subr.bf16.mxu0 0
      %615 = vmatpush2.bf16.xpose.msra.mxu0 0
      %616 = vmatprep.subr.bf16.mxu0 0
      %617 = vmatpush2.bf16.xpose.msra.mxu0 0
      %618 = vmatprep.subr.bf16.mxu0 0
      %619 = vmatpush2.bf16.xpose.msra.mxu0 0
      %620 = vmatprep.subr.bf16.mxu0 0
      %621 = vmatpush2.bf16.xpose.msra.mxu0 0
      %622 = vmatprep.subr.bf16.mxu0 0
      %623 = vmatpush2.bf16.xpose.msra.mxu0 0
      %624 = vmatprep.subr.bf16.mxu0 0
      %625 = vmatpush2.bf16.xpose.msra.mxu0 0
      %626 = vmatprep.mubr.bf16.mxu0 0
      %627 = vmatmul.mubr.bf16.gmra.mxu0 %v592
      %v628 = vpop.f32.mrf.mxu0
      %v629 = vadd.f32 0.0, %v628
      %v630 = vpop.f32.mrf.mxu0
      %v631 = vpop.f32.mrf.mxu0
      %v632 = vadd.f32 0.0, %v631
      %v633 = vpop.f32.mrf.mxu0
      %634 = vdwg.mxu0
      %v637 = vunpack.c.l.b16 %v194
      %v638 = vunpack.c.l.b16 %v195
      %v639 = vpack.c.b16 %v638, %v637
      %v641 = vsel %vm247, %v639, 0
      %643 = vmatprep.subr.bf16.mxu0 0
      %644 = vmatpush1.bf16.xpose.msra.mxu0 0
      %645 = vmatprep.subr.bf16.mxu0 0
      %646 = vmatpush1.bf16.xpose.msra.mxu0 0
      %647 = vmatprep.subr.bf16.mxu0 0
      %648 = vmatpush1.bf16.xpose.msra.mxu0 0
      %649 = vmatprep.subr.bf16.mxu0 0
      %650 = vmatpush1.bf16.xpose.msra.mxu0 0
      %651 = vmatprep.subr.bf16.mxu0 0
      %652 = vmatpush1.bf16.xpose.msra.mxu0 0
      %653 = vmatprep.subr.bf16.mxu0 0
      %654 = vmatpush1.bf16.xpose.msra.mxu0 0
      %655 = vmatprep.subr.bf16.mxu0 0
      %656 = vmatpush1.bf16.xpose.msra.mxu0 0
      %657 = vmatprep.subr.bf16.mxu0 0
      %658 = vmatpush1.bf16.xpose.msra.mxu0 %v641
      %659 = vmatprep.subr.bf16.mxu0 0
      %660 = vmatpush2.bf16.xpose.msra.mxu0 0
      %661 = vmatprep.subr.bf16.mxu0 0
      %662 = vmatpush2.bf16.xpose.msra.mxu0 0
      %663 = vmatprep.subr.bf16.mxu0 0
      %664 = vmatpush2.bf16.xpose.msra.mxu0 0
      %665 = vmatprep.subr.bf16.mxu0 0
      %666 = vmatpush2.bf16.xpose.msra.mxu0 0
      %667 = vmatprep.subr.bf16.mxu0 0
      %668 = vmatpush2.bf16.xpose.msra.mxu0 0
      %669 = vmatprep.subr.bf16.mxu0 0
      %670 = vmatpush2.bf16.xpose.msra.mxu0 0
      %671 = vmatprep.subr.bf16.mxu0 0
      %672 = vmatpush2.bf16.xpose.msra.mxu0 0
      %673 = vmatprep.subr.bf16.mxu0 0
      %674 = vmatpush2.bf16.xpose.msra.mxu0 0
      %675 = vmatprep.mubr.bf16.mxu0 0
      %676 = vmatmul.mubr.bf16.gmra.mxu0 %v641
      %v677 = vpop.f32.mrf.mxu0
      %v678 = vadd.f32 0.0, %v677
      %v679 = vpop.f32.mrf.mxu0
      %v680 = vpop.f32.mrf.mxu0
      %v681 = vadd.f32 0.0, %v680
      %v682 = vpop.f32.mrf.mxu0
      %683 = vdwg.mxu0
      %v686 = vunpack.c.l.b16 %v196
      %v687 = vunpack.c.l.b16 %v197
      %v688 = vpack.c.b16 %v687, %v686
      %v690 = vsel %vm247, %v688, 0
      %692 = vmatprep.subr.bf16.mxu0 0
      %693 = vmatpush1.bf16.xpose.msra.mxu0 0
      %694 = vmatprep.subr.bf16.mxu0 0
      %695 = vmatpush1.bf16.xpose.msra.mxu0 0
      %696 = vmatprep.subr.bf16.mxu0 0
      %697 = vmatpush1.bf16.xpose.msra.mxu0 0
      %698 = vmatprep.subr.bf16.mxu0 0
      %699 = vmatpush1.bf16.xpose.msra.mxu0 0
      %700 = vmatprep.subr.bf16.mxu0 0
      %701 = vmatpush1.bf16.xpose.msra.mxu0 0
      %702 = vmatprep.subr.bf16.mxu0 0
      %703 = vmatpush1.bf16.xpose.msra.mxu0 0
      %704 = vmatprep.subr.bf16.mxu0 0
      %705 = vmatpush1.bf16.xpose.msra.mxu0 0
      %706 = vmatprep.subr.bf16.mxu0 0
      %707 = vmatpush1.bf16.xpose.msra.mxu0 %v690
      %708 = vmatprep.subr.bf16.mxu0 0
      %709 = vmatpush2.bf16.xpose.msra.mxu0 0
      %710 = vmatprep.subr.bf16.mxu0 0
      %711 = vmatpush2.bf16.xpose.msra.mxu0 0
      %712 = vmatprep.subr.bf16.mxu0 0
      %713 = vmatpush2.bf16.xpose.msra.mxu0 0
      %714 = vmatprep.subr.bf16.mxu0 0
      %715 = vmatpush2.bf16.xpose.msra.mxu0 0
      %716 = vmatprep.subr.bf16.mxu0 0
      %717 = vmatpush2.bf16.xpose.msra.mxu0 0
      %718 = vmatprep.subr.bf16.mxu0 0
      %719 = vmatpush2.bf16.xpose.msra.mxu0 0
      %720 = vmatprep.subr.bf16.mxu0 0
      %721 = vmatpush2.bf16.xpose.msra.mxu0 0
      %722 = vmatprep.subr.bf16.mxu0 0
      %723 = vmatpush2.bf16.xpose.msra.mxu0 0
      %724 = vmatprep.mubr.bf16.mxu0 0
      %725 = vmatmul.mubr.bf16.gmra.mxu0 %v690
      %v726 = vpop.f32.mrf.mxu0
      %v727 = vadd.f32 0.0, %v726
      %v728 = vpop.f32.mrf.mxu0
      %v729 = vpop.f32.mrf.mxu0
      %v730 = vadd.f32 0.0, %v729
      %v731 = vpop.f32.mrf.mxu0
      %732 = vdwg.mxu0
      %v735 = vunpack.c.l.b16 %v198
      %v736 = vunpack.c.l.b16 %v199
      %v737 = vpack.c.b16 %v736, %v735
      %v739 = vsel %vm247, %v737, 0
      %741 = vmatprep.subr.bf16.mxu0 0
      %742 = vmatpush1.bf16.xpose.msra.mxu0 0
      %743 = vmatprep.subr.bf16.mxu0 0
      %744 = vmatpush1.bf16.xpose.msra.mxu0 0
      %745 = vmatprep.subr.bf16.mxu0 0
      %746 = vmatpush1.bf16.xpose.msra.mxu0 0
      %747 = vmatprep.subr.bf16.mxu0 0
      %748 = vmatpush1.bf16.xpose.msra.mxu0 0
      %749 = vmatprep.subr.bf16.mxu0 0
      %750 = vmatpush1.bf16.xpose.msra.mxu0 0
      %751 = vmatprep.subr.bf16.mxu0 0
      %752 = vmatpush1.bf16.xpose.msra.mxu0 0
      %753 = vmatprep.subr.bf16.mxu0 0
      %754 = vmatpush1.bf16.xpose.msra.mxu0 0
      %755 = vmatprep.subr.bf16.mxu0 0
      %756 = vmatpush1.bf16.xpose.msra.mxu0 %v739
      %757 = vmatprep.subr.bf16.mxu0 0
      %758 = vmatpush2.bf16.xpose.msra.mxu0 0
      %759 = vmatprep.subr.bf16.mxu0 0
      %760 = vmatpush2.bf16.xpose.msra.mxu0 0
      %761 = vmatprep.subr.bf16.mxu0 0
      %762 = vmatpush2.bf16.xpose.msra.mxu0 0
      %763 = vmatprep.subr.bf16.mxu0 0
      %764 = vmatpush2.bf16.xpose.msra.mxu0 0
      %765 = vmatprep.subr.bf16.mxu0 0
      %766 = vmatpush2.bf16.xpose.msra.mxu0 0
      %767 = vmatprep.subr.bf16.mxu0 0
      %768 = vmatpush2.bf16.xpose.msra.mxu0 0
      %769 = vmatprep.subr.bf16.mxu0 0
      %770 = vmatpush2.bf16.xpose.msra.mxu0 0
      %771 = vmatprep.subr.bf16.mxu0 0
      %772 = vmatpush2.bf16.xpose.msra.mxu0 0
      %773 = vmatprep.mubr.bf16.mxu0 0
      %774 = vmatmul.mubr.bf16.gmra.mxu0 %v739
      %v775 = vpop.f32.mrf.mxu0
      %v776 = vadd.f32 0.0, %v775
      %v777 = vpop.f32.mrf.mxu0
      %v778 = vpop.f32.mrf.mxu0
      %v779 = vadd.f32 0.0, %v778
      %v780 = vpop.f32.mrf.mxu0
      %781 = vdwg.mxu0
      %v784 = vunpack.c.l.b16 %v200
      %v785 = vunpack.c.l.b16 %v201
      %v786 = vpack.c.b16 %v785, %v784
      %v788 = vsel %vm247, %v786, 0
      %790 = vmatprep.subr.bf16.mxu0 0
      %791 = vmatpush1.bf16.xpose.msra.mxu0 0
      %792 = vmatprep.subr.bf16.mxu0 0
      %793 = vmatpush1.bf16.xpose.msra.mxu0 0
      %794 = vmatprep.subr.bf16.mxu0 0
      %795 = vmatpush1.bf16.xpose.msra.mxu0 0
      %796 = vmatprep.subr.bf16.mxu0 0
      %797 = vmatpush1.bf16.xpose.msra.mxu0 0
      %798 = vmatprep.subr.bf16.mxu0 0
      %799 = vmatpush1.bf16.xpose.msra.mxu0 0
      %800 = vmatprep.subr.bf16.mxu0 0
      %801 = vmatpush1.bf16.xpose.msra.mxu0 0
      %802 = vmatprep.subr.bf16.mxu0 0
      %803 = vmatpush1.bf16.xpose.msra.mxu0 0
      %804 = vmatprep.subr.bf16.mxu0 0
      %805 = vmatpush1.bf16.xpose.msra.mxu0 %v788
      %806 = vmatprep.subr.bf16.mxu0 0
      %807 = vmatpush2.bf16.xpose.msra.mxu0 0
      %808 = vmatprep.subr.bf16.mxu0 0
      %809 = vmatpush2.bf16.xpose.msra.mxu0 0
      %810 = vmatprep.subr.bf16.mxu0 0
      %811 = vmatpush2.bf16.xpose.msra.mxu0 0
      %812 = vmatprep.subr.bf16.mxu0 0
      %813 = vmatpush2.bf16.xpose.msra.mxu0 0
      %814 = vmatprep.subr.bf16.mxu0 0
      %815 = vmatpush2.bf16.xpose.msra.mxu0 0
      %816 = vmatprep.subr.bf16.mxu0 0
      %817 = vmatpush2.bf16.xpose.msra.mxu0 0
      %818 = vmatprep.subr.bf16.mxu0 0
      %819 = vmatpush2.bf16.xpose.msra.mxu0 0
      %820 = vmatprep.subr.bf16.mxu0 0
      %821 = vmatpush2.bf16.xpose.msra.mxu0 0
      %822 = vmatprep.mubr.bf16.mxu0 0
      %823 = vmatmul.mubr.bf16.gmra.mxu0 %v788
      %v824 = vpop.f32.mrf.mxu0
      %v825 = vadd.f32 0.0, %v824
      %v826 = vpop.f32.mrf.mxu0
      %v827 = vpop.f32.mrf.mxu0
      %v828 = vadd.f32 0.0, %v827
      %v829 = vpop.f32.mrf.mxu0
      %830 = vdwg.mxu0
      %v833 = vunpack.c.l.b16 %v202
      %v834 = vunpack.c.l.b16 %v203
      %v835 = vpack.c.b16 %v834, %v833
      %v837 = vsel %vm247, %v835, 0
      %839 = vmatprep.subr.bf16.mxu0 0
      %840 = vmatpush1.bf16.xpose.msra.mxu0 0
      %841 = vmatprep.subr.bf16.mxu0 0
      %842 = vmatpush1.bf16.xpose.msra.mxu0 0
      %843 = vmatprep.subr.bf16.mxu0 0
      %844 = vmatpush1.bf16.xpose.msra.mxu0 0
      %845 = vmatprep.subr.bf16.mxu0 0
      %846 = vmatpush1.bf16.xpose.msra.mxu0 0
      %847 = vmatprep.subr.bf16.mxu0 0
      %848 = vmatpush1.bf16.xpose.msra.mxu0 0
      %849 = vmatprep.subr.bf16.mxu0 0
      %850 = vmatpush1.bf16.xpose.msra.mxu0 0
      %851 = vmatprep.subr.bf16.mxu0 0
      %852 = vmatpush1.bf16.xpose.msra.mxu0 0
      %853 = vmatprep.subr.bf16.mxu0 0
      %854 = vmatpush1.bf16.xpose.msra.mxu0 %v837
      %855 = vmatprep.subr.bf16.mxu0 0
      %856 = vmatpush2.bf16.xpose.msra.mxu0 0
      %857 = vmatprep.subr.bf16.mxu0 0
      %858 = vmatpush2.bf16.xpose.msra.mxu0 0
      %859 = vmatprep.subr.bf16.mxu0 0
      %860 = vmatpush2.bf16.xpose.msra.mxu0 0
      %861 = vmatprep.subr.bf16.mxu0 0
      %862 = vmatpush2.bf16.xpose.msra.mxu0 0
      %863 = vmatprep.subr.bf16.mxu0 0
      %864 = vmatpush2.bf16.xpose.msra.mxu0 0
      %865 = vmatprep.subr.bf16.mxu0 0
      %866 = vmatpush2.bf16.xpose.msra.mxu0 0
      %867 = vmatprep.subr.bf16.mxu0 0
      %868 = vmatpush2.bf16.xpose.msra.mxu0 0
      %869 = vmatprep.subr.bf16.mxu0 0
      %870 = vmatpush2.bf16.xpose.msra.mxu0 0
      %871 = vmatprep.mubr.bf16.mxu0 0
      %872 = vmatmul.mubr.bf16.gmra.mxu0 %v837
      %v873 = vpop.f32.mrf.mxu0
      %v874 = vadd.f32 0.0, %v873
      %v875 = vpop.f32.mrf.mxu0
      %v876 = vpop.f32.mrf.mxu0
      %v877 = vadd.f32 0.0, %v876
      %v878 = vpop.f32.mrf.mxu0
      %879 = vdwg.mxu0
      %v882 = vunpack.c.l.b16 %v204
      %v883 = vunpack.c.l.b16 %v205
      %v884 = vpack.c.b16 %v883, %v882
      %v886 = vsel %vm247, %v884, 0
      %888 = vmatprep.subr.bf16.mxu0 0
      %889 = vmatpush1.bf16.xpose.msra.mxu0 0
      %890 = vmatprep.subr.bf16.mxu0 0
      %891 = vmatpush1.bf16.xpose.msra.mxu0 0
      %892 = vmatprep.subr.bf16.mxu0 0
      %893 = vmatpush1.bf16.xpose.msra.mxu0 0
      %894 = vmatprep.subr.bf16.mxu0 0
      %895 = vmatpush1.bf16.xpose.msra.mxu0 0
      %896 = vmatprep.subr.bf16.mxu0 0
      %897 = vmatpush1.bf16.xpose.msra.mxu0 0
      %898 = vmatprep.subr.bf16.mxu0 0
      %899 = vmatpush1.bf16.xpose.msra.mxu0 0
      %900 = vmatprep.subr.bf16.mxu0 0
      %901 = vmatpush1.bf16.xpose.msra.mxu0 0
      %902 = vmatprep.subr.bf16.mxu0 0
      %903 = vmatpush1.bf16.xpose.msra.mxu0 %v886
      %904 = vmatprep.subr.bf16.mxu0 0
      %905 = vmatpush2.bf16.xpose.msra.mxu0 0
      %906 = vmatprep.subr.bf16.mxu0 0
      %907 = vmatpush2.bf16.xpose.msra.mxu0 0
      %908 = vmatprep.subr.bf16.mxu0 0
      %909 = vmatpush2.bf16.xpose.msra.mxu0 0
      %910 = vmatprep.subr.bf16.mxu0 0
      %911 = vmatpush2.bf16.xpose.msra.mxu0 0
      %912 = vmatprep.subr.bf16.mxu0 0
      %913 = vmatpush2.bf16.xpose.msra.mxu0 0
      %914 = vmatprep.subr.bf16.mxu0 0
      %915 = vmatpush2.bf16.xpose.msra.mxu0 0
      %916 = vmatprep.subr.bf16.mxu0 0
      %917 = vmatpush2.bf16.xpose.msra.mxu0 0
      %918 = vmatprep.subr.bf16.mxu0 0
      %919 = vmatpush2.bf16.xpose.msra.mxu0 0
      %920 = vmatprep.mubr.bf16.mxu0 0
      %921 = vmatmul.mubr.bf16.gmra.mxu0 %v886
      %v922 = vpop.f32.mrf.mxu0
      %v923 = vadd.f32 0.0, %v922
      %v924 = vpop.f32.mrf.mxu0
      %v925 = vpop.f32.mrf.mxu0
      %v926 = vadd.f32 0.0, %v925
      %v927 = vpop.f32.mrf.mxu0
      %928 = vdwg.mxu0
      %v931 = vunpack.c.l.b16 %v206
      %v932 = vunpack.c.l.b16 %v207
      %v933 = vpack.c.b16 %v932, %v931
      %v935 = vsel %vm247, %v933, 0
      %937 = vmatprep.subr.bf16.mxu0 0
      %938 = vmatpush1.bf16.xpose.msra.mxu0 0
      %939 = vmatprep.subr.bf16.mxu0 0
      %940 = vmatpush1.bf16.xpose.msra.mxu0 0
      %941 = vmatprep.subr.bf16.mxu0 0
      %942 = vmatpush1.bf16.xpose.msra.mxu0 0
      %943 = vmatprep.subr.bf16.mxu0 0
      %944 = vmatpush1.bf16.xpose.msra.mxu0 0
      %945 = vmatprep.subr.bf16.mxu0 0
      %946 = vmatpush1.bf16.xpose.msra.mxu0 0
      %947 = vmatprep.subr.bf16.mxu0 0
      %948 = vmatpush1.bf16.xpose.msra.mxu0 0
      %949 = vmatprep.subr.bf16.mxu0 0
      %950 = vmatpush1.bf16.xpose.msra.mxu0 0
      %951 = vmatprep.subr.bf16.mxu0 0
      %952 = vmatpush1.bf16.xpose.msra.mxu0 %v935
      %953 = vmatprep.subr.bf16.mxu0 0
      %954 = vmatpush2.bf16.xpose.msra.mxu0 0
      %955 = vmatprep.subr.bf16.mxu0 0
      %956 = vmatpush2.bf16.xpose.msra.mxu0 0
      %957 = vmatprep.subr.bf16.mxu0 0
      %958 = vmatpush2.bf16.xpose.msra.mxu0 0
      %959 = vmatprep.subr.bf16.mxu0 0
      %960 = vmatpush2.bf16.xpose.msra.mxu0 0
      %961 = vmatprep.subr.bf16.mxu0 0
      %962 = vmatpush2.bf16.xpose.msra.mxu0 0
      %963 = vmatprep.subr.bf16.mxu0 0
      %964 = vmatpush2.bf16.xpose.msra.mxu0 0
      %965 = vmatprep.subr.bf16.mxu0 0
      %966 = vmatpush2.bf16.xpose.msra.mxu0 0
      %967 = vmatprep.subr.bf16.mxu0 0
      %968 = vmatpush2.bf16.xpose.msra.mxu0 0
      %969 = vmatprep.mubr.bf16.mxu0 0
      %970 = vmatmul.mubr.bf16.gmra.mxu0 %v935
      %v971 = vpop.f32.mrf.mxu0
      %v972 = vadd.f32 0.0, %v971
      %v973 = vpop.f32.mrf.mxu0
      %v974 = vpop.f32.mrf.mxu0
      %v975 = vadd.f32 0.0, %v974
      %v976 = vpop.f32.mrf.mxu0
      %977 = vdwg.mxu0
      %v980 = vunpack.c.l.b16 %v208
      %v981 = vunpack.c.l.b16 %v209
      %v982 = vpack.c.b16 %v981, %v980
      %v984 = vsel %vm247, %v982, 0
      %986 = vmatprep.subr.bf16.mxu0 0
      %987 = vmatpush1.bf16.xpose.msra.mxu0 0
      %988 = vmatprep.subr.bf16.mxu0 0
      %989 = vmatpush1.bf16.xpose.msra.mxu0 0
      %990 = vmatprep.subr.bf16.mxu0 0
      %991 = vmatpush1.bf16.xpose.msra.mxu0 0
      %992 = vmatprep.subr.bf16.mxu0 0
      %993 = vmatpush1.bf16.xpose.msra.mxu0 0
      %994 = vmatprep.subr.bf16.mxu0 0
      %995 = vmatpush1.bf16.xpose.msra.mxu0 0
      %996 = vmatprep.subr.bf16.mxu0 0
      %997 = vmatpush1.bf16.xpose.msra.mxu0 0
      %998 = vmatprep.subr.bf16.mxu0 0
      %999 = vmatpush1.bf16.xpose.msra.mxu0 0
      %1000 = vmatprep.subr.bf16.mxu0 0
      %1001 = vmatpush1.bf16.xpose.msra.mxu0 %v984
      %1002 = vmatprep.subr.bf16.mxu0 0
      %1003 = vmatpush2.bf16.xpose.msra.mxu0 0
      %1004 = vmatprep.subr.bf16.mxu0 0
      %1005 = vmatpush2.bf16.xpose.msra.mxu0 0
      %1006 = vmatprep.subr.bf16.mxu0 0
      %1007 = vmatpush2.bf16.xpose.msra.mxu0 0
      %1008 = vmatprep.subr.bf16.mxu0 0
      %1009 = vmatpush2.bf16.xpose.msra.mxu0 0
      %1010 = vmatprep.subr.bf16.mxu0 0
      %1011 = vmatpush2.bf16.xpose.msra.mxu0 0
      %1012 = vmatprep.subr.bf16.mxu0 0
      %1013 = vmatpush2.bf16.xpose.msra.mxu0 0
      %1014 = vmatprep.subr.bf16.mxu0 0
      %1015 = vmatpush2.bf16.xpose.msra.mxu0 0
      %1016 = vmatprep.subr.bf16.mxu0 0
      %1017 = vmatpush2.bf16.xpose.msra.mxu0 0
      %1018 = vmatprep.mubr.bf16.mxu0 0
      %1019 = vmatmul.mubr.bf16.gmra.mxu0 %v984
      %v1020 = vpop.f32.mrf.mxu0
      %v1021 = vadd.f32 0.0, %v1020
      %v1022 = vpop.f32.mrf.mxu0
      %v1023 = vpop.f32.mrf.mxu0
      %v1024 = vadd.f32 0.0, %v1023
      %v1025 = vpop.f32.mrf.mxu0
      %1026 = vdwg.mxu0
      %vm1027 = vcmask 130048
      %v1028 = vsel %vm1027, %v286, -inf
      %1029 = vmax.xlane.f32.xlu0 %v1028
      %v1030 = vpop.xlane.xlu0 %1029
      %v1031 = vsel %vm1027, %v289, -inf
      %1032 = vmax.xlane.f32.xlu0 %v1031
      %v1033 = vpop.xlane.xlu0 %1032
      %v1034 = vsel %vm1027, %v335, -inf
      %1035 = vmax.xlane.f32.xlu0 %v1034
      %v1036 = vpop.xlane.xlu0 %1035
      %v1037 = vsel %vm1027, %v338, -inf
      %1038 = vmax.xlane.f32.xlu0 %v1037
      %v1039 = vpop.xlane.xlu0 %1038
      %v1040 = vsel %vm1027, %v384, -inf
      %1041 = vmax.xlane.f32.xlu0 %v1040
      %v1042 = vpop.xlane.xlu0 %1041
      %v1043 = vsel %vm1027, %v387, -inf
      %1044 = vmax.xlane.f32.xlu0 %v1043
      %v1045 = vpop.xlane.xlu0 %1044
      %v1046 = vsel %vm1027, %v433, -inf
      %1047 = vmax.xlane.f32.xlu0 %v1046
      %v1048 = vpop.xlane.xlu0 %1047
      %v1049 = vsel %vm1027, %v436, -inf
      %1050 = vmax.xlane.f32.xlu0 %v1049
      %v1051 = vpop.xlane.xlu0 %1050
      %v1052 = vsel %vm1027, %v482, -inf
      %1053 = vmax.xlane.f32.xlu0 %v1052
      %v1054 = vpop.xlane.xlu0 %1053
      %v1055 = vsel %vm1027, %v485, -inf
      %1056 = vmax.xlane.f32.xlu0 %v1055
      %v1057 = vpop.xlane.xlu0 %1056
      %v1058 = vsel %vm1027, %v531, -inf
      %1059 = vmax.xlane.f32.xlu0 %v1058
      %v1060 = vpop.xlane.xlu0 %1059
      %v1061 = vsel %vm1027, %v534, -inf
      %1062 = vmax.xlane.f32.xlu0 %v1061
      %v1063 = vpop.xlane.xlu0 %1062
      %v1064 = vsel %vm1027, %v580, -inf
      %1065 = vmax.xlane.f32.xlu0 %v1064
      %v1066 = vpop.xlane.xlu0 %1065
      %v1067 = vsel %vm1027, %v583, -inf
      %1068 = vmax.xlane.f32.xlu0 %v1067
      %v1069 = vpop.xlane.xlu0 %1068
      %v1070 = vsel %vm1027, %v629, -inf
      %1071 = vmax.xlane.f32.xlu0 %v1070
      %v1072 = vpop.xlane.xlu0 %1071
      %v1073 = vsel %vm1027, %v632, -inf
      %1074 = vmax.xlane.f32.xlu0 %v1073
      %v1075 = vpop.xlane.xlu0 %1074
      %v1076 = vsel %vm1027, %v678, -inf
      %1077 = vmax.xlane.f32.xlu0 %v1076
      %v1078 = vpop.xlane.xlu0 %1077
      %v1079 = vsel %vm1027, %v681, -inf
      %1080 = vmax.xlane.f32.xlu0 %v1079
      %v1081 = vpop.xlane.xlu0 %1080
      %v1082 = vsel %vm1027, %v727, -inf
      %1083 = vmax.xlane.f32.xlu0 %v1082
      %v1084 = vpop.xlane.xlu0 %1083
      %v1085 = vsel %vm1027, %v730, -inf
      %1086 = vmax.xlane.f32.xlu0 %v1085
      %v1087 = vpop.xlane.xlu0 %1086
      %v1088 = vsel %vm1027, %v776, -inf
      %1089 = vmax.xlane.f32.xlu0 %v1088
      %v1090 = vpop.xlane.xlu0 %1089
      %v1091 = vsel %vm1027, %v779, -inf
      %1092 = vmax.xlane.f32.xlu0 %v1091
      %v1093 = vpop.xlane.xlu0 %1092
      %v1094 = vsel %vm1027, %v825, -inf
      %1095 = vmax.xlane.f32.xlu0 %v1094
      %v1096 = vpop.xlane.xlu0 %1095
      %v1097 = vsel %vm1027, %v828, -inf
      %1098 = vmax.xlane.f32.xlu0 %v1097
      %v1099 = vpop.xlane.xlu0 %1098
      %v1100 = vsel %vm1027, %v874, -inf
      %1101 = vmax.xlane.f32.xlu0 %v1100
      %v1102 = vpop.xlane.xlu0 %1101
      %v1103 = vsel %vm1027, %v877, -inf
      %1104 = vmax.xlane.f32.xlu0 %v1103
      %v1105 = vpop.xlane.xlu0 %1104
      %v1106 = vsel %vm1027, %v923, -inf
      %1107 = vmax.xlane.f32.xlu0 %v1106
      %v1108 = vpop.xlane.xlu0 %1107
      %v1109 = vsel %vm1027, %v926, -inf
      %1110 = vmax.xlane.f32.xlu0 %v1109
      %v1111 = vpop.xlane.xlu0 %1110
      %v1112 = vsel %vm1027, %v972, -inf
      %1113 = vmax.xlane.f32.xlu0 %v1112
      %v1114 = vpop.xlane.xlu0 %1113
      %v1115 = vsel %vm1027, %v975, -inf
      %1116 = vmax.xlane.f32.xlu0 %v1115
      %v1117 = vpop.xlane.xlu0 %1116
      %v1118 = vsel %vm1027, %v1021, -inf
      %1119 = vmax.xlane.f32.xlu0 %v1118
      %v1120 = vpop.xlane.xlu0 %1119
      %v1121 = vsel %vm1027, %v1024, -inf
      %1122 = vmax.xlane.f32.xlu0 %v1121
      %v1123 = vpop.xlane.xlu0 %1122
      %v1124 = vsub.f32 %v286, %v1030
      %v1125 = vsub.f32 %v289, %v1033
      %v1126 = vsub.f32 %v335, %v1036
      %v1127 = vsub.f32 %v338, %v1039
      %v1128 = vsub.f32 %v384, %v1042
      %v1129 = vsub.f32 %v387, %v1045
      %v1130 = vsub.f32 %v433, %v1048
      %v1131 = vsub.f32 %v436, %v1051
      %v1132 = vsub.f32 %v482, %v1054
      %v1133 = vsub.f32 %v485, %v1057
      %v1134 = vsub.f32 %v531, %v1060
      %v1135 = vsub.f32 %v534, %v1063
      %v1136 = vsub.f32 %v580, %v1066
      %v1137 = vsub.f32 %v583, %v1069
      %v1138 = vsub.f32 %v629, %v1072
      %v1139 = vsub.f32 %v632, %v1075
      %v1140 = vsub.f32 %v678, %v1078
      %v1141 = vsub.f32 %v681, %v1081
      %v1142 = vsub.f32 %v727, %v1084
      %v1143 = vsub.f32 %v730, %v1087
      %v1144 = vsub.f32 %v776, %v1090
      %v1145 = vsub.f32 %v779, %v1093
      %v1146 = vsub.f32 %v825, %v1096
      %v1147 = vsub.f32 %v828, %v1099
      %v1148 = vsub.f32 %v874, %v1102
      %v1149 = vsub.f32 %v877, %v1105
      %v1150 = vsub.f32 %v923, %v1108
      %v1151 = vsub.f32 %v926, %v1111
      %v1152 = vsub.f32 %v972, %v1114
      %v1153 = vsub.f32 %v975, %v1117
      %v1154 = vsub.f32 %v1021, %v1120
      %v1155 = vsub.f32 %v1024, %v1123
      %v1156 = vmul.f32 %v1124, 1.442695
      %v1157 = vpow.pop %v1156
      %v1158 = vmul.f32 %v1125, 1.442695
      %v1159 = vpow.pop %v1158
      %v1160 = vmul.f32 %v1126, 1.442695
      %v1161 = vpow.pop %v1160
      %v1162 = vmul.f32 %v1127, 1.442695
      %v1163 = vpow.pop %v1162
      %v1164 = vmul.f32 %v1128, 1.442695
      %v1165 = vpow.pop %v1164
      %v1166 = vmul.f32 %v1129, 1.442695
      %v1167 = vpow.pop %v1166
      %v1168 = vmul.f32 %v1130, 1.442695
      %v1169 = vpow.pop %v1168
      %v1170 = vmul.f32 %v1131, 1.442695
      %v1171 = vpow.pop %v1170
      %v1172 = vmul.f32 %v1132, 1.442695
      %v1173 = vpow.pop %v1172
      %v1174 = vmul.f32 %v1133, 1.442695
      %v1175 = vpow.pop %v1174
      %v1176 = vmul.f32 %v1134, 1.442695
      %v1177 = vpow.pop %v1176
      %v1178 = vmul.f32 %v1135, 1.442695
      %v1179 = vpow.pop %v1178
      %v1180 = vmul.f32 %v1136, 1.442695
      %v1181 = vpow.pop %v1180
      %v1182 = vmul.f32 %v1137, 1.442695
      %v1183 = vpow.pop %v1182
      %v1184 = vmul.f32 %v1138, 1.442695
      %v1185 = vpow.pop %v1184
      %v1186 = vmul.f32 %v1139, 1.442695
      %v1187 = vpow.pop %v1186
      %v1188 = vmul.f32 %v1140, 1.442695
      %v1189 = vpow.pop %v1188
      %v1190 = vmul.f32 %v1141, 1.442695
      %v1191 = vpow.pop %v1190
      %v1192 = vmul.f32 %v1142, 1.442695
      %v1193 = vpow.pop %v1192
      %v1194 = vmul.f32 %v1143, 1.442695
      %v1195 = vpow.pop %v1194
      %v1196 = vmul.f32 %v1144, 1.442695
      %v1197 = vpow.pop %v1196
      %v1198 = vmul.f32 %v1145, 1.442695
      %v1199 = vpow.pop %v1198
      %v1200 = vmul.f32 %v1146, 1.442695
      %v1201 = vpow.pop %v1200
      %v1202 = vmul.f32 %v1147, 1.442695
      %v1203 = vpow.pop %v1202
      %v1204 = vmul.f32 %v1148, 1.442695
      %v1205 = vpow.pop %v1204
      %v1206 = vmul.f32 %v1149, 1.442695
      %v1207 = vpow.pop %v1206
      %v1208 = vmul.f32 %v1150, 1.442695
      %v1209 = vpow.pop %v1208
      %v1210 = vmul.f32 %v1151, 1.442695
      %v1211 = vpow.pop %v1210
      %v1212 = vmul.f32 %v1152, 1.442695
      %v1213 = vpow.pop %v1212
      %v1214 = vmul.f32 %v1153, 1.442695
      %v1215 = vpow.pop %v1214
      %v1216 = vmul.f32 %v1154, 1.442695
      %v1217 = vpow.pop %v1216
      %v1218 = vmul.f32 %v1155, 1.442695
      %v1219 = vpow.pop %v1218
      %v1220 = vsel %vm1027, %v1157, 0.0
      %1221 = vadd.xlane.f32.xlu0 %v1220
      %v1222 = vpop.xlane.xlu0 %1221
      %v1223 = vsel %vm1027, %v1159, 0.0
      %1224 = vadd.xlane.f32.xlu0 %v1223
      %v1225 = vpop.xlane.xlu0 %1224
      %v1226 = vsel %vm1027, %v1161, 0.0
      %1227 = vadd.xlane.f32.xlu0 %v1226
      %v1228 = vpop.xlane.xlu0 %1227
      %v1229 = vsel %vm1027, %v1163, 0.0
      %1230 = vadd.xlane.f32.xlu0 %v1229
      %v1231 = vpop.xlane.xlu0 %1230
      %v1232 = vsel %vm1027, %v1165, 0.0
      %1233 = vadd.xlane.f32.xlu0 %v1232
      %v1234 = vpop.xlane.xlu0 %1233
      %v1235 = vsel %vm1027, %v1167, 0.0
      %1236 = vadd.xlane.f32.xlu0 %v1235
      %v1237 = vpop.xlane.xlu0 %1236
      %v1238 = vsel %vm1027, %v1169, 0.0
      %1239 = vadd.xlane.f32.xlu0 %v1238
      %v1240 = vpop.xlane.xlu0 %1239
      %v1241 = vsel %vm1027, %v1171, 0.0
      %1242 = vadd.xlane.f32.xlu0 %v1241
      %v1243 = vpop.xlane.xlu0 %1242
      %v1244 = vsel %vm1027, %v1173, 0.0
      %1245 = vadd.xlane.f32.xlu0 %v1244
      %v1246 = vpop.xlane.xlu0 %1245
      %v1247 = vsel %vm1027, %v1175, 0.0
      %1248 = vadd.xlane.f32.xlu0 %v1247
      %v1249 = vpop.xlane.xlu0 %1248
      %v1250 = vsel %vm1027, %v1177, 0.0
      %1251 = vadd.xlane.f32.xlu0 %v1250
      %v1252 = vpop.xlane.xlu0 %1251
      %v1253 = vsel %vm1027, %v1179, 0.0
      %1254 = vadd.xlane.f32.xlu0 %v1253
      %v1255 = vpop.xlane.xlu0 %1254
      %v1256 = vsel %vm1027, %v1181, 0.0
      %1257 = vadd.xlane.f32.xlu0 %v1256
      %v1258 = vpop.xlane.xlu0 %1257
      %v1259 = vsel %vm1027, %v1183, 0.0
      %1260 = vadd.xlane.f32.xlu0 %v1259
      %v1261 = vpop.xlane.xlu0 %1260
      %v1262 = vsel %vm1027, %v1185, 0.0
      %1263 = vadd.xlane.f32.xlu0 %v1262
      %v1264 = vpop.xlane.xlu0 %1263
      %v1265 = vsel %vm1027, %v1187, 0.0
      %1266 = vadd.xlane.f32.xlu0 %v1265
      %v1267 = vpop.xlane.xlu0 %1266
      %v1268 = vsel %vm1027, %v1189, 0.0
      %1269 = vadd.xlane.f32.xlu0 %v1268
      %v1270 = vpop.xlane.xlu0 %1269
      %v1271 = vsel %vm1027, %v1191, 0.0
      %1272 = vadd.xlane.f32.xlu0 %v1271
      %v1273 = vpop.xlane.xlu0 %1272
      %v1274 = vsel %vm1027, %v1193, 0.0
      %1275 = vadd.xlane.f32.xlu0 %v1274
      %v1276 = vpop.xlane.xlu0 %1275
      %v1277 = vsel %vm1027, %v1195, 0.0
      %1278 = vadd.xlane.f32.xlu0 %v1277
      %v1279 = vpop.xlane.xlu0 %1278
      %v1280 = vsel %vm1027, %v1197, 0.0
      %1281 = vadd.xlane.f32.xlu0 %v1280
      %v1282 = vpop.xlane.xlu0 %1281
      %v1283 = vsel %vm1027, %v1199, 0.0
      %1284 = vadd.xlane.f32.xlu0 %v1283
      %v1285 = vpop.xlane.xlu0 %1284
      %v1286 = vsel %vm1027, %v1201, 0.0
      %1287 = vadd.xlane.f32.xlu0 %v1286
      %v1288 = vpop.xlane.xlu0 %1287
      %v1289 = vsel %vm1027, %v1203, 0.0
      %1290 = vadd.xlane.f32.xlu0 %v1289
      %v1291 = vpop.xlane.xlu0 %1290
      %v1292 = vsel %vm1027, %v1205, 0.0
      %1293 = vadd.xlane.f32.xlu0 %v1292
      %v1294 = vpop.xlane.xlu0 %1293
      %v1295 = vsel %vm1027, %v1207, 0.0
      %1296 = vadd.xlane.f32.xlu0 %v1295
      %v1297 = vpop.xlane.xlu0 %1296
      %v1298 = vsel %vm1027, %v1209, 0.0
      %1299 = vadd.xlane.f32.xlu0 %v1298
      %v1300 = vpop.xlane.xlu0 %1299
      %v1301 = vsel %vm1027, %v1211, 0.0
      %1302 = vadd.xlane.f32.xlu0 %v1301
      %v1303 = vpop.xlane.xlu0 %1302
      %v1304 = vsel %vm1027, %v1213, 0.0
      %1305 = vadd.xlane.f32.xlu0 %v1304
      %v1306 = vpop.xlane.xlu0 %1305
      %v1307 = vsel %vm1027, %v1215, 0.0
      %1308 = vadd.xlane.f32.xlu0 %v1307
      %v1309 = vpop.xlane.xlu0 %1308
      %v1310 = vsel %vm1027, %v1217, 0.0
      %1311 = vadd.xlane.f32.xlu0 %v1310
      %v1312 = vpop.xlane.xlu0 %1311
      %v1313 = vsel %vm1027, %v1219, 0.0
      %1314 = vadd.xlane.f32.xlu0 %v1313
      %v1315 = vpop.xlane.xlu0 %1314
      %v1316 = vrcp.pop %v1222
      %v1317 = vrcp.pop %v1225
      %v1318 = vrcp.pop %v1228
      %v1319 = vrcp.pop %v1231
      %v1320 = vrcp.pop %v1234
      %v1321 = vrcp.pop %v1237
      %v1322 = vrcp.pop %v1240
      %v1323 = vrcp.pop %v1243
      %v1324 = vrcp.pop %v1246
      %v1325 = vrcp.pop %v1249
      %v1326 = vrcp.pop %v1252
      %v1327 = vrcp.pop %v1255
      %v1328 = vrcp.pop %v1258
      %v1329 = vrcp.pop %v1261
      %v1330 = vrcp.pop %v1264
      %v1331 = vrcp.pop %v1267
      %v1332 = vrcp.pop %v1270
      %v1333 = vrcp.pop %v1273
      %v1334 = vrcp.pop %v1276
      %v1335 = vrcp.pop %v1279
      %v1336 = vrcp.pop %v1282
      %v1337 = vrcp.pop %v1285
      %v1338 = vrcp.pop %v1288
      %v1339 = vrcp.pop %v1291
      %v1340 = vrcp.pop %v1294
      %v1341 = vrcp.pop %v1297
      %v1342 = vrcp.pop %v1300
      %v1343 = vrcp.pop %v1303
      %v1344 = vrcp.pop %v1306
      %v1345 = vrcp.pop %v1309
      %v1346 = vrcp.pop %v1312
      %v1347 = vrcp.pop %v1315
      %v1348 = vmul.f32 %v1157, %v1316
      %v1349 = vmul.f32 %v1159, %v1317
      %v1350 = vmul.f32 %v1161, %v1318
      %v1351 = vmul.f32 %v1163, %v1319
      %v1352 = vmul.f32 %v1165, %v1320
      %v1353 = vmul.f32 %v1167, %v1321
      %v1354 = vmul.f32 %v1169, %v1322
      %v1355 = vmul.f32 %v1171, %v1323
      %v1356 = vmul.f32 %v1173, %v1324
      %v1357 = vmul.f32 %v1175, %v1325
      %v1358 = vmul.f32 %v1177, %v1326
      %v1359 = vmul.f32 %v1179, %v1327
      %v1360 = vmul.f32 %v1181, %v1328
      %v1361 = vmul.f32 %v1183, %v1329
      %v1362 = vmul.f32 %v1185, %v1330
      %v1363 = vmul.f32 %v1187, %v1331
      %v1364 = vmul.f32 %v1189, %v1332
      %v1365 = vmul.f32 %v1191, %v1333
      %v1366 = vmul.f32 %v1193, %v1334
      %v1367 = vmul.f32 %v1195, %v1335
      %v1368 = vmul.f32 %v1197, %v1336
      %v1369 = vmul.f32 %v1199, %v1337
      %v1370 = vmul.f32 %v1201, %v1338
      %v1371 = vmul.f32 %v1203, %v1339
      %v1372 = vmul.f32 %v1205, %v1340
      %v1373 = vmul.f32 %v1207, %v1341
      %v1374 = vmul.f32 %v1209, %v1342
      %v1375 = vmul.f32 %v1211, %v1343
      %v1376 = vmul.f32 %v1213, %v1344
      %v1377 = vmul.f32 %v1215, %v1345
      %v1378 = vmul.f32 %v1217, %v1346
      %v1379 = vmul.f32 %v1219, %v1347
      %v1380 = vpack.c.bf16 %v1349, %v1348
      %v1381 = vpack.c.bf16 %v1351, %v1350
      %v1382 = vpack.c.bf16 %v1353, %v1352
      %v1383 = vpack.c.bf16 %v1355, %v1354
      %v1384 = vpack.c.bf16 %v1357, %v1356
      %v1385 = vpack.c.bf16 %v1359, %v1358
      %v1386 = vpack.c.bf16 %v1361, %v1360
      %v1387 = vpack.c.bf16 %v1363, %v1362
      %v1388 = vpack.c.bf16 %v1365, %v1364
      %v1389 = vpack.c.bf16 %v1367, %v1366
      %v1390 = vpack.c.bf16 %v1369, %v1368
      %v1391 = vpack.c.bf16 %v1371, %v1370
      %v1392 = vpack.c.bf16 %v1373, %v1372
      %v1393 = vpack.c.bf16 %v1375, %v1374
      %v1394 = vpack.c.bf16 %v1377, %v1376
      %v1395 = vpack.c.bf16 %v1379, %v1378
      %v1398 = vunpack.c.l.b16 %v210
      %v1399 = vunpack.c.l.b16 %v211
      %v1400 = vpack.c.b16 %v1399, %v1398
      %v1403 = vsel %vm1027, %v1380, 0
      %1405 = vmatprep.subr.bf16.mxu0 0
      %1406 = vmatpush1.bf16.msra.mxu0 0
      %1407 = vmatprep.subr.bf16.mxu0 0
      %1408 = vmatpush1.bf16.msra.mxu0 0
      %1409 = vmatprep.subr.bf16.mxu0 0
      %1410 = vmatpush1.bf16.msra.mxu0 0
      %1411 = vmatprep.subr.bf16.mxu0 0
      %1412 = vmatpush1.bf16.msra.mxu0 0
      %1413 = vmatprep.subr.bf16.mxu0 0
      %1414 = vmatpush1.bf16.msra.mxu0 0
      %1415 = vmatprep.subr.bf16.mxu0 0
      %1416 = vmatpush1.bf16.msra.mxu0 0
      %1417 = vmatprep.subr.bf16.mxu0 0
      %1418 = vmatpush1.bf16.msra.mxu0 0
      %1419 = vmatprep.subr.bf16.mxu0 0
      %1420 = vmatpush1.bf16.msra.mxu0 %v1400
      %1421 = vmatprep.subr.bf16.mxu0 0
      %1422 = vmatpush2.bf16.msra.mxu0 0
      %1423 = vmatprep.subr.bf16.mxu0 0
      %1424 = vmatpush2.bf16.msra.mxu0 0
      %1425 = vmatprep.subr.bf16.mxu0 0
      %1426 = vmatpush2.bf16.msra.mxu0 0
      %1427 = vmatprep.subr.bf16.mxu0 0
      %1428 = vmatpush2.bf16.msra.mxu0 0
      %1429 = vmatprep.subr.bf16.mxu0 0
      %1430 = vmatpush2.bf16.msra.mxu0 0
      %1431 = vmatprep.subr.bf16.mxu0 0
      %1432 = vmatpush2.bf16.msra.mxu0 0
      %1433 = vmatprep.subr.bf16.mxu0 0
      %1434 = vmatpush2.bf16.msra.mxu0 0
      %1435 = vmatprep.subr.bf16.mxu0 0
      %1436 = vmatpush2.bf16.msra.mxu0 0
      %1437 = vmatprep.mubr.bf16.mxu0 0
      %1438 = vmatmul.mubr.bf16.gmra.mxu0 %v1403
      %v1439 = vpop.f32.mrf.mxu0
      %v1440 = vadd.f32 0.0, %v1439
      %v1441 = vpop.f32.mrf.mxu0
      %v1442 = vpop.f32.mrf.mxu0
      %v1443 = vadd.f32 0.0, %v1442
      %v1444 = vpop.f32.mrf.mxu0
      %1445 = vdwg.mxu0
      %v1448 = vunpack.c.l.b16 %v212
      %v1449 = vunpack.c.l.b16 %v213
      %v1450 = vpack.c.b16 %v1449, %v1448
      %v1453 = vsel %vm1027, %v1381, 0
      %1455 = vmatprep.subr.bf16.mxu0 0
      %1456 = vmatpush1.bf16.msra.mxu0 0
      %1457 = vmatprep.subr.bf16.mxu0 0
      %1458 = vmatpush1.bf16.msra.mxu0 0
      %1459 = vmatprep.subr.bf16.mxu0 0
      %1460 = vmatpush1.bf16.msra.mxu0 0
      %1461 = vmatprep.subr.bf16.mxu0 0
      %1462 = vmatpush1.bf16.msra.mxu0 0
      %1463 = vmatprep.subr.bf16.mxu0 0
      %1464 = vmatpush1.bf16.msra.mxu0 0
      %1465 = vmatprep.subr.bf16.mxu0 0
      %1466 = vmatpush1.bf16.msra.mxu0 0
      %1467 = vmatprep.subr.bf16.mxu0 0
      %1468 = vmatpush1.bf16.msra.mxu0 0
      %1469 = vmatprep.subr.bf16.mxu0 0
      %1470 = vmatpush1.bf16.msra.mxu0 %v1450
      %1471 = vmatprep.subr.bf16.mxu0 0
      %1472 = vmatpush2.bf16.msra.mxu0 0
      %1473 = vmatprep.subr.bf16.mxu0 0
      %1474 = vmatpush2.bf16.msra.mxu0 0
      %1475 = vmatprep.subr.bf16.mxu0 0
      %1476 = vmatpush2.bf16.msra.mxu0 0
      %1477 = vmatprep.subr.bf16.mxu0 0
      %1478 = vmatpush2.bf16.msra.mxu0 0
      %1479 = vmatprep.subr.bf16.mxu0 0
      %1480 = vmatpush2.bf16.msra.mxu0 0
      %1481 = vmatprep.subr.bf16.mxu0 0
      %1482 = vmatpush2.bf16.msra.mxu0 0
      %1483 = vmatprep.subr.bf16.mxu0 0
      %1484 = vmatpush2.bf16.msra.mxu0 0
      %1485 = vmatprep.subr.bf16.mxu0 0
      %1486 = vmatpush2.bf16.msra.mxu0 0
      %1487 = vmatprep.mubr.bf16.mxu0 0
      %1488 = vmatmul.mubr.bf16.gmra.mxu0 %v1453
      %v1489 = vpop.f32.mrf.mxu0
      %v1490 = vadd.f32 0.0, %v1489
      %v1491 = vpop.f32.mrf.mxu0
      %v1492 = vpop.f32.mrf.mxu0
      %v1493 = vadd.f32 0.0, %v1492
      %v1494 = vpop.f32.mrf.mxu0
      %1495 = vdwg.mxu0
      %v1498 = vunpack.c.l.b16 %v214
      %v1499 = vunpack.c.l.b16 %v215
      %v1500 = vpack.c.b16 %v1499, %v1498
      %v1503 = vsel %vm1027, %v1382, 0
      %1505 = vmatprep.subr.bf16.mxu0 0
      %1506 = vmatpush1.bf16.msra.mxu0 0
      %1507 = vmatprep.subr.bf16.mxu0 0
      %1508 = vmatpush1.bf16.msra.mxu0 0
      %1509 = vmatprep.subr.bf16.mxu0 0
      %1510 = vmatpush1.bf16.msra.mxu0 0
      %1511 = vmatprep.subr.bf16.mxu0 0
      %1512 = vmatpush1.bf16.msra.mxu0 0
      %1513 = vmatprep.subr.bf16.mxu0 0
      %1514 = vmatpush1.bf16.msra.mxu0 0
      %1515 = vmatprep.subr.bf16.mxu0 0
      %1516 = vmatpush1.bf16.msra.mxu0 0
      %1517 = vmatprep.subr.bf16.mxu0 0
      %1518 = vmatpush1.bf16.msra.mxu0 0
      %1519 = vmatprep.subr.bf16.mxu0 0
      %1520 = vmatpush1.bf16.msra.mxu0 %v1500
      %1521 = vmatprep.subr.bf16.mxu0 0
      %1522 = vmatpush2.bf16.msra.mxu0 0
      %1523 = vmatprep.subr.bf16.mxu0 0
      %1524 = vmatpush2.bf16.msra.mxu0 0
      %1525 = vmatprep.subr.bf16.mxu0 0
      %1526 = vmatpush2.bf16.msra.mxu0 0
      %1527 = vmatprep.subr.bf16.mxu0 0
      %1528 = vmatpush2.bf16.msra.mxu0 0
      %1529 = vmatprep.subr.bf16.mxu0 0
      %1530 = vmatpush2.bf16.msra.mxu0 0
      %1531 = vmatprep.subr.bf16.mxu0 0
      %1532 = vmatpush2.bf16.msra.mxu0 0
      %1533 = vmatprep.subr.bf16.mxu0 0
      %1534 = vmatpush2.bf16.msra.mxu0 0
      %1535 = vmatprep.subr.bf16.mxu0 0
      %1536 = vmatpush2.bf16.msra.mxu0 0
      %1537 = vmatprep.mubr.bf16.mxu0 0
      %1538 = vmatmul.mubr.bf16.gmra.mxu0 %v1503
      %v1539 = vpop.f32.mrf.mxu0
      %v1540 = vadd.f32 0.0, %v1539
      %v1541 = vpop.f32.mrf.mxu0
      %v1542 = vpop.f32.mrf.mxu0
      %v1543 = vadd.f32 0.0, %v1542
      %v1544 = vpop.f32.mrf.mxu0
      %1545 = vdwg.mxu0
      %v1548 = vunpack.c.l.b16 %v216
      %v1549 = vunpack.c.l.b16 %v217
      %v1550 = vpack.c.b16 %v1549, %v1548
      %v1553 = vsel %vm1027, %v1383, 0
      %1555 = vmatprep.subr.bf16.mxu0 0
      %1556 = vmatpush1.bf16.msra.mxu0 0
      %1557 = vmatprep.subr.bf16.mxu0 0
      %1558 = vmatpush1.bf16.msra.mxu0 0
      %1559 = vmatprep.subr.bf16.mxu0 0
      %1560 = vmatpush1.bf16.msra.mxu0 0
      %1561 = vmatprep.subr.bf16.mxu0 0
      %1562 = vmatpush1.bf16.msra.mxu0 0
      %1563 = vmatprep.subr.bf16.mxu0 0
      %1564 = vmatpush1.bf16.msra.mxu0 0
      %1565 = vmatprep.subr.bf16.mxu0 0
      %1566 = vmatpush1.bf16.msra.mxu0 0
      %1567 = vmatprep.subr.bf16.mxu0 0
      %1568 = vmatpush1.bf16.msra.mxu0 0
      %1569 = vmatprep.subr.bf16.mxu0 0
      %1570 = vmatpush1.bf16.msra.mxu0 %v1550
      %1571 = vmatprep.subr.bf16.mxu0 0
      %1572 = vmatpush2.bf16.msra.mxu0 0
      %1573 = vmatprep.subr.bf16.mxu0 0
      %1574 = vmatpush2.bf16.msra.mxu0 0
      %1575 = vmatprep.subr.bf16.mxu0 0
      %1576 = vmatpush2.bf16.msra.mxu0 0
      %1577 = vmatprep.subr.bf16.mxu0 0
      %1578 = vmatpush2.bf16.msra.mxu0 0
      %1579 = vmatprep.subr.bf16.mxu0 0
      %1580 = vmatpush2.bf16.msra.mxu0 0
      %1581 = vmatprep.subr.bf16.mxu0 0
      %1582 = vmatpush2.bf16.msra.mxu0 0
      %1583 = vmatprep.subr.bf16.mxu0 0
      %1584 = vmatpush2.bf16.msra.mxu0 0
      %1585 = vmatprep.subr.bf16.mxu0 0
      %1586 = vmatpush2.bf16.msra.mxu0 0
      %1587 = vmatprep.mubr.bf16.mxu0 0
      %1588 = vmatmul.mubr.bf16.gmra.mxu0 %v1553
      %v1589 = vpop.f32.mrf.mxu0
      %v1590 = vadd.f32 0.0, %v1589
      %v1591 = vpop.f32.mrf.mxu0
      %v1592 = vpop.f32.mrf.mxu0
      %v1593 = vadd.f32 0.0, %v1592
      %v1594 = vpop.f32.mrf.mxu0
      %1595 = vdwg.mxu0
      %v1598 = vunpack.c.l.b16 %v218
      %v1599 = vunpack.c.l.b16 %v219
      %v1600 = vpack.c.b16 %v1599, %v1598
      %v1603 = vsel %vm1027, %v1384, 0
      %1605 = vmatprep.subr.bf16.mxu0 0
      %1606 = vmatpush1.bf16.msra.mxu0 0
      %1607 = vmatprep.subr.bf16.mxu0 0
      %1608 = vmatpush1.bf16.msra.mxu0 0
      %1609 = vmatprep.subr.bf16.mxu0 0
      %1610 = vmatpush1.bf16.msra.mxu0 0
      %1611 = vmatprep.subr.bf16.mxu0 0
      %1612 = vmatpush1.bf16.msra.mxu0 0
      %1613 = vmatprep.subr.bf16.mxu0 0
      %1614 = vmatpush1.bf16.msra.mxu0 0
      %1615 = vmatprep.subr.bf16.mxu0 0
      %1616 = vmatpush1.bf16.msra.mxu0 0
      %1617 = vmatprep.subr.bf16.mxu0 0
      %1618 = vmatpush1.bf16.msra.mxu0 0
      %1619 = vmatprep.subr.bf16.mxu0 0
      %1620 = vmatpush1.bf16.msra.mxu0 %v1600
      %1621 = vmatprep.subr.bf16.mxu0 0
      %1622 = vmatpush2.bf16.msra.mxu0 0
      %1623 = vmatprep.subr.bf16.mxu0 0
      %1624 = vmatpush2.bf16.msra.mxu0 0
      %1625 = vmatprep.subr.bf16.mxu0 0
      %1626 = vmatpush2.bf16.msra.mxu0 0
      %1627 = vmatprep.subr.bf16.mxu0 0
      %1628 = vmatpush2.bf16.msra.mxu0 0
      %1629 = vmatprep.subr.bf16.mxu0 0
      %1630 = vmatpush2.bf16.msra.mxu0 0
      %1631 = vmatprep.subr.bf16.mxu0 0
      %1632 = vmatpush2.bf16.msra.mxu0 0
      %1633 = vmatprep.subr.bf16.mxu0 0
      %1634 = vmatpush2.bf16.msra.mxu0 0
      %1635 = vmatprep.subr.bf16.mxu0 0
      %1636 = vmatpush2.bf16.msra.mxu0 0
      %1637 = vmatprep.mubr.bf16.mxu0 0
      %1638 = vmatmul.mubr.bf16.gmra.mxu0 %v1603
      %v1639 = vpop.f32.mrf.mxu0
      %v1640 = vadd.f32 0.0, %v1639
      %v1641 = vpop.f32.mrf.mxu0
      %v1642 = vpop.f32.mrf.mxu0
      %v1643 = vadd.f32 0.0, %v1642
      %v1644 = vpop.f32.mrf.mxu0
      %1645 = vdwg.mxu0
      %v1648 = vunpack.c.l.b16 %v220
      %v1649 = vunpack.c.l.b16 %v221
      %v1650 = vpack.c.b16 %v1649, %v1648
      %v1653 = vsel %vm1027, %v1385, 0
      %1655 = vmatprep.subr.bf16.mxu0 0
      %1656 = vmatpush1.bf16.msra.mxu0 0
      %1657 = vmatprep.subr.bf16.mxu0 0
      %1658 = vmatpush1.bf16.msra.mxu0 0
      %1659 = vmatprep.subr.bf16.mxu0 0
      %1660 = vmatpush1.bf16.msra.mxu0 0
      %1661 = vmatprep.subr.bf16.mxu0 0
      %1662 = vmatpush1.bf16.msra.mxu0 0
      %1663 = vmatprep.subr.bf16.mxu0 0
      %1664 = vmatpush1.bf16.msra.mxu0 0
      %1665 = vmatprep.subr.bf16.mxu0 0
      %1666 = vmatpush1.bf16.msra.mxu0 0
      %1667 = vmatprep.subr.bf16.mxu0 0
      %1668 = vmatpush1.bf16.msra.mxu0 0
      %1669 = vmatprep.subr.bf16.mxu0 0
      %1670 = vmatpush1.bf16.msra.mxu0 %v1650
      %1671 = vmatprep.subr.bf16.mxu0 0
      %1672 = vmatpush2.bf16.msra.mxu0 0
      %1673 = vmatprep.subr.bf16.mxu0 0
      %1674 = vmatpush2.bf16.msra.mxu0 0
      %1675 = vmatprep.subr.bf16.mxu0 0
      %1676 = vmatpush2.bf16.msra.mxu0 0
      %1677 = vmatprep.subr.bf16.mxu0 0
      %1678 = vmatpush2.bf16.msra.mxu0 0
      %1679 = vmatprep.subr.bf16.mxu0 0
      %1680 = vmatpush2.bf16.msra.mxu0 0
      %1681 = vmatprep.subr.bf16.mxu0 0
      %1682 = vmatpush2.bf16.msra.mxu0 0
      %1683 = vmatprep.subr.bf16.mxu0 0
      %1684 = vmatpush2.bf16.msra.mxu0 0
      %1685 = vmatprep.subr.bf16.mxu0 0
      %1686 = vmatpush2.bf16.msra.mxu0 0
      %1687 = vmatprep.mubr.bf16.mxu0 0
      %1688 = vmatmul.mubr.bf16.gmra.mxu0 %v1653
      %v1689 = vpop.f32.mrf.mxu0
      %v1690 = vadd.f32 0.0, %v1689
      %v1691 = vpop.f32.mrf.mxu0
      %v1692 = vpop.f32.mrf.mxu0
      %v1693 = vadd.f32 0.0, %v1692
      %v1694 = vpop.f32.mrf.mxu0
      %1695 = vdwg.mxu0
      %v1698 = vunpack.c.l.b16 %v222
      %v1699 = vunpack.c.l.b16 %v223
      %v1700 = vpack.c.b16 %v1699, %v1698
      %v1703 = vsel %vm1027, %v1386, 0
      %1705 = vmatprep.subr.bf16.mxu0 0
      %1706 = vmatpush1.bf16.msra.mxu0 0
      %1707 = vmatprep.subr.bf16.mxu0 0
      %1708 = vmatpush1.bf16.msra.mxu0 0
      %1709 = vmatprep.subr.bf16.mxu0 0
      %1710 = vmatpush1.bf16.msra.mxu0 0
      %1711 = vmatprep.subr.bf16.mxu0 0
      %1712 = vmatpush1.bf16.msra.mxu0 0
      %1713 = vmatprep.subr.bf16.mxu0 0
      %1714 = vmatpush1.bf16.msra.mxu0 0
      %1715 = vmatprep.subr.bf16.mxu0 0
      %1716 = vmatpush1.bf16.msra.mxu0 0
      %1717 = vmatprep.subr.bf16.mxu0 0
      %1718 = vmatpush1.bf16.msra.mxu0 0
      %1719 = vmatprep.subr.bf16.mxu0 0
      %1720 = vmatpush1.bf16.msra.mxu0 %v1700
      %1721 = vmatprep.subr.bf16.mxu0 0
      %1722 = vmatpush2.bf16.msra.mxu0 0
      %1723 = vmatprep.subr.bf16.mxu0 0
      %1724 = vmatpush2.bf16.msra.mxu0 0
      %1725 = vmatprep.subr.bf16.mxu0 0
      %1726 = vmatpush2.bf16.msra.mxu0 0
      %1727 = vmatprep.subr.bf16.mxu0 0
      %1728 = vmatpush2.bf16.msra.mxu0 0
      %1729 = vmatprep.subr.bf16.mxu0 0
      %1730 = vmatpush2.bf16.msra.mxu0 0
      %1731 = vmatprep.subr.bf16.mxu0 0
      %1732 = vmatpush2.bf16.msra.mxu0 0
      %1733 = vmatprep.subr.bf16.mxu0 0
      %1734 = vmatpush2.bf16.msra.mxu0 0
      %1735 = vmatprep.subr.bf16.mxu0 0
      %1736 = vmatpush2.bf16.msra.mxu0 0
      %1737 = vmatprep.mubr.bf16.mxu0 0
      %1738 = vmatmul.mubr.bf16.gmra.mxu0 %v1703
      %v1739 = vpop.f32.mrf.mxu0
      %v1740 = vadd.f32 0.0, %v1739
      %v1741 = vpop.f32.mrf.mxu0
      %v1742 = vpop.f32.mrf.mxu0
      %v1743 = vadd.f32 0.0, %v1742
      %v1744 = vpop.f32.mrf.mxu0
      %1745 = vdwg.mxu0
      %v1748 = vunpack.c.l.b16 %v224
      %v1749 = vunpack.c.l.b16 %v225
      %v1750 = vpack.c.b16 %v1749, %v1748
      %v1753 = vsel %vm1027, %v1387, 0
      %1755 = vmatprep.subr.bf16.mxu0 0
      %1756 = vmatpush1.bf16.msra.mxu0 0
      %1757 = vmatprep.subr.bf16.mxu0 0
      %1758 = vmatpush1.bf16.msra.mxu0 0
      %1759 = vmatprep.subr.bf16.mxu0 0
      %1760 = vmatpush1.bf16.msra.mxu0 0
      %1761 = vmatprep.subr.bf16.mxu0 0
      %1762 = vmatpush1.bf16.msra.mxu0 0
      %1763 = vmatprep.subr.bf16.mxu0 0
      %1764 = vmatpush1.bf16.msra.mxu0 0
      %1765 = vmatprep.subr.bf16.mxu0 0
      %1766 = vmatpush1.bf16.msra.mxu0 0
      %1767 = vmatprep.subr.bf16.mxu0 0
      %1768 = vmatpush1.bf16.msra.mxu0 0
      %1769 = vmatprep.subr.bf16.mxu0 0
      %1770 = vmatpush1.bf16.msra.mxu0 %v1750
      %1771 = vmatprep.subr.bf16.mxu0 0
      %1772 = vmatpush2.bf16.msra.mxu0 0
      %1773 = vmatprep.subr.bf16.mxu0 0
      %1774 = vmatpush2.bf16.msra.mxu0 0
      %1775 = vmatprep.subr.bf16.mxu0 0
      %1776 = vmatpush2.bf16.msra.mxu0 0
      %1777 = vmatprep.subr.bf16.mxu0 0
      %1778 = vmatpush2.bf16.msra.mxu0 0
      %1779 = vmatprep.subr.bf16.mxu0 0
      %1780 = vmatpush2.bf16.msra.mxu0 0
      %1781 = vmatprep.subr.bf16.mxu0 0
      %1782 = vmatpush2.bf16.msra.mxu0 0
      %1783 = vmatprep.subr.bf16.mxu0 0
      %1784 = vmatpush2.bf16.msra.mxu0 0
      %1785 = vmatprep.subr.bf16.mxu0 0
      %1786 = vmatpush2.bf16.msra.mxu0 0
      %1787 = vmatprep.mubr.bf16.mxu0 0
      %1788 = vmatmul.mubr.bf16.gmra.mxu0 %v1753
      %v1789 = vpop.f32.mrf.mxu0
      %v1790 = vadd.f32 0.0, %v1789
      %v1791 = vpop.f32.mrf.mxu0
      %v1792 = vpop.f32.mrf.mxu0
      %v1793 = vadd.f32 0.0, %v1792
      %v1794 = vpop.f32.mrf.mxu0
      %1795 = vdwg.mxu0
      %v1798 = vunpack.c.l.b16 %v226
      %v1799 = vunpack.c.l.b16 %v227
      %v1800 = vpack.c.b16 %v1799, %v1798
      %v1803 = vsel %vm1027, %v1388, 0
      %1805 = vmatprep.subr.bf16.mxu0 0
      %1806 = vmatpush1.bf16.msra.mxu0 0
      %1807 = vmatprep.subr.bf16.mxu0 0
      %1808 = vmatpush1.bf16.msra.mxu0 0
      %1809 = vmatprep.subr.bf16.mxu0 0
      %1810 = vmatpush1.bf16.msra.mxu0 0
      %1811 = vmatprep.subr.bf16.mxu0 0
      %1812 = vmatpush1.bf16.msra.mxu0 0
      %1813 = vmatprep.subr.bf16.mxu0 0
      %1814 = vmatpush1.bf16.msra.mxu0 0
      %1815 = vmatprep.subr.bf16.mxu0 0
      %1816 = vmatpush1.bf16.msra.mxu0 0
      %1817 = vmatprep.subr.bf16.mxu0 0
      %1818 = vmatpush1.bf16.msra.mxu0 0
      %1819 = vmatprep.subr.bf16.mxu0 0
      %1820 = vmatpush1.bf16.msra.mxu0 %v1800
      %1821 = vmatprep.subr.bf16.mxu0 0
      %1822 = vmatpush2.bf16.msra.mxu0 0
      %1823 = vmatprep.subr.bf16.mxu0 0
      %1824 = vmatpush2.bf16.msra.mxu0 0
      %1825 = vmatprep.subr.bf16.mxu0 0
      %1826 = vmatpush2.bf16.msra.mxu0 0
      %1827 = vmatprep.subr.bf16.mxu0 0
      %1828 = vmatpush2.bf16.msra.mxu0 0
      %1829 = vmatprep.subr.bf16.mxu0 0
      %1830 = vmatpush2.bf16.msra.mxu0 0
      %1831 = vmatprep.subr.bf16.mxu0 0
      %1832 = vmatpush2.bf16.msra.mxu0 0
      %1833 = vmatprep.subr.bf16.mxu0 0
      %1834 = vmatpush2.bf16.msra.mxu0 0
      %1835 = vmatprep.subr.bf16.mxu0 0
      %1836 = vmatpush2.bf16.msra.mxu0 0
      %1837 = vmatprep.mubr.bf16.mxu0 0
      %1838 = vmatmul.mubr.bf16.gmra.mxu0 %v1803
      %v1839 = vpop.f32.mrf.mxu0
      %v1840 = vadd.f32 0.0, %v1839
      %v1841 = vpop.f32.mrf.mxu0
      %v1842 = vpop.f32.mrf.mxu0
      %v1843 = vadd.f32 0.0, %v1842
      %v1844 = vpop.f32.mrf.mxu0
      %1845 = vdwg.mxu0
      %v1848 = vunpack.c.l.b16 %v228
      %v1849 = vunpack.c.l.b16 %v229
      %v1850 = vpack.c.b16 %v1849, %v1848
      %v1853 = vsel %vm1027, %v1389, 0
      %1855 = vmatprep.subr.bf16.mxu0 0
      %1856 = vmatpush1.bf16.msra.mxu0 0
      %1857 = vmatprep.subr.bf16.mxu0 0
      %1858 = vmatpush1.bf16.msra.mxu0 0
      %1859 = vmatprep.subr.bf16.mxu0 0
      %1860 = vmatpush1.bf16.msra.mxu0 0
      %1861 = vmatprep.subr.bf16.mxu0 0
      %1862 = vmatpush1.bf16.msra.mxu0 0
      %1863 = vmatprep.subr.bf16.mxu0 0
      %1864 = vmatpush1.bf16.msra.mxu0 0
      %1865 = vmatprep.subr.bf16.mxu0 0
      %1866 = vmatpush1.bf16.msra.mxu0 0
      %1867 = vmatprep.subr.bf16.mxu0 0
      %1868 = vmatpush1.bf16.msra.mxu0 0
      %1869 = vmatprep.subr.bf16.mxu0 0
      %1870 = vmatpush1.bf16.msra.mxu0 %v1850
      %1871 = vmatprep.subr.bf16.mxu0 0
      %1872 = vmatpush2.bf16.msra.mxu0 0
      %1873 = vmatprep.subr.bf16.mxu0 0
      %1874 = vmatpush2.bf16.msra.mxu0 0
      %1875 = vmatprep.subr.bf16.mxu0 0
      %1876 = vmatpush2.bf16.msra.mxu0 0
      %1877 = vmatprep.subr.bf16.mxu0 0
      %1878 = vmatpush2.bf16.msra.mxu0 0
      %1879 = vmatprep.subr.bf16.mxu0 0
      %1880 = vmatpush2.bf16.msra.mxu0 0
      %1881 = vmatprep.subr.bf16.mxu0 0
      %1882 = vmatpush2.bf16.msra.mxu0 0
      %1883 = vmatprep.subr.bf16.mxu0 0
      %1884 = vmatpush2.bf16.msra.mxu0 0
      %1885 = vmatprep.subr.bf16.mxu0 0
      %1886 = vmatpush2.bf16.msra.mxu0 0
      %1887 = vmatprep.mubr.bf16.mxu0 0
      %1888 = vmatmul.mubr.bf16.gmra.mxu0 %v1853
      %v1889 = vpop.f32.mrf.mxu0
      %v1890 = vadd.f32 0.0, %v1889
      %v1891 = vpop.f32.mrf.mxu0
      %v1892 = vpop.f32.mrf.mxu0
      %v1893 = vadd.f32 0.0, %v1892
      %v1894 = vpop.f32.mrf.mxu0
      %1895 = vdwg.mxu0
      %v1898 = vunpack.c.l.b16 %v230
      %v1899 = vunpack.c.l.b16 %v231
      %v1900 = vpack.c.b16 %v1899, %v1898
      %v1903 = vsel %vm1027, %v1390, 0
      %1905 = vmatprep.subr.bf16.mxu0 0
      %1906 = vmatpush1.bf16.msra.mxu0 0
      %1907 = vmatprep.subr.bf16.mxu0 0
      %1908 = vmatpush1.bf16.msra.mxu0 0
      %1909 = vmatprep.subr.bf16.mxu0 0
      %1910 = vmatpush1.bf16.msra.mxu0 0
      %1911 = vmatprep.subr.bf16.mxu0 0
      %1912 = vmatpush1.bf16.msra.mxu0 0
      %1913 = vmatprep.subr.bf16.mxu0 0
      %1914 = vmatpush1.bf16.msra.mxu0 0
      %1915 = vmatprep.subr.bf16.mxu0 0
      %1916 = vmatpush1.bf16.msra.mxu0 0
      %1917 = vmatprep.subr.bf16.mxu0 0
      %1918 = vmatpush1.bf16.msra.mxu0 0
      %1919 = vmatprep.subr.bf16.mxu0 0
      %1920 = vmatpush1.bf16.msra.mxu0 %v1900
      %1921 = vmatprep.subr.bf16.mxu0 0
      %1922 = vmatpush2.bf16.msra.mxu0 0
      %1923 = vmatprep.subr.bf16.mxu0 0
      %1924 = vmatpush2.bf16.msra.mxu0 0
      %1925 = vmatprep.subr.bf16.mxu0 0
      %1926 = vmatpush2.bf16.msra.mxu0 0
      %1927 = vmatprep.subr.bf16.mxu0 0
      %1928 = vmatpush2.bf16.msra.mxu0 0
      %1929 = vmatprep.subr.bf16.mxu0 0
      %1930 = vmatpush2.bf16.msra.mxu0 0
      %1931 = vmatprep.subr.bf16.mxu0 0
      %1932 = vmatpush2.bf16.msra.mxu0 0
      %1933 = vmatprep.subr.bf16.mxu0 0
      %1934 = vmatpush2.bf16.msra.mxu0 0
      %1935 = vmatprep.subr.bf16.mxu0 0
      %1936 = vmatpush2.bf16.msra.mxu0 0
      %1937 = vmatprep.mubr.bf16.mxu0 0
      %1938 = vmatmul.mubr.bf16.gmra.mxu0 %v1903
      %v1939 = vpop.f32.mrf.mxu0
      %v1940 = vadd.f32 0.0, %v1939
      %v1941 = vpop.f32.mrf.mxu0
      %v1942 = vpop.f32.mrf.mxu0
      %v1943 = vadd.f32 0.0, %v1942
      %v1944 = vpop.f32.mrf.mxu0
      %1945 = vdwg.mxu0
      %v1948 = vunpack.c.l.b16 %v232
      %v1949 = vunpack.c.l.b16 %v233
      %v1950 = vpack.c.b16 %v1949, %v1948
      %v1953 = vsel %vm1027, %v1391, 0
      %1955 = vmatprep.subr.bf16.mxu0 0
      %1956 = vmatpush1.bf16.msra.mxu0 0
      %1957 = vmatprep.subr.bf16.mxu0 0
      %1958 = vmatpush1.bf16.msra.mxu0 0
      %1959 = vmatprep.subr.bf16.mxu0 0
      %1960 = vmatpush1.bf16.msra.mxu0 0
      %1961 = vmatprep.subr.bf16.mxu0 0
      %1962 = vmatpush1.bf16.msra.mxu0 0
      %1963 = vmatprep.subr.bf16.mxu0 0
      %1964 = vmatpush1.bf16.msra.mxu0 0
      %1965 = vmatprep.subr.bf16.mxu0 0
      %1966 = vmatpush1.bf16.msra.mxu0 0
      %1967 = vmatprep.subr.bf16.mxu0 0
      %1968 = vmatpush1.bf16.msra.mxu0 0
      %1969 = vmatprep.subr.bf16.mxu0 0
      %1970 = vmatpush1.bf16.msra.mxu0 %v1950
      %1971 = vmatprep.subr.bf16.mxu0 0
      %1972 = vmatpush2.bf16.msra.mxu0 0
      %1973 = vmatprep.subr.bf16.mxu0 0
      %1974 = vmatpush2.bf16.msra.mxu0 0
      %1975 = vmatprep.subr.bf16.mxu0 0
      %1976 = vmatpush2.bf16.msra.mxu0 0
      %1977 = vmatprep.subr.bf16.mxu0 0
      %1978 = vmatpush2.bf16.msra.mxu0 0
      %1979 = vmatprep.subr.bf16.mxu0 0
      %1980 = vmatpush2.bf16.msra.mxu0 0
      %1981 = vmatprep.subr.bf16.mxu0 0
      %1982 = vmatpush2.bf16.msra.mxu0 0
      %1983 = vmatprep.subr.bf16.mxu0 0
      %1984 = vmatpush2.bf16.msra.mxu0 0
      %1985 = vmatprep.subr.bf16.mxu0 0
      %1986 = vmatpush2.bf16.msra.mxu0 0
      %1987 = vmatprep.mubr.bf16.mxu0 0
      %1988 = vmatmul.mubr.bf16.gmra.mxu0 %v1953
      %v1989 = vpop.f32.mrf.mxu0
      %v1990 = vadd.f32 0.0, %v1989
      %v1991 = vpop.f32.mrf.mxu0
      %v1992 = vpop.f32.mrf.mxu0
      %v1993 = vadd.f32 0.0, %v1992
      %v1994 = vpop.f32.mrf.mxu0
      %1995 = vdwg.mxu0
      %v1998 = vunpack.c.l.b16 %v234
      %v1999 = vunpack.c.l.b16 %v235
      %v2000 = vpack.c.b16 %v1999, %v1998
      %v2003 = vsel %vm1027, %v1392, 0
      %2005 = vmatprep.subr.bf16.mxu0 0
      %2006 = vmatpush1.bf16.msra.mxu0 0
      %2007 = vmatprep.subr.bf16.mxu0 0
      %2008 = vmatpush1.bf16.msra.mxu0 0
      %2009 = vmatprep.subr.bf16.mxu0 0
      %2010 = vmatpush1.bf16.msra.mxu0 0
      %2011 = vmatprep.subr.bf16.mxu0 0
      %2012 = vmatpush1.bf16.msra.mxu0 0
      %2013 = vmatprep.subr.bf16.mxu0 0
      %2014 = vmatpush1.bf16.msra.mxu0 0
      %2015 = vmatprep.subr.bf16.mxu0 0
      %2016 = vmatpush1.bf16.msra.mxu0 0
      %2017 = vmatprep.subr.bf16.mxu0 0
      %2018 = vmatpush1.bf16.msra.mxu0 0
      %2019 = vmatprep.subr.bf16.mxu0 0
      %2020 = vmatpush1.bf16.msra.mxu0 %v2000
      %2021 = vmatprep.subr.bf16.mxu0 0
      %2022 = vmatpush2.bf16.msra.mxu0 0
      %2023 = vmatprep.subr.bf16.mxu0 0
      %2024 = vmatpush2.bf16.msra.mxu0 0
      %2025 = vmatprep.subr.bf16.mxu0 0
      %2026 = vmatpush2.bf16.msra.mxu0 0
      %2027 = vmatprep.subr.bf16.mxu0 0
      %2028 = vmatpush2.bf16.msra.mxu0 0
      %2029 = vmatprep.subr.bf16.mxu0 0
      %2030 = vmatpush2.bf16.msra.mxu0 0
      %2031 = vmatprep.subr.bf16.mxu0 0
      %2032 = vmatpush2.bf16.msra.mxu0 0
      %2033 = vmatprep.subr.bf16.mxu0 0
      %2034 = vmatpush2.bf16.msra.mxu0 0
      %2035 = vmatprep.subr.bf16.mxu0 0
      %2036 = vmatpush2.bf16.msra.mxu0 0
      %2037 = vmatprep.mubr.bf16.mxu0 0
      %2038 = vmatmul.mubr.bf16.gmra.mxu0 %v2003
      %v2039 = vpop.f32.mrf.mxu0
      %v2040 = vadd.f32 0.0, %v2039
      %v2041 = vpop.f32.mrf.mxu0
      %v2042 = vpop.f32.mrf.mxu0
      %v2043 = vadd.f32 0.0, %v2042
      %v2044 = vpop.f32.mrf.mxu0
      %2045 = vdwg.mxu0
      %v2048 = vunpack.c.l.b16 %v236
      %v2049 = vunpack.c.l.b16 %v237
      %v2050 = vpack.c.b16 %v2049, %v2048
      %v2053 = vsel %vm1027, %v1393, 0
      %2055 = vmatprep.subr.bf16.mxu0 0
      %2056 = vmatpush1.bf16.msra.mxu0 0
      %2057 = vmatprep.subr.bf16.mxu0 0
      %2058 = vmatpush1.bf16.msra.mxu0 0
      %2059 = vmatprep.subr.bf16.mxu0 0
      %2060 = vmatpush1.bf16.msra.mxu0 0
      %2061 = vmatprep.subr.bf16.mxu0 0
      %2062 = vmatpush1.bf16.msra.mxu0 0
      %2063 = vmatprep.subr.bf16.mxu0 0
      %2064 = vmatpush1.bf16.msra.mxu0 0
      %2065 = vmatprep.subr.bf16.mxu0 0
      %2066 = vmatpush1.bf16.msra.mxu0 0
      %2067 = vmatprep.subr.bf16.mxu0 0
      %2068 = vmatpush1.bf16.msra.mxu0 0
      %2069 = vmatprep.subr.bf16.mxu0 0
      %2070 = vmatpush1.bf16.msra.mxu0 %v2050
      %2071 = vmatprep.subr.bf16.mxu0 0
      %2072 = vmatpush2.bf16.msra.mxu0 0
      %2073 = vmatprep.subr.bf16.mxu0 0
      %2074 = vmatpush2.bf16.msra.mxu0 0
      %2075 = vmatprep.subr.bf16.mxu0 0
      %2076 = vmatpush2.bf16.msra.mxu0 0
      %2077 = vmatprep.subr.bf16.mxu0 0
      %2078 = vmatpush2.bf16.msra.mxu0 0
      %2079 = vmatprep.subr.bf16.mxu0 0
      %2080 = vmatpush2.bf16.msra.mxu0 0
      %2081 = vmatprep.subr.bf16.mxu0 0
      %2082 = vmatpush2.bf16.msra.mxu0 0
      %2083 = vmatprep.subr.bf16.mxu0 0
      %2084 = vmatpush2.bf16.msra.mxu0 0
      %2085 = vmatprep.subr.bf16.mxu0 0
      %2086 = vmatpush2.bf16.msra.mxu0 0
      %2087 = vmatprep.mubr.bf16.mxu0 0
      %2088 = vmatmul.mubr.bf16.gmra.mxu0 %v2053
      %v2089 = vpop.f32.mrf.mxu0
      %v2090 = vadd.f32 0.0, %v2089
      %v2091 = vpop.f32.mrf.mxu0
      %v2092 = vpop.f32.mrf.mxu0
      %v2093 = vadd.f32 0.0, %v2092
      %v2094 = vpop.f32.mrf.mxu0
      %2095 = vdwg.mxu0
      %v2098 = vunpack.c.l.b16 %v238
      %v2099 = vunpack.c.l.b16 %v239
      %v2100 = vpack.c.b16 %v2099, %v2098
      %v2103 = vsel %vm1027, %v1394, 0
      %2105 = vmatprep.subr.bf16.mxu0 0
      %2106 = vmatpush1.bf16.msra.mxu0 0
      %2107 = vmatprep.subr.bf16.mxu0 0
      %2108 = vmatpush1.bf16.msra.mxu0 0
      %2109 = vmatprep.subr.bf16.mxu0 0
      %2110 = vmatpush1.bf16.msra.mxu0 0
      %2111 = vmatprep.subr.bf16.mxu0 0
      %2112 = vmatpush1.bf16.msra.mxu0 0
      %2113 = vmatprep.subr.bf16.mxu0 0
      %2114 = vmatpush1.bf16.msra.mxu0 0
      %2115 = vmatprep.subr.bf16.mxu0 0
      %2116 = vmatpush1.bf16.msra.mxu0 0
      %2117 = vmatprep.subr.bf16.mxu0 0
      %2118 = vmatpush1.bf16.msra.mxu0 0
      %2119 = vmatprep.subr.bf16.mxu0 0
      %2120 = vmatpush1.bf16.msra.mxu0 %v2100
      %2121 = vmatprep.subr.bf16.mxu0 0
      %2122 = vmatpush2.bf16.msra.mxu0 0
      %2123 = vmatprep.subr.bf16.mxu0 0
      %2124 = vmatpush2.bf16.msra.mxu0 0
      %2125 = vmatprep.subr.bf16.mxu0 0
      %2126 = vmatpush2.bf16.msra.mxu0 0
      %2127 = vmatprep.subr.bf16.mxu0 0
      %2128 = vmatpush2.bf16.msra.mxu0 0
      %2129 = vmatprep.subr.bf16.mxu0 0
      %2130 = vmatpush2.bf16.msra.mxu0 0
      %2131 = vmatprep.subr.bf16.mxu0 0
      %2132 = vmatpush2.bf16.msra.mxu0 0
      %2133 = vmatprep.subr.bf16.mxu0 0
      %2134 = vmatpush2.bf16.msra.mxu0 0
      %2135 = vmatprep.subr.bf16.mxu0 0
      %2136 = vmatpush2.bf16.msra.mxu0 0
      %2137 = vmatprep.mubr.bf16.mxu0 0
      %2138 = vmatmul.mubr.bf16.gmra.mxu0 %v2103
      %v2139 = vpop.f32.mrf.mxu0
      %v2140 = vadd.f32 0.0, %v2139
      %v2141 = vpop.f32.mrf.mxu0
      %v2142 = vpop.f32.mrf.mxu0
      %v2143 = vadd.f32 0.0, %v2142
      %v2144 = vpop.f32.mrf.mxu0
      %2145 = vdwg.mxu0
      %v2148 = vunpack.c.l.b16 %v240
      %v2149 = vunpack.c.l.b16 %v241
      %v2150 = vpack.c.b16 %v2149, %v2148
      %v2153 = vsel %vm1027, %v1395, 0
      %2155 = vmatprep.subr.bf16.mxu0 0
      %2156 = vmatpush1.bf16.msra.mxu0 0
      %2157 = vmatprep.subr.bf16.mxu0 0
      %2158 = vmatpush1.bf16.msra.mxu0 0
      %2159 = vmatprep.subr.bf16.mxu0 0
      %2160 = vmatpush1.bf16.msra.mxu0 0
      %2161 = vmatprep.subr.bf16.mxu0 0
      %2162 = vmatpush1.bf16.msra.mxu0 0
      %2163 = vmatprep.subr.bf16.mxu0 0
      %2164 = vmatpush1.bf16.msra.mxu0 0
      %2165 = vmatprep.subr.bf16.mxu0 0
      %2166 = vmatpush1.bf16.msra.mxu0 0
      %2167 = vmatprep.subr.bf16.mxu0 0
      %2168 = vmatpush1.bf16.msra.mxu0 0
      %2169 = vmatprep.subr.bf16.mxu0 0
      %2170 = vmatpush1.bf16.msra.mxu0 %v2150
      %2171 = vmatprep.subr.bf16.mxu0 0
      %2172 = vmatpush2.bf16.msra.mxu0 0
      %2173 = vmatprep.subr.bf16.mxu0 0
      %2174 = vmatpush2.bf16.msra.mxu0 0
      %2175 = vmatprep.subr.bf16.mxu0 0
      %2176 = vmatpush2.bf16.msra.mxu0 0
      %2177 = vmatprep.subr.bf16.mxu0 0
      %2178 = vmatpush2.bf16.msra.mxu0 0
      %2179 = vmatprep.subr.bf16.mxu0 0
      %2180 = vmatpush2.bf16.msra.mxu0 0
      %2181 = vmatprep.subr.bf16.mxu0 0
      %2182 = vmatpush2.bf16.msra.mxu0 0
      %2183 = vmatprep.subr.bf16.mxu0 0
      %2184 = vmatpush2.bf16.msra.mxu0 0
      %2185 = vmatprep.subr.bf16.mxu0 0
      %2186 = vmatpush2.bf16.msra.mxu0 0
      %2187 = vmatprep.mubr.bf16.mxu0 0
      %2188 = vmatmul.mubr.bf16.gmra.mxu0 %v2153
      %v2189 = vpop.f32.mrf.mxu0
      %v2190 = vadd.f32 0.0, %v2189
      %v2191 = vpop.f32.mrf.mxu0
      %v2192 = vpop.f32.mrf.mxu0
      %v2193 = vadd.f32 0.0, %v2192
      %v2194 = vpop.f32.mrf.mxu0
      %2195 = vdwg.mxu0
      %v2196 = vpack.c.bf16 %v1443, %v1440
      %v2197 = vpack.c.bf16 %v1493, %v1490
      %v2198 = vpack.c.bf16 %v1543, %v1540
      %v2199 = vpack.c.bf16 %v1593, %v1590
      %v2200 = vpack.c.bf16 %v1643, %v1640
      %v2201 = vpack.c.bf16 %v1693, %v1690
      %v2202 = vpack.c.bf16 %v1743, %v1740
      %v2203 = vpack.c.bf16 %v1793, %v1790
      %v2204 = vpack.c.bf16 %v1843, %v1840
      %v2205 = vpack.c.bf16 %v1893, %v1890
      %v2206 = vpack.c.bf16 %v1943, %v1940
      %v2207 = vpack.c.bf16 %v1993, %v1990
      %v2208 = vpack.c.bf16 %v2043, %v2040
      %v2209 = vpack.c.bf16 %v2093, %v2090
      %v2210 = vpack.c.bf16 %v2143, %v2140
      %v2211 = vpack.c.bf16 %v2193, %v2190
      %v2228 = vunpack.c.l.b16 %v2196
      %v2229 = vunpack.c.h.b16 %v2196
      %v2230 = vunpack.c.l.b16 %v2197
      %v2231 = vunpack.c.h.b16 %v2197
      %v2232 = vunpack.c.l.b16 %v2198
      %v2233 = vunpack.c.h.b16 %v2198
      %v2234 = vunpack.c.l.b16 %v2199
      %v2235 = vunpack.c.h.b16 %v2199
      %v2236 = vunpack.c.l.b16 %v2200
      %v2237 = vunpack.c.h.b16 %v2200
      %v2238 = vunpack.c.l.b16 %v2201
      %v2239 = vunpack.c.h.b16 %v2201
      %v2240 = vunpack.c.l.b16 %v2202
      %v2241 = vunpack.c.h.b16 %v2202
      %v2242 = vunpack.c.l.b16 %v2203
      %v2243 = vunpack.c.h.b16 %v2203
      %v2244 = vunpack.c.l.b16 %v2204
      %v2245 = vunpack.c.h.b16 %v2204
      %v2246 = vunpack.c.l.b16 %v2205
      %v2247 = vunpack.c.h.b16 %v2205
      %v2248 = vunpack.c.l.b16 %v2206
      %v2249 = vunpack.c.h.b16 %v2206
      %v2250 = vunpack.c.l.b16 %v2207
      %v2251 = vunpack.c.h.b16 %v2207
      %v2252 = vunpack.c.l.b16 %v2208
      %v2253 = vunpack.c.h.b16 %v2208
      %v2254 = vunpack.c.l.b16 %v2209
      %v2255 = vunpack.c.h.b16 %v2209
      %v2256 = vunpack.c.l.b16 %v2210
      %v2257 = vunpack.c.h.b16 %v2210
      %v2258 = vunpack.c.l.b16 %v2211
      %v2259 = vunpack.c.h.b16 %v2211
      %v2260 = vpack.c.b16 %v2228, %v2228
      %v2261 = vpack.c.b16 %v2229, %v2229
      %v2262 = vpack.c.b16 %v2230, %v2230
      %v2263 = vpack.c.b16 %v2231, %v2231
      %v2264 = vpack.c.b16 %v2232, %v2232
      %v2265 = vpack.c.b16 %v2233, %v2233
      %v2266 = vpack.c.b16 %v2234, %v2234
      %v2267 = vpack.c.b16 %v2235, %v2235
      %v2268 = vpack.c.b16 %v2236, %v2236
      %v2269 = vpack.c.b16 %v2237, %v2237
      %v2270 = vpack.c.b16 %v2238, %v2238
      %v2271 = vpack.c.b16 %v2239, %v2239
      %v2272 = vpack.c.b16 %v2240, %v2240
      %v2273 = vpack.c.b16 %v2241, %v2241
      %v2274 = vpack.c.b16 %v2242, %v2242
      %v2275 = vpack.c.b16 %v2243, %v2243
      %v2276 = vpack.c.b16 %v2244, %v2244
      %v2277 = vpack.c.b16 %v2245, %v2245
      %v2278 = vpack.c.b16 %v2246, %v2246
      %v2279 = vpack.c.b16 %v2247, %v2247
      %v2280 = vpack.c.b16 %v2248, %v2248
      %v2281 = vpack.c.b16 %v2249, %v2249
      %v2282 = vpack.c.b16 %v2250, %v2250
      %v2283 = vpack.c.b16 %v2251, %v2251
      %v2284 = vpack.c.b16 %v2252, %v2252
      %v2285 = vpack.c.b16 %v2253, %v2253
      %v2286 = vpack.c.b16 %v2254, %v2254
      %v2287 = vpack.c.b16 %v2255, %v2255
      %v2288 = vpack.c.b16 %v2256, %v2256
      %v2289 = vpack.c.b16 %v2257, %v2257
      %v2290 = vpack.c.b16 %v2258, %v2258
      %v2291 = vpack.c.b16 %v2259, %v2259
      %vm2324 = vcmask 76800
      %2325 = vst.msk [vmem:[%s175] sm:$0xf] %vm2324, %v2260
      %2326 = vst.msk [vmem:[%s175 + $0x4] sm:$0xf] %vm2324, %v2261
      %2327 = vst.msk [vmem:[%s175 + $0x8] sm:$0xf] %vm2324, %v2262
      %2328 = vst.msk [vmem:[%s175 + $0xc] sm:$0xf] %vm2324, %v2263
      %2329 = vst.msk [vmem:[%s175 + $0x10] sm:$0xf] %vm2324, %v2264
      %2330 = vst.msk [vmem:[%s175 + $0x14] sm:$0xf] %vm2324, %v2265
      %2331 = vst.msk [vmem:[%s175 + $0x18] sm:$0xf] %vm2324, %v2266
      %2332 = vst.msk [vmem:[%s175 + $0x1c] sm:$0xf] %vm2324, %v2267
      %2333 = vst.msk [vmem:[%s175 + $0x20] sm:$0xf] %vm2324, %v2268
      %2334 = vst.msk [vmem:[%s175 + $0x24] sm:$0xf] %vm2324, %v2269
      %2335 = vst.msk [vmem:[%s175 + $0x28] sm:$0xf] %vm2324, %v2270
      %2336 = vst.msk [vmem:[%s175 + $0x2c] sm:$0xf] %vm2324, %v2271
      %2337 = vst.msk [vmem:[%s175 + $0x30] sm:$0xf] %vm2324, %v2272
      %2338 = vst.msk [vmem:[%s175 + $0x34] sm:$0xf] %vm2324, %v2273
      %2339 = vst.msk [vmem:[%s175 + $0x38] sm:$0xf] %vm2324, %v2274
      %2340 = vst.msk [vmem:[%s175 + $0x3c] sm:$0xf] %vm2324, %v2275
      %2341 = vst.msk [vmem:[%s175 + $0x40] sm:$0xf] %vm2324, %v2276
      %2342 = vst.msk [vmem:[%s175 + $0x44] sm:$0xf] %vm2324, %v2277
      %2343 = vst.msk [vmem:[%s175 + $0x48] sm:$0xf] %vm2324, %v2278
      %2344 = vst.msk [vmem:[%s175 + $0x4c] sm:$0xf] %vm2324, %v2279
      %2345 = vst.msk [vmem:[%s175 + $0x50] sm:$0xf] %vm2324, %v2280
      %2346 = vst.msk [vmem:[%s175 + $0x54] sm:$0xf] %vm2324, %v2281
      %2347 = vst.msk [vmem:[%s175 + $0x58] sm:$0xf] %vm2324, %v2282
      %2348 = vst.msk [vmem:[%s175 + $0x5c] sm:$0xf] %vm2324, %v2283
      %2349 = vst.msk [vmem:[%s175 + $0x60] sm:$0xf] %vm2324, %v2284
      %2350 = vst.msk [vmem:[%s175 + $0x64] sm:$0xf] %vm2324, %v2285
      %2351 = vst.msk [vmem:[%s175 + $0x68] sm:$0xf] %vm2324, %v2286
      %2352 = vst.msk [vmem:[%s175 + $0x6c] sm:$0xf] %vm2324, %v2287
      %2353 = vst.msk [vmem:[%s175 + $0x70] sm:$0xf] %vm2324, %v2288
      %2354 = vst.msk [vmem:[%s175 + $0x74] sm:$0xf] %vm2324, %v2289
      %2355 = vst.msk [vmem:[%s175 + $0x78] sm:$0xf] %vm2324, %v2290
      %2356 = vst.msk [vmem:[%s175 + $0x7c] sm:$0xf] %vm2324, %v2291
      %s2357 = smul.u32 16, %s13
      %p2358 = scmp.lt.s32.totalorder %s2357, 31
      %s2359 = scalar_select %p2358, %s2357, 31
      %s2360 = smul.addr %s2359, 2
      %s2361 = smul.addr %s2360, 4
      %s2362 = scalar_lea.vmem %s2, %s2361
      // Predicated region
      $region29: #{_lambda_.20} parent=27 // pred_check
        %p2363 = pneg %p83
      $region30: #{_lambda_.20} parent=27 // pred_check_branch
        %2365 = sbr.rel (%p2363) target = $region32
      $region31: #{_lambda_.20} parent=27 // pred_region
        %s2366 = smul.u32 16, %s13
      $region32: #{_lambda_.20} parent=27 // pred_fallthru
        _
    $region28: #{_lambda_.20} parent=5 // pred_fallthru
      _
    %p2367 = scmp.le.s32.totalorder 2, %s8
    // Predicated region
    $region33: #{_lambda_.20} parent=5 // pred_check
      %p2368 = pneg %p2367
    $region34: #{_lambda_.20} parent=5 // pred_check_branch
      %2370 = sbr.rel (%p2368) target = $region36
    $region35: #{_lambda_.20} parent=5 // pred_region
      %s2371 = ssub.s32 %s8, 2
      // Predicated region
      $region37: #{_lambda_.20} parent=35 // pred_check
        %p2372 = pneg %p89
      $region38: #{_lambda_.20} parent=35 // pred_check_branch
        %2374 = sbr.rel (%p2372) target = $region40
      $region39: #{_lambda_.20} parent=35 // pred_region
        %s2375 = smul.u32 16, %s14
        %p2376 = scmp.lt.s32.totalorder %s2375, 31
        %s2377 = scalar_select %p2376, %s2375, 31
        %s2378 = smul.addr %s2377, 2
        %s2379 = smul.addr %s2378, 4
        %s2380 = scalar_lea.vmem %s2, %s2379
      $region40: #{_lambda_.20} parent=35 // pred_fallthru
        _
    $region36: #{_lambda_.20} parent=5 // pred_fallthru
      _
  $region6: #{_lambda_.20} parent=0 // loop_footer
    %s12 = sadd.s32 1, %s8
  $region7: #{_lambda_.20} parent=0 // loop_footer_branch
    %7 = sbr.rel target = $region3
  $region8: #{_lambda_.20} parent=0 // loop_exit
    _

// kernel: _lambda_.23
$region0: #{_lambda_.23}
  #allocation0 [shape = 'u32[]', space=smem, size = 0x4, offset = 0x4, fixed_abs, tag = 'smem constant byte address 0x4 - core index']
  #allocation1 [shape = 'u32[144,128]{1,0:T(1,128)}', space=vmem, size = 0x12000, scoped, tag = 'internal scratch']
  %s0 = inlined_call_operand.vmem [shape: bf16[512,30], index: 0, kind: input, shape index: {}]
  %s1 = inlined_call_operand.vmem [shape: bf16[30,30], index: 1, kind: input, shape index: {}]
  %s2 = inlined_call_operand.vmem [shape: f32[1,30], index: 2, kind: input, shape index: {}]
  %s3 = inlined_call_operand.vmem [shape: bf16[512,30], index: 3, kind: input, shape index: {}]
  %s4 = inlined_call_operand.vmem [shape: bf16[512,30], index: 4, kind: output, shape index: {}]
  %s5 = sld [smem:[#allocation0]]
  $region49: #{_lambda_.23} parent=0
    _
  %s7 = ssub.s32 1, %s5
  %s8 = scalar_select 0, %s7, %s5
  loop: start=0, step=1, limit=4
  $region2: #{_lambda_.23} parent=0 // loop_pre_header
    _
  $region3: #{_lambda_.23} parent=0 // loop_header
    %s10 = sphi 0, %s14
    %p11 = scmp.ge.s32.totalorder %s10, 4
    %s20 = sphi 0, %s22
    %s23 = sphi 0, %s20
    %s24 = sphi 0, %s23
    %s40 = sphi 0, %s24
    %s44 = sphi 0, %s44
    %s46 = sphi 0, %s44
    %s47 = sphi 0, %s46
    %s61 = sphi 0, %s47
    %s65 = sphi 0, %s65
    %s67 = sphi 0, %s65
    %s68 = sphi 0, %s67
    %s82 = sphi 0, %s68
    %s88 = sphi 0, %s90
    %s91 = sphi 0, %s88
    %s92 = sphi 0, %s91
    %s108 = sphi 0, %s92
    %s114 = sphi 0, %s116
    %s117 = sphi 0, %s114
    %s118 = sphi 0, %s117
    %s134 = sphi 0, %s118
  $region4: #{_lambda_.23} parent=0 // loop_header_branch
    %13 = sbr.rel (%p11) target = $region8
  $region5: #{_lambda_.23} parent=0 // loop_body
    %s15 = ssub.s32 %s10, 1
    %s16 = ssub.s32 %s10, 2
    %s17 = sadd.s32 %s10, 1
    %s18 = ssub.s32 %s10, %s17
    %p19 = scmp.eq.s32.totalorder %s18, 0
    %s21 = sadd.s32 %s20, 1
    %s22 = scalar_select %p19, %s20, %s21
    %p25 = pneg %p19
    %p26 = scmp.eq.s32.totalorder %s10, 1
    %p27 = por %p25, %p26
    %p28 = scmp.ne.s32.totalorder %s20, %s23
    %p29 = scmp.eq.s32.totalorder %s10, 0
    %p30 = por %p28, %p29
    %p31 = scmp.ne.s32.totalorder %s20, %s23
    %p32 = scmp.eq.s32.totalorder %s15, 1
    %p33 = por %p31, %p32
    %p34 = scmp.ne.s32.totalorder %s23, %s24
    %p35 = scmp.eq.s32.totalorder %s15, 0
    %p36 = por %p34, %p35
    %p37 = scmp.ne.s32.totalorder %s23, %s24
    %p38 = scmp.eq.s32.totalorder %s16, 1
    %p39 = por %p37, %p38
    %p41 = scmp.ne.s32.totalorder %s24, %s40
    %p42 = scmp.eq.s32.totalorder %s16, 0
    %p43 = por %p41, %p42
    %s45 = sadd.s32 %s44, 1
    %p48 = scmp.eq.s32.totalorder %s10, 1
    %p49 = scmp.ne.s32.totalorder %s44, %s46
    %p50 = scmp.eq.s32.totalorder %s10, 0
    %p51 = por %p49, %p50
    %p52 = scmp.ne.s32.totalorder %s44, %s46
    %p53 = scmp.eq.s32.totalorder %s15, 1
    %p54 = por %p52, %p53
    %p55 = scmp.ne.s32.totalorder %s46, %s47
    %p56 = scmp.eq.s32.totalorder %s15, 0
    %p57 = por %p55, %p56
    %p58 = scmp.ne.s32.totalorder %s46, %s47
    %p59 = scmp.eq.s32.totalorder %s16, 1
    %p60 = por %p58, %p59
    %p62 = scmp.ne.s32.totalorder %s47, %s61
    %p63 = scmp.eq.s32.totalorder %s16, 0
    %p64 = por %p62, %p63
    %s66 = sadd.s32 %s65, 1
    %p69 = scmp.eq.s32.totalorder %s10, 1
    %p70 = scmp.ne.s32.totalorder %s65, %s67
    %p71 = scmp.eq.s32.totalorder %s10, 0
    %p72 = por %p70, %p71
    %p73 = scmp.ne.s32.totalorder %s65, %s67
    %p74 = scmp.eq.s32.totalorder %s15, 1
    %p75 = por %p73, %p74
    %p76 = scmp.ne.s32.totalorder %s67, %s68
    %p77 = scmp.eq.s32.totalorder %s15, 0
    %p78 = por %p76, %p77
    %p79 = scmp.ne.s32.totalorder %s67, %s68
    %p80 = scmp.eq.s32.totalorder %s16, 1
    %p81 = por %p79, %p80
    %p83 = scmp.ne.s32.totalorder %s68, %s82
    %p84 = scmp.eq.s32.totalorder %s16, 0
    %p85 = por %p83, %p84
    %s86 = ssub.s32 %s10, %s17
    %p87 = scmp.eq.s32.totalorder %s86, 0
    %s89 = sadd.s32 %s88, 1
    %s90 = scalar_select %p87, %s88, %s89
    %p93 = pneg %p87
    %p94 = scmp.eq.s32.totalorder %s10, 1
    %p95 = por %p93, %p94
    %p96 = scmp.ne.s32.totalorder %s88, %s91
    %p97 = scmp.eq.s32.totalorder %s10, 0
    %p98 = por %p96, %p97
    %p99 = scmp.ne.s32.totalorder %s88, %s91
    %p100 = scmp.eq.s32.totalorder %s15, 1
    %p101 = por %p99, %p100
    %p102 = scmp.ne.s32.totalorder %s91, %s92
    %p103 = scmp.eq.s32.totalorder %s15, 0
    %p104 = por %p102, %p103
    %p105 = scmp.ne.s32.totalorder %s91, %s92
    %p106 = scmp.eq.s32.totalorder %s16, 1
    %p107 = por %p105, %p106
    %p109 = scmp.ne.s32.totalorder %s92, %s108
    %p110 = scmp.eq.s32.totalorder %s16, 0
    %p111 = por %p109, %p110
    %s112 = ssub.s32 %s10, %s17
    %p113 = scmp.eq.s32.totalorder %s112, 0
    %s115 = sadd.s32 %s114, 1
    %s116 = scalar_select %p113, %s114, %s115
    %p119 = pneg %p113
    %p120 = scmp.eq.s32.totalorder %s10, 1
    %p121 = por %p119, %p120
    %p122 = scmp.ne.s32.totalorder %s114, %s117
    %p123 = scmp.eq.s32.totalorder %s10, 0
    %p124 = por %p122, %p123
    %p125 = scmp.ne.s32.totalorder %s114, %s117
    %p126 = scmp.eq.s32.totalorder %s15, 1
    %p127 = por %p125, %p126
    %p128 = scmp.ne.s32.totalorder %s117, %s118
    %p129 = scmp.eq.s32.totalorder %s15, 0
    %p130 = por %p128, %p129
    %p131 = scmp.ne.s32.totalorder %s117, %s118
    %p132 = scmp.eq.s32.totalorder %s16, 1
    %p133 = por %p131, %p132
    %p135 = scmp.ne.s32.totalorder %s118, %s134
    %p136 = scmp.eq.s32.totalorder %s16, 0
    %p137 = por %p135, %p136
    %p138 = scmp.le.s32.totalorder 1, %s10
    %p139 = scmp.lt.s32.totalorder %s10, 3
    %p140 = pnand %p138, %p139
    %p141 = pneg %p140
    // Predicated region
    $region9: #{_lambda_.23} parent=5 // pred_check
      _
    $region10: #{_lambda_.23} parent=5 // pred_check_branch
      %143 = sbr.rel (%p140) target = $region12
    $region11: #{_lambda_.23} parent=5 // pred_region
      %s144 = ssub.s32 %s10, 1
      // Predicated region
      $region13: #{_lambda_.23} parent=11 // pred_check
        %p145 = pneg %p57
      $region14: #{_lambda_.23} parent=11 // pred_check_branch
        %147 = sbr.rel (%p145) target = $region16
      $region15: #{_lambda_.23} parent=11 // pred_region
        _
      $region16: #{_lambda_.23} parent=11 // pred_fallthru
        _
      // Predicated region
      $region17: #{_lambda_.23} parent=11 // pred_check
        %p148 = pneg %p78
      $region18: #{_lambda_.23} parent=11 // pred_check_branch
        %150 = sbr.rel (%p148) target = $region20
      $region19: #{_lambda_.23} parent=11 // pred_region
        _
      $region20: #{_lambda_.23} parent=11 // pred_fallthru
        _
    $region12: #{_lambda_.23} parent=5 // pred_fallthru
      _
    %p151 = scmp.lt.s32.totalorder %s10, 2
    // Predicated region
    $region21: #{_lambda_.23} parent=5 // pred_check
      %p152 = pneg %p151
    $region22: #{_lambda_.23} parent=5 // pred_check_branch
      %154 = sbr.rel (%p152) target = $region24
    $region23: #{_lambda_.23} parent=5 // pred_region
      // Predicated region
      $region25: #{_lambda_.23} parent=23 // pred_check
        %p155 = pneg %p30
      $region26: #{_lambda_.23} parent=23 // pred_check_branch
        %157 = sbr.rel (%p155) target = $region28
      $region27: #{_lambda_.23} parent=23 // pred_region
        %s158 = smul.u32 32, %s10
        %p159 = scmp.lt.s32.totalorder %s158, 63
        %s160 = scalar_select %p159, %s158, 63
        %s161 = smul.addr %s160, 4
        %s162 = scalar_lea.vmem %s0, %s161
        %s163 = smul.u32 32, %s10
      $region28: #{_lambda_.23} parent=23 // pred_fallthru
        _
      // Predicated region
      $region29: #{_lambda_.23} parent=23 // pred_check
        %p164 = pneg %p98
      $region30: #{_lambda_.23} parent=23 // pred_check_branch
        %166 = sbr.rel (%p164) target = $region32
      $region31: #{_lambda_.23} parent=23 // pred_region
        %s167 = smul.u32 32, %s10
        %p168 = scmp.lt.s32.totalorder %s167, 63
        %s169 = scalar_select %p168, %s167, 63
        %s170 = smul.addr %s169, 4
        %s171 = scalar_lea.vmem %s3, %s170
        %s172 = smul.u32 32, %s10
      $region32: #{_lambda_.23} parent=23 // pred_fallthru
        _
    $region24: #{_lambda_.23} parent=5 // pred_fallthru
      _
    %p173 = scmp.le.s32.totalorder 1, %s10
    %p174 = scmp.lt.s32.totalorder %s10, 3
    %p175 = pnand %p173, %p174
    %p176 = pneg %p175
    // Predicated region
    $region33: #{_lambda_.23} parent=5 // pred_check
      _
    $region34: #{_lambda_.23} parent=5 // pred_check_branch
      %178 = sbr.rel (%p175) target = $region36
    $region35: #{_lambda_.23} parent=5 // pred_region
      %s179 = ssub.s32 %s10, 1
      %s180 = smul.u32 32, %s15
      %p181 = scmp.lt.s32.totalorder %s180, 63
      %s182 = scalar_select %p181, %s180, 63
      %s183 = smul.addr %s182, 4
      %s184 = scalar_lea.vmem %s0, %s183
      %p185 = pneg %p36
      %p186 = pneg %p33
      %p187 = pneg %p57
      %p188 = pneg %p54
      %p189 = pneg %p78
      %p190 = pneg %p75
      %s191 = smul.u32 32, %s15
      %p192 = scmp.lt.s32.totalorder %s191, 63
      %s193 = scalar_select %p192, %s191, 63
      %s194 = smul.addr %s193, 4
      %s195 = scalar_lea.vmem %s3, %s194
      %p196 = pneg %p104
      %p197 = pneg %p101
      %p198 = pneg %p130
      %p199 = pneg %p127
      %s200 = smul.u32 32, %s15
      %p201 = scmp.lt.s32.totalorder %s200, 63
      %s202 = scalar_select %p201, %s200, 63
      %s203 = smul.addr %s202, 4
      %s204 = scalar_lea.vmem %s4, %s203
      %s205 = smul.u32 32, %s15
      %p206 = scmp.lt.s32.totalorder %s205, 63
      %s207 = scalar_select %p206, %s205, 63
      %s208 = smul.addr %s207, 4
      %s209 = scalar_lea.vmem %s0, %s208
      %s210 = smul.u32 32, %s15
      %s211 = smul.u32 32, %s15
      %p212 = scmp.lt.s32.totalorder %s211, 63
      %s213 = scalar_select %p212, %s211, 63
      %s214 = smul.addr %s213, 4
      %s215 = scalar_lea.vmem %s3, %s214
      %s216 = smul.u32 32, %s15
      %s217 = smul.u32 32, %s15
      %p218 = scmp.lt.s32.totalorder %s217, 63
      %s219 = scalar_select %p218, %s217, 63
      %s220 = smul.addr %s219, 4
      %s221 = scalar_lea.vmem %s4, %s220
      %s222 = smul.u32 32, %s15
      %v224 = vld [vmem:[%s209] sm:$0xf]
      %v225 = vld [vmem:[%s209 + $0x4] sm:$0xf]
      %v226 = vld [vmem:[%s209 + $0x8] sm:$0xf]
      %v227 = vld [vmem:[%s209 + $0xc] sm:$0xf]
      %v228 = vld [vmem:[%s209 + $0x10] sm:$0xf]
      %v229 = vld [vmem:[%s209 + $0x14] sm:$0xf]
      %v230 = vld [vmem:[%s209 + $0x18] sm:$0xf]
      %v231 = vld [vmem:[%s209 + $0x1c] sm:$0xf]
      %v232 = vld [vmem:[%s209 + $0x20] sm:$0xf]
      %v233 = vld [vmem:[%s209 + $0x24] sm:$0xf]
      %v234 = vld [vmem:[%s209 + $0x28] sm:$0xf]
      %v235 = vld [vmem:[%s209 + $0x2c] sm:$0xf]
      %v236 = vld [vmem:[%s209 + $0x30] sm:$0xf]
      %v237 = vld [vmem:[%s209 + $0x34] sm:$0xf]
      %v238 = vld [vmem:[%s209 + $0x38] sm:$0xf]
      %v239 = vld [vmem:[%s209 + $0x3c] sm:$0xf]
      %v240 = vld [vmem:[%s209 + $0x40] sm:$0xf]
      %v241 = vld [vmem:[%s209 + $0x44] sm:$0xf]
      %v242 = vld [vmem:[%s209 + $0x48] sm:$0xf]
      %v243 = vld [vmem:[%s209 + $0x4c] sm:$0xf]
      %v244 = vld [vmem:[%s209 + $0x50] sm:$0xf]
      %v245 = vld [vmem:[%s209 + $0x54] sm:$0xf]
      %v246 = vld [vmem:[%s209 + $0x58] sm:$0xf]
      %v247 = vld [vmem:[%s209 + $0x5c] sm:$0xf]
      %v248 = vld [vmem:[%s209 + $0x60] sm:$0xf]
      %v249 = vld [vmem:[%s209 + $0x64] sm:$0xf]
      %v250 = vld [vmem:[%s209 + $0x68] sm:$0xf]
      %v251 = vld [vmem:[%s209 + $0x6c] sm:$0xf]
      %v252 = vld [vmem:[%s209 + $0x70] sm:$0xf]
      %v253 = vld [vmem:[%s209 + $0x74] sm:$0xf]
      %v254 = vld [vmem:[%s209 + $0x78] sm:$0xf]
      %v255 = vld [vmem:[%s209 + $0x7c] sm:$0xf]
      %v256 = vld [vmem:[%s1] sm:$0xf]
      %v257 = vld [vmem:[%s1 + $0x4] sm:$0xf]
      %v258 = vld [vmem:[%s1 + $0x8] sm:$0xf]
      %v259 = vld [vmem:[%s1 + $0xc] sm:$0x7]
      %v260 = vld [vmem:[%s2] sm:$0x1]
      %v262 = vlaneseq
      %v263 = vshrl.u32 %v262, 7
      %v264 = vsub.s32 0, %v263
      %v265 = vrot.slane %v260, %v264
      %v299 = vunpack.c.l.b16 %v224
      %v300 = vunpack.c.l.b16 %v225
      %v301 = vunpack.c.l.b16 %v226
      %v302 = vunpack.c.l.b16 %v227
      %v303 = vunpack.c.l.b16 %v228
      %v304 = vunpack.c.l.b16 %v229
      %v305 = vunpack.c.l.b16 %v230
      %v306 = vunpack.c.l.b16 %v231
      %v307 = vunpack.c.l.b16 %v232
      %v308 = vunpack.c.l.b16 %v233
      %v309 = vunpack.c.l.b16 %v234
      %v310 = vunpack.c.l.b16 %v235
      %v311 = vunpack.c.l.b16 %v236
      %v312 = vunpack.c.l.b16 %v237
      %v313 = vunpack.c.l.b16 %v238
      %v314 = vunpack.c.l.b16 %v239
      %v315 = vunpack.c.l.b16 %v240
      %v316 = vunpack.c.l.b16 %v241
      %v317 = vunpack.c.l.b16 %v242
      %v318 = vunpack.c.l.b16 %v243
      %v319 = vunpack.c.l.b16 %v244
      %v320 = vunpack.c.l.b16 %v245
      %v321 = vunpack.c.l.b16 %v246
      %v322 = vunpack.c.l.b16 %v247
      %v323 = vunpack.c.l.b16 %v248
      %v324 = vunpack.c.l.b16 %v249
      %v325 = vunpack.c.l.b16 %v250
      %v326 = vunpack.c.l.b16 %v251
      %v327 = vunpack.c.l.b16 %v252
      %v328 = vunpack.c.l.b16 %v253
      %v329 = vunpack.c.l.b16 %v254
      %v330 = vunpack.c.l.b16 %v255
      %v331 = vpack.c.b16 %v300, %v299
      %v332 = vpack.c.b16 %v302, %v301
      %v333 = vpack.c.b16 %v304, %v303
      %v334 = vpack.c.b16 %v306, %v305
      %v335 = vpack.c.b16 %v308, %v307
      %v336 = vpack.c.b16 %v310, %v309
      %v337 = vpack.c.b16 %v312, %v311
      %v338 = vpack.c.b16 %v314, %v313
      %v339 = vpack.c.b16 %v316, %v315
      %v340 = vpack.c.b16 %v318, %v317
      %v341 = vpack.c.b16 %v320, %v319
      %v342 = vpack.c.b16 %v322, %v321
      %v343 = vpack.c.b16 %v324, %v323
      %v344 = vpack.c.b16 %v326, %v325
      %v345 = vpack.c.b16 %v328, %v327
      %v346 = vpack.c.b16 %v330, %v329
      %v351 = vunpack.c.l.b16 %v256
      %v352 = vunpack.c.l.b16 %v257
      %v353 = vunpack.c.l.b16 %v258
      %v354 = vunpack.c.l.b16 %v259
      %v355 = vpack.c.b16 %v352, %v351
      %v356 = vpack.c.b16 %v354, %v353
      %vm358 = vcmask 244736
      %v360 = vsel %vm358, %v331, 0
      %v363 = vsel %vm358, %v332, 0
      %v366 = vsel %vm358, %v333, 0
      %v369 = vsel %vm358, %v334, 0
      %v372 = vsel %vm358, %v335, 0
      %v375 = vsel %vm358, %v336, 0
      %v378 = vsel %vm358, %v337, 0
      %v381 = vsel %vm358, %v338, 0
      %v384 = vsel %vm358, %v339, 0
      %v387 = vsel %vm358, %v340, 0
      %v390 = vsel %vm358, %v341, 0
      %v393 = vsel %vm358, %v342, 0
      %v396 = vsel %vm358, %v343, 0
      %v399 = vsel %vm358, %v344, 0
      %v402 = vsel %vm358, %v345, 0
      %v405 = vsel %vm358, %v346, 0
      %vm407 = vcmask 1046528
      %v409 = vsel %vm407, %v356, 0
      %411 = vmatprep.subr.bf16.mxu0 0
      %412 = vmatpush1.bf16.msra.mxu0 0
      %413 = vmatprep.subr.bf16.mxu0 0
      %414 = vmatpush1.bf16.msra.mxu0 0
      %415 = vmatprep.subr.bf16.mxu0 0
      %416 = vmatpush1.bf16.msra.mxu0 0
      %417 = vmatprep.subr.bf16.mxu0 0
      %418 = vmatpush1.bf16.msra.mxu0 0
      %419 = vmatprep.subr.bf16.mxu0 0
      %420 = vmatpush1.bf16.msra.mxu0 0
      %421 = vmatprep.subr.bf16.mxu0 0
      %422 = vmatpush1.bf16.msra.mxu0 0
      %423 = vmatprep.subr.bf16.mxu0 0
      %424 = vmatpush1.bf16.msra.mxu0 %v409
      %425 = vmatprep.subr.bf16.mxu0 0
      %426 = vmatpush1.bf16.msra.mxu0 %v355
      %427 = vmatprep.subr.bf16.mxu0 0
      %428 = vmatpush2.bf16.msra.mxu0 0
      %429 = vmatprep.subr.bf16.mxu0 0
      %430 = vmatpush2.bf16.msra.mxu0 0
      %431 = vmatprep.subr.bf16.mxu0 0
      %432 = vmatpush2.bf16.msra.mxu0 0
      %433 = vmatprep.subr.bf16.mxu0 0
      %434 = vmatpush2.bf16.msra.mxu0 0
      %435 = vmatprep.subr.bf16.mxu0 0
      %436 = vmatpush2.bf16.msra.mxu0 0
      %437 = vmatprep.subr.bf16.mxu0 0
      %438 = vmatpush2.bf16.msra.mxu0 0
      %439 = vmatprep.subr.bf16.mxu0 0
      %440 = vmatpush2.bf16.msra.mxu0 0
      %441 = vmatprep.subr.bf16.mxu0 0
      %442 = vmatpush2.bf16.msra.mxu0 0
      %443 = vmatprep.mubr.bf16.mxu0 0
      %444 = vmatmul.mubr.bf16.gmra.mxu0 %v360
      %v445 = vpop.f32.mrf.mxu0
      %v446 = vadd.f32 %v265, %v445
      %v447 = vpop.f32.mrf.mxu0
      %v448 = vpop.f32.mrf.mxu0
      %v449 = vadd.f32 %v265, %v448
      %v450 = vpop.f32.mrf.mxu0
      %451 = vmatprep.mubr.bf16.mxu0 0
      %452 = vmatmul.mubr.bf16.gmra.mxu0 %v363
      %v453 = vpop.f32.mrf.mxu0
      %v454 = vadd.f32 %v265, %v453
      %v455 = vpop.f32.mrf.mxu0
      %v456 = vpop.f32.mrf.mxu0
      %v457 = vadd.f32 %v265, %v456
      %v458 = vpop.f32.mrf.mxu0
      %459 = vmatprep.mubr.bf16.mxu0 0
      %460 = vmatmul.mubr.bf16.gmra.mxu0 %v366
      %v461 = vpop.f32.mrf.mxu0
      %v462 = vadd.f32 %v265, %v461
      %v463 = vpop.f32.mrf.mxu0
      %v464 = vpop.f32.mrf.mxu0
      %v465 = vadd.f32 %v265, %v464
      %v466 = vpop.f32.mrf.mxu0
      %467 = vmatprep.mubr.bf16.mxu0 0
      %468 = vmatmul.mubr.bf16.gmra.mxu0 %v369
      %v469 = vpop.f32.mrf.mxu0
      %v470 = vadd.f32 %v265, %v469
      %v471 = vpop.f32.mrf.mxu0
      %v472 = vpop.f32.mrf.mxu0
      %v473 = vadd.f32 %v265, %v472
      %v474 = vpop.f32.mrf.mxu0
      %475 = vmatprep.mubr.bf16.mxu0 0
      %476 = vmatmul.mubr.bf16.gmra.mxu0 %v372
      %v477 = vpop.f32.mrf.mxu0
      %v478 = vadd.f32 %v265, %v477
      %v479 = vpop.f32.mrf.mxu0
      %v480 = vpop.f32.mrf.mxu0
      %v481 = vadd.f32 %v265, %v480
      %v482 = vpop.f32.mrf.mxu0
      %483 = vmatprep.mubr.bf16.mxu0 0
      %484 = vmatmul.mubr.bf16.gmra.mxu0 %v375
      %v485 = vpop.f32.mrf.mxu0
      %v486 = vadd.f32 %v265, %v485
      %v487 = vpop.f32.mrf.mxu0
      %v488 = vpop.f32.mrf.mxu0
      %v489 = vadd.f32 %v265, %v488
      %v490 = vpop.f32.mrf.mxu0
      %491 = vmatprep.mubr.bf16.mxu0 0
      %492 = vmatmul.mubr.bf16.gmra.mxu0 %v378
      %v493 = vpop.f32.mrf.mxu0
      %v494 = vadd.f32 %v265, %v493
      %v495 = vpop.f32.mrf.mxu0
      %v496 = vpop.f32.mrf.mxu0
      %v497 = vadd.f32 %v265, %v496
      %v498 = vpop.f32.mrf.mxu0
      %499 = vmatprep.mubr.bf16.mxu0 0
      %500 = vmatmul.mubr.bf16.gmra.mxu0 %v381
      %v501 = vpop.f32.mrf.mxu0
      %v502 = vadd.f32 %v265, %v501
      %v503 = vpop.f32.mrf.mxu0
      %v504 = vpop.f32.mrf.mxu0
      %v505 = vadd.f32 %v265, %v504
      %v506 = vpop.f32.mrf.mxu0
      %507 = vmatprep.mubr.bf16.mxu0 0
      %508 = vmatmul.mubr.bf16.gmra.mxu0 %v384
      %v509 = vpop.f32.mrf.mxu0
      %v510 = vadd.f32 %v265, %v509
      %v511 = vpop.f32.mrf.mxu0
      %v512 = vpop.f32.mrf.mxu0
      %v513 = vadd.f32 %v265, %v512
      %v514 = vpop.f32.mrf.mxu0
      %515 = vmatprep.mubr.bf16.mxu0 0
      %516 = vmatmul.mubr.bf16.gmra.mxu0 %v387
      %v517 = vpop.f32.mrf.mxu0
      %v518 = vadd.f32 %v265, %v517
      %v519 = vpop.f32.mrf.mxu0
      %v520 = vpop.f32.mrf.mxu0
      %v521 = vadd.f32 %v265, %v520
      %v522 = vpop.f32.mrf.mxu0
      %523 = vmatprep.mubr.bf16.mxu0 0
      %524 = vmatmul.mubr.bf16.gmra.mxu0 %v390
      %v525 = vpop.f32.mrf.mxu0
      %v526 = vadd.f32 %v265, %v525
      %v527 = vpop.f32.mrf.mxu0
      %v528 = vpop.f32.mrf.mxu0
      %v529 = vadd.f32 %v265, %v528
      %v530 = vpop.f32.mrf.mxu0
      %531 = vmatprep.mubr.bf16.mxu0 0
      %532 = vmatmul.mubr.bf16.gmra.mxu0 %v393
      %v533 = vpop.f32.mrf.mxu0
      %v534 = vadd.f32 %v265, %v533
      %v535 = vpop.f32.mrf.mxu0
      %v536 = vpop.f32.mrf.mxu0
      %v537 = vadd.f32 %v265, %v536
      %v538 = vpop.f32.mrf.mxu0
      %539 = vmatprep.mubr.bf16.mxu0 0
      %540 = vmatmul.mubr.bf16.gmra.mxu0 %v396
      %v541 = vpop.f32.mrf.mxu0
      %v542 = vadd.f32 %v265, %v541
      %v543 = vpop.f32.mrf.mxu0
      %v544 = vpop.f32.mrf.mxu0
      %v545 = vadd.f32 %v265, %v544
      %v546 = vpop.f32.mrf.mxu0
      %547 = vmatprep.mubr.bf16.mxu0 0
      %548 = vmatmul.mubr.bf16.gmra.mxu0 %v399
      %v549 = vpop.f32.mrf.mxu0
      %v550 = vadd.f32 %v265, %v549
      %v551 = vpop.f32.mrf.mxu0
      %v552 = vpop.f32.mrf.mxu0
      %v553 = vadd.f32 %v265, %v552
      %v554 = vpop.f32.mrf.mxu0
      %555 = vmatprep.mubr.bf16.mxu0 0
      %556 = vmatmul.mubr.bf16.gmra.mxu0 %v402
      %v557 = vpop.f32.mrf.mxu0
      %v558 = vadd.f32 %v265, %v557
      %v559 = vpop.f32.mrf.mxu0
      %v560 = vpop.f32.mrf.mxu0
      %v561 = vadd.f32 %v265, %v560
      %v562 = vpop.f32.mrf.mxu0
      %563 = vmatprep.mubr.bf16.mxu0 0
      %564 = vmatmul.mubr.bf16.gmra.mxu0 %v405
      %v565 = vpop.f32.mrf.mxu0
      %v566 = vadd.f32 %v265, %v565
      %v567 = vpop.f32.mrf.mxu0
      %v568 = vpop.f32.mrf.mxu0
      %v569 = vadd.f32 %v265, %v568
      %v570 = vpop.f32.mrf.mxu0
      %571 = vdwg.mxu0
      %v572 = vld [vmem:[%s215] sm:$0xf]
      %v573 = vld [vmem:[%s215 + $0x4] sm:$0xf]
      %v574 = vld [vmem:[%s215 + $0x8] sm:$0xf]
      %v575 = vld [vmem:[%s215 + $0xc] sm:$0xf]
      %v576 = vld [vmem:[%s215 + $0x10] sm:$0xf]
      %v577 = vld [vmem:[%s215 + $0x14] sm:$0xf]
      %v578 = vld [vmem:[%s215 + $0x18] sm:$0xf]
      %v579 = vld [vmem:[%s215 + $0x1c] sm:$0xf]
      %v580 = vld [vmem:[%s215 + $0x20] sm:$0xf]
      %v581 = vld [vmem:[%s215 + $0x24] sm:$0xf]
      %v582 = vld [vmem:[%s215 + $0x28] sm:$0xf]
      %v583 = vld [vmem:[%s215 + $0x2c] sm:$0xf]
      %v584 = vld [vmem:[%s215 + $0x30] sm:$0xf]
      %v585 = vld [vmem:[%s215 + $0x34] sm:$0xf]
      %v586 = vld [vmem:[%s215 + $0x38] sm:$0xf]
      %v587 = vld [vmem:[%s215 + $0x3c] sm:$0xf]
      %v588 = vld [vmem:[%s215 + $0x40] sm:$0xf]
      %v589 = vld [vmem:[%s215 + $0x44] sm:$0xf]
      %v590 = vld [vmem:[%s215 + $0x48] sm:$0xf]
      %v591 = vld [vmem:[%s215 + $0x4c] sm:$0xf]
      %v592 = vld [vmem:[%s215 + $0x50] sm:$0xf]
      %v593 = vld [vmem:[%s215 + $0x54] sm:$0xf]
      %v594 = vld [vmem:[%s215 + $0x58] sm:$0xf]
      %v595 = vld [vmem:[%s215 + $0x5c] sm:$0xf]
      %v596 = vld [vmem:[%s215 + $0x60] sm:$0xf]
      %v597 = vld [vmem:[%s215 + $0x64] sm:$0xf]
      %v598 = vld [vmem:[%s215 + $0x68] sm:$0xf]
      %v599 = vld [vmem:[%s215 + $0x6c] sm:$0xf]
      %v600 = vld [vmem:[%s215 + $0x70] sm:$0xf]
      %v601 = vld [vmem:[%s215 + $0x74] sm:$0xf]
      %v602 = vld [vmem:[%s215 + $0x78] sm:$0xf]
      %v603 = vld [vmem:[%s215 + $0x7c] sm:$0xf]
      %v604 = vunpack.c.l.bf16 %v572
      %v605 = vunpack.c.l.bf16 %v573
      %v606 = vunpack.c.l.bf16 %v574
      %v607 = vunpack.c.l.bf16 %v575
      %v608 = vunpack.c.l.bf16 %v576
      %v609 = vunpack.c.l.bf16 %v577
      %v610 = vunpack.c.l.bf16 %v578
      %v611 = vunpack.c.l.bf16 %v579
      %v612 = vunpack.c.l.bf16 %v580
      %v613 = vunpack.c.l.bf16 %v581
      %v614 = vunpack.c.l.bf16 %v582
      %v615 = vunpack.c.l.bf16 %v583
      %v616 = vunpack.c.l.bf16 %v584
      %v617 = vunpack.c.l.bf16 %v585
      %v618 = vunpack.c.l.bf16 %v586
      %v619 = vunpack.c.l.bf16 %v587
      %v620 = vunpack.c.l.bf16 %v588
      %v621 = vunpack.c.l.bf16 %v589
      %v622 = vunpack.c.l.bf16 %v590
      %v623 = vunpack.c.l.bf16 %v591
      %v624 = vunpack.c.l.bf16 %v592
      %v625 = vunpack.c.l.bf16 %v593
      %v626 = vunpack.c.l.bf16 %v594
      %v627 = vunpack.c.l.bf16 %v595
      %v628 = vunpack.c.l.bf16 %v596
      %v629 = vunpack.c.l.bf16 %v597
      %v630 = vunpack.c.l.bf16 %v598
      %v631 = vunpack.c.l.bf16 %v599
      %v632 = vunpack.c.l.bf16 %v600
      %v633 = vunpack.c.l.bf16 %v601
      %v634 = vunpack.c.l.bf16 %v602
      %v635 = vunpack.c.l.bf16 %v603
      %v636 = vadd.f32 %v446, %v604
      %v637 = vadd.f32 %v449, %v605
      %v638 = vadd.f32 %v454, %v606
      %v639 = vadd.f32 %v457, %v607
      %v640 = vadd.f32 %v462, %v608
      %v641 = vadd.f32 %v465, %v609
      %v642 = vadd.f32 %v470, %v610
      %v643 = vadd.f32 %v473, %v611
      %v644 = vadd.f32 %v478, %v612
      %v645 = vadd.f32 %v481, %v613
      %v646 = vadd.f32 %v486, %v614
      %v647 = vadd.f32 %v489, %v615
      %v648 = vadd.f32 %v494, %v616
      %v649 = vadd.f32 %v497, %v617
      %v650 = vadd.f32 %v502, %v618
      %v651 = vadd.f32 %v505, %v619
      %v652 = vadd.f32 %v510, %v620
      %v653 = vadd.f32 %v513, %v621
      %v654 = vadd.f32 %v518, %v622
      %v655 = vadd.f32 %v521, %v623
      %v656 = vadd.f32 %v526, %v624
      %v657 = vadd.f32 %v529, %v625
      %v658 = vadd.f32 %v534, %v626
      %v659 = vadd.f32 %v537, %v627
      %v660 = vadd.f32 %v542, %v628
      %v661 = vadd.f32 %v545, %v629
      %v662 = vadd.f32 %v550, %v630
      %v663 = vadd.f32 %v553, %v631
      %v664 = vadd.f32 %v558, %v632
      %v665 = vadd.f32 %v561, %v633
      %v666 = vadd.f32 %v566, %v634
      %v667 = vadd.f32 %v569, %v635
      %v668 = vpack.c.bf16 %v637, %v636
      %v669 = vpack.c.bf16 %v639, %v638
      %v670 = vpack.c.bf16 %v641, %v640
      %v671 = vpack.c.bf16 %v643, %v642
      %v672 = vpack.c.bf16 %v645, %v644
      %v673 = vpack.c.bf16 %v647, %v646
      %v674 = vpack.c.bf16 %v649, %v648
      %v675 = vpack.c.bf16 %v651, %v650
      %v676 = vpack.c.bf16 %v653, %v652
      %v677 = vpack.c.bf16 %v655, %v654
      %v678 = vpack.c.bf16 %v657, %v656
      %v679 = vpack.c.bf16 %v659, %v658
      %v680 = vpack.c.bf16 %v661, %v660
      %v681 = vpack.c.bf16 %v663, %v662
      %v682 = vpack.c.bf16 %v665, %v664
      %v683 = vpack.c.bf16 %v667, %v666
      %v700 = vunpack.c.l.b16 %v668
      %v701 = vunpack.c.h.b16 %v668
      %v702 = vunpack.c.l.b16 %v669
      %v703 = vunpack.c.h.b16 %v669
      %v704 = vunpack.c.l.b16 %v670
      %v705 = vunpack.c.h.b16 %v670
      %v706 = vunpack.c.l.b16 %v671
      %v707 = vunpack.c.h.b16 %v671
      %v708 = vunpack.c.l.b16 %v672
      %v709 = vunpack.c.h.b16 %v672
      %v710 = vunpack.c.l.b16 %v673
      %v711 = vunpack.c.h.b16 %v673
      %v712 = vunpack.c.l.b16 %v674
      %v713 = vunpack.c.h.b16 %v674
      %v714 = vunpack.c.l.b16 %v675
      %v715 = vunpack.c.h.b16 %v675
      %v716 = vunpack.c.l.b16 %v676
      %v717 = vunpack.c.h.b16 %v676
      %v718 = vunpack.c.l.b16 %v677
      %v719 = vunpack.c.h.b16 %v677
      %v720 = vunpack.c.l.b16 %v678
      %v721 = vunpack.c.h.b16 %v678
      %v722 = vunpack.c.l.b16 %v679
      %v723 = vunpack.c.h.b16 %v679
      %v724 = vunpack.c.l.b16 %v680
      %v725 = vunpack.c.h.b16 %v680
      %v726 = vunpack.c.l.b16 %v681
      %v727 = vunpack.c.h.b16 %v681
      %v728 = vunpack.c.l.b16 %v682
      %v729 = vunpack.c.h.b16 %v682
      %v730 = vunpack.c.l.b16 %v683
      %v731 = vunpack.c.h.b16 %v683
      %v732 = vpack.c.b16 %v700, %v700
      %v733 = vpack.c.b16 %v701, %v701
      %v734 = vpack.c.b16 %v702, %v702
      %v735 = vpack.c.b16 %v703, %v703
      %v736 = vpack.c.b16 %v704, %v704
      %v737 = vpack.c.b16 %v705, %v705
      %v738 = vpack.c.b16 %v706, %v706
      %v739 = vpack.c.b16 %v707, %v707
      %v740 = vpack.c.b16 %v708, %v708
      %v741 = vpack.c.b16 %v709, %v709
      %v742 = vpack.c.b16 %v710, %v710
      %v743 = vpack.c.b16 %v711, %v711
      %v744 = vpack.c.b16 %v712, %v712
      %v745 = vpack.c.b16 %v713, %v713
      %v746 = vpack.c.b16 %v714, %v714
      %v747 = vpack.c.b16 %v715, %v715
      %v748 = vpack.c.b16 %v716, %v716
      %v749 = vpack.c.b16 %v717, %v717
      %v750 = vpack.c.b16 %v718, %v718
      %v751 = vpack.c.b16 %v719, %v719
      %v752 = vpack.c.b16 %v720, %v720
      %v753 = vpack.c.b16 %v721, %v721
      %v754 = vpack.c.b16 %v722, %v722
      %v755 = vpack.c.b16 %v723, %v723
      %v756 = vpack.c.b16 %v724, %v724
      %v757 = vpack.c.b16 %v725, %v725
      %v758 = vpack.c.b16 %v726, %v726
      %v759 = vpack.c.b16 %v727, %v727
      %v760 = vpack.c.b16 %v728, %v728
      %v761 = vpack.c.b16 %v729, %v729
      %v762 = vpack.c.b16 %v730, %v730
      %v763 = vpack.c.b16 %v731, %v731
      %vm796 = vcmask 240640
      %797 = vst.msk [vmem:[%s221] sm:$0xf] %vm796, %v732
      %798 = vst.msk [vmem:[%s221 + $0x4] sm:$0xf] %vm796, %v733
      %799 = vst.msk [vmem:[%s221 + $0x8] sm:$0xf] %vm796, %v734
      %800 = vst.msk [vmem:[%s221 + $0xc] sm:$0xf] %vm796, %v735
      %801 = vst.msk [vmem:[%s221 + $0x10] sm:$0xf] %vm796, %v736
      %802 = vst.msk [vmem:[%s221 + $0x14] sm:$0xf] %vm796, %v737
      %803 = vst.msk [vmem:[%s221 + $0x18] sm:$0xf] %vm796, %v738
      %804 = vst.msk [vmem:[%s221 + $0x1c] sm:$0xf] %vm796, %v739
      %805 = vst.msk [vmem:[%s221 + $0x20] sm:$0xf] %vm796, %v740
      %806 = vst.msk [vmem:[%s221 + $0x24] sm:$0xf] %vm796, %v741
      %807 = vst.msk [vmem:[%s221 + $0x28] sm:$0xf] %vm796, %v742
      %808 = vst.msk [vmem:[%s221 + $0x2c] sm:$0xf] %vm796, %v743
      %809 = vst.msk [vmem:[%s221 + $0x30] sm:$0xf] %vm796, %v744
      %810 = vst.msk [vmem:[%s221 + $0x34] sm:$0xf] %vm796, %v745
      %811 = vst.msk [vmem:[%s221 + $0x38] sm:$0xf] %vm796, %v746
      %812 = vst.msk [vmem:[%s221 + $0x3c] sm:$0xf] %vm796, %v747
      %813 = vst.msk [vmem:[%s221 + $0x40] sm:$0xf] %vm796, %v748
      %814 = vst.msk [vmem:[%s221 + $0x44] sm:$0xf] %vm796, %v749
      %815 = vst.msk [vmem:[%s221 + $0x48] sm:$0xf] %vm796, %v750
      %816 = vst.msk [vmem:[%s221 + $0x4c] sm:$0xf] %vm796, %v751
      %817 = vst.msk [vmem:[%s221 + $0x50] sm:$0xf] %vm796, %v752
      %818 = vst.msk [vmem:[%s221 + $0x54] sm:$0xf] %vm796, %v753
      %819 = vst.msk [vmem:[%s221 + $0x58] sm:$0xf] %vm796, %v754
      %820 = vst.msk [vmem:[%s221 + $0x5c] sm:$0xf] %vm796, %v755
      %821 = vst.msk [vmem:[%s221 + $0x60] sm:$0xf] %vm796, %v756
      %822 = vst.msk [vmem:[%s221 + $0x64] sm:$0xf] %vm796, %v757
      %823 = vst.msk [vmem:[%s221 + $0x68] sm:$0xf] %vm796, %v758
      %824 = vst.msk [vmem:[%s221 + $0x6c] sm:$0xf] %vm796, %v759
      %825 = vst.msk [vmem:[%s221 + $0x70] sm:$0xf] %vm796, %v760
      %826 = vst.msk [vmem:[%s221 + $0x74] sm:$0xf] %vm796, %v761
      %827 = vst.msk [vmem:[%s221 + $0x78] sm:$0xf] %vm796, %v762
      %828 = vst.msk [vmem:[%s221 + $0x7c] sm:$0xf] %vm796, %v763
      %s829 = smul.u32 32, %s15
      %p830 = scmp.lt.s32.totalorder %s829, 63
      %s831 = scalar_select %p830, %s829, 63
      %s832 = smul.addr %s831, 4
      %s833 = scalar_lea.vmem %s4, %s832
      // Predicated region
      $region37: #{_lambda_.23} parent=35 // pred_check
        %p834 = pneg %p127
      $region38: #{_lambda_.23} parent=35 // pred_check_branch
        %836 = sbr.rel (%p834) target = $region40
      $region39: #{_lambda_.23} parent=35 // pred_region
        %s837 = smul.u32 32, %s15
      $region40: #{_lambda_.23} parent=35 // pred_fallthru
        _
    $region36: #{_lambda_.23} parent=5 // pred_fallthru
      _
    %p838 = scmp.le.s32.totalorder 2, %s10
    // Predicated region
    $region41: #{_lambda_.23} parent=5 // pred_check
      %p839 = pneg %p838
    $region42: #{_lambda_.23} parent=5 // pred_check_branch
      %841 = sbr.rel (%p839) target = $region44
    $region43: #{_lambda_.23} parent=5 // pred_region
      %s842 = ssub.s32 %s10, 2
      // Predicated region
      $region45: #{_lambda_.23} parent=43 // pred_check
        %p843 = pneg %p133
      $region46: #{_lambda_.23} parent=43 // pred_check_branch
        %845 = sbr.rel (%p843) target = $region48
      $region47: #{_lambda_.23} parent=43 // pred_region
        %s846 = smul.u32 32, %s16
        %p847 = scmp.lt.s32.totalorder %s846, 63
        %s848 = scalar_select %p847, %s846, 63
        %s849 = smul.addr %s848, 4
        %s850 = scalar_lea.vmem %s4, %s849
      $region48: #{_lambda_.23} parent=43 // pred_fallthru
        _
    $region44: #{_lambda_.23} parent=5 // pred_fallthru
      _
  $region6: #{_lambda_.23} parent=0 // loop_footer
    %s14 = sadd.s32 1, %s10
  $region7: #{_lambda_.23} parent=0 // loop_footer_branch
    %9 = sbr.rel target = $region3
  $region8: #{_lambda_.23} parent=0 // loop_exit
    _

// kernel: _lambda_.31
$region0: #{_lambda_.31}
  #allocation0 [shape = 'u32[]', space=smem, size = 0x4, offset = 0x4, fixed_abs, tag = 'smem constant byte address 0x4 - core index']
  #allocation1 [shape = 'u32[144,128]{1,0:T(1,128)}', space=vmem, size = 0x12000, scoped, tag = 'internal scratch']
  %s0 = inlined_call_operand.vmem [shape: bf16[512,270], index: 0, kind: input, shape index: {}]
  %s1 = inlined_call_operand.vmem [shape: bf16[270,12], index: 1, kind: input, shape index: {}]
  %s2 = inlined_call_operand.vmem [shape: f32[1,12], index: 2, kind: input, shape index: {}]
  %s3 = inlined_call_operand.vmem [shape: f32[512,12], index: 3, kind: output, shape index: {}]
  %s4 = sld [smem:[#allocation0]]
  $region45: #{_lambda_.31} parent=0
    _
  %s6 = ssub.s32 1, %s4
  %s7 = scalar_select 0, %s6, %s4
  loop: start=0, step=1, limit=4
  $region2: #{_lambda_.31} parent=0 // loop_pre_header
    _
  $region3: #{_lambda_.31} parent=0 // loop_header
    %s9 = sphi 0, %s13
    %p10 = scmp.ge.s32.totalorder %s9, 4
    %s19 = sphi 0, %s21
    %s22 = sphi 0, %s19
    %s23 = sphi 0, %s22
    %s39 = sphi 0, %s23
    %s43 = sphi 0, %s43
    %s45 = sphi 0, %s43
    %s46 = sphi 0, %s45
    %s60 = sphi 0, %s46
    %s64 = sphi 0, %s64
    %s66 = sphi 0, %s64
    %s67 = sphi 0, %s66
    %s81 = sphi 0, %s67
    %s87 = sphi 0, %s89
    %s90 = sphi 0, %s87
    %s91 = sphi 0, %s90
    %s107 = sphi 0, %s91
  $region4: #{_lambda_.31} parent=0 // loop_header_branch
    %12 = sbr.rel (%p10) target = $region8
  $region5: #{_lambda_.31} parent=0 // loop_body
    %s14 = ssub.s32 %s9, 1
    %s15 = ssub.s32 %s9, 2
    %s16 = sadd.s32 %s9, 1
    %s17 = ssub.s32 %s9, %s16
    %p18 = scmp.eq.s32.totalorder %s17, 0
    %s20 = sadd.s32 %s19, 1
    %s21 = scalar_select %p18, %s19, %s20
    %p24 = pneg %p18
    %p25 = scmp.eq.s32.totalorder %s9, 1
    %p26 = por %p24, %p25
    %p27 = scmp.ne.s32.totalorder %s19, %s22
    %p28 = scmp.eq.s32.totalorder %s9, 0
    %p29 = por %p27, %p28
    %p30 = scmp.ne.s32.totalorder %s19, %s22
    %p31 = scmp.eq.s32.totalorder %s14, 1
    %p32 = por %p30, %p31
    %p33 = scmp.ne.s32.totalorder %s22, %s23
    %p34 = scmp.eq.s32.totalorder %s14, 0
    %p35 = por %p33, %p34
    %p36 = scmp.ne.s32.totalorder %s22, %s23
    %p37 = scmp.eq.s32.totalorder %s15, 1
    %p38 = por %p36, %p37
    %p40 = scmp.ne.s32.totalorder %s23, %s39
    %p41 = scmp.eq.s32.totalorder %s15, 0
    %p42 = por %p40, %p41
    %s44 = sadd.s32 %s43, 1
    %p47 = scmp.eq.s32.totalorder %s9, 1
    %p48 = scmp.ne.s32.totalorder %s43, %s45
    %p49 = scmp.eq.s32.totalorder %s9, 0
    %p50 = por %p48, %p49
    %p51 = scmp.ne.s32.totalorder %s43, %s45
    %p52 = scmp.eq.s32.totalorder %s14, 1
    %p53 = por %p51, %p52
    %p54 = scmp.ne.s32.totalorder %s45, %s46
    %p55 = scmp.eq.s32.totalorder %s14, 0
    %p56 = por %p54, %p55
    %p57 = scmp.ne.s32.totalorder %s45, %s46
    %p58 = scmp.eq.s32.totalorder %s15, 1
    %p59 = por %p57, %p58
    %p61 = scmp.ne.s32.totalorder %s46, %s60
    %p62 = scmp.eq.s32.totalorder %s15, 0
    %p63 = por %p61, %p62
    %s65 = sadd.s32 %s64, 1
    %p68 = scmp.eq.s32.totalorder %s9, 1
    %p69 = scmp.ne.s32.totalorder %s64, %s66
    %p70 = scmp.eq.s32.totalorder %s9, 0
    %p71 = por %p69, %p70
    %p72 = scmp.ne.s32.totalorder %s64, %s66
    %p73 = scmp.eq.s32.totalorder %s14, 1
    %p74 = por %p72, %p73
    %p75 = scmp.ne.s32.totalorder %s66, %s67
    %p76 = scmp.eq.s32.totalorder %s14, 0
    %p77 = por %p75, %p76
    %p78 = scmp.ne.s32.totalorder %s66, %s67
    %p79 = scmp.eq.s32.totalorder %s15, 1
    %p80 = por %p78, %p79
    %p82 = scmp.ne.s32.totalorder %s67, %s81
    %p83 = scmp.eq.s32.totalorder %s15, 0
    %p84 = por %p82, %p83
    %s85 = ssub.s32 %s9, %s16
    %p86 = scmp.eq.s32.totalorder %s85, 0
    %s88 = sadd.s32 %s87, 1
    %s89 = scalar_select %p86, %s87, %s88
    %p92 = pneg %p86
    %p93 = scmp.eq.s32.totalorder %s9, 1
    %p94 = por %p92, %p93
    %p95 = scmp.ne.s32.totalorder %s87, %s90
    %p96 = scmp.eq.s32.totalorder %s9, 0
    %p97 = por %p95, %p96
    %p98 = scmp.ne.s32.totalorder %s87, %s90
    %p99 = scmp.eq.s32.totalorder %s14, 1
    %p100 = por %p98, %p99
    %p101 = scmp.ne.s32.totalorder %s90, %s91
    %p102 = scmp.eq.s32.totalorder %s14, 0
    %p103 = por %p101, %p102
    %p104 = scmp.ne.s32.totalorder %s90, %s91
    %p105 = scmp.eq.s32.totalorder %s15, 1
    %p106 = por %p104, %p105
    %p108 = scmp.ne.s32.totalorder %s91, %s107
    %p109 = scmp.eq.s32.totalorder %s15, 0
    %p110 = por %p108, %p109
    %p111 = scmp.le.s32.totalorder 1, %s9
    %p112 = scmp.lt.s32.totalorder %s9, 3
    %p113 = pnand %p111, %p112
    %p114 = pneg %p113
    // Predicated region
    $region9: #{_lambda_.31} parent=5 // pred_check
      _
    $region10: #{_lambda_.31} parent=5 // pred_check_branch
      %116 = sbr.rel (%p113) target = $region12
    $region11: #{_lambda_.31} parent=5 // pred_region
      %s117 = ssub.s32 %s9, 1
      // Predicated region
      $region13: #{_lambda_.31} parent=11 // pred_check
        %p118 = pneg %p56
      $region14: #{_lambda_.31} parent=11 // pred_check_branch
        %120 = sbr.rel (%p118) target = $region16
      $region15: #{_lambda_.31} parent=11 // pred_region
        _
      $region16: #{_lambda_.31} parent=11 // pred_fallthru
        _
      // Predicated region
      $region17: #{_lambda_.31} parent=11 // pred_check
        %p121 = pneg %p77
      $region18: #{_lambda_.31} parent=11 // pred_check_branch
        %123 = sbr.rel (%p121) target = $region20
      $region19: #{_lambda_.31} parent=11 // pred_region
        _
      $region20: #{_lambda_.31} parent=11 // pred_fallthru
        _
    $region12: #{_lambda_.31} parent=5 // pred_fallthru
      _
    %p124 = scmp.lt.s32.totalorder %s9, 2
    // Predicated region
    $region21: #{_lambda_.31} parent=5 // pred_check
      %p125 = pneg %p124
    $region22: #{_lambda_.31} parent=5 // pred_check_branch
      %127 = sbr.rel (%p125) target = $region24
    $region23: #{_lambda_.31} parent=5 // pred_region
      // Predicated region
      $region25: #{_lambda_.31} parent=23 // pred_check
        %p128 = pneg %p29
      $region26: #{_lambda_.31} parent=23 // pred_check_branch
        %130 = sbr.rel (%p128) target = $region28
      $region27: #{_lambda_.31} parent=23 // pred_region
        %s131 = smul.u32 32, %s9
        %p132 = scmp.lt.s32.totalorder %s131, 63
        %s133 = scalar_select %p132, %s131, 63
        %s134 = smul.addr %s133, 3
        %s135 = smul.addr %s134, 4
        %s136 = scalar_lea.vmem %s0, %s135
        %s137 = smul.u32 32, %s9
      $region28: #{_lambda_.31} parent=23 // pred_fallthru
        _
    $region24: #{_lambda_.31} parent=5 // pred_fallthru
      _
    %p138 = scmp.le.s32.totalorder 1, %s9
    %p139 = scmp.lt.s32.totalorder %s9, 3
    %p140 = pnand %p138, %p139
    %p141 = pneg %p140
    // Predicated region
    $region29: #{_lambda_.31} parent=5 // pred_check
      _
    $region30: #{_lambda_.31} parent=5 // pred_check_branch
      %143 = sbr.rel (%p140) target = $region32
    $region31: #{_lambda_.31} parent=5 // pred_region
      %s144 = ssub.s32 %s9, 1
      %s145 = smul.u32 32, %s14
      %p146 = scmp.lt.s32.totalorder %s145, 63
      %s147 = scalar_select %p146, %s145, 63
      %s148 = smul.addr %s147, 3
      %s149 = smul.addr %s148, 4
      %s150 = scalar_lea.vmem %s0, %s149
      %p151 = pneg %p35
      %p152 = pneg %p32
      %p153 = pneg %p56
      %p154 = pneg %p53
      %p155 = pneg %p77
      %p156 = pneg %p74
      %p157 = pneg %p103
      %p158 = pneg %p100
      %s159 = smul.u32 32, %s14
      %p160 = scmp.lt.s32.totalorder %s159, 63
      %s161 = scalar_select %p160, %s159, 63
      %s162 = smul.addr %s161, 8
      %s163 = scalar_lea.vmem %s3, %s162
      %s164 = smul.u32 32, %s14
      %p165 = scmp.lt.s32.totalorder %s164, 63
      %s166 = scalar_select %p165, %s164, 63
      %s167 = smul.addr %s166, 3
      %s168 = smul.addr %s167, 4
      %s169 = scalar_lea.vmem %s0, %s168
      %s170 = smul.u32 32, %s14
      %s171 = smul.u32 32, %s14
      %p172 = scmp.lt.s32.totalorder %s171, 63
      %s173 = scalar_select %p172, %s171, 63
      %s174 = smul.addr %s173, 8
      %s175 = scalar_lea.vmem %s3, %s174
      %s176 = smul.u32 32, %s14
      %v178 = vld [vmem:[%s169] sm:$0xff]
      %v179 = vld [vmem:[%s169 + $0x8] sm:$0xf]
      %v180 = vld [vmem:[%s169 + $0xc] sm:$0xff]
      %v181 = vld [vmem:[%s169 + $0x14] sm:$0xf]
      %v182 = vld [vmem:[%s169 + $0x18] sm:$0xff]
      %v183 = vld [vmem:[%s169 + $0x20] sm:$0xf]
      %v184 = vld [vmem:[%s169 + $0x24] sm:$0xff]
      %v185 = vld [vmem:[%s169 + $0x2c] sm:$0xf]
      %v186 = vld [vmem:[%s169 + $0x30] sm:$0xff]
      %v187 = vld [vmem:[%s169 + $0x38] sm:$0xf]
      %v188 = vld [vmem:[%s169 + $0x3c] sm:$0xff]
      %v189 = vld [vmem:[%s169 + $0x44] sm:$0xf]
      %v190 = vld [vmem:[%s169 + $0x48] sm:$0xff]
      %v191 = vld [vmem:[%s169 + $0x50] sm:$0xf]
      %v192 = vld [vmem:[%s169 + $0x54] sm:$0xff]
      %v193 = vld [vmem:[%s169 + $0x5c] sm:$0xf]
      %v194 = vld [vmem:[%s169 + $0x60] sm:$0xff]
      %v195 = vld [vmem:[%s169 + $0x68] sm:$0xf]
      %v196 = vld [vmem:[%s169 + $0x6c] sm:$0xff]
      %v197 = vld [vmem:[%s169 + $0x74] sm:$0xf]
      %v198 = vld [vmem:[%s169 + $0x78] sm:$0xff]
      %v199 = vld [vmem:[%s169 + $0x80] sm:$0xf]
      %v200 = vld [vmem:[%s169 + $0x84] sm:$0xff]
      %v201 = vld [vmem:[%s169 + $0x8c] sm:$0xf]
      %v202 = vld [vmem:[%s169 + $0x90] sm:$0xff]
      %v203 = vld [vmem:[%s169 + $0x98] sm:$0xf]
      %v204 = vld [vmem:[%s169 + $0x9c] sm:$0xff]
      %v205 = vld [vmem:[%s169 + $0xa4] sm:$0xf]
      %v206 = vld [vmem:[%s169 + $0xa8] sm:$0xff]
      %v207 = vld [vmem:[%s169 + $0xb0] sm:$0xf]
      %v208 = vld [vmem:[%s169 + $0xb4] sm:$0xff]
      %v209 = vld [vmem:[%s169 + $0xbc] sm:$0xf]
      %v210 = vld [vmem:[%s169 + $0xc0] sm:$0xff]
      %v211 = vld [vmem:[%s169 + $0xc8] sm:$0xf]
      %v212 = vld [vmem:[%s169 + $0xcc] sm:$0xff]
      %v213 = vld [vmem:[%s169 + $0xd4] sm:$0xf]
      %v214 = vld [vmem:[%s169 + $0xd8] sm:$0xff]
      %v215 = vld [vmem:[%s169 + $0xe0] sm:$0xf]
      %v216 = vld [vmem:[%s169 + $0xe4] sm:$0xff]
      %v217 = vld [vmem:[%s169 + $0xec] sm:$0xf]
      %v218 = vld [vmem:[%s169 + $0xf0] sm:$0xff]
      %v219 = vld [vmem:[%s169 + $0xf8] sm:$0xf]
      %v220 = vld [vmem:[%s169 + $0xfc] sm:$0xff]
      %v221 = vld [vmem:[%s169 + $0x104] sm:$0xf]
      %v222 = vld [vmem:[%s169 + $0x108] sm:$0xff]
      %v223 = vld [vmem:[%s169 + $0x110] sm:$0xf]
      %v224 = vld [vmem:[%s169 + $0x114] sm:$0xff]
      %v225 = vld [vmem:[%s169 + $0x11c] sm:$0xf]
      %v226 = vld [vmem:[%s169 + $0x120] sm:$0xff]
      %v227 = vld [vmem:[%s169 + $0x128] sm:$0xf]
      %v228 = vld [vmem:[%s169 + $0x12c] sm:$0xff]
      %v229 = vld [vmem:[%s169 + $0x134] sm:$0xf]
      %v230 = vld [vmem:[%s169 + $0x138] sm:$0xff]
      %v231 = vld [vmem:[%s169 + $0x140] sm:$0xf]
      %v232 = vld [vmem:[%s169 + $0x144] sm:$0xff]
      %v233 = vld [vmem:[%s169 + $0x14c] sm:$0xf]
      %v234 = vld [vmem:[%s169 + $0x150] sm:$0xff]
      %v235 = vld [vmem:[%s169 + $0x158] sm:$0xf]
      %v236 = vld [vmem:[%s169 + $0x15c] sm:$0xff]
      %v237 = vld [vmem:[%s169 + $0x164] sm:$0xf]
      %v238 = vld [vmem:[%s169 + $0x168] sm:$0xff]
      %v239 = vld [vmem:[%s169 + $0x170] sm:$0xf]
      %v240 = vld [vmem:[%s169 + $0x174] sm:$0xff]
      %v241 = vld [vmem:[%s169 + $0x17c] sm:$0xf]
      %v242 = vld [vmem:[%s1] sm:$0xf]
      %v243 = vld [vmem:[%s1 + $0x4] sm:$0xf]
      %v244 = vld [vmem:[%s1 + $0x8] sm:$0xf]
      %v245 = vld [vmem:[%s1 + $0xc] sm:$0xf]
      %v246 = vld [vmem:[%s1 + $0x10] sm:$0xf]
      %v247 = vld [vmem:[%s1 + $0x14] sm:$0xf]
      %v248 = vld [vmem:[%s1 + $0x18] sm:$0xf]
      %v249 = vld [vmem:[%s1 + $0x1c] sm:$0xf]
      %v250 = vld [vmem:[%s1 + $0x20] sm:$0xf]
      %v251 = vld [vmem:[%s1 + $0x24] sm:$0xf]
      %v252 = vld [vmem:[%s1 + $0x28] sm:$0xf]
      %v253 = vld [vmem:[%s1 + $0x2c] sm:$0xf]
      %v254 = vld [vmem:[%s1 + $0x30] sm:$0xf]
      %v255 = vld [vmem:[%s1 + $0x34] sm:$0xf]
      %v256 = vld [vmem:[%s1 + $0x38] sm:$0xf]
      %v257 = vld [vmem:[%s1 + $0x3c] sm:$0xf]
      %v258 = vld [vmem:[%s1 + $0x40] sm:$0xf]
      %v259 = vld [vmem:[%s1 + $0x44] sm:$0xf]
      %v260 = vld [vmem:[%s1 + $0x48] sm:$0xf]
      %v261 = vld [vmem:[%s1 + $0x4c] sm:$0xf]
      %v262 = vld [vmem:[%s1 + $0x50] sm:$0xf]
      %v263 = vld [vmem:[%s1 + $0x54] sm:$0xf]
      %v264 = vld [vmem:[%s1 + $0x58] sm:$0xf]
      %v265 = vld [vmem:[%s1 + $0x5c] sm:$0xf]
      %v266 = vld [vmem:[%s1 + $0x60] sm:$0xf]
      %v267 = vld [vmem:[%s1 + $0x64] sm:$0xf]
      %v268 = vld [vmem:[%s1 + $0x68] sm:$0xf]
      %v269 = vld [vmem:[%s1 + $0x6c] sm:$0xf]
      %v270 = vld [vmem:[%s1 + $0x70] sm:$0xf]
      %v271 = vld [vmem:[%s1 + $0x74] sm:$0xf]
      %v272 = vld [vmem:[%s1 + $0x78] sm:$0xf]
      %v273 = vld [vmem:[%s1 + $0x7c] sm:$0xf]
      %v274 = vld [vmem:[%s1 + $0x80] sm:$0xf]
      %v275 = vld [vmem:[%s1 + $0x84] sm:$0x7]
      %v276 = vld [vmem:[%s2] sm:$0x1]
      %v278 = vlaneseq
      %v279 = vshrl.u32 %v278, 7
      %v280 = vsub.s32 0, %v279
      %v281 = vrot.slane %v276, %v280
      %v347 = vunpack.c.l.b16 %v178
      %v348 = vunpack.c.h.b16 %v178
      %v349 = vunpack.c.l.b16 %v179
      %v350 = vunpack.c.l.b16 %v180
      %v351 = vunpack.c.h.b16 %v180
      %v352 = vunpack.c.l.b16 %v181
      %v353 = vunpack.c.l.b16 %v182
      %v354 = vunpack.c.h.b16 %v182
      %v355 = vunpack.c.l.b16 %v183
      %v356 = vunpack.c.l.b16 %v184
      %v357 = vunpack.c.h.b16 %v184
      %v358 = vunpack.c.l.b16 %v185
      %v359 = vunpack.c.l.b16 %v186
      %v360 = vunpack.c.h.b16 %v186
      %v361 = vunpack.c.l.b16 %v187
      %v362 = vunpack.c.l.b16 %v188
      %v363 = vunpack.c.h.b16 %v188
      %v364 = vunpack.c.l.b16 %v189
      %v365 = vunpack.c.l.b16 %v190
      %v366 = vunpack.c.h.b16 %v190
      %v367 = vunpack.c.l.b16 %v191
      %v368 = vunpack.c.l.b16 %v192
      %v369 = vunpack.c.h.b16 %v192
      %v370 = vunpack.c.l.b16 %v193
      %v371 = vunpack.c.l.b16 %v194
      %v372 = vunpack.c.h.b16 %v194
      %v373 = vunpack.c.l.b16 %v195
      %v374 = vunpack.c.l.b16 %v196
      %v375 = vunpack.c.h.b16 %v196
      %v376 = vunpack.c.l.b16 %v197
      %v377 = vunpack.c.l.b16 %v198
      %v378 = vunpack.c.h.b16 %v198
      %v379 = vunpack.c.l.b16 %v199
      %v380 = vunpack.c.l.b16 %v200
      %v381 = vunpack.c.h.b16 %v200
      %v382 = vunpack.c.l.b16 %v201
      %v383 = vunpack.c.l.b16 %v202
      %v384 = vunpack.c.h.b16 %v202
      %v385 = vunpack.c.l.b16 %v203
      %v386 = vunpack.c.l.b16 %v204
      %v387 = vunpack.c.h.b16 %v204
      %v388 = vunpack.c.l.b16 %v205
      %v389 = vunpack.c.l.b16 %v206
      %v390 = vunpack.c.h.b16 %v206
      %v391 = vunpack.c.l.b16 %v207
      %v392 = vunpack.c.l.b16 %v208
      %v393 = vunpack.c.h.b16 %v208
      %v394 = vunpack.c.l.b16 %v209
      %v395 = vunpack.c.l.b16 %v210
      %v396 = vunpack.c.h.b16 %v210
      %v397 = vunpack.c.l.b16 %v211
      %v398 = vunpack.c.l.b16 %v212
      %v399 = vunpack.c.h.b16 %v212
      %v400 = vunpack.c.l.b16 %v213
      %v401 = vunpack.c.l.b16 %v214
      %v402 = vunpack.c.h.b16 %v214
      %v403 = vunpack.c.l.b16 %v215
      %v404 = vunpack.c.l.b16 %v216
      %v405 = vunpack.c.h.b16 %v216
      %v406 = vunpack.c.l.b16 %v217
      %v407 = vunpack.c.l.b16 %v218
      %v408 = vunpack.c.h.b16 %v218
      %v409 = vunpack.c.l.b16 %v219
      %v410 = vunpack.c.l.b16 %v220
      %v411 = vunpack.c.h.b16 %v220
      %v412 = vunpack.c.l.b16 %v221
      %v413 = vunpack.c.l.b16 %v222
      %v414 = vunpack.c.h.b16 %v222
      %v415 = vunpack.c.l.b16 %v223
      %v416 = vunpack.c.l.b16 %v224
      %v417 = vunpack.c.h.b16 %v224
      %v418 = vunpack.c.l.b16 %v225
      %v419 = vunpack.c.l.b16 %v226
      %v420 = vunpack.c.h.b16 %v226
      %v421 = vunpack.c.l.b16 %v227
      %v422 = vunpack.c.l.b16 %v228
      %v423 = vunpack.c.h.b16 %v228
      %v424 = vunpack.c.l.b16 %v229
      %v425 = vunpack.c.l.b16 %v230
      %v426 = vunpack.c.h.b16 %v230
      %v427 = vunpack.c.l.b16 %v231
      %v428 = vunpack.c.l.b16 %v232
      %v429 = vunpack.c.h.b16 %v232
      %v430 = vunpack.c.l.b16 %v233
      %v431 = vunpack.c.l.b16 %v234
      %v432 = vunpack.c.h.b16 %v234
      %v433 = vunpack.c.l.b16 %v235
      %v434 = vunpack.c.l.b16 %v236
      %v435 = vunpack.c.h.b16 %v236
      %v436 = vunpack.c.l.b16 %v237
      %v437 = vunpack.c.l.b16 %v238
      %v438 = vunpack.c.h.b16 %v238
      %v439 = vunpack.c.l.b16 %v239
      %v440 = vunpack.c.l.b16 %v240
      %v441 = vunpack.c.h.b16 %v240
      %v442 = vunpack.c.l.b16 %v241
      %v443 = vpack.c.b16 %v350, %v347
      %v444 = vpack.c.b16 %v351, %v348
      %v445 = vpack.c.b16 %v352, %v349
      %v446 = vpack.c.b16 %v356, %v353
      %v447 = vpack.c.b16 %v357, %v354
      %v448 = vpack.c.b16 %v358, %v355
      %v449 = vpack.c.b16 %v362, %v359
      %v450 = vpack.c.b16 %v363, %v360
      %v451 = vpack.c.b16 %v364, %v361
      %v452 = vpack.c.b16 %v368, %v365
      %v453 = vpack.c.b16 %v369, %v366
      %v454 = vpack.c.b16 %v370, %v367
      %v455 = vpack.c.b16 %v374, %v371
      %v456 = vpack.c.b16 %v375, %v372
      %v457 = vpack.c.b16 %v376, %v373
      %v458 = vpack.c.b16 %v380, %v377
      %v459 = vpack.c.b16 %v381, %v378
      %v460 = vpack.c.b16 %v382, %v379
      %v461 = vpack.c.b16 %v386, %v383
      %v462 = vpack.c.b16 %v387, %v384
      %v463 = vpack.c.b16 %v388, %v385
      %v464 = vpack.c.b16 %v392, %v389
      %v465 = vpack.c.b16 %v393, %v390
      %v466 = vpack.c.b16 %v394, %v391
      %v467 = vpack.c.b16 %v398, %v395
      %v468 = vpack.c.b16 %v399, %v396
      %v469 = vpack.c.b16 %v400, %v397
      %v470 = vpack.c.b16 %v404, %v401
      %v471 = vpack.c.b16 %v405, %v402
      %v472 = vpack.c.b16 %v406, %v403
      %v473 = vpack.c.b16 %v410, %v407
      %v474 = vpack.c.b16 %v411, %v408
      %v475 = vpack.c.b16 %v412, %v409
      %v476 = vpack.c.b16 %v416, %v413
      %v477 = vpack.c.b16 %v417, %v414
      %v478 = vpack.c.b16 %v418, %v415
      %v479 = vpack.c.b16 %v422, %v419
      %v480 = vpack.c.b16 %v423, %v420
      %v481 = vpack.c.b16 %v424, %v421
      %v482 = vpack.c.b16 %v428, %v425
      %v483 = vpack.c.b16 %v429, %v426
      %v484 = vpack.c.b16 %v430, %v427
      %v485 = vpack.c.b16 %v434, %v431
      %v486 = vpack.c.b16 %v435, %v432
      %v487 = vpack.c.b16 %v436, %v433
      %v488 = vpack.c.b16 %v440, %v437
      %v489 = vpack.c.b16 %v441, %v438
      %v490 = vpack.c.b16 %v442, %v439
      %v557 = vunpack.c.l.b16 %v242
      %v558 = vunpack.c.l.b16 %v243
      %v559 = vunpack.c.l.b16 %v244
      %v560 = vunpack.c.l.b16 %v245
      %v561 = vunpack.c.l.b16 %v246
      %v562 = vunpack.c.l.b16 %v247
      %v563 = vunpack.c.l.b16 %v248
      %v564 = vunpack.c.l.b16 %v249
      %v565 = vunpack.c.l.b16 %v250
      %v566 = vunpack.c.l.b16 %v251
      %v567 = vunpack.c.l.b16 %v252
      %v568 = vunpack.c.l.b16 %v253
      %v569 = vunpack.c.l.b16 %v254
      %v570 = vunpack.c.l.b16 %v255
      %v571 = vunpack.c.l.b16 %v256
      %v572 = vunpack.c.l.b16 %v257
      %v573 = vunpack.c.l.b16 %v258
      %v574 = vunpack.c.l.b16 %v259
      %v575 = vunpack.c.l.b16 %v260
      %v576 = vunpack.c.l.b16 %v261
      %v577 = vunpack.c.l.b16 %v262
      %v578 = vunpack.c.l.b16 %v263
      %v579 = vunpack.c.l.b16 %v264
      %v580 = vunpack.c.l.b16 %v265
      %v581 = vunpack.c.l.b16 %v266
      %v582 = vunpack.c.l.b16 %v267
      %v583 = vunpack.c.l.b16 %v268
      %v584 = vunpack.c.l.b16 %v269
      %v585 = vunpack.c.l.b16 %v270
      %v586 = vunpack.c.l.b16 %v271
      %v587 = vunpack.c.l.b16 %v272
      %v588 = vunpack.c.l.b16 %v273
      %v589 = vunpack.c.l.b16 %v274
      %v590 = vunpack.c.l.b16 %v275
      %v591 = vpack.c.b16 %v558, %v557
      %v592 = vpack.c.b16 %v560, %v559
      %v593 = vpack.c.b16 %v562, %v561
      %v594 = vpack.c.b16 %v564, %v563
      %v595 = vpack.c.b16 %v566, %v565
      %v596 = vpack.c.b16 %v568, %v567
      %v597 = vpack.c.b16 %v570, %v569
      %v598 = vpack.c.b16 %v572, %v571
      %v599 = vpack.c.b16 %v574, %v573
      %v600 = vpack.c.b16 %v576, %v575
      %v601 = vpack.c.b16 %v578, %v577
      %v602 = vpack.c.b16 %v580, %v579
      %v603 = vpack.c.b16 %v582, %v581
      %v604 = vpack.c.b16 %v584, %v583
      %v605 = vpack.c.b16 %v586, %v585
      %v606 = vpack.c.b16 %v588, %v587
      %v607 = vpack.c.b16 %v590, %v589
      %vm624 = vcmask 113664
      %v626 = vsel %vm624, %v445, 0
      %v629 = vsel %vm624, %v448, 0
      %v632 = vsel %vm624, %v451, 0
      %v635 = vsel %vm624, %v454, 0
      %v638 = vsel %vm624, %v457, 0
      %v641 = vsel %vm624, %v460, 0
      %v644 = vsel %vm624, %v463, 0
      %v647 = vsel %vm624, %v466, 0
      %v650 = vsel %vm624, %v469, 0
      %v653 = vsel %vm624, %v472, 0
      %v656 = vsel %vm624, %v475, 0
      %v659 = vsel %vm624, %v478, 0
      %v662 = vsel %vm624, %v481, 0
      %v665 = vsel %vm624, %v484, 0
      %v668 = vsel %vm624, %v487, 0
      %v671 = vsel %vm624, %v490, 0
      %vm673 = vcmask 1046528
      %v675 = vsel %vm673, %v607, 0
      %677 = vmatprep.subr.bf16.mxu0 0
      %678 = vmatpush1.bf16.msra.mxu0 %v598
      %679 = vmatprep.subr.bf16.mxu0 0
      %680 = vmatpush1.bf16.msra.mxu0 %v597
      %681 = vmatprep.subr.bf16.mxu0 0
      %682 = vmatpush1.bf16.msra.mxu0 %v596
      %683 = vmatprep.subr.bf16.mxu0 0
      %684 = vmatpush1.bf16.msra.mxu0 %v595
      %685 = vmatprep.subr.bf16.mxu0 0
      %686 = vmatpush1.bf16.msra.mxu0 %v594
      %687 = vmatprep.subr.bf16.mxu0 0
      %688 = vmatpush1.bf16.msra.mxu0 %v593
      %689 = vmatprep.subr.bf16.mxu0 0
      %690 = vmatpush1.bf16.msra.mxu0 %v592
      %691 = vmatprep.subr.bf16.mxu0 0
      %692 = vmatpush1.bf16.msra.mxu0 %v591
      %693 = vmatprep.subr.bf16.mxu0 0
      %694 = vmatpush2.bf16.msra.mxu0 %v606
      %695 = vmatprep.subr.bf16.mxu0 0
      %696 = vmatpush2.bf16.msra.mxu0 %v605
      %697 = vmatprep.subr.bf16.mxu0 0
      %698 = vmatpush2.bf16.msra.mxu0 %v604
      %699 = vmatprep.subr.bf16.mxu0 0
      %700 = vmatpush2.bf16.msra.mxu0 %v603
      %701 = vmatprep.subr.bf16.mxu0 0
      %702 = vmatpush2.bf16.msra.mxu0 %v602
      %703 = vmatprep.subr.bf16.mxu0 0
      %704 = vmatpush2.bf16.msra.mxu0 %v601
      %705 = vmatprep.subr.bf16.mxu0 0
      %706 = vmatpush2.bf16.msra.mxu0 %v600
      %707 = vmatprep.subr.bf16.mxu0 0
      %708 = vmatpush2.bf16.msra.mxu0 %v599
      %709 = vmatprep.mubr.bf16.mxu0 %v444
      %710 = vmatmul.mubr.bf16.gmra.mxu0 %v443
      %v711 = vpop.f32.mrf.mxu0
      %v712 = vadd.f32 %v281, %v711
      %v713 = vpop.f32.mrf.mxu0
      %v714 = vpop.f32.mrf.mxu0
      %v715 = vadd.f32 %v281, %v714
      %v716 = vpop.f32.mrf.mxu0
      %717 = vmatprep.mubr.bf16.mxu0 %v447
      %718 = vmatmul.mubr.bf16.gmra.mxu0 %v446
      %v719 = vpop.f32.mrf.mxu0
      %v720 = vadd.f32 %v281, %v719
      %v721 = vpop.f32.mrf.mxu0
      %v722 = vpop.f32.mrf.mxu0
      %v723 = vadd.f32 %v281, %v722
      %v724 = vpop.f32.mrf.mxu0
      %725 = vmatprep.mubr.bf16.mxu0 %v450
      %726 = vmatmul.mubr.bf16.gmra.mxu0 %v449
      %v727 = vpop.f32.mrf.mxu0
      %v728 = vadd.f32 %v281, %v727
      %v729 = vpop.f32.mrf.mxu0
      %v730 = vpop.f32.mrf.mxu0
      %v731 = vadd.f32 %v281, %v730
      %v732 = vpop.f32.mrf.mxu0
      %733 = vmatprep.mubr.bf16.mxu0 %v453
      %734 = vmatmul.mubr.bf16.gmra.mxu0 %v452
      %v735 = vpop.f32.mrf.mxu0
      %v736 = vadd.f32 %v281, %v735
      %v737 = vpop.f32.mrf.mxu0
      %v738 = vpop.f32.mrf.mxu0
      %v739 = vadd.f32 %v281, %v738
      %v740 = vpop.f32.mrf.mxu0
      %741 = vmatprep.mubr.bf16.mxu0 %v456
      %742 = vmatmul.mubr.bf16.gmra.mxu0 %v455
      %v743 = vpop.f32.mrf.mxu0
      %v744 = vadd.f32 %v281, %v743
      %v745 = vpop.f32.mrf.mxu0
      %v746 = vpop.f32.mrf.mxu0
      %v747 = vadd.f32 %v281, %v746
      %v748 = vpop.f32.mrf.mxu0
      %749 = vmatprep.mubr.bf16.mxu0 %v459
      %750 = vmatmul.mubr.bf16.gmra.mxu0 %v458
      %v751 = vpop.f32.mrf.mxu0
      %v752 = vadd.f32 %v281, %v751
      %v753 = vpop.f32.mrf.mxu0
      %v754 = vpop.f32.mrf.mxu0
      %v755 = vadd.f32 %v281, %v754
      %v756 = vpop.f32.mrf.mxu0
      %757 = vmatprep.mubr.bf16.mxu0 %v462
      %758 = vmatmul.mubr.bf16.gmra.mxu0 %v461
      %v759 = vpop.f32.mrf.mxu0
      %v760 = vadd.f32 %v281, %v759
      %v761 = vpop.f32.mrf.mxu0
      %v762 = vpop.f32.mrf.mxu0
      %v763 = vadd.f32 %v281, %v762
      %v764 = vpop.f32.mrf.mxu0
      %765 = vmatprep.mubr.bf16.mxu0 %v465
      %766 = vmatmul.mubr.bf16.gmra.mxu0 %v464
      %v767 = vpop.f32.mrf.mxu0
      %v768 = vadd.f32 %v281, %v767
      %v769 = vpop.f32.mrf.mxu0
      %v770 = vpop.f32.mrf.mxu0
      %v771 = vadd.f32 %v281, %v770
      %v772 = vpop.f32.mrf.mxu0
      %773 = vmatprep.mubr.bf16.mxu0 %v468
      %774 = vmatmul.mubr.bf16.gmra.mxu0 %v467
      %v775 = vpop.f32.mrf.mxu0
      %v776 = vadd.f32 %v281, %v775
      %v777 = vpop.f32.mrf.mxu0
      %v778 = vpop.f32.mrf.mxu0
      %v779 = vadd.f32 %v281, %v778
      %v780 = vpop.f32.mrf.mxu0
      %781 = vmatprep.mubr.bf16.mxu0 %v471
      %782 = vmatmul.mubr.bf16.gmra.mxu0 %v470
      %v783 = vpop.f32.mrf.mxu0
      %v784 = vadd.f32 %v281, %v783
      %v785 = vpop.f32.mrf.mxu0
      %v786 = vpop.f32.mrf.mxu0
      %v787 = vadd.f32 %v281, %v786
      %v788 = vpop.f32.mrf.mxu0
      %789 = vmatprep.mubr.bf16.mxu0 %v474
      %790 = vmatmul.mubr.bf16.gmra.mxu0 %v473
      %v791 = vpop.f32.mrf.mxu0
      %v792 = vadd.f32 %v281, %v791
      %v793 = vpop.f32.mrf.mxu0
      %v794 = vpop.f32.mrf.mxu0
      %v795 = vadd.f32 %v281, %v794
      %v796 = vpop.f32.mrf.mxu0
      %797 = vmatprep.mubr.bf16.mxu0 %v477
      %798 = vmatmul.mubr.bf16.gmra.mxu0 %v476
      %v799 = vpop.f32.mrf.mxu0
      %v800 = vadd.f32 %v281, %v799
      %v801 = vpop.f32.mrf.mxu0
      %v802 = vpop.f32.mrf.mxu0
      %v803 = vadd.f32 %v281, %v802
      %v804 = vpop.f32.mrf.mxu0
      %805 = vmatprep.mubr.bf16.mxu0 %v480
      %806 = vmatmul.mubr.bf16.gmra.mxu0 %v479
      %v807 = vpop.f32.mrf.mxu0
      %v808 = vadd.f32 %v281, %v807
      %v809 = vpop.f32.mrf.mxu0
      %v810 = vpop.f32.mrf.mxu0
      %v811 = vadd.f32 %v281, %v810
      %v812 = vpop.f32.mrf.mxu0
      %813 = vmatprep.mubr.bf16.mxu0 %v483
      %814 = vmatmul.mubr.bf16.gmra.mxu0 %v482
      %v815 = vpop.f32.mrf.mxu0
      %v816 = vadd.f32 %v281, %v815
      %v817 = vpop.f32.mrf.mxu0
      %v818 = vpop.f32.mrf.mxu0
      %v819 = vadd.f32 %v281, %v818
      %v820 = vpop.f32.mrf.mxu0
      %821 = vmatprep.mubr.bf16.mxu0 %v486
      %822 = vmatmul.mubr.bf16.gmra.mxu0 %v485
      %v823 = vpop.f32.mrf.mxu0
      %v824 = vadd.f32 %v281, %v823
      %v825 = vpop.f32.mrf.mxu0
      %v826 = vpop.f32.mrf.mxu0
      %v827 = vadd.f32 %v281, %v826
      %v828 = vpop.f32.mrf.mxu0
      %829 = vmatprep.mubr.bf16.mxu0 %v489
      %830 = vmatmul.mubr.bf16.gmra.mxu0 %v488
      %v831 = vpop.f32.mrf.mxu0
      %v832 = vadd.f32 %v281, %v831
      %v833 = vpop.f32.mrf.mxu0
      %v834 = vpop.f32.mrf.mxu0
      %v835 = vadd.f32 %v281, %v834
      %v836 = vpop.f32.mrf.mxu0
      %837 = vdwg.mxu0
      %838 = vmatprep.subr.bf16.mxu0 0
      %839 = vmatpush1.bf16.msra.mxu0 0
      %840 = vmatprep.subr.bf16.mxu0 0
      %841 = vmatpush1.bf16.msra.mxu0 0
      %842 = vmatprep.subr.bf16.mxu0 0
      %843 = vmatpush1.bf16.msra.mxu0 0
      %844 = vmatprep.subr.bf16.mxu0 0
      %845 = vmatpush1.bf16.msra.mxu0 0
      %846 = vmatprep.subr.bf16.mxu0 0
      %847 = vmatpush1.bf16.msra.mxu0 0
      %848 = vmatprep.subr.bf16.mxu0 0
      %849 = vmatpush1.bf16.msra.mxu0 0
      %850 = vmatprep.subr.bf16.mxu0 0
      %851 = vmatpush1.bf16.msra.mxu0 0
      %852 = vmatprep.subr.bf16.mxu0 0
      %853 = vmatpush1.bf16.msra.mxu0 %v675
      %854 = vmatprep.subr.bf16.mxu0 0
      %855 = vmatpush2.bf16.msra.mxu0 0
      %856 = vmatprep.subr.bf16.mxu0 0
      %857 = vmatpush2.bf16.msra.mxu0 0
      %858 = vmatprep.subr.bf16.mxu0 0
      %859 = vmatpush2.bf16.msra.mxu0 0
      %860 = vmatprep.subr.bf16.mxu0 0
      %861 = vmatpush2.bf16.msra.mxu0 0
      %862 = vmatprep.subr.bf16.mxu0 0
      %863 = vmatpush2.bf16.msra.mxu0 0
      %864 = vmatprep.subr.bf16.mxu0 0
      %865 = vmatpush2.bf16.msra.mxu0 0
      %866 = vmatprep.subr.bf16.mxu0 0
      %867 = vmatpush2.bf16.msra.mxu0 0
      %868 = vmatprep.subr.bf16.mxu0 0
      %869 = vmatpush2.bf16.msra.mxu0 0
      %870 = vmatprep.mubr.bf16.mxu0 0
      %871 = vmatmul.mubr.bf16.gmra.mxu0 %v626
      %v872 = vpop.f32.mrf.mxu0
      %v873 = vadd.f32 %v712, %v872
      %v874 = vpop.f32.mrf.mxu0
      %v875 = vpop.f32.mrf.mxu0
      %v876 = vadd.f32 %v715, %v875
      %v877 = vpop.f32.mrf.mxu0
      %878 = vmatprep.mubr.bf16.mxu0 0
      %879 = vmatmul.mubr.bf16.gmra.mxu0 %v629
      %v880 = vpop.f32.mrf.mxu0
      %v881 = vadd.f32 %v720, %v880
      %v882 = vpop.f32.mrf.mxu0
      %v883 = vpop.f32.mrf.mxu0
      %v884 = vadd.f32 %v723, %v883
      %v885 = vpop.f32.mrf.mxu0
      %886 = vmatprep.mubr.bf16.mxu0 0
      %887 = vmatmul.mubr.bf16.gmra.mxu0 %v632
      %v888 = vpop.f32.mrf.mxu0
      %v889 = vadd.f32 %v728, %v888
      %v890 = vpop.f32.mrf.mxu0
      %v891 = vpop.f32.mrf.mxu0
      %v892 = vadd.f32 %v731, %v891
      %v893 = vpop.f32.mrf.mxu0
      %894 = vmatprep.mubr.bf16.mxu0 0
      %895 = vmatmul.mubr.bf16.gmra.mxu0 %v635
      %v896 = vpop.f32.mrf.mxu0
      %v897 = vadd.f32 %v736, %v896
      %v898 = vpop.f32.mrf.mxu0
      %v899 = vpop.f32.mrf.mxu0
      %v900 = vadd.f32 %v739, %v899
      %v901 = vpop.f32.mrf.mxu0
      %902 = vmatprep.mubr.bf16.mxu0 0
      %903 = vmatmul.mubr.bf16.gmra.mxu0 %v638
      %v904 = vpop.f32.mrf.mxu0
      %v905 = vadd.f32 %v744, %v904
      %v906 = vpop.f32.mrf.mxu0
      %v907 = vpop.f32.mrf.mxu0
      %v908 = vadd.f32 %v747, %v907
      %v909 = vpop.f32.mrf.mxu0
      %910 = vmatprep.mubr.bf16.mxu0 0
      %911 = vmatmul.mubr.bf16.gmra.mxu0 %v641
      %v912 = vpop.f32.mrf.mxu0
      %v913 = vadd.f32 %v752, %v912
      %v914 = vpop.f32.mrf.mxu0
      %v915 = vpop.f32.mrf.mxu0
      %v916 = vadd.f32 %v755, %v915
      %v917 = vpop.f32.mrf.mxu0
      %918 = vmatprep.mubr.bf16.mxu0 0
      %919 = vmatmul.mubr.bf16.gmra.mxu0 %v644
      %v920 = vpop.f32.mrf.mxu0
      %v921 = vadd.f32 %v760, %v920
      %v922 = vpop.f32.mrf.mxu0
      %v923 = vpop.f32.mrf.mxu0
      %v924 = vadd.f32 %v763, %v923
      %v925 = vpop.f32.mrf.mxu0
      %926 = vmatprep.mubr.bf16.mxu0 0
      %927 = vmatmul.mubr.bf16.gmra.mxu0 %v647
      %v928 = vpop.f32.mrf.mxu0
      %v929 = vadd.f32 %v768, %v928
      %v930 = vpop.f32.mrf.mxu0
      %v931 = vpop.f32.mrf.mxu0
      %v932 = vadd.f32 %v771, %v931
      %v933 = vpop.f32.mrf.mxu0
      %934 = vmatprep.mubr.bf16.mxu0 0
      %935 = vmatmul.mubr.bf16.gmra.mxu0 %v650
      %v936 = vpop.f32.mrf.mxu0
      %v937 = vadd.f32 %v776, %v936
      %v938 = vpop.f32.mrf.mxu0
      %v939 = vpop.f32.mrf.mxu0
      %v940 = vadd.f32 %v779, %v939
      %v941 = vpop.f32.mrf.mxu0
      %942 = vmatprep.mubr.bf16.mxu0 0
      %943 = vmatmul.mubr.bf16.gmra.mxu0 %v653
      %v944 = vpop.f32.mrf.mxu0
      %v945 = vadd.f32 %v784, %v944
      %v946 = vpop.f32.mrf.mxu0
      %v947 = vpop.f32.mrf.mxu0
      %v948 = vadd.f32 %v787, %v947
      %v949 = vpop.f32.mrf.mxu0
      %950 = vmatprep.mubr.bf16.mxu0 0
      %951 = vmatmul.mubr.bf16.gmra.mxu0 %v656
      %v952 = vpop.f32.mrf.mxu0
      %v953 = vadd.f32 %v792, %v952
      %v954 = vpop.f32.mrf.mxu0
      %v955 = vpop.f32.mrf.mxu0
      %v956 = vadd.f32 %v795, %v955
      %v957 = vpop.f32.mrf.mxu0
      %958 = vmatprep.mubr.bf16.mxu0 0
      %959 = vmatmul.mubr.bf16.gmra.mxu0 %v659
      %v960 = vpop.f32.mrf.mxu0
      %v961 = vadd.f32 %v800, %v960
      %v962 = vpop.f32.mrf.mxu0
      %v963 = vpop.f32.mrf.mxu0
      %v964 = vadd.f32 %v803, %v963
      %v965 = vpop.f32.mrf.mxu0
      %966 = vmatprep.mubr.bf16.mxu0 0
      %967 = vmatmul.mubr.bf16.gmra.mxu0 %v662
      %v968 = vpop.f32.mrf.mxu0
      %v969 = vadd.f32 %v808, %v968
      %v970 = vpop.f32.mrf.mxu0
      %v971 = vpop.f32.mrf.mxu0
      %v972 = vadd.f32 %v811, %v971
      %v973 = vpop.f32.mrf.mxu0
      %974 = vmatprep.mubr.bf16.mxu0 0
      %975 = vmatmul.mubr.bf16.gmra.mxu0 %v665
      %v976 = vpop.f32.mrf.mxu0
      %v977 = vadd.f32 %v816, %v976
      %v978 = vpop.f32.mrf.mxu0
      %v979 = vpop.f32.mrf.mxu0
      %v980 = vadd.f32 %v819, %v979
      %v981 = vpop.f32.mrf.mxu0
      %982 = vmatprep.mubr.bf16.mxu0 0
      %983 = vmatmul.mubr.bf16.gmra.mxu0 %v668
      %v984 = vpop.f32.mrf.mxu0
      %v985 = vadd.f32 %v824, %v984
      %v986 = vpop.f32.mrf.mxu0
      %v987 = vpop.f32.mrf.mxu0
      %v988 = vadd.f32 %v827, %v987
      %v989 = vpop.f32.mrf.mxu0
      %990 = vmatprep.mubr.bf16.mxu0 0
      %991 = vmatmul.mubr.bf16.gmra.mxu0 %v671
      %v992 = vpop.f32.mrf.mxu0
      %v993 = vadd.f32 %v832, %v992
      %v994 = vpop.f32.mrf.mxu0
      %v995 = vpop.f32.mrf.mxu0
      %v996 = vadd.f32 %v835, %v995
      %v997 = vpop.f32.mrf.mxu0
      %998 = vdwg.mxu0
      %vm999 = vcmask 97280
      %1000 = vst.msk [vmem:[%s175] sm:$0xff] %vm999, %v873
      %1001 = vst.msk [vmem:[%s175 + $0x8] sm:$0xff] %vm999, %v876
      %1002 = vst.msk [vmem:[%s175 + $0x10] sm:$0xff] %vm999, %v881
      %1003 = vst.msk [vmem:[%s175 + $0x18] sm:$0xff] %vm999, %v884
      %1004 = vst.msk [vmem:[%s175 + $0x20] sm:$0xff] %vm999, %v889
      %1005 = vst.msk [vmem:[%s175 + $0x28] sm:$0xff] %vm999, %v892
      %1006 = vst.msk [vmem:[%s175 + $0x30] sm:$0xff] %vm999, %v897
      %1007 = vst.msk [vmem:[%s175 + $0x38] sm:$0xff] %vm999, %v900
      %1008 = vst.msk [vmem:[%s175 + $0x40] sm:$0xff] %vm999, %v905
      %1009 = vst.msk [vmem:[%s175 + $0x48] sm:$0xff] %vm999, %v908
      %1010 = vst.msk [vmem:[%s175 + $0x50] sm:$0xff] %vm999, %v913
      %1011 = vst.msk [vmem:[%s175 + $0x58] sm:$0xff] %vm999, %v916
      %1012 = vst.msk [vmem:[%s175 + $0x60] sm:$0xff] %vm999, %v921
      %1013 = vst.msk [vmem:[%s175 + $0x68] sm:$0xff] %vm999, %v924
      %1014 = vst.msk [vmem:[%s175 + $0x70] sm:$0xff] %vm999, %v929
      %1015 = vst.msk [vmem:[%s175 + $0x78] sm:$0xff] %vm999, %v932
      %1016 = vst.msk [vmem:[%s175 + $0x80] sm:$0xff] %vm999, %v937
      %1017 = vst.msk [vmem:[%s175 + $0x88] sm:$0xff] %vm999, %v940
      %1018 = vst.msk [vmem:[%s175 + $0x90] sm:$0xff] %vm999, %v945
      %1019 = vst.msk [vmem:[%s175 + $0x98] sm:$0xff] %vm999, %v948
      %1020 = vst.msk [vmem:[%s175 + $0xa0] sm:$0xff] %vm999, %v953
      %1021 = vst.msk [vmem:[%s175 + $0xa8] sm:$0xff] %vm999, %v956
      %1022 = vst.msk [vmem:[%s175 + $0xb0] sm:$0xff] %vm999, %v961
      %1023 = vst.msk [vmem:[%s175 + $0xb8] sm:$0xff] %vm999, %v964
      %1024 = vst.msk [vmem:[%s175 + $0xc0] sm:$0xff] %vm999, %v969
      %1025 = vst.msk [vmem:[%s175 + $0xc8] sm:$0xff] %vm999, %v972
      %1026 = vst.msk [vmem:[%s175 + $0xd0] sm:$0xff] %vm999, %v977
      %1027 = vst.msk [vmem:[%s175 + $0xd8] sm:$0xff] %vm999, %v980
      %1028 = vst.msk [vmem:[%s175 + $0xe0] sm:$0xff] %vm999, %v985
      %1029 = vst.msk [vmem:[%s175 + $0xe8] sm:$0xff] %vm999, %v988
      %1030 = vst.msk [vmem:[%s175 + $0xf0] sm:$0xff] %vm999, %v993
      %1031 = vst.msk [vmem:[%s175 + $0xf8] sm:$0xff] %vm999, %v996
      %s1032 = smul.u32 32, %s14
      %p1033 = scmp.lt.s32.totalorder %s1032, 63
      %s1034 = scalar_select %p1033, %s1032, 63
      %s1035 = smul.addr %s1034, 8
      %s1036 = scalar_lea.vmem %s3, %s1035
      // Predicated region
      $region33: #{_lambda_.31} parent=31 // pred_check
        %p1037 = pneg %p100
      $region34: #{_lambda_.31} parent=31 // pred_check_branch
        %1039 = sbr.rel (%p1037) target = $region36
      $region35: #{_lambda_.31} parent=31 // pred_region
        %s1040 = smul.u32 32, %s14
      $region36: #{_lambda_.31} parent=31 // pred_fallthru
        _
    $region32: #{_lambda_.31} parent=5 // pred_fallthru
      _
    %p1041 = scmp.le.s32.totalorder 2, %s9
    // Predicated region
    $region37: #{_lambda_.31} parent=5 // pred_check
      %p1042 = pneg %p1041
    $region38: #{_lambda_.31} parent=5 // pred_check_branch
      %1044 = sbr.rel (%p1042) target = $region40
    $region39: #{_lambda_.31} parent=5 // pred_region
      %s1045 = ssub.s32 %s9, 2
      // Predicated region
      $region41: #{_lambda_.31} parent=39 // pred_check
        %p1046 = pneg %p106
      $region42: #{_lambda_.31} parent=39 // pred_check_branch
        %1048 = sbr.rel (%p1046) target = $region44
      $region43: #{_lambda_.31} parent=39 // pred_region
        %s1049 = smul.u32 32, %s15
        %p1050 = scmp.lt.s32.totalorder %s1049, 63
        %s1051 = scalar_select %p1050, %s1049, 63
        %s1052 = smul.addr %s1051, 8
        %s1053 = scalar_lea.vmem %s3, %s1052
      $region44: #{_lambda_.31} parent=39 // pred_fallthru
        _
    $region40: #{_lambda_.31} parent=5 // pred_fallthru
      _
  $region6: #{_lambda_.31} parent=0 // loop_footer
    %s13 = sadd.s32 1, %s9
  $region7: #{_lambda_.31} parent=0 // loop_footer_branch
    %8 = sbr.rel target = $region3
  $region8: #{_lambda_.31} parent=0 // loop_exit
    _

</llo_original>
